<compile_context>
chip_gen: v5e
topology: v5e:2x2
jax: 0.10.0
libtpu: 0.0.40
codegen_flags: <defaults>
</compile_context>

<pallas_src>
import functools
import math

import jax
import jax.numpy as jnp
from jax import lax
from jax.experimental import pallas as pl
from jax.experimental.pallas import tpu as pltpu

# Single-buffer pipeline mode for constant-index weight blocks.
try:
    _SINGLE_BUF = pl.Buffered(buffer_count=1)
except Exception:  # pragma: no cover - fall back to default double buffering
    _SINGLE_BUF = None

_VMEM_LIMIT_CACHE = None


def _vmem_limit():
    """~70% of physical VMEM, capped at 96 MB (v5e/v6e ~90 MB, v7x ~45 MB)."""
    global _VMEM_LIMIT_CACHE
    if _VMEM_LIMIT_CACHE is None:
        try:
            cap = int(getattr(pltpu.get_tpu_info(), "vmem_capacity_bytes", 0))
        except Exception:
            cap = 0
        if cap <= 0:
            cap = 64 * 1024 * 1024  # conservative (v7x-sized) fallback
        _VMEM_LIMIT_CACHE = int(min(96 * 1024 * 1024, (cap * 7) // 10))
    return _VMEM_LIMIT_CACHE


def _pick_batch_tile(n, target=8):
    """Largest divisor of n that is <= target while keeping >= 2 grid steps
    (so dimension_semantics=('parallel',) can shard across v7x's two cores)."""
    divs = [d for d in range(1, n + 1) if n % d == 0 and d <= target]
    two_step = [d for d in divs if n // d >= 2]
    return max(two_step) if two_step else max(divs)


def _weight_spec(shape):
    """Constant-index (never changing) block; request single buffering."""
    assert len(shape) == 2
    idx = lambda n: (0, 0)
    if _SINGLE_BUF is not None:
        try:
            return pl.BlockSpec(shape, idx, pipeline_mode=_SINGLE_BUF)
        except TypeError:  # pragma: no cover
            pass
    return pl.BlockSpec(shape, idx)


# ----------------------- conv1: 8x8 / stride 4 + ReLU -----------------------
def _conv1_kernel(x_ref, w_ref, b_ref, o_ref, *, kh, kb, stride, oh, ow):
    # x_ref: (nb, H/s, s, W/s, s*C) bf16  -- stride-factored NHWC view
    # w_ref: (kh*kw*C, 32) bf16 im2col weights, row order (kh, kw, cin)
    # b_ref: (1, 32) f32
    # o_ref: (nb, oh, ow, 32) bf16
    nb = o_ref.shape[0]
    m = nb * oh * ow
    taps = []
    for i in range(kh):                       # kernel rows
        qi, ri = divmod(i, stride)
        for blk in range(kb):                 # stride-blocks of kernel columns
            taps.append(x_ref[:, qi:qi + oh, ri, blk:blk + ow, :])
    patches = jnp.concatenate(taps, axis=-1).reshape(m, w_ref.shape[0])
    acc = jnp.dot(patches, w_ref[...], preferred_element_type=jnp.float32)
    acc = jnp.maximum(acc + b_ref[...], 0.0)
    o_ref[...] = acc.reshape(o_ref.shape).astype(o_ref.dtype)


def conv1_relu_pallas(x_nhwc, w_flat, b, *, kh=8, kw=8, stride=4, batch_target=8):
    N, H, W, C = x_nhwc.shape
    assert H % stride == 0 and W % stride == 0 and kw % stride == 0
    oh = (H - kh) // stride + 1
    ow = (W - kw) // stride + 1
    kb = kw // stride
    sc = stride * C
    cout = w_flat.shape[1]
    assert w_flat.shape[0] == kh * kw * C
    # Pure metadata (row-major preserving) reshape: no HBM duplication.
    x6 = x_nhwc.reshape(N, H // stride, stride, W // stride, sc)
    nb = _pick_batch_tile(N, batch_target)
    kernel = functools.partial(_conv1_kernel, kh=kh, kb=kb, stride=stride,
                               oh=oh, ow=ow)
    return pl.pallas_call(
        kernel,
        out_shape=jax.ShapeDtypeStruct((N, oh, ow, cout), jnp.bfloat16),
        grid=(N // nb,),
        in_specs=[
            pl.BlockSpec((nb, H // stride, stride, W // stride, sc),
                         lambda n: (n, 0, 0, 0, 0)),
            _weight_spec(w_flat.shape),
            _weight_spec(b.shape),
        ],
        out_specs=pl.BlockSpec((nb, oh, ow, cout), lambda n: (n, 0, 0, 0)),
        compiler_params=pltpu.CompilerParams(
            dimension_semantics=("parallel",),
            vmem_limit_bytes=_vmem_limit()),
    )(x6, w_flat, b)


# -------------- fused conv2 + conv3 + fc1 + fc2 (tail kernel) ---------------
def _tail_kernel(x1_ref, w2_ref, b2_ref, w3_ref, b3_ref,
                 fw1_ref, fb1_ref, fw2_ref, fb2_ref, o_ref, *,
                 k2, s2, oh2, ow2, k3, oh3, ow3):
    nb = o_ref.shape[0]

    # ---- conv2: 4x4 / stride 2, tap-concatenated im2col, one K=512 matmul --
    m2 = nb * oh2 * ow2
    kb2 = k2 // s2
    taps = []
    for i in range(k2):
        qi, ri = divmod(i, s2)
        for blk in range(kb2):
            taps.append(x1_ref[:, qi:qi + oh2, ri, blk:blk + ow2, :])
    p2 = jnp.concatenate(taps, axis=-1).reshape(m2, w2_ref.shape[0])
    a2 = jnp.maximum(
        jnp.dot(p2, w2_ref[...], preferred_element_type=jnp.float32)
        + b2_ref[...], 0.0)
    x2 = a2.astype(jnp.bfloat16).reshape(nb, oh2, ow2, w2_ref.shape[1])

    # ---- conv3: 3x3 / stride 1, tap-concatenated im2col, one K=576 matmul --
    m3 = nb * oh3 * ow3
    taps = []
    for i in range(k3):
        for j in range(k3):
            taps.append(x2[:, i:i + oh3, j:j + ow3, :])
    p3 = jnp.concatenate(taps, axis=-1).reshape(m3, w3_ref.shape[0])
    a3 = jnp.maximum(
        jnp.dot(p3, w3_ref[...], preferred_element_type=jnp.float32)
        + b3_ref[...], 0.0)
    c3 = w3_ref.shape[1]
    x3 = a3.astype(jnp.bfloat16).reshape(nb, oh3, ow3, c3)

    # ---- flatten (h, w, c) + fused FC head; hidden never leaves VMEM -------
    feats = jnp.concatenate(
        [x3[:, i:i + 1, j:j + 1, :].reshape(nb, c3)
         for i in range(oh3) for j in range(ow3)], axis=-1)
    h = jnp.dot(feats, fw1_ref[...], preferred_element_type=jnp.float32)
    h = jnp.maximum(h + fb1_ref[...], 0.0).astype(jnp.bfloat16)
    o = jnp.dot(h, fw2_ref[...], preferred_element_type=jnp.float32)
    o_ref[:, 0, :] = jnp.maximum(o + fb2_ref[...], 0.0).astype(o_ref.dtype)


def conv23_fc_pallas(x1, w2, b2, w3, b3, fw1, fb1, fw2, fb2, *,
                     k2=4, s2=2, k3=3, batch_target=8):
    N, oh1, ow1, c1 = x1.shape
    assert oh1 % s2 == 0 and ow1 % s2 == 0
    oh2 = (oh1 - k2) // s2 + 1
    ow2 = (ow1 - k2) // s2 + 1
    oh3 = oh2 - k3 + 1
    ow3 = ow2 - k3 + 1
    assert w2.shape[0] == k2 * k2 * c1
    assert w3.shape[0] == k3 * k3 * w2.shape[1]
    assert fw1.shape[0] == oh3 * ow3 * w3.shape[1]
    n_out = fw2.shape[1]
    # Metadata-only stride-factored view for conv2's in-kernel im2col.
    x1v = x1.reshape(N, oh1 // s2, s2, ow1 // s2, s2 * c1)
    nb = _pick_batch_tile(N, batch_target)
    kernel = functools.partial(_tail_kernel, k2=k2, s2=s2, oh2=oh2, ow2=ow2,
                               k3=k3, oh3=oh3, ow3=ow3)
    # Output carries a unit middle dim so the block's last two dims are always
    # (1, n_out) (full dims) regardless of the batch tile size.
    out = pl.pallas_call(
        kernel,
        out_shape=jax.ShapeDtypeStruct((N, 1, n_out), jnp.float32),
        grid=(N // nb,),
        in_specs=[
            pl.BlockSpec((nb, oh1 // s2, s2, ow1 // s2, s2 * c1),
                         lambda n: (n, 0, 0, 0, 0)),
            _weight_spec(w2.shape), _weight_spec(b2.shape),
            _weight_spec(w3.shape), _weight_spec(b3.shape),
            _weight_spec(fw1.shape), _weight_spec(fb1.shape),
            _weight_spec(fw2.shape), _weight_spec(fb2.shape),
        ],
        out_specs=pl.BlockSpec((nb, 1, n_out), lambda n: (n, 0, 0)),
        compiler_params=pltpu.CompilerParams(
            dimension_semantics=("parallel",),
            vmem_limit_bytes=_vmem_limit()),
    )(x1v, w2, b2, w3, b3, fw1, fb1, fw2, fb2)
    return out.reshape(N, n_out)


# ------------------------------- full model ---------------------------------
def cnn_model_forward(x_nchw, prep):
    # TODO(synk): fold this NCHW->NHWC transpose + bf16 cast into conv1.
    x = jnp.transpose(x_nchw, (0, 2, 3, 1)).astype(jnp.bfloat16)
    x1 = conv1_relu_pallas(x, prep["w1"], prep["b1"])
    return conv23_fc_pallas(x1, prep["w2"], prep["b2"], prep["w3"], prep["b3"],
                            prep["fc1_w"], prep["fc1_b"],
                            prep["fc2_w"], prep["fc2_b"])


# --------------------- one-time parameter preparation -----------------------
def prepare_params(params, in_hw):
    H, W = in_hw
    oh1, ow1 = (H - 8) // 4 + 1, (W - 8) // 4 + 1
    oh3, ow3 = (oh1 - 4) // 2 - 1, (ow1 - 4) // 2 - 1
    bf = lambda a: a.astype(jnp.bfloat16)
    f32row = lambda a: a.reshape(1, -1).astype(jnp.float32)
    # HWIO -> flat im2col weights with row order (kh, kw, cin); no padding.
    w1 = bf(params["w1"].reshape(-1, params["w1"].shape[-1]))   # (8*8*Cin, 32)
    w2 = bf(params["w2"].reshape(-1, params["w2"].shape[-1]))   # (512, 64)
    w3 = bf(params["w3"].reshape(-1, params["w3"].shape[-1]))   # (576, 64)
    # Fold PyTorch's NCHW flatten order (c, h, w) into fc1_w rows so the kernel
    # can flatten conv3's NHWC output as (h, w, c) -- no transpose, no padding.
    fc1 = params["fc1_w"].reshape(64, oh3, ow3, 1024)
    fc1_w = bf(jnp.transpose(fc1, (1, 2, 0, 3)).reshape(oh3 * ow3 * 64, 1024))
    return dict(
        w1=w1, b1=f32row(params["b1"]),
        w2=w2, b2=f32row(params["b2"]),
        w3=w3, b3=f32row(params["b3"]),
        fc1_w=fc1_w, fc1_b=f32row(params["fc1_b"]),
        fc2_w=bf(params["fc2_w"]), fc2_b=f32row(params["fc2_b"]))


# ------------------------- deterministic params ------------------------------
def init_params(key, in_channels, in_hw):
    def uniform(k, shape, fan_in):
        bound = 1.0 / math.sqrt(fan_in)
        return jax.random.uniform(k, shape, jnp.float32, -bound, bound)

    keys = jax.random.split(key, 10)
    H, W = in_hw
    oh = (((H - 8) // 4 + 1 - 4) // 2 + 1 - 3) // 1 + 1
    ow = (((W - 8) // 4 + 1 - 4) // 2 + 1 - 3) // 1 + 1
    w1 = uniform(keys[0], (8, 8, in_channels, 32), in_channels * 8 * 8)
    b1 = uniform(keys[1], (32,), in_channels * 8 * 8)
    w2 = uniform(keys[2], (4, 4, 32, 64), 32 * 4 * 4)
    b2 = uniform(keys[3], (64,), 32 * 4 * 4)
    w3 = uniform(keys[4], (3, 3, 64, 64), 64 * 3 * 3)
    b3 = uniform(keys[5], (64,), 64 * 3 * 3)
    cnn_out = 64 * oh * ow
    fc1_w = uniform(keys[6], (cnn_out, 1024), cnn_out)
    fc1_b = uniform(keys[7], (1024,), cnn_out)
    fc2_w = uniform(keys[8], (1024, 512), 1024)
    fc2_b = uniform(keys[9], (512,), 1024)
    return dict(w1=w1, b1=b1, w2=w2, b2=b2, w3=w3, b3=b3,
                fc1_w=fc1_w, fc1_b=fc1_b, fc2_w=fc2_w, fc2_b=fc2_b)


# ------------------------------- references ----------------------------------
def reference_f32(x_nchw, p):
    x = jnp.transpose(x_nchw, (0, 2, 3, 1))
    dn = ("NHWC", "HWIO", "NHWC")
    for w, b, s in ((p["w1"], p["b1"], 4), (p["w2"], p["b2"], 2),
                    (p["w3"], p["b3"], 1)):
        x = lax.conv_general_dilated(x, w, (s, s), "VALID", dimension_numbers=dn,
                                     precision=lax.Precision.HIGHEST)
        x = jnp.maximum(x + b, 0.0)
    x = jnp.transpose(x, (0, 3, 1, 2)).reshape(x.shape[0], -1)
    x = jnp.maximum(
        jnp.dot(x, p["fc1_w"], precision=lax.Precision.HIGHEST) + p["fc1_b"], 0.0)
    x = jnp.maximum(
        jnp.dot(x, p["fc2_w"], precision=lax.Precision.HIGHEST) + p["fc2_b"], 0.0)
    return x


def reference_mimic_bf16(x_nchw, p):
    """Same numerics as the Pallas path: bf16 operands, f32 accumulation."""
    x = jnp.transpose(x_nchw, (0, 2, 3, 1)).astype(jnp.bfloat16)
    dn = ("NHWC", "HWIO", "NHWC")
    for w, b, s in ((p["w1"], p["b1"], 4), (p["w2"], p["b2"], 2),
                    (p["w3"], p["b3"], 1)):
        y = lax.conv_general_dilated(x, w.astype(jnp.bfloat16), (s, s), "VALID",
                                     dimension_numbers=dn,
                                     preferred_element_type=jnp.float32)
        x = jnp.maximum(y + b, 0.0).astype(jnp.bfloat16)
    x = jnp.transpose(x, (0, 3, 1, 2)).reshape(x.shape[0], -1)
    h = jnp.dot(x, p["fc1_w"].astype(jnp.bfloat16),
                preferred_element_type=jnp.float32) + p["fc1_b"]
    h = jnp.maximum(h, 0.0).astype(jnp.bfloat16)
    o = jnp.dot(h, p["fc2_w"].astype(jnp.bfloat16),
                preferred_element_type=jnp.float32) + p["fc2_b"]
    return jnp.maximum(o, 0.0)


if __name__ == "__main__":
    # Small shapes consistent with nature_cnn: 36x36 input ->
    # conv1: 8x8 -> conv2: 3x3 -> conv3: 1x1 -> cnn_out = 64.
    # B=8 so both grids get 2 parallel steps with a batch tile of 4.
    B, C, H, W = 8, 4, 36, 36
    key = jax.random.PRNGKey(0)
    kx, kp = jax.random.split(key)
    x = jax.random.normal(kx, (B, C, H, W), jnp.float32)
    params = init_params(kp, C, (H, W))
    prep = prepare_params(params, (H, W))

    fwd = jax.jit(cnn_model_forward)
    out = jax.block_until_ready(fwd(x, prep))
    assert out.shape == (B, 512), out.shape

    ref_m = jax.block_until_ready(reference_mimic_bf16(x, params))
    ref_f = jax.block_until_ready(reference_f32(x, params))
    err_m = float(jnp.max(jnp.abs(out - ref_m)))
    err_f = float(jnp.max(jnp.abs(out - ref_f)))
    assert jnp.allclose(out, ref_m, atol=1e-2, rtol=1e-2), err_m
    assert jnp.allclose(out, ref_f, atol=1e-1, rtol=1e-1), err_f

    print("KERNEL_OK")
</pallas_src>

<mosaic_0001>
module attributes {stable_mosaic.version = 11 : i64} {
  func.func @_conv1_kernel(%arg0: i32, %arg1: memref<4x9x4x9x16xbf16, #tpu.memory_space<vmem>>, %arg2: memref<256x32xbf16, #tpu.memory_space<vmem>>, %arg3: memref<1x32xf32, #tpu.memory_space<vmem>>, %arg4: memref<4x8x8x32xbf16, #tpu.memory_space<vmem>>) attributes {dimension_semantics = [#tpu.dimension_semantics<parallel>], iteration_bounds = array<i64: 2>, scalar_prefetch = 0 : i64, scratch_operands = 0 : i64, tpu.core_type = #tpu.core_type<tc>, window_params = [{transform_indices = @transform_0, window_bounds = array<i64: 4, 9, 4, 9, 16>}, {pipeline_mode = #tpu.pipeline_mode<synchronous>, transform_indices = @transform_1, window_bounds = array<i64: 256, 32>}, {pipeline_mode = #tpu.pipeline_mode<synchronous>, transform_indices = @transform_2, window_bounds = array<i64: 1, 32>}, {transform_indices = @transform_3, window_bounds = array<i64: 4, 8, 8, 32>}]} {
    %c0 = arith.constant 0 : index
    %c0_0 = arith.constant 0 : index
    %c0_1 = arith.constant 0 : index
    %c0_2 = arith.constant 0 : index
    %c0_3 = arith.constant 0 : index
    %0 = vector.load %arg1[%c0, %c0_0, %c0_1, %c0_2, %c0_3] : memref<4x9x4x9x16xbf16, #tpu.memory_space<vmem>>, vector<4x8x1x8x16xbf16>
    %1 = vector.shape_cast %0 : vector<4x8x1x8x16xbf16> to vector<4x8x8x16xbf16>
    %c0_4 = arith.constant 0 : index
    %c0_5 = arith.constant 0 : index
    %c0_6 = arith.constant 0 : index
    %c1 = arith.constant 1 : index
    %c0_7 = arith.constant 0 : index
    %2 = vector.load %arg1[%c0_4, %c0_5, %c0_6, %c1, %c0_7] : memref<4x9x4x9x16xbf16, #tpu.memory_space<vmem>>, vector<4x8x1x8x16xbf16>
    %3 = vector.shape_cast %2 : vector<4x8x1x8x16xbf16> to vector<4x8x8x16xbf16>
    %c0_8 = arith.constant 0 : index
    %c0_9 = arith.constant 0 : index
    %c1_10 = arith.constant 1 : index
    %c0_11 = arith.constant 0 : index
    %c0_12 = arith.constant 0 : index
    %4 = vector.load %arg1[%c0_8, %c0_9, %c1_10, %c0_11, %c0_12] : memref<4x9x4x9x16xbf16, #tpu.memory_space<vmem>>, vector<4x8x1x8x16xbf16>
    %5 = vector.shape_cast %4 : vector<4x8x1x8x16xbf16> to vector<4x8x8x16xbf16>
    %c0_13 = arith.constant 0 : index
    %c0_14 = arith.constant 0 : index
    %c1_15 = arith.constant 1 : index
    %c1_16 = arith.constant 1 : index
    %c0_17 = arith.constant 0 : index
    %6 = vector.load %arg1[%c0_13, %c0_14, %c1_15, %c1_16, %c0_17] : memref<4x9x4x9x16xbf16, #tpu.memory_space<vmem>>, vector<4x8x1x8x16xbf16>
    %7 = vector.shape_cast %6 : vector<4x8x1x8x16xbf16> to vector<4x8x8x16xbf16>
    %c0_18 = arith.constant 0 : index
    %c0_19 = arith.constant 0 : index
    %c2 = arith.constant 2 : index
    %c0_20 = arith.constant 0 : index
    %c0_21 = arith.constant 0 : index
    %8 = vector.load %arg1[%c0_18, %c0_19, %c2, %c0_20, %c0_21] : memref<4x9x4x9x16xbf16, #tpu.memory_space<vmem>>, vector<4x8x1x8x16xbf16>
    %9 = vector.shape_cast %8 : vector<4x8x1x8x16xbf16> to vector<4x8x8x16xbf16>
    %c0_22 = arith.constant 0 : index
    %c0_23 = arith.constant 0 : index
    %c2_24 = arith.constant 2 : index
    %c1_25 = arith.constant 1 : index
    %c0_26 = arith.constant 0 : index
    %10 = vector.load %arg1[%c0_22, %c0_23, %c2_24, %c1_25, %c0_26] : memref<4x9x4x9x16xbf16, #tpu.memory_space<vmem>>, vector<4x8x1x8x16xbf16>
    %11 = vector.shape_cast %10 : vector<4x8x1x8x16xbf16> to vector<4x8x8x16xbf16>
    %c0_27 = arith.constant 0 : index
    %c0_28 = arith.constant 0 : index
    %c3 = arith.constant 3 : index
    %c0_29 = arith.constant 0 : index
    %c0_30 = arith.constant 0 : index
    %12 = vector.load %arg1[%c0_27, %c0_28, %c3, %c0_29, %c0_30] : memref<4x9x4x9x16xbf16, #tpu.memory_space<vmem>>, vector<4x8x1x8x16xbf16>
    %13 = vector.shape_cast %12 : vector<4x8x1x8x16xbf16> to vector<4x8x8x16xbf16>
    %c0_31 = arith.constant 0 : index
    %c0_32 = arith.constant 0 : index
    %c3_33 = arith.constant 3 : index
    %c1_34 = arith.constant 1 : index
    %c0_35 = arith.constant 0 : index
    %14 = vector.load %arg1[%c0_31, %c0_32, %c3_33, %c1_34, %c0_35] : memref<4x9x4x9x16xbf16, #tpu.memory_space<vmem>>, vector<4x8x1x8x16xbf16>
    %15 = vector.shape_cast %14 : vector<4x8x1x8x16xbf16> to vector<4x8x8x16xbf16>
    %c0_36 = arith.constant 0 : index
    %c1_37 = arith.constant 1 : index
    %c0_38 = arith.constant 0 : index
    %c0_39 = arith.constant 0 : index
    %c0_40 = arith.constant 0 : index
    %16 = vector.load %arg1[%c0_36, %c1_37, %c0_38, %c0_39, %c0_40] : memref<4x9x4x9x16xbf16, #tpu.memory_space<vmem>>, vector<4x8x1x8x16xbf16>
    %17 = vector.shape_cast %16 : vector<4x8x1x8x16xbf16> to vector<4x8x8x16xbf16>
    %c0_41 = arith.constant 0 : index
    %c1_42 = arith.constant 1 : index
    %c0_43 = arith.constant 0 : index
    %c1_44 = arith.constant 1 : index
    %c0_45 = arith.constant 0 : index
    %18 = vector.load %arg1[%c0_41, %c1_42, %c0_43, %c1_44, %c0_45] : memref<4x9x4x9x16xbf16, #tpu.memory_space<vmem>>, vector<4x8x1x8x16xbf16>
    %19 = vector.shape_cast %18 : vector<4x8x1x8x16xbf16> to vector<4x8x8x16xbf16>
    %c0_46 = arith.constant 0 : index
    %c1_47 = arith.constant 1 : index
    %c1_48 = arith.constant 1 : index
    %c0_49 = arith.constant 0 : index
    %c0_50 = arith.constant 0 : index
    %20 = vector.load %arg1[%c0_46, %c1_47, %c1_48, %c0_49, %c0_50] : memref<4x9x4x9x16xbf16, #tpu.memory_space<vmem>>, vector<4x8x1x8x16xbf16>
    %21 = vector.shape_cast %20 : vector<4x8x1x8x16xbf16> to vector<4x8x8x16xbf16>
    %c0_51 = arith.constant 0 : index
    %c1_52 = arith.constant 1 : index
    %c1_53 = arith.constant 1 : index
    %c1_54 = arith.constant 1 : index
    %c0_55 = arith.constant 0 : index
    %22 = vector.load %arg1[%c0_51, %c1_52, %c1_53, %c1_54, %c0_55] : memref<4x9x4x9x16xbf16, #tpu.memory_space<vmem>>, vector<4x8x1x8x16xbf16>
    %23 = vector.shape_cast %22 : vector<4x8x1x8x16xbf16> to vector<4x8x8x16xbf16>
    %c0_56 = arith.constant 0 : index
    %c1_57 = arith.constant 1 : index
    %c2_58 = arith.constant 2 : index
    %c0_59 = arith.constant 0 : index
    %c0_60 = arith.constant 0 : index
    %24 = vector.load %arg1[%c0_56, %c1_57, %c2_58, %c0_59, %c0_60] : memref<4x9x4x9x16xbf16, #tpu.memory_space<vmem>>, vector<4x8x1x8x16xbf16>
    %25 = vector.shape_cast %24 : vector<4x8x1x8x16xbf16> to vector<4x8x8x16xbf16>
    %c0_61 = arith.constant 0 : index
    %c1_62 = arith.constant 1 : index
    %c2_63 = arith.constant 2 : index
    %c1_64 = arith.constant 1 : index
    %c0_65 = arith.constant 0 : index
    %26 = vector.load %arg1[%c0_61, %c1_62, %c2_63, %c1_64, %c0_65] : memref<4x9x4x9x16xbf16, #tpu.memory_space<vmem>>, vector<4x8x1x8x16xbf16>
    %27 = vector.shape_cast %26 : vector<4x8x1x8x16xbf16> to vector<4x8x8x16xbf16>
    %c0_66 = arith.constant 0 : index
    %c1_67 = arith.constant 1 : index
    %c3_68 = arith.constant 3 : index
    %c0_69 = arith.constant 0 : index
    %c0_70 = arith.constant 0 : index
    %28 = vector.load %arg1[%c0_66, %c1_67, %c3_68, %c0_69, %c0_70] : memref<4x9x4x9x16xbf16, #tpu.memory_space<vmem>>, vector<4x8x1x8x16xbf16>
    %29 = vector.shape_cast %28 : vector<4x8x1x8x16xbf16> to vector<4x8x8x16xbf16>
    %c0_71 = arith.constant 0 : index
    %c1_72 = arith.constant 1 : index
    %c3_73 = arith.constant 3 : index
    %c1_74 = arith.constant 1 : index
    %c0_75 = arith.constant 0 : index
    %30 = vector.load %arg1[%c0_71, %c1_72, %c3_73, %c1_74, %c0_75] : memref<4x9x4x9x16xbf16, #tpu.memory_space<vmem>>, vector<4x8x1x8x16xbf16>
    %31 = vector.shape_cast %30 : vector<4x8x1x8x16xbf16> to vector<4x8x8x16xbf16>
    %32 = tpu.concatenate %1, %3, %5, %7, %9, %11, %13, %15, %17, %19, %21, %23, %25, %27, %29, %31 in 3 : vector<4x8x8x16xbf16>, vector<4x8x8x16xbf16>, vector<4x8x8x16xbf16>, vector<4x8x8x16xbf16>, vector<4x8x8x16xbf16>, vector<4x8x8x16xbf16>, vector<4x8x8x16xbf16>, vector<4x8x8x16xbf16>, vector<4x8x8x16xbf16>, vector<4x8x8x16xbf16>, vector<4x8x8x16xbf16>, vector<4x8x8x16xbf16>, vector<4x8x8x16xbf16>, vector<4x8x8x16xbf16>, vector<4x8x8x16xbf16>, vector<4x8x8x16xbf16> -> vector<4x8x8x256xbf16>
    %33 = vector.shape_cast %32 : vector<4x8x8x256xbf16> to vector<256x256xbf16>
    %c0_76 = arith.constant 0 : index
    %c0_77 = arith.constant 0 : index
    %34 = vector.load %arg2[%c0_76, %c0_77] : memref<256x32xbf16, #tpu.memory_space<vmem>>, vector<256x32xbf16>
    %cst = arith.constant dense<0.000000e+00> : vector<256x32xf32>
    %35 = tpu.matmul %33, %34, %cst {dimension_numbers = #tpu.dot_dimension_numbers<[1], [0], [0], [1], [0, 0, 1, 1], [], []>} : vector<256x256xbf16>, vector<256x32xbf16>, vector<256x32xf32> -> vector<256x32xf32>
    %c0_78 = arith.constant 0 : index
    %c0_79 = arith.constant 0 : index
    %36 = vector.load %arg3[%c0_78, %c0_79] : memref<1x32xf32, #tpu.memory_space<vmem>>, vector<1x32xf32>
    %37 = vector.broadcast %36 : vector<1x32xf32> to vector<256x32xf32>
    %38 = arith.addf %35, %37 : vector<256x32xf32>
    %cst_80 = arith.constant 0.000000e+00 : f32
    %39 = vector.broadcast %cst_80 : f32 to vector<256x32xf32>
    %40 = arith.maximumf %38, %39 : vector<256x32xf32>
    %41 = vector.shape_cast %40 : vector<256x32xf32> to vector<4x8x8x32xf32>
    %42 = arith.truncf %41 : vector<4x8x8x32xf32> to vector<4x8x8x32xbf16>
    %c0_81 = arith.constant 0 : index
    %c0_82 = arith.constant 0 : index
    %c0_83 = arith.constant 0 : index
    %c0_84 = arith.constant 0 : index
    %43 = vector.load %arg4[%c0_81, %c0_82, %c0_83, %c0_84] : memref<4x8x8x32xbf16, #tpu.memory_space<vmem>>, vector<4x8x8x32xbf16>
    tpu.vector_store %arg4[%c0_81, %c0_82, %c0_83, %c0_84], %42 {strides = array<i32>} : memref<4x8x8x32xbf16, #tpu.memory_space<vmem>>, vector<4x8x8x32xbf16>,
    return
  }
  func.func @transform_0(%arg0: i32) -> (i32, i32, i32, i32, i32) {
    %c0_i32 = arith.constant 0 : i32
    %c0_i32_0 = arith.constant 0 : i32
    %c0_i32_1 = arith.constant 0 : i32
    %c0_i32_2 = arith.constant 0 : i32
    %c0_i32_3 = arith.constant 0 : i32
    return %arg0, %c0_i32, %c0_i32_0, %c0_i32_1, %c0_i32_2 : i32, i32, i32, i32, i32
  }
  func.func @transform_1(%arg0: i32) -> (i32, i32) {
    %c0_i32 = arith.constant 0 : i32
    %c0_i32_0 = arith.constant 0 : i32
    %c0_i32_1 = arith.constant 0 : i32
    return %c0_i32, %c0_i32_0 : i32, i32
  }
  func.func @transform_2(%arg0: i32) -> (i32, i32) {
    %c0_i32 = arith.constant 0 : i32
    %c0_i32_0 = arith.constant 0 : i32
    %c0_i32_1 = arith.constant 0 : i32
    return %c0_i32, %c0_i32_0 : i32, i32
  }
  func.func @transform_3(%arg0: i32) -> (i32, i32, i32, i32) {
    %c0_i32 = arith.constant 0 : i32
    %c0_i32_0 = arith.constant 0 : i32
    %c0_i32_1 = arith.constant 0 : i32
    %c0_i32_2 = arith.constant 0 : i32
    return %arg0, %c0_i32, %c0_i32_0, %c0_i32_1 : i32, i32, i32, i32
  }
}

module attributes {stable_mosaic.version = 11 : i64} {
  func.func @_tail_kernel(%arg0: i32, %arg1: memref<4x4x2x4x64xbf16, #tpu.memory_space<vmem>>, %arg2: memref<512x64xbf16, #tpu.memory_space<vmem>>, %arg3: memref<1x64xf32, #tpu.memory_space<vmem>>, %arg4: memref<576x64xbf16, #tpu.memory_space<vmem>>, %arg5: memref<1x64xf32, #tpu.memory_space<vmem>>, %arg6: memref<64x1024xbf16, #tpu.memory_space<vmem>>, %arg7: memref<1x1024xf32, #tpu.memory_space<vmem>>, %arg8: memref<1024x512xbf16, #tpu.memory_space<vmem>>, %arg9: memref<1x512xf32, #tpu.memory_space<vmem>>, %arg10: memref<4x1x512xf32, #tpu.memory_space<vmem>>) attributes {dimension_semantics = [#tpu.dimension_semantics<parallel>], iteration_bounds = array<i64: 2>, scalar_prefetch = 0 : i64, scratch_operands = 0 : i64, tpu.core_type = #tpu.core_type<tc>, window_params = [{transform_indices = @transform_0, window_bounds = array<i64: 4, 4, 2, 4, 64>}, {pipeline_mode = #tpu.pipeline_mode<synchronous>, transform_indices = @transform_1, window_bounds = array<i64: 512, 64>}, {pipeline_mode = #tpu.pipeline_mode<synchronous>, transform_indices = @transform_2, window_bounds = array<i64: 1, 64>}, {pipeline_mode = #tpu.pipeline_mode<synchronous>, transform_indices = @transform_3, window_bounds = array<i64: 576, 64>}, {pipeline_mode = #tpu.pipeline_mode<synchronous>, transform_indices = @transform_4, window_bounds = array<i64: 1, 64>}, {pipeline_mode = #tpu.pipeline_mode<synchronous>, transform_indices = @transform_5, window_bounds = array<i64: 64, 1024>}, {pipeline_mode = #tpu.pipeline_mode<synchronous>, transform_indices = @transform_6, window_bounds = array<i64: 1, 1024>}, {pipeline_mode = #tpu.pipeline_mode<synchronous>, transform_indices = @transform_7, window_bounds = array<i64: 1024, 512>}, {pipeline_mode = #tpu.pipeline_mode<synchronous>, transform_indices = @transform_8, window_bounds = array<i64: 1, 512>}, {transform_indices = @transform_9, window_bounds = array<i64: 4, 1, 512>}]} {
    %c0 = arith.constant 0 : index
    %c0_0 = arith.constant 0 : index
    %c0_1 = arith.constant 0 : index
    %c0_2 = arith.constant 0 : index
    %c0_3 = arith.constant 0 : index
    %0 = vector.load %arg1[%c0, %c0_0, %c0_1, %c0_2, %c0_3] : memref<4x4x2x4x64xbf16, #tpu.memory_space<vmem>>, vector<4x3x1x3x64xbf16>
    %1 = vector.shape_cast %0 : vector<4x3x1x3x64xbf16> to vector<4x3x3x64xbf16>
    %c0_4 = arith.constant 0 : index
    %c0_5 = arith.constant 0 : index
    %c0_6 = arith.constant 0 : index
    %c1 = arith.constant 1 : index
    %c0_7 = arith.constant 0 : index
    %2 = vector.load %arg1[%c0_4, %c0_5, %c0_6, %c1, %c0_7] : memref<4x4x2x4x64xbf16, #tpu.memory_space<vmem>>, vector<4x3x1x3x64xbf16>
    %3 = vector.shape_cast %2 : vector<4x3x1x3x64xbf16> to vector<4x3x3x64xbf16>
    %c0_8 = arith.constant 0 : index
    %c0_9 = arith.constant 0 : index
    %c1_10 = arith.constant 1 : index
    %c0_11 = arith.constant 0 : index
    %c0_12 = arith.constant 0 : index
    %4 = vector.load %arg1[%c0_8, %c0_9, %c1_10, %c0_11, %c0_12] : memref<4x4x2x4x64xbf16, #tpu.memory_space<vmem>>, vector<4x3x1x3x64xbf16>
    %5 = vector.shape_cast %4 : vector<4x3x1x3x64xbf16> to vector<4x3x3x64xbf16>
    %c0_13 = arith.constant 0 : index
    %c0_14 = arith.constant 0 : index
    %c1_15 = arith.constant 1 : index
    %c1_16 = arith.constant 1 : index
    %c0_17 = arith.constant 0 : index
    %6 = vector.load %arg1[%c0_13, %c0_14, %c1_15, %c1_16, %c0_17] : memref<4x4x2x4x64xbf16, #tpu.memory_space<vmem>>, vector<4x3x1x3x64xbf16>
    %7 = vector.shape_cast %6 : vector<4x3x1x3x64xbf16> to vector<4x3x3x64xbf16>
    %c0_18 = arith.constant 0 : index
    %c1_19 = arith.constant 1 : index
    %c0_20 = arith.constant 0 : index
    %c0_21 = arith.constant 0 : index
    %c0_22 = arith.constant 0 : index
    %8 = vector.load %arg1[%c0_18, %c1_19, %c0_20, %c0_21, %c0_22] : memref<4x4x2x4x64xbf16, #tpu.memory_space<vmem>>, vector<4x3x1x3x64xbf16>
    %9 = vector.shape_cast %8 : vector<4x3x1x3x64xbf16> to vector<4x3x3x64xbf16>
    %c0_23 = arith.constant 0 : index
    %c1_24 = arith.constant 1 : index
    %c0_25 = arith.constant 0 : index
    %c1_26 = arith.constant 1 : index
    %c0_27 = arith.constant 0 : index
    %10 = vector.load %arg1[%c0_23, %c1_24, %c0_25, %c1_26, %c0_27] : memref<4x4x2x4x64xbf16, #tpu.memory_space<vmem>>, vector<4x3x1x3x64xbf16>
    %11 = vector.shape_cast %10 : vector<4x3x1x3x64xbf16> to vector<4x3x3x64xbf16>
    %c0_28 = arith.constant 0 : index
    %c1_29 = arith.constant 1 : index
    %c1_30 = arith.constant 1 : index
    %c0_31 = arith.constant 0 : index
    %c0_32 = arith.constant 0 : index
    %12 = vector.load %arg1[%c0_28, %c1_29, %c1_30, %c0_31, %c0_32] : memref<4x4x2x4x64xbf16, #tpu.memory_space<vmem>>, vector<4x3x1x3x64xbf16>
    %13 = vector.shape_cast %12 : vector<4x3x1x3x64xbf16> to vector<4x3x3x64xbf16>
    %c0_33 = arith.constant 0 : index
    %c1_34 = arith.constant 1 : index
    %c1_35 = arith.constant 1 : index
    %c1_36 = arith.constant 1 : index
    %c0_37 = arith.constant 0 : index
    %14 = vector.load %arg1[%c0_33, %c1_34, %c1_35, %c1_36, %c0_37] : memref<4x4x2x4x64xbf16, #tpu.memory_space<vmem>>, vector<4x3x1x3x64xbf16>
    %15 = vector.shape_cast %14 : vector<4x3x1x3x64xbf16> to vector<4x3x3x64xbf16>
    %16 = tpu.concatenate %1, %3, %5, %7, %9, %11, %13, %15 in 3 : vector<4x3x3x64xbf16>, vector<4x3x3x64xbf16>, vector<4x3x3x64xbf16>, vector<4x3x3x64xbf16>, vector<4x3x3x64xbf16>, vector<4x3x3x64xbf16>, vector<4x3x3x64xbf16>, vector<4x3x3x64xbf16> -> vector<4x3x3x512xbf16>
    %17 = vector.shape_cast %16 : vector<4x3x3x512xbf16> to vector<36x512xbf16>
    %c0_38 = arith.constant 0 : index
    %c0_39 = arith.constant 0 : index
    %18 = vector.load %arg2[%c0_38, %c0_39] : memref<512x64xbf16, #tpu.memory_space<vmem>>, vector<512x64xbf16>
    %cst = arith.constant dense<0.000000e+00> : vector<36x64xf32>
    %19 = tpu.matmul %17, %18, %cst {dimension_numbers = #tpu.dot_dimension_numbers<[1], [0], [0], [1], [0, 0, 1, 1], [], []>} : vector<36x512xbf16>, vector<512x64xbf16>, vector<36x64xf32> -> vector<36x64xf32>
    %c0_40 = arith.constant 0 : index
    %c0_41 = arith.constant 0 : index
    %20 = vector.load %arg3[%c0_40, %c0_41] : memref<1x64xf32, #tpu.memory_space<vmem>>, vector<1x64xf32>
    %21 = vector.broadcast %20 : vector<1x64xf32> to vector<36x64xf32>
    %22 = arith.addf %19, %21 : vector<36x64xf32>
    %cst_42 = arith.constant 0.000000e+00 : f32
    %23 = vector.broadcast %cst_42 : f32 to vector<36x64xf32>
    %24 = arith.maximumf %22, %23 : vector<36x64xf32>
    %25 = arith.truncf %24 : vector<36x64xf32> to vector<36x64xbf16>
    %26 = vector.shape_cast %25 : vector<36x64xbf16> to vector<4x3x3x64xbf16>
    %27 = vector.extract_strided_slice %26 {offsets = [0, 0, 0, 0], sizes = [4, 1, 1, 64], strides = [1, 1, 1, 1]} : vector<4x3x3x64xbf16> to vector<4x1x1x64xbf16>
    %28 = vector.extract_strided_slice %26 {offsets = [0, 0, 1, 0], sizes = [4, 1, 1, 64], strides = [1, 1, 1, 1]} : vector<4x3x3x64xbf16> to vector<4x1x1x64xbf16>
    %29 = vector.extract_strided_slice %26 {offsets = [0, 0, 2, 0], sizes = [4, 1, 1, 64], strides = [1, 1, 1, 1]} : vector<4x3x3x64xbf16> to vector<4x1x1x64xbf16>
    %30 = vector.extract_strided_slice %26 {offsets = [0, 1, 0, 0], sizes = [4, 1, 1, 64], strides = [1, 1, 1, 1]} : vector<4x3x3x64xbf16> to vector<4x1x1x64xbf16>
    %31 = vector.extract_strided_slice %26 {offsets = [0, 1, 1, 0], sizes = [4, 1, 1, 64], strides = [1, 1, 1, 1]} : vector<4x3x3x64xbf16> to vector<4x1x1x64xbf16>
    %32 = vector.extract_strided_slice %26 {offsets = [0, 1, 2, 0], sizes = [4, 1, 1, 64], strides = [1, 1, 1, 1]} : vector<4x3x3x64xbf16> to vector<4x1x1x64xbf16>
    %33 = vector.extract_strided_slice %26 {offsets = [0, 2, 0, 0], sizes = [4, 1, 1, 64], strides = [1, 1, 1, 1]} : vector<4x3x3x64xbf16> to vector<4x1x1x64xbf16>
    %34 = vector.extract_strided_slice %26 {offsets = [0, 2, 1, 0], sizes = [4, 1, 1, 64], strides = [1, 1, 1, 1]} : vector<4x3x3x64xbf16> to vector<4x1x1x64xbf16>
    %35 = vector.extract_strided_slice %26 {offsets = [0, 2, 2, 0], sizes = [4, 1, 1, 64], strides = [1, 1, 1, 1]} : vector<4x3x3x64xbf16> to vector<4x1x1x64xbf16>
    %36 = tpu.concatenate %27, %28, %29, %30, %31, %32, %33, %34, %35 in 3 : vector<4x1x1x64xbf16>, vector<4x1x1x64xbf16>, vector<4x1x1x64xbf16>, vector<4x1x1x64xbf16>, vector<4x1x1x64xbf16>, vector<4x1x1x64xbf16>, vector<4x1x1x64xbf16>, vector<4x1x1x64xbf16>, vector<4x1x1x64xbf16> -> vector<4x1x1x576xbf16>
    %37 = vector.shape_cast %36 : vector<4x1x1x576xbf16> to vector<4x576xbf16>
    %c0_43 = arith.constant 0 : index
    %c0_44 = arith.constant 0 : index
    %38 = vector.load %arg4[%c0_43, %c0_44] : memref<576x64xbf16, #tpu.memory_space<vmem>>, vector<576x64xbf16>
    %cst_45 = arith.constant dense<0.000000e+00> : vector<4x64xf32>
    %39 = tpu.matmul %37, %38, %cst_45 {dimension_numbers = #tpu.dot_dimension_numbers<[1], [0], [0], [1], [0, 0, 1, 1], [], []>} : vector<4x576xbf16>, vector<576x64xbf16>, vector<4x64xf32> -> vector<4x64xf32>
    %c0_46 = arith.constant 0 : index
    %c0_47 = arith.constant 0 : index
    %40 = vector.load %arg5[%c0_46, %c0_47] : memref<1x64xf32, #tpu.memory_space<vmem>>, vector<1x64xf32>
    %41 = vector.broadcast %40 : vector<1x64xf32> to vector<4x64xf32>
    %42 = arith.addf %39, %41 : vector<4x64xf32>
    %cst_48 = arith.constant 0.000000e+00 : f32
    %43 = vector.broadcast %cst_48 : f32 to vector<4x64xf32>
    %44 = arith.maximumf %42, %43 : vector<4x64xf32>
    %45 = arith.truncf %44 : vector<4x64xf32> to vector<4x64xbf16>
    %46 = vector.shape_cast %45 : vector<4x64xbf16> to vector<4x1x1x64xbf16>
    %47 = vector.shape_cast %46 : vector<4x1x1x64xbf16> to vector<4x64xbf16>
    %c0_49 = arith.constant 0 : index
    %c0_50 = arith.constant 0 : index
    %48 = vector.load %arg6[%c0_49, %c0_50] : memref<64x1024xbf16, #tpu.memory_space<vmem>>, vector<64x1024xbf16>
    %cst_51 = arith.constant dense<0.000000e+00> : vector<4x1024xf32>
    %49 = tpu.matmul %47, %48, %cst_51 {dimension_numbers = #tpu.dot_dimension_numbers<[1], [0], [0], [1], [0, 0, 1, 1], [], []>} : vector<4x64xbf16>, vector<64x1024xbf16>, vector<4x1024xf32> -> vector<4x1024xf32>
    %c0_52 = arith.constant 0 : index
    %c0_53 = arith.constant 0 : index
    %50 = vector.load %arg7[%c0_52, %c0_53] : memref<1x1024xf32, #tpu.memory_space<vmem>>, vector<1x1024xf32>
    %51 = vector.broadcast %50 : vector<1x1024xf32> to vector<4x1024xf32>
    %52 = arith.addf %49, %51 : vector<4x1024xf32>
    %cst_54 = arith.constant 0.000000e+00 : f32
    %53 = vector.broadcast %cst_54 : f32 to vector<4x1024xf32>
    %54 = arith.maximumf %52, %53 : vector<4x1024xf32>
    %55 = arith.truncf %54 : vector<4x1024xf32> to vector<4x1024xbf16>
    %c0_55 = arith.constant 0 : index
    %c0_56 = arith.constant 0 : index
    %56 = vector.load %arg8[%c0_55, %c0_56] : memref<1024x512xbf16, #tpu.memory_space<vmem>>, vector<1024x512xbf16>
    %cst_57 = arith.constant dense<0.000000e+00> : vector<4x512xf32>
    %57 = tpu.matmul %55, %56, %cst_57 {dimension_numbers = #tpu.dot_dimension_numbers<[1], [0], [0], [1], [0, 0, 1, 1], [], []>} : vector<4x1024xbf16>, vector<1024x512xbf16>, vector<4x512xf32> -> vector<4x512xf32>
    %c0_58 = arith.constant 0 : index
    %c0_59 = arith.constant 0 : index
    %58 = vector.load %arg9[%c0_58, %c0_59] : memref<1x512xf32, #tpu.memory_space<vmem>>, vector<1x512xf32>
    %59 = vector.broadcast %58 : vector<1x512xf32> to vector<4x512xf32>
    %60 = arith.addf %57, %59 : vector<4x512xf32>
    %cst_60 = arith.constant 0.000000e+00 : f32
    %61 = vector.broadcast %cst_60 : f32 to vector<4x512xf32>
    %62 = arith.maximumf %60, %61 : vector<4x512xf32>
    %c0_61 = arith.constant 0 : index
    %c0_62 = arith.constant 0 : index
    %c0_63 = arith.constant 0 : index
    %63 = vector.load %arg10[%c0_61, %c0_62, %c0_63] : memref<4x1x512xf32, #tpu.memory_space<vmem>>, vector<4x1x512xf32>
    %64 = vector.shape_cast %63 : vector<4x1x512xf32> to vector<4x512xf32>
    %65 = vector.shape_cast %62 : vector<4x512xf32> to vector<4x1x512xf32>
    tpu.vector_store %arg10[%c0_61, %c0_62, %c0_63], %65 {strides = array<i32>} : memref<4x1x512xf32, #tpu.memory_space<vmem>>, vector<4x1x512xf32>,
    return
  }
  func.func @transform_0(%arg0: i32) -> (i32, i32, i32, i32, i32) {
    %c0_i32 = arith.constant 0 : i32
    %c0_i32_0 = arith.constant 0 : i32
    %c0_i32_1 = arith.constant 0 : i32
    %c0_i32_2 = arith.constant 0 : i32
    %c0_i32_3 = arith.constant 0 : i32
    return %arg0, %c0_i32, %c0_i32_0, %c0_i32_1, %c0_i32_2 : i32, i32, i32, i32, i32
  }
  func.func @transform_1(%arg0: i32) -> (i32, i32) {
    %c0_i32 = arith.constant 0 : i32
    %c0_i32_0 = arith.constant 0 : i32
    %c0_i32_1 = arith.constant 0 : i32
    return %c0_i32, %c0_i32_0 : i32, i32
  }
  func.func @transform_2(%arg0: i32) -> (i32, i32) {
    %c0_i32 = arith.constant 0 : i32
    %c0_i32_0 = arith.constant 0 : i32
    %c0_i32_1 = arith.constant 0 : i32
    return %c0_i32, %c0_i32_0 : i32, i32
  }
  func.func @transform_3(%arg0: i32) -> (i32, i32) {
    %c0_i32 = arith.constant 0 : i32
    %c0_i32_0 = arith.constant 0 : i32
    %c0_i32_1 = arith.constant 0 : i32
    return %c0_i32, %c0_i32_0 : i32, i32
  }
  func.func @transform_4(%arg0: i32) -> (i32, i32) {
    %c0_i32 = arith.constant 0 : i32
    %c0_i32_0 = arith.constant 0 : i32
    %c0_i32_1 = arith.constant 0 : i32
    return %c0_i32, %c0_i32_0 : i32, i32
  }
  func.func @transform_5(%arg0: i32) -> (i32, i32) {
    %c0_i32 = arith.constant 0 : i32
    %c0_i32_0 = arith.constant 0 : i32
    %c0_i32_1 = arith.constant 0 : i32
    return %c0_i32, %c0_i32_0 : i32, i32
  }
  func.func @transform_6(%arg0: i32) -> (i32, i32) {
    %c0_i32 = arith.constant 0 : i32
    %c0_i32_0 = arith.constant 0 : i32
    %c0_i32_1 = arith.constant 0 : i32
    return %c0_i32, %c0_i32_0 : i32, i32
  }
  func.func @transform_7(%arg0: i32) -> (i32, i32) {
    %c0_i32 = arith.constant 0 : i32
    %c0_i32_0 = arith.constant 0 : i32
    %c0_i32_1 = arith.constant 0 : i32
    return %c0_i32, %c0_i32_0 : i32, i32
  }
  func.func @transform_8(%arg0: i32) -> (i32, i32) {
    %c0_i32 = arith.constant 0 : i32
    %c0_i32_0 = arith.constant 0 : i32
    %c0_i32_1 = arith.constant 0 : i32
    return %c0_i32, %c0_i32_0 : i32, i32
  }
  func.func @transform_9(%arg0: i32) -> (i32, i32, i32) {
    %c0_i32 = arith.constant 0 : i32
    %c0_i32_0 = arith.constant 0 : i32
    %c0_i32_1 = arith.constant 0 : i32
    return %arg0, %c0_i32, %c0_i32_0 : i32, i32, i32
  }
}

</mosaic_0001>

<llo_original>
// kernel: cnn_model_forward.3
$region0: #{cnn_model_forward.3}
  #allocation0 [shape = 'u32[]', space=smem, size = 0x4, offset = 0x4, fixed_abs, tag = 'smem constant byte address 0x4 - core index']
  #allocation1 [shape = 'u32[72,128]{1,0:T(1,128)}', space=vmem, size = 0x9000, scoped, tag = 'internal scratch']
  %s0 = inlined_call_operand.vmem [shape: bf16[8,4,2,4,64], index: 0, kind: input, shape index: {}]
  %s1 = inlined_call_operand.vmem [shape: bf16[512,64], index: 1, kind: input, shape index: {}]
  %s2 = inlined_call_operand.vmem [shape: f32[1,64], index: 2, kind: input, shape index: {}]
  %s3 = inlined_call_operand.vmem [shape: bf16[576,64], index: 3, kind: input, shape index: {}]
  %s4 = inlined_call_operand.vmem [shape: f32[1,64], index: 4, kind: input, shape index: {}]
  %s5 = inlined_call_operand.vmem [shape: bf16[64,1024], index: 5, kind: input, shape index: {}]
  %s6 = inlined_call_operand.vmem [shape: f32[1,1024], index: 6, kind: input, shape index: {}]
  %s7 = inlined_call_operand.vmem [shape: bf16[1024,512], index: 7, kind: input, shape index: {}]
  %s8 = inlined_call_operand.vmem [shape: f32[1,512], index: 8, kind: input, shape index: {}]
  %s9 = inlined_call_operand.vmem [shape: f32[8,1,512], index: 9, kind: output, shape index: {}]
  %s10 = sld [smem:[#allocation0]]
  $region69: #{cnn_model_forward.3} parent=0
    _
  %s12 = ssub.s32 1, %s10
  %s13 = scalar_select 0, %s12, %s10
  loop: start=0, step=1, limit=4
  $region2: #{cnn_model_forward.3} parent=0 // loop_pre_header
    _
  $region3: #{cnn_model_forward.3} parent=0 // loop_header
    %s15 = sphi 0, %s19
    %p16 = scmp.ge.s32.totalorder %s15, 4
    %s25 = sphi 0, %s27
    %s28 = sphi 0, %s25
    %s29 = sphi 0, %s28
    %s45 = sphi 0, %s29
    %s49 = sphi 0, %s49
    %s51 = sphi 0, %s49
    %s52 = sphi 0, %s51
    %s66 = sphi 0, %s52
    %s70 = sphi 0, %s70
    %s72 = sphi 0, %s70
    %s73 = sphi 0, %s72
    %s87 = sphi 0, %s73
    %s91 = sphi 0, %s91
    %s93 = sphi 0, %s91
    %s94 = sphi 0, %s93
    %s108 = sphi 0, %s94
    %s112 = sphi 0, %s112
    %s114 = sphi 0, %s112
    %s115 = sphi 0, %s114
    %s129 = sphi 0, %s115
    %s133 = sphi 0, %s133
    %s135 = sphi 0, %s133
    %s136 = sphi 0, %s135
    %s150 = sphi 0, %s136
    %s154 = sphi 0, %s154
    %s156 = sphi 0, %s154
    %s157 = sphi 0, %s156
    %s171 = sphi 0, %s157
    %s175 = sphi 0, %s175
    %s177 = sphi 0, %s175
    %s178 = sphi 0, %s177
    %s192 = sphi 0, %s178
    %s196 = sphi 0, %s196
    %s198 = sphi 0, %s196
    %s199 = sphi 0, %s198
    %s213 = sphi 0, %s199
    %s219 = sphi 0, %s221
    %s222 = sphi 0, %s219
    %s223 = sphi 0, %s222
    %s239 = sphi 0, %s223
  $region4: #{cnn_model_forward.3} parent=0 // loop_header_branch
    %18 = sbr.rel (%p16) target = $region8
  $region5: #{cnn_model_forward.3} parent=0 // loop_body
    %s20 = ssub.s32 %s15, 1
    %s21 = ssub.s32 %s15, 2
    %s22 = sadd.s32 %s15, 1
    %s23 = ssub.s32 %s15, %s22
    %p24 = scmp.eq.s32.totalorder %s23, 0
    %s26 = sadd.s32 %s25, 1
    %s27 = scalar_select %p24, %s25, %s26
    %p30 = pneg %p24
    %p31 = scmp.eq.s32.totalorder %s15, 1
    %p32 = por %p30, %p31
    %p33 = scmp.ne.s32.totalorder %s25, %s28
    %p34 = scmp.eq.s32.totalorder %s15, 0
    %p35 = por %p33, %p34
    %p36 = scmp.ne.s32.totalorder %s25, %s28
    %p37 = scmp.eq.s32.totalorder %s20, 1
    %p38 = por %p36, %p37
    %p39 = scmp.ne.s32.totalorder %s28, %s29
    %p40 = scmp.eq.s32.totalorder %s20, 0
    %p41 = por %p39, %p40
    %p42 = scmp.ne.s32.totalorder %s28, %s29
    %p43 = scmp.eq.s32.totalorder %s21, 1
    %p44 = por %p42, %p43
    %p46 = scmp.ne.s32.totalorder %s29, %s45
    %p47 = scmp.eq.s32.totalorder %s21, 0
    %p48 = por %p46, %p47
    %s50 = sadd.s32 %s49, 1
    %p53 = scmp.eq.s32.totalorder %s15, 1
    %p54 = scmp.ne.s32.totalorder %s49, %s51
    %p55 = scmp.eq.s32.totalorder %s15, 0
    %p56 = por %p54, %p55
    %p57 = scmp.ne.s32.totalorder %s49, %s51
    %p58 = scmp.eq.s32.totalorder %s20, 1
    %p59 = por %p57, %p58
    %p60 = scmp.ne.s32.totalorder %s51, %s52
    %p61 = scmp.eq.s32.totalorder %s20, 0
    %p62 = por %p60, %p61
    %p63 = scmp.ne.s32.totalorder %s51, %s52
    %p64 = scmp.eq.s32.totalorder %s21, 1
    %p65 = por %p63, %p64
    %p67 = scmp.ne.s32.totalorder %s52, %s66
    %p68 = scmp.eq.s32.totalorder %s21, 0
    %p69 = por %p67, %p68
    %s71 = sadd.s32 %s70, 1
    %p74 = scmp.eq.s32.totalorder %s15, 1
    %p75 = scmp.ne.s32.totalorder %s70, %s72
    %p76 = scmp.eq.s32.totalorder %s15, 0
    %p77 = por %p75, %p76
    %p78 = scmp.ne.s32.totalorder %s70, %s72
    %p79 = scmp.eq.s32.totalorder %s20, 1
    %p80 = por %p78, %p79
    %p81 = scmp.ne.s32.totalorder %s72, %s73
    %p82 = scmp.eq.s32.totalorder %s20, 0
    %p83 = por %p81, %p82
    %p84 = scmp.ne.s32.totalorder %s72, %s73
    %p85 = scmp.eq.s32.totalorder %s21, 1
    %p86 = por %p84, %p85
    %p88 = scmp.ne.s32.totalorder %s73, %s87
    %p89 = scmp.eq.s32.totalorder %s21, 0
    %p90 = por %p88, %p89
    %s92 = sadd.s32 %s91, 1
    %p95 = scmp.eq.s32.totalorder %s15, 1
    %p96 = scmp.ne.s32.totalorder %s91, %s93
    %p97 = scmp.eq.s32.totalorder %s15, 0
    %p98 = por %p96, %p97
    %p99 = scmp.ne.s32.totalorder %s91, %s93
    %p100 = scmp.eq.s32.totalorder %s20, 1
    %p101 = por %p99, %p100
    %p102 = scmp.ne.s32.totalorder %s93, %s94
    %p103 = scmp.eq.s32.totalorder %s20, 0
    %p104 = por %p102, %p103
    %p105 = scmp.ne.s32.totalorder %s93, %s94
    %p106 = scmp.eq.s32.totalorder %s21, 1
    %p107 = por %p105, %p106
    %p109 = scmp.ne.s32.totalorder %s94, %s108
    %p110 = scmp.eq.s32.totalorder %s21, 0
    %p111 = por %p109, %p110
    %s113 = sadd.s32 %s112, 1
    %p116 = scmp.eq.s32.totalorder %s15, 1
    %p117 = scmp.ne.s32.totalorder %s112, %s114
    %p118 = scmp.eq.s32.totalorder %s15, 0
    %p119 = por %p117, %p118
    %p120 = scmp.ne.s32.totalorder %s112, %s114
    %p121 = scmp.eq.s32.totalorder %s20, 1
    %p122 = por %p120, %p121
    %p123 = scmp.ne.s32.totalorder %s114, %s115
    %p124 = scmp.eq.s32.totalorder %s20, 0
    %p125 = por %p123, %p124
    %p126 = scmp.ne.s32.totalorder %s114, %s115
    %p127 = scmp.eq.s32.totalorder %s21, 1
    %p128 = por %p126, %p127
    %p130 = scmp.ne.s32.totalorder %s115, %s129
    %p131 = scmp.eq.s32.totalorder %s21, 0
    %p132 = por %p130, %p131
    %s134 = sadd.s32 %s133, 1
    %p137 = scmp.eq.s32.totalorder %s15, 1
    %p138 = scmp.ne.s32.totalorder %s133, %s135
    %p139 = scmp.eq.s32.totalorder %s15, 0
    %p140 = por %p138, %p139
    %p141 = scmp.ne.s32.totalorder %s133, %s135
    %p142 = scmp.eq.s32.totalorder %s20, 1
    %p143 = por %p141, %p142
    %p144 = scmp.ne.s32.totalorder %s135, %s136
    %p145 = scmp.eq.s32.totalorder %s20, 0
    %p146 = por %p144, %p145
    %p147 = scmp.ne.s32.totalorder %s135, %s136
    %p148 = scmp.eq.s32.totalorder %s21, 1
    %p149 = por %p147, %p148
    %p151 = scmp.ne.s32.totalorder %s136, %s150
    %p152 = scmp.eq.s32.totalorder %s21, 0
    %p153 = por %p151, %p152
    %s155 = sadd.s32 %s154, 1
    %p158 = scmp.eq.s32.totalorder %s15, 1
    %p159 = scmp.ne.s32.totalorder %s154, %s156
    %p160 = scmp.eq.s32.totalorder %s15, 0
    %p161 = por %p159, %p160
    %p162 = scmp.ne.s32.totalorder %s154, %s156
    %p163 = scmp.eq.s32.totalorder %s20, 1
    %p164 = por %p162, %p163
    %p165 = scmp.ne.s32.totalorder %s156, %s157
    %p166 = scmp.eq.s32.totalorder %s20, 0
    %p167 = por %p165, %p166
    %p168 = scmp.ne.s32.totalorder %s156, %s157
    %p169 = scmp.eq.s32.totalorder %s21, 1
    %p170 = por %p168, %p169
    %p172 = scmp.ne.s32.totalorder %s157, %s171
    %p173 = scmp.eq.s32.totalorder %s21, 0
    %p174 = por %p172, %p173
    %s176 = sadd.s32 %s175, 1
    %p179 = scmp.eq.s32.totalorder %s15, 1
    %p180 = scmp.ne.s32.totalorder %s175, %s177
    %p181 = scmp.eq.s32.totalorder %s15, 0
    %p182 = por %p180, %p181
    %p183 = scmp.ne.s32.totalorder %s175, %s177
    %p184 = scmp.eq.s32.totalorder %s20, 1
    %p185 = por %p183, %p184
    %p186 = scmp.ne.s32.totalorder %s177, %s178
    %p187 = scmp.eq.s32.totalorder %s20, 0
    %p188 = por %p186, %p187
    %p189 = scmp.ne.s32.totalorder %s177, %s178
    %p190 = scmp.eq.s32.totalorder %s21, 1
    %p191 = por %p189, %p190
    %p193 = scmp.ne.s32.totalorder %s178, %s192
    %p194 = scmp.eq.s32.totalorder %s21, 0
    %p195 = por %p193, %p194
    %s197 = sadd.s32 %s196, 1
    %p200 = scmp.eq.s32.totalorder %s15, 1
    %p201 = scmp.ne.s32.totalorder %s196, %s198
    %p202 = scmp.eq.s32.totalorder %s15, 0
    %p203 = por %p201, %p202
    %p204 = scmp.ne.s32.totalorder %s196, %s198
    %p205 = scmp.eq.s32.totalorder %s20, 1
    %p206 = por %p204, %p205
    %p207 = scmp.ne.s32.totalorder %s198, %s199
    %p208 = scmp.eq.s32.totalorder %s20, 0
    %p209 = por %p207, %p208
    %p210 = scmp.ne.s32.totalorder %s198, %s199
    %p211 = scmp.eq.s32.totalorder %s21, 1
    %p212 = por %p210, %p211
    %p214 = scmp.ne.s32.totalorder %s199, %s213
    %p215 = scmp.eq.s32.totalorder %s21, 0
    %p216 = por %p214, %p215
    %s217 = ssub.s32 %s15, %s22
    %p218 = scmp.eq.s32.totalorder %s217, 0
    %s220 = sadd.s32 %s219, 1
    %s221 = scalar_select %p218, %s219, %s220
    %p224 = pneg %p218
    %p225 = scmp.eq.s32.totalorder %s15, 1
    %p226 = por %p224, %p225
    %p227 = scmp.ne.s32.totalorder %s219, %s222
    %p228 = scmp.eq.s32.totalorder %s15, 0
    %p229 = por %p227, %p228
    %p230 = scmp.ne.s32.totalorder %s219, %s222
    %p231 = scmp.eq.s32.totalorder %s20, 1
    %p232 = por %p230, %p231
    %p233 = scmp.ne.s32.totalorder %s222, %s223
    %p234 = scmp.eq.s32.totalorder %s20, 0
    %p235 = por %p233, %p234
    %p236 = scmp.ne.s32.totalorder %s222, %s223
    %p237 = scmp.eq.s32.totalorder %s21, 1
    %p238 = por %p236, %p237
    %p240 = scmp.ne.s32.totalorder %s223, %s239
    %p241 = scmp.eq.s32.totalorder %s21, 0
    %p242 = por %p240, %p241
    %p243 = scmp.le.s32.totalorder 1, %s15
    %p244 = scmp.lt.s32.totalorder %s15, 3
    %p245 = pnand %p243, %p244
    %p246 = pneg %p245
    // Predicated region
    $region9: #{cnn_model_forward.3} parent=5 // pred_check
      _
    $region10: #{cnn_model_forward.3} parent=5 // pred_check_branch
      %248 = sbr.rel (%p245) target = $region12
    $region11: #{cnn_model_forward.3} parent=5 // pred_region
      %s249 = ssub.s32 %s15, 1
      // Predicated region
      $region13: #{cnn_model_forward.3} parent=11 // pred_check
        %p250 = pneg %p62
      $region14: #{cnn_model_forward.3} parent=11 // pred_check_branch
        %252 = sbr.rel (%p250) target = $region16
      $region15: #{cnn_model_forward.3} parent=11 // pred_region
        _
      $region16: #{cnn_model_forward.3} parent=11 // pred_fallthru
        _
      // Predicated region
      $region17: #{cnn_model_forward.3} parent=11 // pred_check
        %p253 = pneg %p83
      $region18: #{cnn_model_forward.3} parent=11 // pred_check_branch
        %255 = sbr.rel (%p253) target = $region20
      $region19: #{cnn_model_forward.3} parent=11 // pred_region
        _
      $region20: #{cnn_model_forward.3} parent=11 // pred_fallthru
        _
      // Predicated region
      $region21: #{cnn_model_forward.3} parent=11 // pred_check
        %p256 = pneg %p104
      $region22: #{cnn_model_forward.3} parent=11 // pred_check_branch
        %258 = sbr.rel (%p256) target = $region24
      $region23: #{cnn_model_forward.3} parent=11 // pred_region
        _
      $region24: #{cnn_model_forward.3} parent=11 // pred_fallthru
        _
      // Predicated region
      $region25: #{cnn_model_forward.3} parent=11 // pred_check
        %p259 = pneg %p125
      $region26: #{cnn_model_forward.3} parent=11 // pred_check_branch
        %261 = sbr.rel (%p259) target = $region28
      $region27: #{cnn_model_forward.3} parent=11 // pred_region
        _
      $region28: #{cnn_model_forward.3} parent=11 // pred_fallthru
        _
      // Predicated region
      $region29: #{cnn_model_forward.3} parent=11 // pred_check
        %p262 = pneg %p146
      $region30: #{cnn_model_forward.3} parent=11 // pred_check_branch
        %264 = sbr.rel (%p262) target = $region32
      $region31: #{cnn_model_forward.3} parent=11 // pred_region
        _
      $region32: #{cnn_model_forward.3} parent=11 // pred_fallthru
        _
      // Predicated region
      $region33: #{cnn_model_forward.3} parent=11 // pred_check
        %p265 = pneg %p167
      $region34: #{cnn_model_forward.3} parent=11 // pred_check_branch
        %267 = sbr.rel (%p265) target = $region36
      $region35: #{cnn_model_forward.3} parent=11 // pred_region
        _
      $region36: #{cnn_model_forward.3} parent=11 // pred_fallthru
        _
      // Predicated region
      $region37: #{cnn_model_forward.3} parent=11 // pred_check
        %p268 = pneg %p188
      $region38: #{cnn_model_forward.3} parent=11 // pred_check_branch
        %270 = sbr.rel (%p268) target = $region40
      $region39: #{cnn_model_forward.3} parent=11 // pred_region
        _
      $region40: #{cnn_model_forward.3} parent=11 // pred_fallthru
        _
      // Predicated region
      $region41: #{cnn_model_forward.3} parent=11 // pred_check
        %p271 = pneg %p209
      $region42: #{cnn_model_forward.3} parent=11 // pred_check_branch
        %273 = sbr.rel (%p271) target = $region44
      $region43: #{cnn_model_forward.3} parent=11 // pred_region
        _
      $region44: #{cnn_model_forward.3} parent=11 // pred_fallthru
        _
    $region12: #{cnn_model_forward.3} parent=5 // pred_fallthru
      _
    %p274 = scmp.lt.s32.totalorder %s15, 2
    // Predicated region
    $region45: #{cnn_model_forward.3} parent=5 // pred_check
      %p275 = pneg %p274
    $region46: #{cnn_model_forward.3} parent=5 // pred_check_branch
      %277 = sbr.rel (%p275) target = $region48
    $region47: #{cnn_model_forward.3} parent=5 // pred_region
      // Predicated region
      $region49: #{cnn_model_forward.3} parent=47 // pred_check
        %p278 = pneg %p35
      $region50: #{cnn_model_forward.3} parent=47 // pred_check_branch
        %280 = sbr.rel (%p278) target = $region52
      $region51: #{cnn_model_forward.3} parent=47 // pred_region
        %s281 = smul.u32 4, %s15
        %p282 = scmp.lt.s32.totalorder %s281, 7
        %s283 = scalar_select %p282, %s281, 7
        %s284 = smul.addr %s283, 8
        %s285 = smul.addr %s284, 2
        %s286 = scalar_lea.vmem %s0, %s285
        %s287 = smul.u32 4, %s15
      $region52: #{cnn_model_forward.3} parent=47 // pred_fallthru
        _
    $region48: #{cnn_model_forward.3} parent=5 // pred_fallthru
      _
    %p288 = scmp.le.s32.totalorder 1, %s15
    %p289 = scmp.lt.s32.totalorder %s15, 3
    %p290 = pnand %p288, %p289
    %p291 = pneg %p290
    // Predicated region
    $region53: #{cnn_model_forward.3} parent=5 // pred_check
      _
    $region54: #{cnn_model_forward.3} parent=5 // pred_check_branch
      %293 = sbr.rel (%p290) target = $region56
    $region55: #{cnn_model_forward.3} parent=5 // pred_region
      %s294 = ssub.s32 %s15, 1
      %s295 = smul.u32 4, %s20
      %p296 = scmp.lt.s32.totalorder %s295, 7
      %s297 = scalar_select %p296, %s295, 7
      %s298 = smul.addr %s297, 8
      %s299 = smul.addr %s298, 2
      %s300 = scalar_lea.vmem %s0, %s299
      %p301 = pneg %p41
      %p302 = pneg %p38
      %p303 = pneg %p62
      %p304 = pneg %p59
      %p305 = pneg %p83
      %p306 = pneg %p80
      %p307 = pneg %p104
      %p308 = pneg %p101
      %p309 = pneg %p125
      %p310 = pneg %p122
      %p311 = pneg %p146
      %p312 = pneg %p143
      %p313 = pneg %p167
      %p314 = pneg %p164
      %p315 = pneg %p188
      %p316 = pneg %p185
      %p317 = pneg %p209
      %p318 = pneg %p206
      %p319 = pneg %p235
      %p320 = pneg %p232
      %s321 = smul.u32 4, %s20
      %p322 = scmp.lt.s32.totalorder %s321, 7
      %s323 = scalar_select %p322, %s321, 7
      %s324 = smul.addr %s323, 4
      %s325 = scalar_lea.vmem %s9, %s324
      %s326 = smul.u32 4, %s20
      %p327 = scmp.lt.s32.totalorder %s326, 7
      %s328 = scalar_select %p327, %s326, 7
      %s329 = smul.addr %s328, 8
      %s330 = smul.addr %s329, 2
      %s331 = scalar_lea.vmem %s0, %s330
      %s332 = smul.u32 4, %s20
      %s333 = smul.u32 4, %s20
      %p334 = scmp.lt.s32.totalorder %s333, 7
      %s335 = scalar_select %p334, %s333, 7
      %s336 = smul.addr %s335, 4
      %s337 = scalar_lea.vmem %s9, %s336
      %s338 = smul.u32 4, %s20
      %v340 = vld [vmem:[%s331] sm:$0x3]
      %v341 = vld [vmem:[%s331 + $0x4] sm:$0x3]
      %v342 = vld [vmem:[%s331 + $0x8] sm:$0x3]
      %v343 = vld [vmem:[%s331 + $0x10] sm:$0x3]
      %v344 = vld [vmem:[%s331 + $0x14] sm:$0x3]
      %v345 = vld [vmem:[%s331 + $0x18] sm:$0x3]
      %v346 = vld [vmem:[%s331 + $0x20] sm:$0x3]
      %v347 = vld [vmem:[%s331 + $0x24] sm:$0x3]
      %v348 = vld [vmem:[%s331 + $0x28] sm:$0x3]
      %v349 = vld [vmem:[%s331 + $0x30] sm:$0x3]
      %v350 = vld [vmem:[%s331 + $0x34] sm:$0x3]
      %v351 = vld [vmem:[%s331 + $0x38] sm:$0x3]
      %s352 = scalar_lea.vmem %s331, 2
      %v353 = vld [vmem:[%s352] sm:$0x3]
      %v354 = vld [vmem:[%s352 + $0x4] sm:$0x3]
      %v355 = vld [vmem:[%s352 + $0x8] sm:$0x3]
      %v356 = vld [vmem:[%s352 + $0x10] sm:$0x3]
      %v357 = vld [vmem:[%s352 + $0x14] sm:$0x3]
      %v358 = vld [vmem:[%s352 + $0x18] sm:$0x3]
      %v359 = vld [vmem:[%s352 + $0x20] sm:$0x3]
      %v360 = vld [vmem:[%s352 + $0x24] sm:$0x3]
      %v361 = vld [vmem:[%s352 + $0x28] sm:$0x3]
      %v362 = vld [vmem:[%s352 + $0x30] sm:$0x3]
      %v363 = vld [vmem:[%s352 + $0x34] sm:$0x3]
      %v364 = vld [vmem:[%s352 + $0x38] sm:$0x3]
      %s365 = scalar_lea.vmem %s331, 4
      %v366 = vld [vmem:[%s365] sm:$0x3]
      %v367 = vld [vmem:[%s365 + $0x4] sm:$0x3]
      %v368 = vld [vmem:[%s365 + $0x8] sm:$0x3]
      %v369 = vld [vmem:[%s365 + $0x10] sm:$0x3]
      %v370 = vld [vmem:[%s365 + $0x14] sm:$0x3]
      %v371 = vld [vmem:[%s365 + $0x18] sm:$0x3]
      %v372 = vld [vmem:[%s365 + $0x20] sm:$0x3]
      %v373 = vld [vmem:[%s365 + $0x24] sm:$0x3]
      %v374 = vld [vmem:[%s365 + $0x28] sm:$0x3]
      %v375 = vld [vmem:[%s365 + $0x30] sm:$0x3]
      %v376 = vld [vmem:[%s365 + $0x34] sm:$0x3]
      %v377 = vld [vmem:[%s365 + $0x38] sm:$0x3]
      %s378 = scalar_lea.vmem %s331, 6
      %v379 = vld [vmem:[%s378] sm:$0x3]
      %v380 = vld [vmem:[%s378 + $0x4] sm:$0x3]
      %v381 = vld [vmem:[%s378 + $0x8] sm:$0x3]
      %v382 = vld [vmem:[%s378 + $0x10] sm:$0x3]
      %v383 = vld [vmem:[%s378 + $0x14] sm:$0x3]
      %v384 = vld [vmem:[%s378 + $0x18] sm:$0x3]
      %v385 = vld [vmem:[%s378 + $0x20] sm:$0x3]
      %v386 = vld [vmem:[%s378 + $0x24] sm:$0x3]
      %v387 = vld [vmem:[%s378 + $0x28] sm:$0x3]
      %v388 = vld [vmem:[%s378 + $0x30] sm:$0x3]
      %v389 = vld [vmem:[%s378 + $0x34] sm:$0x3]
      %v390 = vld [vmem:[%s378 + $0x38] sm:$0x3]
      %392 = vst [vmem:[#allocation1] ss:$4 sm:$0xff] %v340
      %v393 = vld.sshfl [vmem:[#allocation1] sm:$0xff pattern:$0x73625140]
      %s395 = scalar_lea.vmem [#allocation1], 32
      %396 = vst [vmem:[%s395] ss:$4 sm:$0xff] %v341
      %v397 = vld.sshfl [vmem:[#allocation1 + $0x20] sm:$0xff pattern:$0x73625140]
      %399 = vst [vmem:[#allocation1] ss:$4 sm:$0xff] %v342
      %v400 = vld.sshfl [vmem:[#allocation1] sm:$0xff pattern:$0x73625140]
      %402 = vst [vmem:[%s395] ss:$4 sm:$0xff] %v343
      %v403 = vld.sshfl [vmem:[#allocation1 + $0x20] sm:$0xff pattern:$0x73625140]
      %405 = vst [vmem:[#allocation1] ss:$4 sm:$0xff] %v344
      %v406 = vld.sshfl [vmem:[#allocation1] sm:$0xff pattern:$0x73625140]
      %408 = vst [vmem:[%s395] ss:$4 sm:$0xff] %v345
      %v409 = vld.sshfl [vmem:[#allocation1 + $0x20] sm:$0xff pattern:$0x73625140]
      %411 = vst [vmem:[#allocation1] ss:$4 sm:$0xff] %v346
      %v412 = vld.sshfl [vmem:[#allocation1] sm:$0xff pattern:$0x73625140]
      %414 = vst [vmem:[%s395] ss:$4 sm:$0xff] %v347
      %v415 = vld.sshfl [vmem:[#allocation1 + $0x20] sm:$0xff pattern:$0x73625140]
      %417 = vst [vmem:[#allocation1] ss:$4 sm:$0xff] %v348
      %v418 = vld.sshfl [vmem:[#allocation1] sm:$0xff pattern:$0x73625140]
      %420 = vst [vmem:[%s395] ss:$4 sm:$0xff] %v349
      %v421 = vld.sshfl [vmem:[#allocation1 + $0x20] sm:$0xff pattern:$0x73625140]
      %423 = vst [vmem:[#allocation1] ss:$4 sm:$0xff] %v350
      %v424 = vld.sshfl [vmem:[#allocation1] sm:$0xff pattern:$0x73625140]
      %426 = vst [vmem:[%s395] ss:$4 sm:$0xff] %v351
      %v427 = vld.sshfl [vmem:[#allocation1 + $0x20] sm:$0xff pattern:$0x73625140]
      %v428 = vshrl.u32 %v393, 16
      %v430 = vshll.u32 %v393, 16
      %v432 = vrot.slane %v430, 1
      %v433 = vor.u32 %v428, %v432
      %v434 = vshrl.u32 %v397, 16
      %v436 = vshll.u32 %v397, 16
      %v438 = vrot.slane %v436, 1
      %v439 = vor.u32 %v434, %v438
      %v440 = vshrl.u32 %v400, 16
      %v442 = vshll.u32 %v400, 16
      %v444 = vrot.slane %v442, 1
      %v445 = vor.u32 %v440, %v444
      %v446 = vshrl.u32 %v403, 16
      %v448 = vshll.u32 %v403, 16
      %v450 = vrot.slane %v448, 1
      %v451 = vor.u32 %v446, %v450
      %v452 = vshrl.u32 %v406, 16
      %v454 = vshll.u32 %v406, 16
      %v456 = vrot.slane %v454, 1
      %v457 = vor.u32 %v452, %v456
      %v458 = vshrl.u32 %v409, 16
      %v460 = vshll.u32 %v409, 16
      %v462 = vrot.slane %v460, 1
      %v463 = vor.u32 %v458, %v462
      %v464 = vshrl.u32 %v412, 16
      %v466 = vshll.u32 %v412, 16
      %v468 = vrot.slane %v466, 1
      %v469 = vor.u32 %v464, %v468
      %v470 = vshrl.u32 %v415, 16
      %v472 = vshll.u32 %v415, 16
      %v474 = vrot.slane %v472, 1
      %v475 = vor.u32 %v470, %v474
      %v476 = vshrl.u32 %v418, 16
      %v478 = vshll.u32 %v418, 16
      %v480 = vrot.slane %v478, 1
      %v481 = vor.u32 %v476, %v480
      %v482 = vshrl.u32 %v421, 16
      %v484 = vshll.u32 %v421, 16
      %v486 = vrot.slane %v484, 1
      %v487 = vor.u32 %v482, %v486
      %v488 = vshrl.u32 %v424, 16
      %v490 = vshll.u32 %v424, 16
      %v492 = vrot.slane %v490, 1
      %v493 = vor.u32 %v488, %v492
      %v494 = vshrl.u32 %v427, 16
      %v496 = vshll.u32 %v427, 16
      %v498 = vrot.slane %v496, 1
      %v499 = vor.u32 %v494, %v498
      %500 = vrot.lane.b32.xlu0 %v433, 64
      %v501 = vpop.permute.xlu0 %500
      %502 = vrot.lane.b32.xlu0 %v439, 64
      %v503 = vpop.permute.xlu0 %502
      %504 = vrot.lane.b32.xlu0 %v445, 64
      %v505 = vpop.permute.xlu0 %504
      %506 = vrot.lane.b32.xlu0 %v451, 64
      %v507 = vpop.permute.xlu0 %506
      %508 = vrot.lane.b32.xlu0 %v457, 64
      %v509 = vpop.permute.xlu0 %508
      %510 = vrot.lane.b32.xlu0 %v463, 64
      %v511 = vpop.permute.xlu0 %510
      %512 = vrot.lane.b32.xlu0 %v469, 64
      %v513 = vpop.permute.xlu0 %512
      %514 = vrot.lane.b32.xlu0 %v475, 64
      %v515 = vpop.permute.xlu0 %514
      %516 = vrot.lane.b32.xlu0 %v481, 64
      %v517 = vpop.permute.xlu0 %516
      %518 = vrot.lane.b32.xlu0 %v487, 64
      %v519 = vpop.permute.xlu0 %518
      %520 = vrot.lane.b32.xlu0 %v493, 64
      %v521 = vpop.permute.xlu0 %520
      %522 = vrot.lane.b32.xlu0 %v499, 64
      %v523 = vpop.permute.xlu0 %522
      %525 = vst [vmem:[#allocation1] ss:$4 sm:$0xff] %v353
      %v526 = vld.sshfl [vmem:[#allocation1] sm:$0xff pattern:$0x73625140]
      %s528 = scalar_lea.vmem [#allocation1], 32
      %529 = vst [vmem:[%s528] ss:$4 sm:$0xff] %v354
      %v530 = vld.sshfl [vmem:[#allocation1 + $0x20] sm:$0xff pattern:$0x73625140]
      %532 = vst [vmem:[#allocation1] ss:$4 sm:$0xff] %v355
      %v533 = vld.sshfl [vmem:[#allocation1] sm:$0xff pattern:$0x73625140]
      %535 = vst [vmem:[%s528] ss:$4 sm:$0xff] %v356
      %v536 = vld.sshfl [vmem:[#allocation1 + $0x20] sm:$0xff pattern:$0x73625140]
      %538 = vst [vmem:[#allocation1] ss:$4 sm:$0xff] %v357
      %v539 = vld.sshfl [vmem:[#allocation1] sm:$0xff pattern:$0x73625140]
      %541 = vst [vmem:[%s528] ss:$4 sm:$0xff] %v358
      %v542 = vld.sshfl [vmem:[#allocation1 + $0x20] sm:$0xff pattern:$0x73625140]
      %544 = vst [vmem:[#allocation1] ss:$4 sm:$0xff] %v359
      %v545 = vld.sshfl [vmem:[#allocation1] sm:$0xff pattern:$0x73625140]
      %547 = vst [vmem:[%s528] ss:$4 sm:$0xff] %v360
      %v548 = vld.sshfl [vmem:[#allocation1 + $0x20] sm:$0xff pattern:$0x73625140]
      %550 = vst [vmem:[#allocation1] ss:$4 sm:$0xff] %v361
      %v551 = vld.sshfl [vmem:[#allocation1] sm:$0xff pattern:$0x73625140]
      %553 = vst [vmem:[%s528] ss:$4 sm:$0xff] %v362
      %v554 = vld.sshfl [vmem:[#allocation1 + $0x20] sm:$0xff pattern:$0x73625140]
      %556 = vst [vmem:[#allocation1] ss:$4 sm:$0xff] %v363
      %v557 = vld.sshfl [vmem:[#allocation1] sm:$0xff pattern:$0x73625140]
      %559 = vst [vmem:[%s528] ss:$4 sm:$0xff] %v364
      %v560 = vld.sshfl [vmem:[#allocation1 + $0x20] sm:$0xff pattern:$0x73625140]
      %v561 = vshrl.u32 %v526, 16
      %v563 = vshll.u32 %v526, 16
      %v565 = vrot.slane %v563, 1
      %v566 = vor.u32 %v561, %v565
      %v567 = vshrl.u32 %v530, 16
      %v569 = vshll.u32 %v530, 16
      %v571 = vrot.slane %v569, 1
      %v572 = vor.u32 %v567, %v571
      %v573 = vshrl.u32 %v533, 16
      %v575 = vshll.u32 %v533, 16
      %v577 = vrot.slane %v575, 1
      %v578 = vor.u32 %v573, %v577
      %v579 = vshrl.u32 %v536, 16
      %v581 = vshll.u32 %v536, 16
      %v583 = vrot.slane %v581, 1
      %v584 = vor.u32 %v579, %v583
      %v585 = vshrl.u32 %v539, 16
      %v587 = vshll.u32 %v539, 16
      %v589 = vrot.slane %v587, 1
      %v590 = vor.u32 %v585, %v589
      %v591 = vshrl.u32 %v542, 16
      %v593 = vshll.u32 %v542, 16
      %v595 = vrot.slane %v593, 1
      %v596 = vor.u32 %v591, %v595
      %v597 = vshrl.u32 %v545, 16
      %v599 = vshll.u32 %v545, 16
      %v601 = vrot.slane %v599, 1
      %v602 = vor.u32 %v597, %v601
      %v603 = vshrl.u32 %v548, 16
      %v605 = vshll.u32 %v548, 16
      %v607 = vrot.slane %v605, 1
      %v608 = vor.u32 %v603, %v607
      %v609 = vshrl.u32 %v551, 16
      %v611 = vshll.u32 %v551, 16
      %v613 = vrot.slane %v611, 1
      %v614 = vor.u32 %v609, %v613
      %v615 = vshrl.u32 %v554, 16
      %v617 = vshll.u32 %v554, 16
      %v619 = vrot.slane %v617, 1
      %v620 = vor.u32 %v615, %v619
      %v621 = vshrl.u32 %v557, 16
      %v623 = vshll.u32 %v557, 16
      %v625 = vrot.slane %v623, 1
      %v626 = vor.u32 %v621, %v625
      %v627 = vshrl.u32 %v560, 16
      %v629 = vshll.u32 %v560, 16
      %v631 = vrot.slane %v629, 1
      %v632 = vor.u32 %v627, %v631
      %633 = vrot.lane.b32.xlu0 %v566, 64
      %v634 = vpop.permute.xlu0 %633
      %635 = vrot.lane.b32.xlu0 %v572, 64
      %v636 = vpop.permute.xlu0 %635
      %637 = vrot.lane.b32.xlu0 %v578, 64
      %v638 = vpop.permute.xlu0 %637
      %639 = vrot.lane.b32.xlu0 %v584, 64
      %v640 = vpop.permute.xlu0 %639
      %641 = vrot.lane.b32.xlu0 %v590, 64
      %v642 = vpop.permute.xlu0 %641
      %643 = vrot.lane.b32.xlu0 %v596, 64
      %v644 = vpop.permute.xlu0 %643
      %645 = vrot.lane.b32.xlu0 %v602, 64
      %v646 = vpop.permute.xlu0 %645
      %647 = vrot.lane.b32.xlu0 %v608, 64
      %v648 = vpop.permute.xlu0 %647
      %649 = vrot.lane.b32.xlu0 %v614, 64
      %v650 = vpop.permute.xlu0 %649
      %651 = vrot.lane.b32.xlu0 %v620, 64
      %v652 = vpop.permute.xlu0 %651
      %653 = vrot.lane.b32.xlu0 %v626, 64
      %v654 = vpop.permute.xlu0 %653
      %655 = vrot.lane.b32.xlu0 %v632, 64
      %v656 = vpop.permute.xlu0 %655
      %658 = vst [vmem:[#allocation1] ss:$4 sm:$0xff] %v366
      %v659 = vld.sshfl [vmem:[#allocation1] sm:$0xff pattern:$0x73625140]
      %s661 = scalar_lea.vmem [#allocation1], 32
      %662 = vst [vmem:[%s661] ss:$4 sm:$0xff] %v367
      %v663 = vld.sshfl [vmem:[#allocation1 + $0x20] sm:$0xff pattern:$0x73625140]
      %665 = vst [vmem:[#allocation1] ss:$4 sm:$0xff] %v368
      %v666 = vld.sshfl [vmem:[#allocation1] sm:$0xff pattern:$0x73625140]
      %668 = vst [vmem:[%s661] ss:$4 sm:$0xff] %v369
      %v669 = vld.sshfl [vmem:[#allocation1 + $0x20] sm:$0xff pattern:$0x73625140]
      %671 = vst [vmem:[#allocation1] ss:$4 sm:$0xff] %v370
      %v672 = vld.sshfl [vmem:[#allocation1] sm:$0xff pattern:$0x73625140]
      %674 = vst [vmem:[%s661] ss:$4 sm:$0xff] %v371
      %v675 = vld.sshfl [vmem:[#allocation1 + $0x20] sm:$0xff pattern:$0x73625140]
      %677 = vst [vmem:[#allocation1] ss:$4 sm:$0xff] %v372
      %v678 = vld.sshfl [vmem:[#allocation1] sm:$0xff pattern:$0x73625140]
      %680 = vst [vmem:[%s661] ss:$4 sm:$0xff] %v373
      %v681 = vld.sshfl [vmem:[#allocation1 + $0x20] sm:$0xff pattern:$0x73625140]
      %683 = vst [vmem:[#allocation1] ss:$4 sm:$0xff] %v374
      %v684 = vld.sshfl [vmem:[#allocation1] sm:$0xff pattern:$0x73625140]
      %686 = vst [vmem:[%s661] ss:$4 sm:$0xff] %v375
      %v687 = vld.sshfl [vmem:[#allocation1 + $0x20] sm:$0xff pattern:$0x73625140]
      %689 = vst [vmem:[#allocation1] ss:$4 sm:$0xff] %v376
      %v690 = vld.sshfl [vmem:[#allocation1] sm:$0xff pattern:$0x73625140]
      %692 = vst [vmem:[%s661] ss:$4 sm:$0xff] %v377
      %v693 = vld.sshfl [vmem:[#allocation1 + $0x20] sm:$0xff pattern:$0x73625140]
      %v694 = vshrl.u32 %v659, 16
      %v696 = vshll.u32 %v659, 16
      %v698 = vrot.slane %v696, 1
      %v699 = vor.u32 %v694, %v698
      %v700 = vshrl.u32 %v663, 16
      %v702 = vshll.u32 %v663, 16
      %v704 = vrot.slane %v702, 1
      %v705 = vor.u32 %v700, %v704
      %v706 = vshrl.u32 %v666, 16
      %v708 = vshll.u32 %v666, 16
      %v710 = vrot.slane %v708, 1
      %v711 = vor.u32 %v706, %v710
      %v712 = vshrl.u32 %v669, 16
      %v714 = vshll.u32 %v669, 16
      %v716 = vrot.slane %v714, 1
      %v717 = vor.u32 %v712, %v716
      %v718 = vshrl.u32 %v672, 16
      %v720 = vshll.u32 %v672, 16
      %v722 = vrot.slane %v720, 1
      %v723 = vor.u32 %v718, %v722
      %v724 = vshrl.u32 %v675, 16
      %v726 = vshll.u32 %v675, 16
      %v728 = vrot.slane %v726, 1
      %v729 = vor.u32 %v724, %v728
      %v730 = vshrl.u32 %v678, 16
      %v732 = vshll.u32 %v678, 16
      %v734 = vrot.slane %v732, 1
      %v735 = vor.u32 %v730, %v734
      %v736 = vshrl.u32 %v681, 16
      %v738 = vshll.u32 %v681, 16
      %v740 = vrot.slane %v738, 1
      %v741 = vor.u32 %v736, %v740
      %v742 = vshrl.u32 %v684, 16
      %v744 = vshll.u32 %v684, 16
      %v746 = vrot.slane %v744, 1
      %v747 = vor.u32 %v742, %v746
      %v748 = vshrl.u32 %v687, 16
      %v750 = vshll.u32 %v687, 16
      %v752 = vrot.slane %v750, 1
      %v753 = vor.u32 %v748, %v752
      %v754 = vshrl.u32 %v690, 16
      %v756 = vshll.u32 %v690, 16
      %v758 = vrot.slane %v756, 1
      %v759 = vor.u32 %v754, %v758
      %v760 = vshrl.u32 %v693, 16
      %v762 = vshll.u32 %v693, 16
      %v764 = vrot.slane %v762, 1
      %v765 = vor.u32 %v760, %v764
      %766 = vrot.lane.b32.xlu0 %v699, 64
      %v767 = vpop.permute.xlu0 %766
      %768 = vrot.lane.b32.xlu0 %v705, 64
      %v769 = vpop.permute.xlu0 %768
      %770 = vrot.lane.b32.xlu0 %v711, 64
      %v771 = vpop.permute.xlu0 %770
      %772 = vrot.lane.b32.xlu0 %v717, 64
      %v773 = vpop.permute.xlu0 %772
      %774 = vrot.lane.b32.xlu0 %v723, 64
      %v775 = vpop.permute.xlu0 %774
      %776 = vrot.lane.b32.xlu0 %v729, 64
      %v777 = vpop.permute.xlu0 %776
      %778 = vrot.lane.b32.xlu0 %v735, 64
      %v779 = vpop.permute.xlu0 %778
      %780 = vrot.lane.b32.xlu0 %v741, 64
      %v781 = vpop.permute.xlu0 %780
      %782 = vrot.lane.b32.xlu0 %v747, 64
      %v783 = vpop.permute.xlu0 %782
      %784 = vrot.lane.b32.xlu0 %v753, 64
      %v785 = vpop.permute.xlu0 %784
      %786 = vrot.lane.b32.xlu0 %v759, 64
      %v787 = vpop.permute.xlu0 %786
      %788 = vrot.lane.b32.xlu0 %v765, 64
      %v789 = vpop.permute.xlu0 %788
      %791 = vst [vmem:[#allocation1] ss:$4 sm:$0xff] %v379
      %v792 = vld.sshfl [vmem:[#allocation1] sm:$0xff pattern:$0x73625140]
      %s794 = scalar_lea.vmem [#allocation1], 32
      %795 = vst [vmem:[%s794] ss:$4 sm:$0xff] %v380
      %v796 = vld.sshfl [vmem:[#allocation1 + $0x20] sm:$0xff pattern:$0x73625140]
      %798 = vst [vmem:[#allocation1] ss:$4 sm:$0xff] %v381
      %v799 = vld.sshfl [vmem:[#allocation1] sm:$0xff pattern:$0x73625140]
      %801 = vst [vmem:[%s794] ss:$4 sm:$0xff] %v382
      %v802 = vld.sshfl [vmem:[#allocation1 + $0x20] sm:$0xff pattern:$0x73625140]
      %804 = vst [vmem:[#allocation1] ss:$4 sm:$0xff] %v383
      %v805 = vld.sshfl [vmem:[#allocation1] sm:$0xff pattern:$0x73625140]
      %807 = vst [vmem:[%s794] ss:$4 sm:$0xff] %v384
      %v808 = vld.sshfl [vmem:[#allocation1 + $0x20] sm:$0xff pattern:$0x73625140]
      %810 = vst [vmem:[#allocation1] ss:$4 sm:$0xff] %v385
      %v811 = vld.sshfl [vmem:[#allocation1] sm:$0xff pattern:$0x73625140]
      %813 = vst [vmem:[%s794] ss:$4 sm:$0xff] %v386
      %v814 = vld.sshfl [vmem:[#allocation1 + $0x20] sm:$0xff pattern:$0x73625140]
      %816 = vst [vmem:[#allocation1] ss:$4 sm:$0xff] %v387
      %v817 = vld.sshfl [vmem:[#allocation1] sm:$0xff pattern:$0x73625140]
      %819 = vst [vmem:[%s794] ss:$4 sm:$0xff] %v388
      %v820 = vld.sshfl [vmem:[#allocation1 + $0x20] sm:$0xff pattern:$0x73625140]
      %822 = vst [vmem:[#allocation1] ss:$4 sm:$0xff] %v389
      %v823 = vld.sshfl [vmem:[#allocation1] sm:$0xff pattern:$0x73625140]
      %825 = vst [vmem:[%s794] ss:$4 sm:$0xff] %v390
      %v826 = vld.sshfl [vmem:[#allocation1 + $0x20] sm:$0xff pattern:$0x73625140]
      %v827 = vshrl.u32 %v792, 16
      %v829 = vshll.u32 %v792, 16
      %v831 = vrot.slane %v829, 1
      %v832 = vor.u32 %v827, %v831
      %v833 = vshrl.u32 %v796, 16
      %v835 = vshll.u32 %v796, 16
      %v837 = vrot.slane %v835, 1
      %v838 = vor.u32 %v833, %v837
      %v839 = vshrl.u32 %v799, 16
      %v841 = vshll.u32 %v799, 16
      %v843 = vrot.slane %v841, 1
      %v844 = vor.u32 %v839, %v843
      %v845 = vshrl.u32 %v802, 16
      %v847 = vshll.u32 %v802, 16
      %v849 = vrot.slane %v847, 1
      %v850 = vor.u32 %v845, %v849
      %v851 = vshrl.u32 %v805, 16
      %v853 = vshll.u32 %v805, 16
      %v855 = vrot.slane %v853, 1
      %v856 = vor.u32 %v851, %v855
      %v857 = vshrl.u32 %v808, 16
      %v859 = vshll.u32 %v808, 16
      %v861 = vrot.slane %v859, 1
      %v862 = vor.u32 %v857, %v861
      %v863 = vshrl.u32 %v811, 16
      %v865 = vshll.u32 %v811, 16
      %v867 = vrot.slane %v865, 1
      %v868 = vor.u32 %v863, %v867
      %v869 = vshrl.u32 %v814, 16
      %v871 = vshll.u32 %v814, 16
      %v873 = vrot.slane %v871, 1
      %v874 = vor.u32 %v869, %v873
      %v875 = vshrl.u32 %v817, 16
      %v877 = vshll.u32 %v817, 16
      %v879 = vrot.slane %v877, 1
      %v880 = vor.u32 %v875, %v879
      %v881 = vshrl.u32 %v820, 16
      %v883 = vshll.u32 %v820, 16
      %v885 = vrot.slane %v883, 1
      %v886 = vor.u32 %v881, %v885
      %v887 = vshrl.u32 %v823, 16
      %v889 = vshll.u32 %v823, 16
      %v891 = vrot.slane %v889, 1
      %v892 = vor.u32 %v887, %v891
      %v893 = vshrl.u32 %v826, 16
      %v895 = vshll.u32 %v826, 16
      %v897 = vrot.slane %v895, 1
      %v898 = vor.u32 %v893, %v897
      %899 = vrot.lane.b32.xlu0 %v832, 64
      %v900 = vpop.permute.xlu0 %899
      %901 = vrot.lane.b32.xlu0 %v838, 64
      %v902 = vpop.permute.xlu0 %901
      %903 = vrot.lane.b32.xlu0 %v844, 64
      %v904 = vpop.permute.xlu0 %903
      %905 = vrot.lane.b32.xlu0 %v850, 64
      %v906 = vpop.permute.xlu0 %905
      %907 = vrot.lane.b32.xlu0 %v856, 64
      %v908 = vpop.permute.xlu0 %907
      %909 = vrot.lane.b32.xlu0 %v862, 64
      %v910 = vpop.permute.xlu0 %909
      %911 = vrot.lane.b32.xlu0 %v868, 64
      %v912 = vpop.permute.xlu0 %911
      %913 = vrot.lane.b32.xlu0 %v874, 64
      %v914 = vpop.permute.xlu0 %913
      %915 = vrot.lane.b32.xlu0 %v880, 64
      %v916 = vpop.permute.xlu0 %915
      %917 = vrot.lane.b32.xlu0 %v886, 64
      %v918 = vpop.permute.xlu0 %917
      %919 = vrot.lane.b32.xlu0 %v892, 64
      %v920 = vpop.permute.xlu0 %919
      %921 = vrot.lane.b32.xlu0 %v898, 64
      %v922 = vpop.permute.xlu0 %921
      %vm923 = vcmask 523264
      %v925 = vsel %vm923, %v340, %v501
      %v927 = vsel %vm923, %v341, %v503
      %v929 = vsel %vm923, %v342, %v505
      %v931 = vsel %vm923, %v343, %v507
      %v933 = vsel %vm923, %v344, %v509
      %v935 = vsel %vm923, %v345, %v511
      %v937 = vsel %vm923, %v346, %v513
      %v939 = vsel %vm923, %v347, %v515
      %v941 = vsel %vm923, %v348, %v517
      %v943 = vsel %vm923, %v349, %v519
      %v945 = vsel %vm923, %v350, %v521
      %v947 = vsel %vm923, %v351, %v523
      %v949 = vsel %vm923, %v353, %v634
      %v951 = vsel %vm923, %v354, %v636
      %v953 = vsel %vm923, %v355, %v638
      %v955 = vsel %vm923, %v356, %v640
      %v957 = vsel %vm923, %v357, %v642
      %v959 = vsel %vm923, %v358, %v644
      %v961 = vsel %vm923, %v359, %v646
      %v963 = vsel %vm923, %v360, %v648
      %v965 = vsel %vm923, %v361, %v650
      %v967 = vsel %vm923, %v362, %v652
      %v969 = vsel %vm923, %v363, %v654
      %v971 = vsel %vm923, %v364, %v656
      %v973 = vsel %vm923, %v366, %v767
      %v975 = vsel %vm923, %v367, %v769
      %v977 = vsel %vm923, %v368, %v771
      %v979 = vsel %vm923, %v369, %v773
      %v981 = vsel %vm923, %v370, %v775
      %v983 = vsel %vm923, %v371, %v777
      %v985 = vsel %vm923, %v372, %v779
      %v987 = vsel %vm923, %v373, %v781
      %v989 = vsel %vm923, %v374, %v783
      %v991 = vsel %vm923, %v375, %v785
      %v993 = vsel %vm923, %v376, %v787
      %v995 = vsel %vm923, %v377, %v789
      %v997 = vsel %vm923, %v379, %v900
      %v999 = vsel %vm923, %v380, %v902
      %v1001 = vsel %vm923, %v381, %v904
      %v1003 = vsel %vm923, %v382, %v906
      %v1005 = vsel %vm923, %v383, %v908
      %v1007 = vsel %vm923, %v384, %v910
      %v1009 = vsel %vm923, %v385, %v912
      %v1011 = vsel %vm923, %v386, %v914
      %v1013 = vsel %vm923, %v387, %v916
      %v1015 = vsel %vm923, %v388, %v918
      %v1017 = vsel %vm923, %v389, %v920
      %v1019 = vsel %vm923, %v390, %v922
      %v1056 = vrot.slane %v949, 7
      %v1057 = vrot.slane %v973, 6
      %v1058 = vrot.slane %v997, 5
      %v1059 = vrot.slane %v951, 7
      %v1060 = vrot.slane %v975, 6
      %v1061 = vrot.slane %v999, 5
      %v1062 = vrot.slane %v953, 7
      %v1063 = vrot.slane %v977, 6
      %v1064 = vrot.slane %v1001, 5
      %v1065 = vrot.slane %v955, 7
      %v1066 = vrot.slane %v979, 6
      %v1067 = vrot.slane %v1003, 5
      %v1068 = vrot.slane %v957, 7
      %v1069 = vrot.slane %v981, 6
      %v1070 = vrot.slane %v1005, 5
      %v1071 = vrot.slane %v959, 7
      %v1072 = vrot.slane %v983, 6
      %v1073 = vrot.slane %v1007, 5
      %v1074 = vrot.slane %v961, 7
      %v1075 = vrot.slane %v985, 6
      %v1076 = vrot.slane %v1009, 5
      %v1077 = vrot.slane %v963, 7
      %v1078 = vrot.slane %v987, 6
      %v1079 = vrot.slane %v1011, 5
      %v1080 = vrot.slane %v965, 7
      %v1081 = vrot.slane %v989, 6
      %v1082 = vrot.slane %v1013, 5
      %v1083 = vrot.slane %v967, 7
      %v1084 = vrot.slane %v991, 6
      %v1085 = vrot.slane %v1015, 5
      %v1086 = vrot.slane %v969, 7
      %v1087 = vrot.slane %v993, 6
      %v1088 = vrot.slane %v1017, 5
      %v1089 = vrot.slane %v971, 7
      %v1090 = vrot.slane %v995, 6
      %v1091 = vrot.slane %v1019, 5
      %vm1092 = vcmask 1040384
      %v1094 = vsel %vm1092, %v925, %v1056
      %vm1095 = vcmask 1042434
      %v1098 = vsel %vm1095, %v1057, %v1058
      %vm1099 = vcmask 1041408
      %v1100 = vsel %vm1099, %v1094, %v1098
      %vm1102 = vcmask 1041409
      %v1103 = vsel %vm1102, %v925, %v1056
      %vm1104 = vcmask 1043459
      %v1105 = vsel %vm1104, %v1057, %v1058
      %vm1106 = vcmask 1042433
      %v1107 = vsel %vm1106, %v1103, %v1105
      %v1109 = vrot.slane %v1107, 1
      %v1111 = vsel %vm1092, %v927, %v1059
      %v1114 = vsel %vm1095, %v1060, %v1061
      %v1115 = vsel %vm1099, %v1111, %v1114
      %v1117 = vsel %vm1102, %v927, %v1059
      %v1118 = vsel %vm1104, %v1060, %v1061
      %v1119 = vsel %vm1106, %v1117, %v1118
      %v1121 = vrot.slane %v1119, 1
      %v1123 = vsel %vm1092, %v929, %v1062
      %v1126 = vsel %vm1095, %v1063, %v1064
      %v1127 = vsel %vm1099, %v1123, %v1126
      %v1129 = vsel %vm1102, %v929, %v1062
      %v1130 = vsel %vm1104, %v1063, %v1064
      %v1131 = vsel %vm1106, %v1129, %v1130
      %v1133 = vrot.slane %v1131, 1
      %v1135 = vsel %vm1092, %v931, %v1065
      %v1138 = vsel %vm1095, %v1066, %v1067
      %v1139 = vsel %vm1099, %v1135, %v1138
      %v1141 = vsel %vm1102, %v931, %v1065
      %v1142 = vsel %vm1104, %v1066, %v1067
      %v1143 = vsel %vm1106, %v1141, %v1142
      %v1145 = vrot.slane %v1143, 1
      %v1147 = vsel %vm1092, %v933, %v1068
      %v1150 = vsel %vm1095, %v1069, %v1070
      %v1151 = vsel %vm1099, %v1147, %v1150
      %v1153 = vsel %vm1102, %v933, %v1068
      %v1154 = vsel %vm1104, %v1069, %v1070
      %v1155 = vsel %vm1106, %v1153, %v1154
      %v1157 = vrot.slane %v1155, 1
      %v1159 = vsel %vm1092, %v935, %v1071
      %v1162 = vsel %vm1095, %v1072, %v1073
      %v1163 = vsel %vm1099, %v1159, %v1162
      %v1165 = vsel %vm1102, %v935, %v1071
      %v1166 = vsel %vm1104, %v1072, %v1073
      %v1167 = vsel %vm1106, %v1165, %v1166
      %v1169 = vrot.slane %v1167, 1
      %v1171 = vsel %vm1092, %v937, %v1074
      %v1174 = vsel %vm1095, %v1075, %v1076
      %v1175 = vsel %vm1099, %v1171, %v1174
      %v1177 = vsel %vm1102, %v937, %v1074
      %v1178 = vsel %vm1104, %v1075, %v1076
      %v1179 = vsel %vm1106, %v1177, %v1178
      %v1181 = vrot.slane %v1179, 1
      %v1183 = vsel %vm1092, %v939, %v1077
      %v1186 = vsel %vm1095, %v1078, %v1079
      %v1187 = vsel %vm1099, %v1183, %v1186
      %v1189 = vsel %vm1102, %v939, %v1077
      %v1190 = vsel %vm1104, %v1078, %v1079
      %v1191 = vsel %vm1106, %v1189, %v1190
      %v1193 = vrot.slane %v1191, 1
      %v1195 = vsel %vm1092, %v941, %v1080
      %v1198 = vsel %vm1095, %v1081, %v1082
      %v1199 = vsel %vm1099, %v1195, %v1198
      %v1201 = vsel %vm1102, %v941, %v1080
      %v1202 = vsel %vm1104, %v1081, %v1082
      %v1203 = vsel %vm1106, %v1201, %v1202
      %v1205 = vrot.slane %v1203, 1
      %v1207 = vsel %vm1092, %v943, %v1083
      %v1210 = vsel %vm1095, %v1084, %v1085
      %v1211 = vsel %vm1099, %v1207, %v1210
      %v1213 = vsel %vm1102, %v943, %v1083
      %v1214 = vsel %vm1104, %v1084, %v1085
      %v1215 = vsel %vm1106, %v1213, %v1214
      %v1217 = vrot.slane %v1215, 1
      %v1219 = vsel %vm1092, %v945, %v1086
      %v1222 = vsel %vm1095, %v1087, %v1088
      %v1223 = vsel %vm1099, %v1219, %v1222
      %v1225 = vsel %vm1102, %v945, %v1086
      %v1226 = vsel %vm1104, %v1087, %v1088
      %v1227 = vsel %vm1106, %v1225, %v1226
      %v1229 = vrot.slane %v1227, 1
      %v1231 = vsel %vm1092, %v947, %v1089
      %v1234 = vsel %vm1095, %v1090, %v1091
      %v1235 = vsel %vm1099, %v1231, %v1234
      %v1237 = vsel %vm1102, %v947, %v1089
      %v1238 = vsel %vm1104, %v1090, %v1091
      %v1239 = vsel %vm1106, %v1237, %v1238
      %v1241 = vrot.slane %v1239, 1
      %v1242 = vunpack.i.l.s16 %v1100
      %v1243 = vunpack.i.h.s16 %v1100
      %v1244 = vunpack.i.l.s16 %v1109
      %v1245 = vunpack.i.l.s16 %v1115
      %v1246 = vunpack.i.h.s16 %v1115
      %v1247 = vunpack.i.l.s16 %v1121
      %v1248 = vunpack.i.l.s16 %v1127
      %v1249 = vunpack.i.h.s16 %v1127
      %v1250 = vunpack.i.l.s16 %v1133
      %v1251 = vunpack.i.l.s16 %v1139
      %v1252 = vunpack.i.h.s16 %v1139
      %v1253 = vunpack.i.l.s16 %v1145
      %v1254 = vunpack.i.l.s16 %v1151
      %v1255 = vunpack.i.h.s16 %v1151
      %v1256 = vunpack.i.l.s16 %v1157
      %v1257 = vunpack.i.l.s16 %v1163
      %v1258 = vunpack.i.h.s16 %v1163
      %v1259 = vunpack.i.l.s16 %v1169
      %v1260 = vunpack.i.l.s16 %v1175
      %v1261 = vunpack.i.h.s16 %v1175
      %v1262 = vunpack.i.l.s16 %v1181
      %v1263 = vunpack.i.l.s16 %v1187
      %v1264 = vunpack.i.h.s16 %v1187
      %v1265 = vunpack.i.l.s16 %v1193
      %v1266 = vunpack.i.l.s16 %v1199
      %v1267 = vunpack.i.h.s16 %v1199
      %v1268 = vunpack.i.l.s16 %v1205
      %v1269 = vunpack.i.l.s16 %v1211
      %v1270 = vunpack.i.h.s16 %v1211
      %v1271 = vunpack.i.l.s16 %v1217
      %v1272 = vunpack.i.l.s16 %v1223
      %v1273 = vunpack.i.h.s16 %v1223
      %v1274 = vunpack.i.l.s16 %v1229
      %v1275 = vunpack.i.l.s16 %v1235
      %v1276 = vunpack.i.h.s16 %v1235
      %v1277 = vunpack.i.l.s16 %v1241
      %v1278 = vld [vmem:[%s1] sm:$0xf]
      %v1279 = vld [vmem:[%s1 + $0x4] sm:$0xf]
      %v1280 = vld [vmem:[%s1 + $0x8] sm:$0xf]
      %v1281 = vld [vmem:[%s1 + $0xc] sm:$0xf]
      %v1282 = vld [vmem:[%s1 + $0x10] sm:$0xf]
      %v1283 = vld [vmem:[%s1 + $0x14] sm:$0xf]
      %v1284 = vld [vmem:[%s1 + $0x18] sm:$0xf]
      %v1285 = vld [vmem:[%s1 + $0x1c] sm:$0xf]
      %v1286 = vld [vmem:[%s1 + $0x20] sm:$0xf]
      %v1287 = vld [vmem:[%s1 + $0x24] sm:$0xf]
      %v1288 = vld [vmem:[%s1 + $0x28] sm:$0xf]
      %v1289 = vld [vmem:[%s1 + $0x2c] sm:$0xf]
      %v1290 = vld [vmem:[%s1 + $0x30] sm:$0xf]
      %v1291 = vld [vmem:[%s1 + $0x34] sm:$0xf]
      %v1292 = vld [vmem:[%s1 + $0x38] sm:$0xf]
      %v1293 = vld [vmem:[%s1 + $0x3c] sm:$0xf]
      %v1294 = vld [vmem:[%s1 + $0x40] sm:$0xf]
      %v1295 = vld [vmem:[%s1 + $0x44] sm:$0xf]
      %v1296 = vld [vmem:[%s1 + $0x48] sm:$0xf]
      %v1297 = vld [vmem:[%s1 + $0x4c] sm:$0xf]
      %v1298 = vld [vmem:[%s1 + $0x50] sm:$0xf]
      %v1299 = vld [vmem:[%s1 + $0x54] sm:$0xf]
      %v1300 = vld [vmem:[%s1 + $0x58] sm:$0xf]
      %v1301 = vld [vmem:[%s1 + $0x5c] sm:$0xf]
      %v1302 = vld [vmem:[%s1 + $0x60] sm:$0xf]
      %v1303 = vld [vmem:[%s1 + $0x64] sm:$0xf]
      %v1304 = vld [vmem:[%s1 + $0x68] sm:$0xf]
      %v1305 = vld [vmem:[%s1 + $0x6c] sm:$0xf]
      %v1306 = vld [vmem:[%s1 + $0x70] sm:$0xf]
      %v1307 = vld [vmem:[%s1 + $0x74] sm:$0xf]
      %v1308 = vld [vmem:[%s1 + $0x78] sm:$0xf]
      %v1309 = vld [vmem:[%s1 + $0x7c] sm:$0xf]
      %v1310 = vld [vmem:[%s1 + $0x80] sm:$0xf]
      %v1311 = vld [vmem:[%s1 + $0x84] sm:$0xf]
      %v1312 = vld [vmem:[%s1 + $0x88] sm:$0xf]
      %v1313 = vld [vmem:[%s1 + $0x8c] sm:$0xf]
      %v1314 = vld [vmem:[%s1 + $0x90] sm:$0xf]
      %v1315 = vld [vmem:[%s1 + $0x94] sm:$0xf]
      %v1316 = vld [vmem:[%s1 + $0x98] sm:$0xf]
      %v1317 = vld [vmem:[%s1 + $0x9c] sm:$0xf]
      %v1318 = vld [vmem:[%s1 + $0xa0] sm:$0xf]
      %v1319 = vld [vmem:[%s1 + $0xa4] sm:$0xf]
      %v1320 = vld [vmem:[%s1 + $0xa8] sm:$0xf]
      %v1321 = vld [vmem:[%s1 + $0xac] sm:$0xf]
      %v1322 = vld [vmem:[%s1 + $0xb0] sm:$0xf]
      %v1323 = vld [vmem:[%s1 + $0xb4] sm:$0xf]
      %v1324 = vld [vmem:[%s1 + $0xb8] sm:$0xf]
      %v1325 = vld [vmem:[%s1 + $0xbc] sm:$0xf]
      %v1326 = vld [vmem:[%s1 + $0xc0] sm:$0xf]
      %v1327 = vld [vmem:[%s1 + $0xc4] sm:$0xf]
      %v1328 = vld [vmem:[%s1 + $0xc8] sm:$0xf]
      %v1329 = vld [vmem:[%s1 + $0xcc] sm:$0xf]
      %v1330 = vld [vmem:[%s1 + $0xd0] sm:$0xf]
      %v1331 = vld [vmem:[%s1 + $0xd4] sm:$0xf]
      %v1332 = vld [vmem:[%s1 + $0xd8] sm:$0xf]
      %v1333 = vld [vmem:[%s1 + $0xdc] sm:$0xf]
      %v1334 = vld [vmem:[%s1 + $0xe0] sm:$0xf]
      %v1335 = vld [vmem:[%s1 + $0xe4] sm:$0xf]
      %v1336 = vld [vmem:[%s1 + $0xe8] sm:$0xf]
      %v1337 = vld [vmem:[%s1 + $0xec] sm:$0xf]
      %v1338 = vld [vmem:[%s1 + $0xf0] sm:$0xf]
      %v1339 = vld [vmem:[%s1 + $0xf4] sm:$0xf]
      %v1340 = vld [vmem:[%s1 + $0xf8] sm:$0xf]
      %v1341 = vld [vmem:[%s1 + $0xfc] sm:$0xf]
      %v1342 = vld [vmem:[%s2] sm:$0x1]
      %v1344 = vperm.slane %v1342, 0
      %v1346 = vpack.i.b16 %v1243, %v1242
      %v1347 = vpack.i.b16 %v1245, %v1244
      %v1348 = vpack.i.b16 %v1247, %v1246
      %v1349 = vpack.i.b16 %v1249, %v1248
      %v1350 = vpack.i.b16 %v1251, %v1250
      %v1351 = vpack.i.b16 %v1253, %v1252
      %v1352 = vpack.i.b16 %v1255, %v1254
      %v1353 = vpack.i.b16 %v1257, %v1256
      %v1354 = vpack.i.b16 %v1259, %v1258
      %v1355 = vpack.i.b16 %v1261, %v1260
      %v1356 = vpack.i.b16 %v1263, %v1262
      %v1357 = vpack.i.b16 %v1265, %v1264
      %v1358 = vpack.i.b16 %v1267, %v1266
      %v1359 = vpack.i.b16 %v1269, %v1268
      %v1360 = vpack.i.b16 %v1271, %v1270
      %v1361 = vpack.i.b16 %v1273, %v1272
      %v1362 = vpack.i.b16 %v1275, %v1274
      %v1363 = vpack.i.b16 %v1277, %v1276
      %1365 = vst [vmem:[#allocation1] ss:$9 sm:$0xff] %v1346
      %s1367 = scalar_lea.vmem [#allocation1], 1
      %1368 = vst [vmem:[%s1367] ss:$9 sm:$0xff] %v1347
      %s1370 = scalar_lea.vmem [#allocation1], 2
      %1371 = vst [vmem:[%s1370] ss:$9 sm:$0xff] %v1348
      %s1373 = scalar_lea.vmem [#allocation1], 3
      %1374 = vst [vmem:[%s1373] ss:$9 sm:$0xff] %v1349
      %s1376 = scalar_lea.vmem [#allocation1], 4
      %1377 = vst [vmem:[%s1376] ss:$9 sm:$0xff] %v1350
      %s1379 = scalar_lea.vmem [#allocation1], 5
      %1380 = vst [vmem:[%s1379] ss:$9 sm:$0xff] %v1351
      %s1382 = scalar_lea.vmem [#allocation1], 6
      %1383 = vst [vmem:[%s1382] ss:$9 sm:$0xff] %v1352
      %s1385 = scalar_lea.vmem [#allocation1], 7
      %1386 = vst [vmem:[%s1385] ss:$9 sm:$0xff] %v1353
      %v1387 = vld [vmem:[#allocation1] sm:$0xff]
      %v1388 = vld [vmem:[#allocation1 + $0x9] sm:$0xff]
      %v1389 = vld [vmem:[#allocation1 + $0x12] sm:$0xff]
      %v1390 = vld [vmem:[#allocation1 + $0x1b] sm:$0xff]
      %1392 = vst [vmem:[#allocation1] ss:$9 sm:$0xff] %v1354
      %1394 = vst [vmem:[%s1367] ss:$9 sm:$0xff] %v1355
      %1396 = vst [vmem:[%s1370] ss:$9 sm:$0xff] %v1356
      %1398 = vst [vmem:[%s1373] ss:$9 sm:$0xff] %v1357
      %1400 = vst [vmem:[%s1376] ss:$9 sm:$0xff] %v1358
      %1402 = vst [vmem:[%s1379] ss:$9 sm:$0xff] %v1359
      %1404 = vst [vmem:[%s1382] ss:$9 sm:$0xff] %v1360
      %1406 = vst [vmem:[%s1385] ss:$9 sm:$0xff] %v1361
      %v1407 = vld [vmem:[#allocation1] sm:$0xff]
      %v1408 = vld [vmem:[#allocation1 + $0x9] sm:$0xff]
      %v1409 = vld [vmem:[#allocation1 + $0x12] sm:$0xff]
      %v1410 = vld [vmem:[#allocation1 + $0x1b] sm:$0xff]
      %1412 = vst [vmem:[#allocation1] ss:$9 sm:$0xff] %v1362
      %1414 = vst [vmem:[%s1367] ss:$9 sm:$0xff] %v1363
      %v1415 = vld [vmem:[#allocation1] sm:$0xff]
      %v1416 = vld [vmem:[#allocation1 + $0x9] sm:$0xff]
      %v1417 = vld [vmem:[#allocation1 + $0x12] sm:$0xff]
      %v1418 = vld [vmem:[#allocation1 + $0x1b] sm:$0xff]
      %v1495 = vunpack.c.l.b16 %v1278
      %v1496 = vunpack.c.l.b16 %v1279
      %v1497 = vunpack.c.l.b16 %v1280
      %v1498 = vunpack.c.l.b16 %v1281
      %v1499 = vunpack.c.l.b16 %v1282
      %v1500 = vunpack.c.l.b16 %v1283
      %v1501 = vunpack.c.l.b16 %v1284
      %v1502 = vunpack.c.l.b16 %v1285
      %v1503 = vunpack.c.l.b16 %v1286
      %v1504 = vunpack.c.l.b16 %v1287
      %v1505 = vunpack.c.l.b16 %v1288
      %v1506 = vunpack.c.l.b16 %v1289
      %v1507 = vunpack.c.l.b16 %v1290
      %v1508 = vunpack.c.l.b16 %v1291
      %v1509 = vunpack.c.l.b16 %v1292
      %v1510 = vunpack.c.l.b16 %v1293
      %v1511 = vunpack.c.l.b16 %v1294
      %v1512 = vunpack.c.l.b16 %v1295
      %v1513 = vunpack.c.l.b16 %v1296
      %v1514 = vunpack.c.l.b16 %v1297
      %v1515 = vunpack.c.l.b16 %v1298
      %v1516 = vunpack.c.l.b16 %v1299
      %v1517 = vunpack.c.l.b16 %v1300
      %v1518 = vunpack.c.l.b16 %v1301
      %v1519 = vunpack.c.l.b16 %v1302
      %v1520 = vunpack.c.l.b16 %v1303
      %v1521 = vunpack.c.l.b16 %v1304
      %v1522 = vunpack.c.l.b16 %v1305
      %v1523 = vunpack.c.l.b16 %v1306
      %v1524 = vunpack.c.l.b16 %v1307
      %v1525 = vunpack.c.l.b16 %v1308
      %v1526 = vunpack.c.l.b16 %v1309
      %v1527 = vunpack.c.l.b16 %v1310
      %v1528 = vunpack.c.l.b16 %v1311
      %v1529 = vunpack.c.l.b16 %v1312
      %v1530 = vunpack.c.l.b16 %v1313
      %v1531 = vunpack.c.l.b16 %v1314
      %v1532 = vunpack.c.l.b16 %v1315
      %v1533 = vunpack.c.l.b16 %v1316
      %v1534 = vunpack.c.l.b16 %v1317
      %v1535 = vunpack.c.l.b16 %v1318
      %v1536 = vunpack.c.l.b16 %v1319
      %v1537 = vunpack.c.l.b16 %v1320
      %v1538 = vunpack.c.l.b16 %v1321
      %v1539 = vunpack.c.l.b16 %v1322
      %v1540 = vunpack.c.l.b16 %v1323
      %v1541 = vunpack.c.l.b16 %v1324
      %v1542 = vunpack.c.l.b16 %v1325
      %v1543 = vunpack.c.l.b16 %v1326
      %v1544 = vunpack.c.l.b16 %v1327
      %v1545 = vunpack.c.l.b16 %v1328
      %v1546 = vunpack.c.l.b16 %v1329
      %v1547 = vunpack.c.l.b16 %v1330
      %v1548 = vunpack.c.l.b16 %v1331
      %v1549 = vunpack.c.l.b16 %v1332
      %v1550 = vunpack.c.l.b16 %v1333
      %v1551 = vunpack.c.l.b16 %v1334
      %v1552 = vunpack.c.l.b16 %v1335
      %v1553 = vunpack.c.l.b16 %v1336
      %v1554 = vunpack.c.l.b16 %v1337
      %v1555 = vunpack.c.l.b16 %v1338
      %v1556 = vunpack.c.l.b16 %v1339
      %v1557 = vunpack.c.l.b16 %v1340
      %v1558 = vunpack.c.l.b16 %v1341
      %v1559 = vpack.c.b16 %v1496, %v1495
      %v1560 = vpack.c.b16 %v1498, %v1497
      %v1561 = vpack.c.b16 %v1500, %v1499
      %v1562 = vpack.c.b16 %v1502, %v1501
      %v1563 = vpack.c.b16 %v1504, %v1503
      %v1564 = vpack.c.b16 %v1506, %v1505
      %v1565 = vpack.c.b16 %v1508, %v1507
      %v1566 = vpack.c.b16 %v1510, %v1509
      %v1567 = vpack.c.b16 %v1512, %v1511
      %v1568 = vpack.c.b16 %v1514, %v1513
      %v1569 = vpack.c.b16 %v1516, %v1515
      %v1570 = vpack.c.b16 %v1518, %v1517
      %v1571 = vpack.c.b16 %v1520, %v1519
      %v1572 = vpack.c.b16 %v1522, %v1521
      %v1573 = vpack.c.b16 %v1524, %v1523
      %v1574 = vpack.c.b16 %v1526, %v1525
      %v1575 = vpack.c.b16 %v1528, %v1527
      %v1576 = vpack.c.b16 %v1530, %v1529
      %v1577 = vpack.c.b16 %v1532, %v1531
      %v1578 = vpack.c.b16 %v1534, %v1533
      %v1579 = vpack.c.b16 %v1536, %v1535
      %v1580 = vpack.c.b16 %v1538, %v1537
      %v1581 = vpack.c.b16 %v1540, %v1539
      %v1582 = vpack.c.b16 %v1542, %v1541
      %v1583 = vpack.c.b16 %v1544, %v1543
      %v1584 = vpack.c.b16 %v1546, %v1545
      %v1585 = vpack.c.b16 %v1548, %v1547
      %v1586 = vpack.c.b16 %v1550, %v1549
      %v1587 = vpack.c.b16 %v1552, %v1551
      %v1588 = vpack.c.b16 %v1554, %v1553
      %v1589 = vpack.c.b16 %v1556, %v1555
      %v1590 = vpack.c.b16 %v1558, %v1557
      %1623 = vmatpush.bf16.msra.mxu0 %v1566
      %1624 = vmatpush.bf16.msra.mxu0 %v1565
      %1625 = vmatpush.bf16.msra.mxu0 %v1564
      %1626 = vmatpush.bf16.msra.mxu0 %v1563
      %1627 = vmatpush.bf16.msra.mxu0 %v1562
      %1628 = vmatpush.bf16.msra.mxu0 %v1561
      %1629 = vmatpush.bf16.msra.mxu0 %v1560
      %1630 = vmatpush.bf16.msra.mxu0 %v1559
      %1631 = vmatmul.bf16.gmra.mxu0 %v1387
      %v1632 = vpop.f32.mrf.mxu0
      %v1633 = vadd.f32 %v1344, %v1632
      %v1634 = vpop.f32.mrf.mxu0
      %v1635 = vadd.f32 %v1344, %v1634
      %1636 = vmatmul.bf16.gmra.mxu0 %v1407
      %v1637 = vpop.f32.mrf.mxu0
      %v1638 = vadd.f32 %v1344, %v1637
      %v1639 = vpop.f32.mrf.mxu0
      %v1640 = vadd.f32 %v1344, %v1639
      %1641 = vmatmul.bf16.gmra.mxu0 %v1415
      %v1642 = vpop.f32.mrf.mxu0
      %v1643 = vadd.f32 %v1344, %v1642
      %v1644 = vpop.f32.mrf.mxu0
      %1645 = vdwg.mxu0
      %1646 = vmatpush.bf16.msra.mxu0 %v1574
      %1647 = vmatpush.bf16.msra.mxu0 %v1573
      %1648 = vmatpush.bf16.msra.mxu0 %v1572
      %1649 = vmatpush.bf16.msra.mxu0 %v1571
      %1650 = vmatpush.bf16.msra.mxu0 %v1570
      %1651 = vmatpush.bf16.msra.mxu0 %v1569
      %1652 = vmatpush.bf16.msra.mxu0 %v1568
      %1653 = vmatpush.bf16.msra.mxu0 %v1567
      %1654 = vmatmul.bf16.gmra.mxu0 %v1388
      %v1655 = vpop.f32.mrf.mxu0
      %v1656 = vadd.f32 %v1633, %v1655
      %v1657 = vpop.f32.mrf.mxu0
      %v1658 = vadd.f32 %v1635, %v1657
      %1659 = vmatmul.bf16.gmra.mxu0 %v1408
      %v1660 = vpop.f32.mrf.mxu0
      %v1661 = vadd.f32 %v1638, %v1660
      %v1662 = vpop.f32.mrf.mxu0
      %v1663 = vadd.f32 %v1640, %v1662
      %1664 = vmatmul.bf16.gmra.mxu0 %v1416
      %v1665 = vpop.f32.mrf.mxu0
      %v1666 = vadd.f32 %v1643, %v1665
      %v1667 = vpop.f32.mrf.mxu0
      %1668 = vdwg.mxu0
      %1669 = vmatpush.bf16.msra.mxu0 %v1582
      %1670 = vmatpush.bf16.msra.mxu0 %v1581
      %1671 = vmatpush.bf16.msra.mxu0 %v1580
      %1672 = vmatpush.bf16.msra.mxu0 %v1579
      %1673 = vmatpush.bf16.msra.mxu0 %v1578
      %1674 = vmatpush.bf16.msra.mxu0 %v1577
      %1675 = vmatpush.bf16.msra.mxu0 %v1576
      %1676 = vmatpush.bf16.msra.mxu0 %v1575
      %1677 = vmatmul.bf16.gmra.mxu0 %v1389
      %v1678 = vpop.f32.mrf.mxu0
      %v1679 = vadd.f32 %v1656, %v1678
      %v1680 = vpop.f32.mrf.mxu0
      %v1681 = vadd.f32 %v1658, %v1680
      %1682 = vmatmul.bf16.gmra.mxu0 %v1409
      %v1683 = vpop.f32.mrf.mxu0
      %v1684 = vadd.f32 %v1661, %v1683
      %v1685 = vpop.f32.mrf.mxu0
      %v1686 = vadd.f32 %v1663, %v1685
      %1687 = vmatmul.bf16.gmra.mxu0 %v1417
      %v1688 = vpop.f32.mrf.mxu0
      %v1689 = vadd.f32 %v1666, %v1688
      %v1690 = vpop.f32.mrf.mxu0
      %1691 = vdwg.mxu0
      %1692 = vmatpush.bf16.msra.mxu0 %v1590
      %1693 = vmatpush.bf16.msra.mxu0 %v1589
      %1694 = vmatpush.bf16.msra.mxu0 %v1588
      %1695 = vmatpush.bf16.msra.mxu0 %v1587
      %1696 = vmatpush.bf16.msra.mxu0 %v1586
      %1697 = vmatpush.bf16.msra.mxu0 %v1585
      %1698 = vmatpush.bf16.msra.mxu0 %v1584
      %1699 = vmatpush.bf16.msra.mxu0 %v1583
      %1700 = vmatmul.bf16.gmra.mxu0 %v1390
      %v1701 = vpop.f32.mrf.mxu0
      %v1702 = vadd.f32 %v1679, %v1701
      %v1703 = vpop.f32.mrf.mxu0
      %v1704 = vadd.f32 %v1681, %v1703
      %1705 = vmatmul.bf16.gmra.mxu0 %v1410
      %v1706 = vpop.f32.mrf.mxu0
      %v1707 = vadd.f32 %v1684, %v1706
      %v1708 = vpop.f32.mrf.mxu0
      %v1709 = vadd.f32 %v1686, %v1708
      %1710 = vmatmul.bf16.gmra.mxu0 %v1418
      %v1711 = vpop.f32.mrf.mxu0
      %v1712 = vadd.f32 %v1689, %v1711
      %v1713 = vpop.f32.mrf.mxu0
      %1714 = vdwg.mxu0
      %v1715 = vmax.f32 %v1702, 0.0
      %v1716 = vmax.f32 %v1704, 0.0
      %v1717 = vmax.f32 %v1707, 0.0
      %v1718 = vmax.f32 %v1709, 0.0
      %v1719 = vmax.f32 %v1712, 0.0
      %v1720 = vpack.c.bf16 %v1715, %v1715
      %v1721 = vpack.c.bf16 %v1716, %v1716
      %v1722 = vpack.c.bf16 %v1717, %v1717
      %v1723 = vpack.c.bf16 %v1718, %v1718
      %v1724 = vpack.c.bf16 %v1719, %v1719
      %v1730 = vrot.slane %v1720, 3
      %v1731 = vrot.slane %v1721, 3
      %v1732 = vrot.slane %v1722, 3
      %v1733 = vrot.slane %v1723, 3
      %v1734 = vrot.slane %v1724, 3
      %v1737 = vsel %vm1092, %v1720, %v1730
      %v1739 = vsel %vm1102, %v1720, %v1730
      %v1741 = vrot.slane %v1739, 1
      %v1742 = vsel %vm1095, %v1720, %v1730
      %v1744 = vrot.slane %v1742, 2
      %v1745 = vsel %vm1104, %v1720, %v1730
      %v1747 = vrot.slane %v1745, 3
      %v1750 = vsel %vm1092, %v1721, %v1731
      %v1752 = vsel %vm1102, %v1721, %v1731
      %v1754 = vrot.slane %v1752, 1
      %v1755 = vsel %vm1095, %v1721, %v1731
      %v1757 = vrot.slane %v1755, 2
      %v1758 = vsel %vm1104, %v1721, %v1731
      %v1760 = vrot.slane %v1758, 3
      %v1763 = vsel %vm1092, %v1722, %v1732
      %v1765 = vsel %vm1102, %v1722, %v1732
      %v1767 = vrot.slane %v1765, 1
      %v1768 = vsel %vm1095, %v1722, %v1732
      %v1770 = vrot.slane %v1768, 2
      %v1771 = vsel %vm1104, %v1722, %v1732
      %v1773 = vrot.slane %v1771, 3
      %v1776 = vsel %vm1092, %v1723, %v1733
      %v1778 = vsel %vm1102, %v1723, %v1733
      %v1780 = vrot.slane %v1778, 1
      %v1781 = vsel %vm1095, %v1723, %v1733
      %v1783 = vrot.slane %v1781, 2
      %v1784 = vsel %vm1104, %v1723, %v1733
      %v1786 = vrot.slane %v1784, 3
      %v1789 = vsel %vm1092, %v1724, %v1734
      %v1791 = vsel %vm1102, %v1724, %v1734
      %v1793 = vrot.slane %v1791, 1
      %v1794 = vunpack.i.l.s16 %v1737
      %v1795 = vunpack.i.h.s16 %v1737
      %v1796 = vunpack.i.l.s16 %v1741
      %v1797 = vunpack.i.h.s16 %v1741
      %v1798 = vunpack.i.l.s16 %v1744
      %v1799 = vunpack.i.h.s16 %v1744
      %v1800 = vunpack.i.l.s16 %v1747
      %v1801 = vunpack.i.h.s16 %v1747
      %v1802 = vunpack.i.l.s16 %v1750
      %v1803 = vunpack.i.h.s16 %v1750
      %v1804 = vunpack.i.l.s16 %v1754
      %v1805 = vunpack.i.h.s16 %v1754
      %v1806 = vunpack.i.l.s16 %v1757
      %v1807 = vunpack.i.h.s16 %v1757
      %v1808 = vunpack.i.l.s16 %v1760
      %v1809 = vunpack.i.h.s16 %v1760
      %v1810 = vunpack.i.l.s16 %v1763
      %v1811 = vunpack.i.h.s16 %v1763
      %v1812 = vunpack.i.l.s16 %v1767
      %v1813 = vunpack.i.h.s16 %v1767
      %v1814 = vunpack.i.l.s16 %v1770
      %v1815 = vunpack.i.h.s16 %v1770
      %v1816 = vunpack.i.l.s16 %v1773
      %v1817 = vunpack.i.h.s16 %v1773
      %v1818 = vunpack.i.l.s16 %v1776
      %v1819 = vunpack.i.h.s16 %v1776
      %v1820 = vunpack.i.l.s16 %v1780
      %v1821 = vunpack.i.h.s16 %v1780
      %v1822 = vunpack.i.l.s16 %v1783
      %v1823 = vunpack.i.h.s16 %v1783
      %v1824 = vunpack.i.l.s16 %v1786
      %v1825 = vunpack.i.h.s16 %v1786
      %v1826 = vunpack.i.l.s16 %v1789
      %v1827 = vunpack.i.h.s16 %v1789
      %v1828 = vunpack.i.l.s16 %v1793
      %v1829 = vunpack.i.h.s16 %v1793
      %v1830 = vpack.i.b16 %v1794, %v1794
      %v1831 = vpack.i.b16 %v1803, %v1803
      %v1832 = vpack.i.b16 %v1812, %v1812
      %v1833 = vpack.i.b16 %v1821, %v1821
      %v1834 = vperm.slane %v1830, 0
      %v1835 = vperm.slane %v1831, 0
      %v1836 = vperm.slane %v1832, 0
      %v1837 = vperm.slane %v1833, 0
      %v1838 = vpack.i.b16 %v1795, %v1795
      %v1839 = vpack.i.b16 %v1804, %v1804
      %v1840 = vpack.i.b16 %v1813, %v1813
      %v1841 = vpack.i.b16 %v1822, %v1822
      %v1842 = vperm.slane %v1838, 0
      %v1843 = vperm.slane %v1839, 0
      %v1844 = vperm.slane %v1840, 0
      %v1845 = vperm.slane %v1841, 0
      %1846 = vrot.lane.b32.xlu0 %v1842, 64
      %v1847 = vpop.permute.xlu0 %1846
      %1848 = vrot.lane.b32.xlu0 %v1843, 64
      %v1849 = vpop.permute.xlu0 %1848
      %1850 = vrot.lane.b32.xlu0 %v1844, 64
      %v1851 = vpop.permute.xlu0 %1850
      %1852 = vrot.lane.b32.xlu0 %v1845, 64
      %v1853 = vpop.permute.xlu0 %1852
      %v1854 = vpack.i.b16 %v1796, %v1796
      %v1855 = vpack.i.b16 %v1805, %v1805
      %v1856 = vpack.i.b16 %v1814, %v1814
      %v1857 = vpack.i.b16 %v1823, %v1823
      %v1858 = vperm.slane %v1854, 0
      %v1859 = vperm.slane %v1855, 0
      %v1860 = vperm.slane %v1856, 0
      %v1861 = vperm.slane %v1857, 0
      %v1862 = vpack.i.b16 %v1797, %v1797
      %v1863 = vpack.i.b16 %v1806, %v1806
      %v1864 = vpack.i.b16 %v1815, %v1815
      %v1865 = vpack.i.b16 %v1824, %v1824
      %v1866 = vperm.slane %v1862, 0
      %v1867 = vperm.slane %v1863, 0
      %v1868 = vperm.slane %v1864, 0
      %v1869 = vperm.slane %v1865, 0
      %1870 = vrot.lane.b32.xlu0 %v1866, 64
      %v1871 = vpop.permute.xlu0 %1870
      %1872 = vrot.lane.b32.xlu0 %v1867, 64
      %v1873 = vpop.permute.xlu0 %1872
      %1874 = vrot.lane.b32.xlu0 %v1868, 64
      %v1875 = vpop.permute.xlu0 %1874
      %1876 = vrot.lane.b32.xlu0 %v1869, 64
      %v1877 = vpop.permute.xlu0 %1876
      %v1878 = vpack.i.b16 %v1798, %v1798
      %v1879 = vpack.i.b16 %v1807, %v1807
      %v1880 = vpack.i.b16 %v1816, %v1816
      %v1881 = vpack.i.b16 %v1825, %v1825
      %v1882 = vperm.slane %v1878, 0
      %v1883 = vperm.slane %v1879, 0
      %v1884 = vperm.slane %v1880, 0
      %v1885 = vperm.slane %v1881, 0
      %v1886 = vpack.i.b16 %v1799, %v1799
      %v1887 = vpack.i.b16 %v1808, %v1808
      %v1888 = vpack.i.b16 %v1817, %v1817
      %v1889 = vpack.i.b16 %v1826, %v1826
      %v1890 = vperm.slane %v1886, 0
      %v1891 = vperm.slane %v1887, 0
      %v1892 = vperm.slane %v1888, 0
      %v1893 = vperm.slane %v1889, 0
      %1894 = vrot.lane.b32.xlu0 %v1890, 64
      %v1895 = vpop.permute.xlu0 %1894
      %1896 = vrot.lane.b32.xlu0 %v1891, 64
      %v1897 = vpop.permute.xlu0 %1896
      %1898 = vrot.lane.b32.xlu0 %v1892, 64
      %v1899 = vpop.permute.xlu0 %1898
      %1900 = vrot.lane.b32.xlu0 %v1893, 64
      %v1901 = vpop.permute.xlu0 %1900
      %v1902 = vpack.i.b16 %v1800, %v1800
      %v1903 = vpack.i.b16 %v1809, %v1809
      %v1904 = vpack.i.b16 %v1818, %v1818
      %v1905 = vpack.i.b16 %v1827, %v1827
      %v1906 = vperm.slane %v1902, 0
      %v1907 = vperm.slane %v1903, 0
      %v1908 = vperm.slane %v1904, 0
      %v1909 = vperm.slane %v1905, 0
      %v1910 = vpack.i.b16 %v1801, %v1801
      %v1911 = vpack.i.b16 %v1810, %v1810
      %v1912 = vpack.i.b16 %v1819, %v1819
      %v1913 = vpack.i.b16 %v1828, %v1828
      %v1914 = vperm.slane %v1910, 0
      %v1915 = vperm.slane %v1911, 0
      %v1916 = vperm.slane %v1912, 0
      %v1917 = vperm.slane %v1913, 0
      %1918 = vrot.lane.b32.xlu0 %v1914, 64
      %v1919 = vpop.permute.xlu0 %1918
      %1920 = vrot.lane.b32.xlu0 %v1915, 64
      %v1921 = vpop.permute.xlu0 %1920
      %1922 = vrot.lane.b32.xlu0 %v1916, 64
      %v1923 = vpop.permute.xlu0 %1922
      %1924 = vrot.lane.b32.xlu0 %v1917, 64
      %v1925 = vpop.permute.xlu0 %1924
      %v1926 = vpack.i.b16 %v1802, %v1802
      %v1927 = vpack.i.b16 %v1811, %v1811
      %v1928 = vpack.i.b16 %v1820, %v1820
      %v1929 = vpack.i.b16 %v1829, %v1829
      %v1930 = vperm.slane %v1926, 0
      %v1931 = vperm.slane %v1927, 0
      %v1932 = vperm.slane %v1928, 0
      %v1933 = vperm.slane %v1929, 0
      %v1936 = vsel %vm923, %v1834, %v1847
      %v1939 = vsel %vm923, %v1835, %v1849
      %v1942 = vsel %vm923, %v1836, %v1851
      %v1945 = vsel %vm923, %v1837, %v1853
      %v1948 = vsel %vm923, %v1858, %v1871
      %v1951 = vsel %vm923, %v1859, %v1873
      %v1954 = vsel %vm923, %v1860, %v1875
      %v1957 = vsel %vm923, %v1861, %v1877
      %v1960 = vsel %vm923, %v1882, %v1895
      %v1963 = vsel %vm923, %v1883, %v1897
      %v1966 = vsel %vm923, %v1884, %v1899
      %v1969 = vsel %vm923, %v1885, %v1901
      %v1972 = vsel %vm923, %v1906, %v1919
      %v1975 = vsel %vm923, %v1907, %v1921
      %v1978 = vsel %vm923, %v1908, %v1923
      %v1981 = vsel %vm923, %v1909, %v1925
      %v1982 = vld [vmem:[%s3] sm:$0xf]
      %v1983 = vld [vmem:[%s3 + $0x4] sm:$0xf]
      %v1984 = vld [vmem:[%s3 + $0x8] sm:$0xf]
      %v1985 = vld [vmem:[%s3 + $0xc] sm:$0xf]
      %v1986 = vld [vmem:[%s3 + $0x10] sm:$0xf]
      %v1987 = vld [vmem:[%s3 + $0x14] sm:$0xf]
      %v1988 = vld [vmem:[%s3 + $0x18] sm:$0xf]
      %v1989 = vld [vmem:[%s3 + $0x1c] sm:$0xf]
      %v1990 = vld [vmem:[%s3 + $0x20] sm:$0xf]
      %v1991 = vld [vmem:[%s3 + $0x24] sm:$0xf]
      %v1992 = vld [vmem:[%s3 + $0x28] sm:$0xf]
      %v1993 = vld [vmem:[%s3 + $0x2c] sm:$0xf]
      %v1994 = vld [vmem:[%s3 + $0x30] sm:$0xf]
      %v1995 = vld [vmem:[%s3 + $0x34] sm:$0xf]
      %v1996 = vld [vmem:[%s3 + $0x38] sm:$0xf]
      %v1997 = vld [vmem:[%s3 + $0x3c] sm:$0xf]
      %v1998 = vld [vmem:[%s3 + $0x40] sm:$0xf]
      %v1999 = vld [vmem:[%s3 + $0x44] sm:$0xf]
      %v2000 = vld [vmem:[%s3 + $0x48] sm:$0xf]
      %v2001 = vld [vmem:[%s3 + $0x4c] sm:$0xf]
      %v2002 = vld [vmem:[%s3 + $0x50] sm:$0xf]
      %v2003 = vld [vmem:[%s3 + $0x54] sm:$0xf]
      %v2004 = vld [vmem:[%s3 + $0x58] sm:$0xf]
      %v2005 = vld [vmem:[%s3 + $0x5c] sm:$0xf]
      %v2006 = vld [vmem:[%s3 + $0x60] sm:$0xf]
      %v2007 = vld [vmem:[%s3 + $0x64] sm:$0xf]
      %v2008 = vld [vmem:[%s3 + $0x68] sm:$0xf]
      %v2009 = vld [vmem:[%s3 + $0x6c] sm:$0xf]
      %v2010 = vld [vmem:[%s3 + $0x70] sm:$0xf]
      %v2011 = vld [vmem:[%s3 + $0x74] sm:$0xf]
      %v2012 = vld [vmem:[%s3 + $0x78] sm:$0xf]
      %v2013 = vld [vmem:[%s3 + $0x7c] sm:$0xf]
      %v2014 = vld [vmem:[%s3 + $0x80] sm:$0xf]
      %v2015 = vld [vmem:[%s3 + $0x84] sm:$0xf]
      %v2016 = vld [vmem:[%s3 + $0x88] sm:$0xf]
      %v2017 = vld [vmem:[%s3 + $0x8c] sm:$0xf]
      %v2018 = vld [vmem:[%s3 + $0x90] sm:$0xf]
      %v2019 = vld [vmem:[%s3 + $0x94] sm:$0xf]
      %v2020 = vld [vmem:[%s3 + $0x98] sm:$0xf]
      %v2021 = vld [vmem:[%s3 + $0x9c] sm:$0xf]
      %v2022 = vld [vmem:[%s3 + $0xa0] sm:$0xf]
      %v2023 = vld [vmem:[%s3 + $0xa4] sm:$0xf]
      %v2024 = vld [vmem:[%s3 + $0xa8] sm:$0xf]
      %v2025 = vld [vmem:[%s3 + $0xac] sm:$0xf]
      %v2026 = vld [vmem:[%s3 + $0xb0] sm:$0xf]
      %v2027 = vld [vmem:[%s3 + $0xb4] sm:$0xf]
      %v2028 = vld [vmem:[%s3 + $0xb8] sm:$0xf]
      %v2029 = vld [vmem:[%s3 + $0xbc] sm:$0xf]
      %v2030 = vld [vmem:[%s3 + $0xc0] sm:$0xf]
      %v2031 = vld [vmem:[%s3 + $0xc4] sm:$0xf]
      %v2032 = vld [vmem:[%s3 + $0xc8] sm:$0xf]
      %v2033 = vld [vmem:[%s3 + $0xcc] sm:$0xf]
      %v2034 = vld [vmem:[%s3 + $0xd0] sm:$0xf]
      %v2035 = vld [vmem:[%s3 + $0xd4] sm:$0xf]
      %v2036 = vld [vmem:[%s3 + $0xd8] sm:$0xf]
      %v2037 = vld [vmem:[%s3 + $0xdc] sm:$0xf]
      %v2038 = vld [vmem:[%s3 + $0xe0] sm:$0xf]
      %v2039 = vld [vmem:[%s3 + $0xe4] sm:$0xf]
      %v2040 = vld [vmem:[%s3 + $0xe8] sm:$0xf]
      %v2041 = vld [vmem:[%s3 + $0xec] sm:$0xf]
      %v2042 = vld [vmem:[%s3 + $0xf0] sm:$0xf]
      %v2043 = vld [vmem:[%s3 + $0xf4] sm:$0xf]
      %v2044 = vld [vmem:[%s3 + $0xf8] sm:$0xf]
      %v2045 = vld [vmem:[%s3 + $0xfc] sm:$0xf]
      %v2046 = vld [vmem:[%s3 + $0x100] sm:$0xf]
      %v2047 = vld [vmem:[%s3 + $0x104] sm:$0xf]
      %v2048 = vld [vmem:[%s3 + $0x108] sm:$0xf]
      %v2049 = vld [vmem:[%s3 + $0x10c] sm:$0xf]
      %v2050 = vld [vmem:[%s3 + $0x110] sm:$0xf]
      %v2051 = vld [vmem:[%s3 + $0x114] sm:$0xf]
      %v2052 = vld [vmem:[%s3 + $0x118] sm:$0xf]
      %v2053 = vld [vmem:[%s3 + $0x11c] sm:$0xf]
      %v2054 = vld [vmem:[%s4] sm:$0x1]
      %v2056 = vperm.slane %v2054, 0
      %v2074 = vunpack.c.l.b16 %v1936
      %v2075 = vunpack.c.l.b16 %v1948
      %v2076 = vunpack.c.l.b16 %v1960
      %v2077 = vunpack.c.l.b16 %v1972
      %v2078 = vunpack.c.l.b16 %v1930
      %v2079 = vunpack.c.l.b16 %v1939
      %v2080 = vunpack.c.l.b16 %v1951
      %v2081 = vunpack.c.l.b16 %v1963
      %v2082 = vunpack.c.l.b16 %v1975
      %v2083 = vunpack.c.l.b16 %v1931
      %v2084 = vunpack.c.l.b16 %v1942
      %v2085 = vunpack.c.l.b16 %v1954
      %v2086 = vunpack.c.l.b16 %v1966
      %v2087 = vunpack.c.l.b16 %v1978
      %v2088 = vunpack.c.l.b16 %v1932
      %v2089 = vunpack.c.l.b16 %v1945
      %v2090 = vunpack.c.l.b16 %v1957
      %v2091 = vunpack.c.l.b16 %v1969
      %v2092 = vunpack.c.l.b16 %v1981
      %v2093 = vunpack.c.l.b16 %v1933
      %v2094 = vrot.slane %v2079, 7
      %v2095 = vsel %vm1102, %v2094, %v2074
      %v2096 = vrot.slane %v2084, 6
      %v2097 = vsel %vm1095, %v2096, %v2095
      %v2098 = vrot.slane %v2089, 5
      %v2099 = vsel %vm1104, %v2098, %v2097
      %v2100 = vrot.slane %v2080, 7
      %v2101 = vsel %vm1102, %v2100, %v2075
      %v2102 = vrot.slane %v2085, 6
      %v2103 = vsel %vm1095, %v2102, %v2101
      %v2104 = vrot.slane %v2090, 5
      %v2105 = vsel %vm1104, %v2104, %v2103
      %v2106 = vrot.slane %v2081, 7
      %v2107 = vsel %vm1102, %v2106, %v2076
      %v2108 = vrot.slane %v2086, 6
      %v2109 = vsel %vm1095, %v2108, %v2107
      %v2110 = vrot.slane %v2091, 5
      %v2111 = vsel %vm1104, %v2110, %v2109
      %v2112 = vrot.slane %v2082, 7
      %v2113 = vsel %vm1102, %v2112, %v2077
      %v2114 = vrot.slane %v2087, 6
      %v2115 = vsel %vm1095, %v2114, %v2113
      %v2116 = vrot.slane %v2092, 5
      %v2117 = vsel %vm1104, %v2116, %v2115
      %v2118 = vrot.slane %v2083, 7
      %v2119 = vsel %vm1102, %v2118, %v2078
      %v2120 = vrot.slane %v2088, 6
      %v2121 = vsel %vm1095, %v2120, %v2119
      %v2122 = vrot.slane %v2093, 5
      %v2123 = vsel %vm1104, %v2122, %v2121
      %v2124 = vpack.c.b16 %v2099, %v2099
      %v2125 = vpack.c.b16 %v2105, %v2105
      %v2126 = vpack.c.b16 %v2111, %v2111
      %v2127 = vpack.c.b16 %v2117, %v2117
      %v2128 = vpack.c.b16 %v2123, %v2123
      %v2205 = vunpack.c.l.b16 %v1982
      %v2206 = vunpack.c.l.b16 %v1983
      %v2207 = vunpack.c.l.b16 %v1984
      %v2208 = vunpack.c.l.b16 %v1985
      %v2209 = vunpack.c.l.b16 %v1986
      %v2210 = vunpack.c.l.b16 %v1987
      %v2211 = vunpack.c.l.b16 %v1988
      %v2212 = vunpack.c.l.b16 %v1989
      %v2213 = vunpack.c.l.b16 %v1990
      %v2214 = vunpack.c.l.b16 %v1991
      %v2215 = vunpack.c.l.b16 %v1992
      %v2216 = vunpack.c.l.b16 %v1993
      %v2217 = vunpack.c.l.b16 %v1994
      %v2218 = vunpack.c.l.b16 %v1995
      %v2219 = vunpack.c.l.b16 %v1996
      %v2220 = vunpack.c.l.b16 %v1997
      %v2221 = vunpack.c.l.b16 %v1998
      %v2222 = vunpack.c.l.b16 %v1999
      %v2223 = vunpack.c.l.b16 %v2000
      %v2224 = vunpack.c.l.b16 %v2001
      %v2225 = vunpack.c.l.b16 %v2002
      %v2226 = vunpack.c.l.b16 %v2003
      %v2227 = vunpack.c.l.b16 %v2004
      %v2228 = vunpack.c.l.b16 %v2005
      %v2229 = vunpack.c.l.b16 %v2006
      %v2230 = vunpack.c.l.b16 %v2007
      %v2231 = vunpack.c.l.b16 %v2008
      %v2232 = vunpack.c.l.b16 %v2009
      %v2233 = vunpack.c.l.b16 %v2010
      %v2234 = vunpack.c.l.b16 %v2011
      %v2235 = vunpack.c.l.b16 %v2012
      %v2236 = vunpack.c.l.b16 %v2013
      %v2237 = vunpack.c.l.b16 %v2014
      %v2238 = vunpack.c.l.b16 %v2015
      %v2239 = vunpack.c.l.b16 %v2016
      %v2240 = vunpack.c.l.b16 %v2017
      %v2241 = vunpack.c.l.b16 %v2018
      %v2242 = vunpack.c.l.b16 %v2019
      %v2243 = vunpack.c.l.b16 %v2020
      %v2244 = vunpack.c.l.b16 %v2021
      %v2245 = vunpack.c.l.b16 %v2022
      %v2246 = vunpack.c.l.b16 %v2023
      %v2247 = vunpack.c.l.b16 %v2024
      %v2248 = vunpack.c.l.b16 %v2025
      %v2249 = vunpack.c.l.b16 %v2026
      %v2250 = vunpack.c.l.b16 %v2027
      %v2251 = vunpack.c.l.b16 %v2028
      %v2252 = vunpack.c.l.b16 %v2029
      %v2253 = vunpack.c.l.b16 %v2030
      %v2254 = vunpack.c.l.b16 %v2031
      %v2255 = vunpack.c.l.b16 %v2032
      %v2256 = vunpack.c.l.b16 %v2033
      %v2257 = vunpack.c.l.b16 %v2034
      %v2258 = vunpack.c.l.b16 %v2035
      %v2259 = vunpack.c.l.b16 %v2036
      %v2260 = vunpack.c.l.b16 %v2037
      %v2261 = vunpack.c.l.b16 %v2038
      %v2262 = vunpack.c.l.b16 %v2039
      %v2263 = vunpack.c.l.b16 %v2040
      %v2264 = vunpack.c.l.b16 %v2041
      %v2265 = vunpack.c.l.b16 %v2042
      %v2266 = vunpack.c.l.b16 %v2043
      %v2267 = vunpack.c.l.b16 %v2044
      %v2268 = vunpack.c.l.b16 %v2045
      %v2269 = vunpack.c.l.b16 %v2046
      %v2270 = vunpack.c.l.b16 %v2047
      %v2271 = vunpack.c.l.b16 %v2048
      %v2272 = vunpack.c.l.b16 %v2049
      %v2273 = vunpack.c.l.b16 %v2050
      %v2274 = vunpack.c.l.b16 %v2051
      %v2275 = vunpack.c.l.b16 %v2052
      %v2276 = vunpack.c.l.b16 %v2053
      %v2277 = vpack.c.b16 %v2206, %v2205
      %v2278 = vpack.c.b16 %v2208, %v2207
      %v2279 = vpack.c.b16 %v2210, %v2209
      %v2280 = vpack.c.b16 %v2212, %v2211
      %v2281 = vpack.c.b16 %v2214, %v2213
      %v2282 = vpack.c.b16 %v2216, %v2215
      %v2283 = vpack.c.b16 %v2218, %v2217
      %v2284 = vpack.c.b16 %v2220, %v2219
      %v2285 = vpack.c.b16 %v2222, %v2221
      %v2286 = vpack.c.b16 %v2224, %v2223
      %v2287 = vpack.c.b16 %v2226, %v2225
      %v2288 = vpack.c.b16 %v2228, %v2227
      %v2289 = vpack.c.b16 %v2230, %v2229
      %v2290 = vpack.c.b16 %v2232, %v2231
      %v2291 = vpack.c.b16 %v2234, %v2233
      %v2292 = vpack.c.b16 %v2236, %v2235
      %v2293 = vpack.c.b16 %v2238, %v2237
      %v2294 = vpack.c.b16 %v2240, %v2239
      %v2295 = vpack.c.b16 %v2242, %v2241
      %v2296 = vpack.c.b16 %v2244, %v2243
      %v2297 = vpack.c.b16 %v2246, %v2245
      %v2298 = vpack.c.b16 %v2248, %v2247
      %v2299 = vpack.c.b16 %v2250, %v2249
      %v2300 = vpack.c.b16 %v2252, %v2251
      %v2301 = vpack.c.b16 %v2254, %v2253
      %v2302 = vpack.c.b16 %v2256, %v2255
      %v2303 = vpack.c.b16 %v2258, %v2257
      %v2304 = vpack.c.b16 %v2260, %v2259
      %v2305 = vpack.c.b16 %v2262, %v2261
      %v2306 = vpack.c.b16 %v2264, %v2263
      %v2307 = vpack.c.b16 %v2266, %v2265
      %v2308 = vpack.c.b16 %v2268, %v2267
      %v2309 = vpack.c.b16 %v2270, %v2269
      %v2310 = vpack.c.b16 %v2272, %v2271
      %v2311 = vpack.c.b16 %v2274, %v2273
      %v2312 = vpack.c.b16 %v2276, %v2275
      %v2350 = vsel %vm923, %v2128, 0
      %2352 = vmatpush.bf16.msra.mxu0 %v2284
      %2353 = vmatpush.bf16.msra.mxu0 %v2283
      %2354 = vmatpush.bf16.msra.mxu0 %v2282
      %2355 = vmatpush.bf16.msra.mxu0 %v2281
      %2356 = vmatpush.bf16.msra.mxu0 %v2280
      %2357 = vmatpush.bf16.msra.mxu0 %v2279
      %2358 = vmatpush.bf16.msra.mxu0 %v2278
      %2359 = vmatpush.bf16.msra.mxu0 %v2277
      %2360 = vmatmul.bf16.gmra.mxu0 %v2124
      %v2361 = vpop.f32.mrf.mxu0
      %v2362 = vadd.f32 %v2056, %v2361
      %v2363 = vpop.f32.mrf.mxu0
      %2364 = vdwg.mxu0
      %2365 = vmatpush.bf16.msra.mxu0 %v2292
      %2366 = vmatpush.bf16.msra.mxu0 %v2291
      %2367 = vmatpush.bf16.msra.mxu0 %v2290
      %2368 = vmatpush.bf16.msra.mxu0 %v2289
      %2369 = vmatpush.bf16.msra.mxu0 %v2288
      %2370 = vmatpush.bf16.msra.mxu0 %v2287
      %2371 = vmatpush.bf16.msra.mxu0 %v2286
      %2372 = vmatpush.bf16.msra.mxu0 %v2285
      %2373 = vmatmul.bf16.gmra.mxu0 %v2125
      %v2374 = vpop.f32.mrf.mxu0
      %v2375 = vadd.f32 %v2362, %v2374
      %v2376 = vpop.f32.mrf.mxu0
      %2377 = vdwg.mxu0
      %2378 = vmatpush.bf16.msra.mxu0 %v2300
      %2379 = vmatpush.bf16.msra.mxu0 %v2299
      %2380 = vmatpush.bf16.msra.mxu0 %v2298
      %2381 = vmatpush.bf16.msra.mxu0 %v2297
      %2382 = vmatpush.bf16.msra.mxu0 %v2296
      %2383 = vmatpush.bf16.msra.mxu0 %v2295
      %2384 = vmatpush.bf16.msra.mxu0 %v2294
      %2385 = vmatpush.bf16.msra.mxu0 %v2293
      %2386 = vmatmul.bf16.gmra.mxu0 %v2126
      %v2387 = vpop.f32.mrf.mxu0
      %v2388 = vadd.f32 %v2375, %v2387
      %v2389 = vpop.f32.mrf.mxu0
      %2390 = vdwg.mxu0
      %2391 = vmatpush.bf16.msra.mxu0 %v2308
      %2392 = vmatpush.bf16.msra.mxu0 %v2307
      %2393 = vmatpush.bf16.msra.mxu0 %v2306
      %2394 = vmatpush.bf16.msra.mxu0 %v2305
      %2395 = vmatpush.bf16.msra.mxu0 %v2304
      %2396 = vmatpush.bf16.msra.mxu0 %v2303
      %2397 = vmatpush.bf16.msra.mxu0 %v2302
      %2398 = vmatpush.bf16.msra.mxu0 %v2301
      %2399 = vmatmul.bf16.gmra.mxu0 %v2127
      %v2400 = vpop.f32.mrf.mxu0
      %v2401 = vadd.f32 %v2388, %v2400
      %v2402 = vpop.f32.mrf.mxu0
      %2403 = vdwg.mxu0
      %2404 = vmatpush.bf16.msra.mxu0 0
      %2405 = vmatpush.bf16.msra.mxu0 0
      %2406 = vmatpush.bf16.msra.mxu0 0
      %2407 = vmatpush.bf16.msra.mxu0 0
      %2408 = vmatpush.bf16.msra.mxu0 %v2312
      %2409 = vmatpush.bf16.msra.mxu0 %v2311
      %2410 = vmatpush.bf16.msra.mxu0 %v2310
      %2411 = vmatpush.bf16.msra.mxu0 %v2309
      %2412 = vmatmul.bf16.gmra.mxu0 %v2350
      %v2413 = vpop.f32.mrf.mxu0
      %v2414 = vadd.f32 %v2401, %v2413
      %v2415 = vpop.f32.mrf.mxu0
      %2416 = vdwg.mxu0
      %v2417 = vmax.f32 %v2414, 0.0
      %v2418 = vpack.c.bf16 %v2417, %v2417
      %v2419 = vld [vmem:[%s5] sm:$0xff]
      %v2420 = vld [vmem:[%s5 + $0x8] sm:$0xff]
      %v2421 = vld [vmem:[%s5 + $0x10] sm:$0xff]
      %v2422 = vld [vmem:[%s5 + $0x18] sm:$0xff]
      %v2423 = vld [vmem:[%s5 + $0x20] sm:$0xff]
      %v2424 = vld [vmem:[%s5 + $0x28] sm:$0xff]
      %v2425 = vld [vmem:[%s5 + $0x30] sm:$0xff]
      %v2426 = vld [vmem:[%s5 + $0x38] sm:$0xff]
      %v2427 = vld [vmem:[%s5 + $0x40] sm:$0xff]
      %v2428 = vld [vmem:[%s5 + $0x48] sm:$0xff]
      %v2429 = vld [vmem:[%s5 + $0x50] sm:$0xff]
      %v2430 = vld [vmem:[%s5 + $0x58] sm:$0xff]
      %v2431 = vld [vmem:[%s5 + $0x60] sm:$0xff]
      %v2432 = vld [vmem:[%s5 + $0x68] sm:$0xff]
      %v2433 = vld [vmem:[%s5 + $0x70] sm:$0xff]
      %v2434 = vld [vmem:[%s5 + $0x78] sm:$0xff]
      %v2435 = vld [vmem:[%s5 + $0x80] sm:$0xff]
      %v2436 = vld [vmem:[%s5 + $0x88] sm:$0xff]
      %v2437 = vld [vmem:[%s5 + $0x90] sm:$0xff]
      %v2438 = vld [vmem:[%s5 + $0x98] sm:$0xff]
      %v2439 = vld [vmem:[%s5 + $0xa0] sm:$0xff]
      %v2440 = vld [vmem:[%s5 + $0xa8] sm:$0xff]
      %v2441 = vld [vmem:[%s5 + $0xb0] sm:$0xff]
      %v2442 = vld [vmem:[%s5 + $0xb8] sm:$0xff]
      %v2443 = vld [vmem:[%s5 + $0xc0] sm:$0xff]
      %v2444 = vld [vmem:[%s5 + $0xc8] sm:$0xff]
      %v2445 = vld [vmem:[%s5 + $0xd0] sm:$0xff]
      %v2446 = vld [vmem:[%s5 + $0xd8] sm:$0xff]
      %v2447 = vld [vmem:[%s5 + $0xe0] sm:$0xff]
      %v2448 = vld [vmem:[%s5 + $0xe8] sm:$0xff]
      %v2449 = vld [vmem:[%s5 + $0xf0] sm:$0xff]
      %v2450 = vld [vmem:[%s5 + $0xf8] sm:$0xff]
      %v2451 = vld [vmem:[%s6] sm:$0xff]
      %v2453 = vperm.slane %v2451, 0
      %v2454 = vperm.slane %v2451, 1
      %v2455 = vperm.slane %v2451, 2
      %v2456 = vperm.slane %v2451, 3
      %v2457 = vperm.slane %v2451, 4
      %v2458 = vperm.slane %v2451, 5
      %v2459 = vperm.slane %v2451, 6
      %v2460 = vperm.slane %v2451, 7
      %v2501 = vunpack.c.l.b16 %v2419
      %v2502 = vunpack.c.h.b16 %v2419
      %v2503 = vunpack.c.l.b16 %v2420
      %v2504 = vunpack.c.h.b16 %v2420
      %v2505 = vunpack.c.l.b16 %v2421
      %v2506 = vunpack.c.h.b16 %v2421
      %v2507 = vunpack.c.l.b16 %v2422
      %v2508 = vunpack.c.h.b16 %v2422
      %v2509 = vunpack.c.l.b16 %v2423
      %v2510 = vunpack.c.h.b16 %v2423
      %v2511 = vunpack.c.l.b16 %v2424
      %v2512 = vunpack.c.h.b16 %v2424
      %v2513 = vunpack.c.l.b16 %v2425
      %v2514 = vunpack.c.h.b16 %v2425
      %v2515 = vunpack.c.l.b16 %v2426
      %v2516 = vunpack.c.h.b16 %v2426
      %v2517 = vunpack.c.l.b16 %v2427
      %v2518 = vunpack.c.h.b16 %v2427
      %v2519 = vunpack.c.l.b16 %v2428
      %v2520 = vunpack.c.h.b16 %v2428
      %v2521 = vunpack.c.l.b16 %v2429
      %v2522 = vunpack.c.h.b16 %v2429
      %v2523 = vunpack.c.l.b16 %v2430
      %v2524 = vunpack.c.h.b16 %v2430
      %v2525 = vunpack.c.l.b16 %v2431
      %v2526 = vunpack.c.h.b16 %v2431
      %v2527 = vunpack.c.l.b16 %v2432
      %v2528 = vunpack.c.h.b16 %v2432
      %v2529 = vunpack.c.l.b16 %v2433
      %v2530 = vunpack.c.h.b16 %v2433
      %v2531 = vunpack.c.l.b16 %v2434
      %v2532 = vunpack.c.h.b16 %v2434
      %v2533 = vunpack.c.l.b16 %v2435
      %v2534 = vunpack.c.h.b16 %v2435
      %v2535 = vunpack.c.l.b16 %v2436
      %v2536 = vunpack.c.h.b16 %v2436
      %v2537 = vunpack.c.l.b16 %v2437
      %v2538 = vunpack.c.h.b16 %v2437
      %v2539 = vunpack.c.l.b16 %v2438
      %v2540 = vunpack.c.h.b16 %v2438
      %v2541 = vunpack.c.l.b16 %v2439
      %v2542 = vunpack.c.h.b16 %v2439
      %v2543 = vunpack.c.l.b16 %v2440
      %v2544 = vunpack.c.h.b16 %v2440
      %v2545 = vunpack.c.l.b16 %v2441
      %v2546 = vunpack.c.h.b16 %v2441
      %v2547 = vunpack.c.l.b16 %v2442
      %v2548 = vunpack.c.h.b16 %v2442
      %v2549 = vunpack.c.l.b16 %v2443
      %v2550 = vunpack.c.h.b16 %v2443
      %v2551 = vunpack.c.l.b16 %v2444
      %v2552 = vunpack.c.h.b16 %v2444
      %v2553 = vunpack.c.l.b16 %v2445
      %v2554 = vunpack.c.h.b16 %v2445
      %v2555 = vunpack.c.l.b16 %v2446
      %v2556 = vunpack.c.h.b16 %v2446
      %v2557 = vunpack.c.l.b16 %v2447
      %v2558 = vunpack.c.h.b16 %v2447
      %v2559 = vunpack.c.l.b16 %v2448
      %v2560 = vunpack.c.h.b16 %v2448
      %v2561 = vunpack.c.l.b16 %v2449
      %v2562 = vunpack.c.h.b16 %v2449
      %v2563 = vunpack.c.l.b16 %v2450
      %v2564 = vunpack.c.h.b16 %v2450
      %v2565 = vpack.c.b16 %v2509, %v2501
      %v2566 = vpack.c.b16 %v2510, %v2502
      %v2567 = vpack.c.b16 %v2511, %v2503
      %v2568 = vpack.c.b16 %v2512, %v2504
      %v2569 = vpack.c.b16 %v2513, %v2505
      %v2570 = vpack.c.b16 %v2514, %v2506
      %v2571 = vpack.c.b16 %v2515, %v2507
      %v2572 = vpack.c.b16 %v2516, %v2508
      %v2573 = vpack.c.b16 %v2525, %v2517
      %v2574 = vpack.c.b16 %v2526, %v2518
      %v2575 = vpack.c.b16 %v2527, %v2519
      %v2576 = vpack.c.b16 %v2528, %v2520
      %v2577 = vpack.c.b16 %v2529, %v2521
      %v2578 = vpack.c.b16 %v2530, %v2522
      %v2579 = vpack.c.b16 %v2531, %v2523
      %v2580 = vpack.c.b16 %v2532, %v2524
      %v2581 = vpack.c.b16 %v2541, %v2533
      %v2582 = vpack.c.b16 %v2542, %v2534
      %v2583 = vpack.c.b16 %v2543, %v2535
      %v2584 = vpack.c.b16 %v2544, %v2536
      %v2585 = vpack.c.b16 %v2545, %v2537
      %v2586 = vpack.c.b16 %v2546, %v2538
      %v2587 = vpack.c.b16 %v2547, %v2539
      %v2588 = vpack.c.b16 %v2548, %v2540
      %v2589 = vpack.c.b16 %v2557, %v2549
      %v2590 = vpack.c.b16 %v2558, %v2550
      %v2591 = vpack.c.b16 %v2559, %v2551
      %v2592 = vpack.c.b16 %v2560, %v2552
      %v2593 = vpack.c.b16 %v2561, %v2553
      %v2594 = vpack.c.b16 %v2562, %v2554
      %v2595 = vpack.c.b16 %v2563, %v2555
      %v2596 = vpack.c.b16 %v2564, %v2556
      %v2630 = vsel %vm923, %v2418, 0
      %2632 = vmatpush.bf16.msra.mxu0 0
      %2633 = vmatpush.bf16.msra.mxu0 0
      %2634 = vmatpush.bf16.msra.mxu0 0
      %2635 = vmatpush.bf16.msra.mxu0 0
      %2636 = vmatpush.bf16.msra.mxu0 %v2589
      %2637 = vmatpush.bf16.msra.mxu0 %v2581
      %2638 = vmatpush.bf16.msra.mxu0 %v2573
      %2639 = vmatpush.bf16.msra.mxu0 %v2565
      %2640 = vmatmul.bf16.gmra.mxu0 %v2630
      %v2641 = vpop.f32.mrf.mxu0
      %v2642 = vadd.f32 %v2453, %v2641
      %v2643 = vpop.f32.mrf.mxu0
      %2644 = vdwg.mxu0
      %2645 = vmatpush.bf16.msra.mxu0 0
      %2646 = vmatpush.bf16.msra.mxu0 0
      %2647 = vmatpush.bf16.msra.mxu0 0
      %2648 = vmatpush.bf16.msra.mxu0 0
      %2649 = vmatpush.bf16.msra.mxu0 %v2590
      %2650 = vmatpush.bf16.msra.mxu0 %v2582
      %2651 = vmatpush.bf16.msra.mxu0 %v2574
      %2652 = vmatpush.bf16.msra.mxu0 %v2566
      %2653 = vmatmul.bf16.gmra.mxu0 %v2630
      %v2654 = vpop.f32.mrf.mxu0
      %v2655 = vadd.f32 %v2454, %v2654
      %v2656 = vpop.f32.mrf.mxu0
      %2657 = vdwg.mxu0
      %2658 = vmatpush.bf16.msra.mxu0 0
      %2659 = vmatpush.bf16.msra.mxu0 0
      %2660 = vmatpush.bf16.msra.mxu0 0
      %2661 = vmatpush.bf16.msra.mxu0 0
      %2662 = vmatpush.bf16.msra.mxu0 %v2591
      %2663 = vmatpush.bf16.msra.mxu0 %v2583
      %2664 = vmatpush.bf16.msra.mxu0 %v2575
      %2665 = vmatpush.bf16.msra.mxu0 %v2567
      %2666 = vmatmul.bf16.gmra.mxu0 %v2630
      %v2667 = vpop.f32.mrf.mxu0
      %v2668 = vadd.f32 %v2455, %v2667
      %v2669 = vpop.f32.mrf.mxu0
      %2670 = vdwg.mxu0
      %2671 = vmatpush.bf16.msra.mxu0 0
      %2672 = vmatpush.bf16.msra.mxu0 0
      %2673 = vmatpush.bf16.msra.mxu0 0
      %2674 = vmatpush.bf16.msra.mxu0 0
      %2675 = vmatpush.bf16.msra.mxu0 %v2592
      %2676 = vmatpush.bf16.msra.mxu0 %v2584
      %2677 = vmatpush.bf16.msra.mxu0 %v2576
      %2678 = vmatpush.bf16.msra.mxu0 %v2568
      %2679 = vmatmul.bf16.gmra.mxu0 %v2630
      %v2680 = vpop.f32.mrf.mxu0
      %v2681 = vadd.f32 %v2456, %v2680
      %v2682 = vpop.f32.mrf.mxu0
      %2683 = vdwg.mxu0
      %2684 = vmatpush.bf16.msra.mxu0 0
      %2685 = vmatpush.bf16.msra.mxu0 0
      %2686 = vmatpush.bf16.msra.mxu0 0
      %2687 = vmatpush.bf16.msra.mxu0 0
      %2688 = vmatpush.bf16.msra.mxu0 %v2593
      %2689 = vmatpush.bf16.msra.mxu0 %v2585
      %2690 = vmatpush.bf16.msra.mxu0 %v2577
      %2691 = vmatpush.bf16.msra.mxu0 %v2569
      %2692 = vmatmul.bf16.gmra.mxu0 %v2630
      %v2693 = vpop.f32.mrf.mxu0
      %v2694 = vadd.f32 %v2457, %v2693
      %v2695 = vpop.f32.mrf.mxu0
      %2696 = vdwg.mxu0
      %2697 = vmatpush.bf16.msra.mxu0 0
      %2698 = vmatpush.bf16.msra.mxu0 0
      %2699 = vmatpush.bf16.msra.mxu0 0
      %2700 = vmatpush.bf16.msra.mxu0 0
      %2701 = vmatpush.bf16.msra.mxu0 %v2594
      %2702 = vmatpush.bf16.msra.mxu0 %v2586
      %2703 = vmatpush.bf16.msra.mxu0 %v2578
      %2704 = vmatpush.bf16.msra.mxu0 %v2570
      %2705 = vmatmul.bf16.gmra.mxu0 %v2630
      %v2706 = vpop.f32.mrf.mxu0
      %v2707 = vadd.f32 %v2458, %v2706
      %v2708 = vpop.f32.mrf.mxu0
      %2709 = vdwg.mxu0
      %2710 = vmatpush.bf16.msra.mxu0 0
      %2711 = vmatpush.bf16.msra.mxu0 0
      %2712 = vmatpush.bf16.msra.mxu0 0
      %2713 = vmatpush.bf16.msra.mxu0 0
      %2714 = vmatpush.bf16.msra.mxu0 %v2595
      %2715 = vmatpush.bf16.msra.mxu0 %v2587
      %2716 = vmatpush.bf16.msra.mxu0 %v2579
      %2717 = vmatpush.bf16.msra.mxu0 %v2571
      %2718 = vmatmul.bf16.gmra.mxu0 %v2630
      %v2719 = vpop.f32.mrf.mxu0
      %v2720 = vadd.f32 %v2459, %v2719
      %v2721 = vpop.f32.mrf.mxu0
      %2722 = vdwg.mxu0
      %2723 = vmatpush.bf16.msra.mxu0 0
      %2724 = vmatpush.bf16.msra.mxu0 0
      %2725 = vmatpush.bf16.msra.mxu0 0
      %2726 = vmatpush.bf16.msra.mxu0 0
      %2727 = vmatpush.bf16.msra.mxu0 %v2596
      %2728 = vmatpush.bf16.msra.mxu0 %v2588
      %2729 = vmatpush.bf16.msra.mxu0 %v2580
      %2730 = vmatpush.bf16.msra.mxu0 %v2572
      %2731 = vmatmul.bf16.gmra.mxu0 %v2630
      %v2732 = vpop.f32.mrf.mxu0
      %v2733 = vadd.f32 %v2460, %v2732
      %v2734 = vpop.f32.mrf.mxu0
      %2735 = vdwg.mxu0
      %v2736 = vmax.f32 %v2642, 0.0
      %v2737 = vmax.f32 %v2655, 0.0
      %v2738 = vmax.f32 %v2668, 0.0
      %v2739 = vmax.f32 %v2681, 0.0
      %v2740 = vmax.f32 %v2694, 0.0
      %v2741 = vmax.f32 %v2707, 0.0
      %v2742 = vmax.f32 %v2720, 0.0
      %v2743 = vmax.f32 %v2733, 0.0
      %v2744 = vpack.c.bf16 %v2736, %v2736
      %v2745 = vpack.c.bf16 %v2737, %v2737
      %v2746 = vpack.c.bf16 %v2738, %v2738
      %v2747 = vpack.c.bf16 %v2739, %v2739
      %v2748 = vpack.c.bf16 %v2740, %v2740
      %v2749 = vpack.c.bf16 %v2741, %v2741
      %v2750 = vpack.c.bf16 %v2742, %v2742
      %v2751 = vpack.c.bf16 %v2743, %v2743
      %v2752 = vld [vmem:[%s7] sm:$0xff]
      %v2753 = vld [vmem:[%s7 + $0x8] sm:$0xff]
      %v2754 = vld [vmem:[%s7 + $0x10] sm:$0xff]
      %v2755 = vld [vmem:[%s7 + $0x18] sm:$0xff]
      %v2756 = vld [vmem:[%s7 + $0x20] sm:$0xff]
      %v2757 = vld [vmem:[%s7 + $0x28] sm:$0xff]
      %v2758 = vld [vmem:[%s7 + $0x30] sm:$0xff]
      %v2759 = vld [vmem:[%s7 + $0x38] sm:$0xff]
      %v2760 = vld [vmem:[%s7 + $0x40] sm:$0xff]
      %v2761 = vld [vmem:[%s7 + $0x48] sm:$0xff]
      %v2762 = vld [vmem:[%s7 + $0x50] sm:$0xff]
      %v2763 = vld [vmem:[%s7 + $0x58] sm:$0xff]
      %v2764 = vld [vmem:[%s7 + $0x60] sm:$0xff]
      %v2765 = vld [vmem:[%s7 + $0x68] sm:$0xff]
      %v2766 = vld [vmem:[%s7 + $0x70] sm:$0xff]
      %v2767 = vld [vmem:[%s7 + $0x78] sm:$0xff]
      %v2768 = vld [vmem:[%s7 + $0x80] sm:$0xff]
      %v2769 = vld [vmem:[%s7 + $0x88] sm:$0xff]
      %v2770 = vld [vmem:[%s7 + $0x90] sm:$0xff]
      %v2771 = vld [vmem:[%s7 + $0x98] sm:$0xff]
      %v2772 = vld [vmem:[%s7 + $0xa0] sm:$0xff]
      %v2773 = vld [vmem:[%s7 + $0xa8] sm:$0xff]
      %v2774 = vld [vmem:[%s7 + $0xb0] sm:$0xff]
      %v2775 = vld [vmem:[%s7 + $0xb8] sm:$0xff]
      %v2776 = vld [vmem:[%s7 + $0xc0] sm:$0xff]
      %v2777 = vld [vmem:[%s7 + $0xc8] sm:$0xff]
      %v2778 = vld [vmem:[%s7 + $0xd0] sm:$0xff]
      %v2779 = vld [vmem:[%s7 + $0xd8] sm:$0xff]
      %v2780 = vld [vmem:[%s7 + $0xe0] sm:$0xff]
      %v2781 = vld [vmem:[%s7 + $0xe8] sm:$0xff]
      %v2782 = vld [vmem:[%s7 + $0xf0] sm:$0xff]
      %v2783 = vld [vmem:[%s7 + $0xf8] sm:$0xff]
      %v2784 = vld [vmem:[%s7 + $0x100] sm:$0xff]
      %v2785 = vld [vmem:[%s7 + $0x108] sm:$0xff]
      %v2786 = vld [vmem:[%s7 + $0x110] sm:$0xff]
      %v2787 = vld [vmem:[%s7 + $0x118] sm:$0xff]
      %v2788 = vld [vmem:[%s7 + $0x120] sm:$0xff]
      %v2789 = vld [vmem:[%s7 + $0x128] sm:$0xff]
      %v2790 = vld [vmem:[%s7 + $0x130] sm:$0xff]
      %v2791 = vld [vmem:[%s7 + $0x138] sm:$0xff]
      %v2792 = vld [vmem:[%s7 + $0x140] sm:$0xff]
      %v2793 = vld [vmem:[%s7 + $0x148] sm:$0xff]
      %v2794 = vld [vmem:[%s7 + $0x150] sm:$0xff]
      %v2795 = vld [vmem:[%s7 + $0x158] sm:$0xff]
      %v2796 = vld [vmem:[%s7 + $0x160] sm:$0xff]
      %v2797 = vld [vmem:[%s7 + $0x168] sm:$0xff]
      %v2798 = vld [vmem:[%s7 + $0x170] sm:$0xff]
      %v2799 = vld [vmem:[%s7 + $0x178] sm:$0xff]
      %v2800 = vld [vmem:[%s7 + $0x180] sm:$0xff]
      %v2801 = vld [vmem:[%s7 + $0x188] sm:$0xff]
      %v2802 = vld [vmem:[%s7 + $0x190] sm:$0xff]
      %v2803 = vld [vmem:[%s7 + $0x198] sm:$0xff]
      %v2804 = vld [vmem:[%s7 + $0x1a0] sm:$0xff]
      %v2805 = vld [vmem:[%s7 + $0x1a8] sm:$0xff]
      %v2806 = vld [vmem:[%s7 + $0x1b0] sm:$0xff]
      %v2807 = vld [vmem:[%s7 + $0x1b8] sm:$0xff]
      %v2808 = vld [vmem:[%s7 + $0x1c0] sm:$0xff]
      %v2809 = vld [vmem:[%s7 + $0x1c8] sm:$0xff]
      %v2810 = vld [vmem:[%s7 + $0x1d0] sm:$0xff]
      %v2811 = vld [vmem:[%s7 + $0x1d8] sm:$0xff]
      %v2812 = vld [vmem:[%s7 + $0x1e0] sm:$0xff]
      %v2813 = vld [vmem:[%s7 + $0x1e8] sm:$0xff]
      %v2814 = vld [vmem:[%s7 + $0x1f0] sm:$0xff]
      %v2815 = vld [vmem:[%s7 + $0x1f8] sm:$0xff]
      %v2816 = vld [vmem:[%s7 + $0x200] sm:$0xff]
      %v2817 = vld [vmem:[%s7 + $0x208] sm:$0xff]
      %v2818 = vld [vmem:[%s7 + $0x210] sm:$0xff]
      %v2819 = vld [vmem:[%s7 + $0x218] sm:$0xff]
      %v2820 = vld [vmem:[%s7 + $0x220] sm:$0xff]
      %v2821 = vld [vmem:[%s7 + $0x228] sm:$0xff]
      %v2822 = vld [vmem:[%s7 + $0x230] sm:$0xff]
      %v2823 = vld [vmem:[%s7 + $0x238] sm:$0xff]
      %v2824 = vld [vmem:[%s7 + $0x240] sm:$0xff]
      %v2825 = vld [vmem:[%s7 + $0x248] sm:$0xff]
      %v2826 = vld [vmem:[%s7 + $0x250] sm:$0xff]
      %v2827 = vld [vmem:[%s7 + $0x258] sm:$0xff]
      %v2828 = vld [vmem:[%s7 + $0x260] sm:$0xff]
      %v2829 = vld [vmem:[%s7 + $0x268] sm:$0xff]
      %v2830 = vld [vmem:[%s7 + $0x270] sm:$0xff]
      %v2831 = vld [vmem:[%s7 + $0x278] sm:$0xff]
      %v2832 = vld [vmem:[%s7 + $0x280] sm:$0xff]
      %v2833 = vld [vmem:[%s7 + $0x288] sm:$0xff]
      %v2834 = vld [vmem:[%s7 + $0x290] sm:$0xff]
      %v2835 = vld [vmem:[%s7 + $0x298] sm:$0xff]
      %v2836 = vld [vmem:[%s7 + $0x2a0] sm:$0xff]
      %v2837 = vld [vmem:[%s7 + $0x2a8] sm:$0xff]
      %v2838 = vld [vmem:[%s7 + $0x2b0] sm:$0xff]
      %v2839 = vld [vmem:[%s7 + $0x2b8] sm:$0xff]
      %v2840 = vld [vmem:[%s7 + $0x2c0] sm:$0xff]
      %v2841 = vld [vmem:[%s7 + $0x2c8] sm:$0xff]
      %v2842 = vld [vmem:[%s7 + $0x2d0] sm:$0xff]
      %v2843 = vld [vmem:[%s7 + $0x2d8] sm:$0xff]
      %v2844 = vld [vmem:[%s7 + $0x2e0] sm:$0xff]
      %v2845 = vld [vmem:[%s7 + $0x2e8] sm:$0xff]
      %v2846 = vld [vmem:[%s7 + $0x2f0] sm:$0xff]
      %v2847 = vld [vmem:[%s7 + $0x2f8] sm:$0xff]
      %v2848 = vld [vmem:[%s7 + $0x300] sm:$0xff]
      %v2849 = vld [vmem:[%s7 + $0x308] sm:$0xff]
      %v2850 = vld [vmem:[%s7 + $0x310] sm:$0xff]
      %v2851 = vld [vmem:[%s7 + $0x318] sm:$0xff]
      %v2852 = vld [vmem:[%s7 + $0x320] sm:$0xff]
      %v2853 = vld [vmem:[%s7 + $0x328] sm:$0xff]
      %v2854 = vld [vmem:[%s7 + $0x330] sm:$0xff]
      %v2855 = vld [vmem:[%s7 + $0x338] sm:$0xff]
      %v2856 = vld [vmem:[%s7 + $0x340] sm:$0xff]
      %v2857 = vld [vmem:[%s7 + $0x348] sm:$0xff]
      %v2858 = vld [vmem:[%s7 + $0x350] sm:$0xff]
      %v2859 = vld [vmem:[%s7 + $0x358] sm:$0xff]
      %v2860 = vld [vmem:[%s7 + $0x360] sm:$0xff]
      %v2861 = vld [vmem:[%s7 + $0x368] sm:$0xff]
      %v2862 = vld [vmem:[%s7 + $0x370] sm:$0xff]
      %v2863 = vld [vmem:[%s7 + $0x378] sm:$0xff]
      %v2864 = vld [vmem:[%s7 + $0x380] sm:$0xff]
      %v2865 = vld [vmem:[%s7 + $0x388] sm:$0xff]
      %v2866 = vld [vmem:[%s7 + $0x390] sm:$0xff]
      %v2867 = vld [vmem:[%s7 + $0x398] sm:$0xff]
      %v2868 = vld [vmem:[%s7 + $0x3a0] sm:$0xff]
      %v2869 = vld [vmem:[%s7 + $0x3a8] sm:$0xff]
      %v2870 = vld [vmem:[%s7 + $0x3b0] sm:$0xff]
      %v2871 = vld [vmem:[%s7 + $0x3b8] sm:$0xff]
      %v2872 = vld [vmem:[%s7 + $0x3c0] sm:$0xff]
      %v2873 = vld [vmem:[%s7 + $0x3c8] sm:$0xff]
      %v2874 = vld [vmem:[%s7 + $0x3d0] sm:$0xff]
      %v2875 = vld [vmem:[%s7 + $0x3d8] sm:$0xff]
      %v2876 = vld [vmem:[%s7 + $0x3e0] sm:$0xff]
      %v2877 = vld [vmem:[%s7 + $0x3e8] sm:$0xff]
      %v2878 = vld [vmem:[%s7 + $0x3f0] sm:$0xff]
      %v2879 = vld [vmem:[%s7 + $0x3f8] sm:$0xff]
      %v2880 = vld [vmem:[%s7 + $0x400] sm:$0xff]
      %v2881 = vld [vmem:[%s7 + $0x408] sm:$0xff]
      %v2882 = vld [vmem:[%s7 + $0x410] sm:$0xff]
      %v2883 = vld [vmem:[%s7 + $0x418] sm:$0xff]
      %v2884 = vld [vmem:[%s7 + $0x420] sm:$0xff]
      %v2885 = vld [vmem:[%s7 + $0x428] sm:$0xff]
      %v2886 = vld [vmem:[%s7 + $0x430] sm:$0xff]
      %v2887 = vld [vmem:[%s7 + $0x438] sm:$0xff]
      %v2888 = vld [vmem:[%s7 + $0x440] sm:$0xff]
      %v2889 = vld [vmem:[%s7 + $0x448] sm:$0xff]
      %v2890 = vld [vmem:[%s7 + $0x450] sm:$0xff]
      %v2891 = vld [vmem:[%s7 + $0x458] sm:$0xff]
      %v2892 = vld [vmem:[%s7 + $0x460] sm:$0xff]
      %v2893 = vld [vmem:[%s7 + $0x468] sm:$0xff]
      %v2894 = vld [vmem:[%s7 + $0x470] sm:$0xff]
      %v2895 = vld [vmem:[%s7 + $0x478] sm:$0xff]
      %v2896 = vld [vmem:[%s7 + $0x480] sm:$0xff]
      %v2897 = vld [vmem:[%s7 + $0x488] sm:$0xff]
      %v2898 = vld [vmem:[%s7 + $0x490] sm:$0xff]
      %v2899 = vld [vmem:[%s7 + $0x498] sm:$0xff]
      %v2900 = vld [vmem:[%s7 + $0x4a0] sm:$0xff]
      %v2901 = vld [vmem:[%s7 + $0x4a8] sm:$0xff]
      %v2902 = vld [vmem:[%s7 + $0x4b0] sm:$0xff]
      %v2903 = vld [vmem:[%s7 + $0x4b8] sm:$0xff]
      %v2904 = vld [vmem:[%s7 + $0x4c0] sm:$0xff]
      %v2905 = vld [vmem:[%s7 + $0x4c8] sm:$0xff]
      %v2906 = vld [vmem:[%s7 + $0x4d0] sm:$0xff]
      %v2907 = vld [vmem:[%s7 + $0x4d8] sm:$0xff]
      %v2908 = vld [vmem:[%s7 + $0x4e0] sm:$0xff]
      %v2909 = vld [vmem:[%s7 + $0x4e8] sm:$0xff]
      %v2910 = vld [vmem:[%s7 + $0x4f0] sm:$0xff]
      %v2911 = vld [vmem:[%s7 + $0x4f8] sm:$0xff]
      %v2912 = vld [vmem:[%s7 + $0x500] sm:$0xff]
      %v2913 = vld [vmem:[%s7 + $0x508] sm:$0xff]
      %v2914 = vld [vmem:[%s7 + $0x510] sm:$0xff]
      %v2915 = vld [vmem:[%s7 + $0x518] sm:$0xff]
      %v2916 = vld [vmem:[%s7 + $0x520] sm:$0xff]
      %v2917 = vld [vmem:[%s7 + $0x528] sm:$0xff]
      %v2918 = vld [vmem:[%s7 + $0x530] sm:$0xff]
      %v2919 = vld [vmem:[%s7 + $0x538] sm:$0xff]
      %v2920 = vld [vmem:[%s7 + $0x540] sm:$0xff]
      %v2921 = vld [vmem:[%s7 + $0x548] sm:$0xff]
      %v2922 = vld [vmem:[%s7 + $0x550] sm:$0xff]
      %v2923 = vld [vmem:[%s7 + $0x558] sm:$0xff]
      %v2924 = vld [vmem:[%s7 + $0x560] sm:$0xff]
      %v2925 = vld [vmem:[%s7 + $0x568] sm:$0xff]
      %v2926 = vld [vmem:[%s7 + $0x570] sm:$0xff]
      %v2927 = vld [vmem:[%s7 + $0x578] sm:$0xff]
      %v2928 = vld [vmem:[%s7 + $0x580] sm:$0xff]
      %v2929 = vld [vmem:[%s7 + $0x588] sm:$0xff]
      %v2930 = vld [vmem:[%s7 + $0x590] sm:$0xff]
      %v2931 = vld [vmem:[%s7 + $0x598] sm:$0xff]
      %v2932 = vld [vmem:[%s7 + $0x5a0] sm:$0xff]
      %v2933 = vld [vmem:[%s7 + $0x5a8] sm:$0xff]
      %v2934 = vld [vmem:[%s7 + $0x5b0] sm:$0xff]
      %v2935 = vld [vmem:[%s7 + $0x5b8] sm:$0xff]
      %v2936 = vld [vmem:[%s7 + $0x5c0] sm:$0xff]
      %v2937 = vld [vmem:[%s7 + $0x5c8] sm:$0xff]
      %v2938 = vld [vmem:[%s7 + $0x5d0] sm:$0xff]
      %v2939 = vld [vmem:[%s7 + $0x5d8] sm:$0xff]
      %v2940 = vld [vmem:[%s7 + $0x5e0] sm:$0xff]
      %v2941 = vld [vmem:[%s7 + $0x5e8] sm:$0xff]
      %v2942 = vld [vmem:[%s7 + $0x5f0] sm:$0xff]
      %v2943 = vld [vmem:[%s7 + $0x5f8] sm:$0xff]
      %v2944 = vld [vmem:[%s7 + $0x600] sm:$0xff]
      %v2945 = vld [vmem:[%s7 + $0x608] sm:$0xff]
      %v2946 = vld [vmem:[%s7 + $0x610] sm:$0xff]
      %v2947 = vld [vmem:[%s7 + $0x618] sm:$0xff]
      %v2948 = vld [vmem:[%s7 + $0x620] sm:$0xff]
      %v2949 = vld [vmem:[%s7 + $0x628] sm:$0xff]
      %v2950 = vld [vmem:[%s7 + $0x630] sm:$0xff]
      %v2951 = vld [vmem:[%s7 + $0x638] sm:$0xff]
      %v2952 = vld [vmem:[%s7 + $0x640] sm:$0xff]
      %v2953 = vld [vmem:[%s7 + $0x648] sm:$0xff]
      %v2954 = vld [vmem:[%s7 + $0x650] sm:$0xff]
      %v2955 = vld [vmem:[%s7 + $0x658] sm:$0xff]
      %v2956 = vld [vmem:[%s7 + $0x660] sm:$0xff]
      %v2957 = vld [vmem:[%s7 + $0x668] sm:$0xff]
      %v2958 = vld [vmem:[%s7 + $0x670] sm:$0xff]
      %v2959 = vld [vmem:[%s7 + $0x678] sm:$0xff]
      %v2960 = vld [vmem:[%s7 + $0x680] sm:$0xff]
      %v2961 = vld [vmem:[%s7 + $0x688] sm:$0xff]
      %v2962 = vld [vmem:[%s7 + $0x690] sm:$0xff]
      %v2963 = vld [vmem:[%s7 + $0x698] sm:$0xff]
      %v2964 = vld [vmem:[%s7 + $0x6a0] sm:$0xff]
      %v2965 = vld [vmem:[%s7 + $0x6a8] sm:$0xff]
      %v2966 = vld [vmem:[%s7 + $0x6b0] sm:$0xff]
      %v2967 = vld [vmem:[%s7 + $0x6b8] sm:$0xff]
      %v2968 = vld [vmem:[%s7 + $0x6c0] sm:$0xff]
      %v2969 = vld [vmem:[%s7 + $0x6c8] sm:$0xff]
      %v2970 = vld [vmem:[%s7 + $0x6d0] sm:$0xff]
      %v2971 = vld [vmem:[%s7 + $0x6d8] sm:$0xff]
      %v2972 = vld [vmem:[%s7 + $0x6e0] sm:$0xff]
      %v2973 = vld [vmem:[%s7 + $0x6e8] sm:$0xff]
      %v2974 = vld [vmem:[%s7 + $0x6f0] sm:$0xff]
      %v2975 = vld [vmem:[%s7 + $0x6f8] sm:$0xff]
      %v2976 = vld [vmem:[%s7 + $0x700] sm:$0xff]
      %v2977 = vld [vmem:[%s7 + $0x708] sm:$0xff]
      %v2978 = vld [vmem:[%s7 + $0x710] sm:$0xff]
      %v2979 = vld [vmem:[%s7 + $0x718] sm:$0xff]
      %v2980 = vld [vmem:[%s7 + $0x720] sm:$0xff]
      %v2981 = vld [vmem:[%s7 + $0x728] sm:$0xff]
      %v2982 = vld [vmem:[%s7 + $0x730] sm:$0xff]
      %v2983 = vld [vmem:[%s7 + $0x738] sm:$0xff]
      %v2984 = vld [vmem:[%s7 + $0x740] sm:$0xff]
      %v2985 = vld [vmem:[%s7 + $0x748] sm:$0xff]
      %v2986 = vld [vmem:[%s7 + $0x750] sm:$0xff]
      %v2987 = vld [vmem:[%s7 + $0x758] sm:$0xff]
      %v2988 = vld [vmem:[%s7 + $0x760] sm:$0xff]
      %v2989 = vld [vmem:[%s7 + $0x768] sm:$0xff]
      %v2990 = vld [vmem:[%s7 + $0x770] sm:$0xff]
      %v2991 = vld [vmem:[%s7 + $0x778] sm:$0xff]
      %v2992 = vld [vmem:[%s7 + $0x780] sm:$0xff]
      %v2993 = vld [vmem:[%s7 + $0x788] sm:$0xff]
      %v2994 = vld [vmem:[%s7 + $0x790] sm:$0xff]
      %v2995 = vld [vmem:[%s7 + $0x798] sm:$0xff]
      %v2996 = vld [vmem:[%s7 + $0x7a0] sm:$0xff]
      %v2997 = vld [vmem:[%s7 + $0x7a8] sm:$0xff]
      %v2998 = vld [vmem:[%s7 + $0x7b0] sm:$0xff]
      %v2999 = vld [vmem:[%s7 + $0x7b8] sm:$0xff]
      %v3000 = vld [vmem:[%s7 + $0x7c0] sm:$0xff]
      %v3001 = vld [vmem:[%s7 + $0x7c8] sm:$0xff]
      %v3002 = vld [vmem:[%s7 + $0x7d0] sm:$0xff]
      %v3003 = vld [vmem:[%s7 + $0x7d8] sm:$0xff]
      %v3004 = vld [vmem:[%s7 + $0x7e0] sm:$0xff]
      %v3005 = vld [vmem:[%s7 + $0x7e8] sm:$0xff]
      %v3006 = vld [vmem:[%s7 + $0x7f0] sm:$0xff]
      %v3007 = vld [vmem:[%s7 + $0x7f8] sm:$0xff]
      %v3008 = vld [vmem:[%s8] sm:$0xf]
      %v3010 = vperm.slane %v3008, 0
      %v3011 = vperm.slane %v3008, 1
      %v3012 = vperm.slane %v3008, 2
      %v3013 = vperm.slane %v3008, 3
      %v3274 = vunpack.c.l.b16 %v2752
      %v3275 = vunpack.c.h.b16 %v2752
      %v3276 = vunpack.c.l.b16 %v2753
      %v3277 = vunpack.c.h.b16 %v2753
      %v3278 = vunpack.c.l.b16 %v2754
      %v3279 = vunpack.c.h.b16 %v2754
      %v3280 = vunpack.c.l.b16 %v2755
      %v3281 = vunpack.c.h.b16 %v2755
      %v3282 = vunpack.c.l.b16 %v2756
      %v3283 = vunpack.c.h.b16 %v2756
      %v3284 = vunpack.c.l.b16 %v2757
      %v3285 = vunpack.c.h.b16 %v2757
      %v3286 = vunpack.c.l.b16 %v2758
      %v3287 = vunpack.c.h.b16 %v2758
      %v3288 = vunpack.c.l.b16 %v2759
      %v3289 = vunpack.c.h.b16 %v2759
      %v3290 = vunpack.c.l.b16 %v2760
      %v3291 = vunpack.c.h.b16 %v2760
      %v3292 = vunpack.c.l.b16 %v2761
      %v3293 = vunpack.c.h.b16 %v2761
      %v3294 = vunpack.c.l.b16 %v2762
      %v3295 = vunpack.c.h.b16 %v2762
      %v3296 = vunpack.c.l.b16 %v2763
      %v3297 = vunpack.c.h.b16 %v2763
      %v3298 = vunpack.c.l.b16 %v2764
      %v3299 = vunpack.c.h.b16 %v2764
      %v3300 = vunpack.c.l.b16 %v2765
      %v3301 = vunpack.c.h.b16 %v2765
      %v3302 = vunpack.c.l.b16 %v2766
      %v3303 = vunpack.c.h.b16 %v2766
      %v3304 = vunpack.c.l.b16 %v2767
      %v3305 = vunpack.c.h.b16 %v2767
      %v3306 = vunpack.c.l.b16 %v2768
      %v3307 = vunpack.c.h.b16 %v2768
      %v3308 = vunpack.c.l.b16 %v2769
      %v3309 = vunpack.c.h.b16 %v2769
      %v3310 = vunpack.c.l.b16 %v2770
      %v3311 = vunpack.c.h.b16 %v2770
      %v3312 = vunpack.c.l.b16 %v2771
      %v3313 = vunpack.c.h.b16 %v2771
      %v3314 = vunpack.c.l.b16 %v2772
      %v3315 = vunpack.c.h.b16 %v2772
      %v3316 = vunpack.c.l.b16 %v2773
      %v3317 = vunpack.c.h.b16 %v2773
      %v3318 = vunpack.c.l.b16 %v2774
      %v3319 = vunpack.c.h.b16 %v2774
      %v3320 = vunpack.c.l.b16 %v2775
      %v3321 = vunpack.c.h.b16 %v2775
      %v3322 = vunpack.c.l.b16 %v2776
      %v3323 = vunpack.c.h.b16 %v2776
      %v3324 = vunpack.c.l.b16 %v2777
      %v3325 = vunpack.c.h.b16 %v2777
      %v3326 = vunpack.c.l.b16 %v2778
      %v3327 = vunpack.c.h.b16 %v2778
      %v3328 = vunpack.c.l.b16 %v2779
      %v3329 = vunpack.c.h.b16 %v2779
      %v3330 = vunpack.c.l.b16 %v2780
      %v3331 = vunpack.c.h.b16 %v2780
      %v3332 = vunpack.c.l.b16 %v2781
      %v3333 = vunpack.c.h.b16 %v2781
      %v3334 = vunpack.c.l.b16 %v2782
      %v3335 = vunpack.c.h.b16 %v2782
      %v3336 = vunpack.c.l.b16 %v2783
      %v3337 = vunpack.c.h.b16 %v2783
      %v3338 = vunpack.c.l.b16 %v2784
      %v3339 = vunpack.c.h.b16 %v2784
      %v3340 = vunpack.c.l.b16 %v2785
      %v3341 = vunpack.c.h.b16 %v2785
      %v3342 = vunpack.c.l.b16 %v2786
      %v3343 = vunpack.c.h.b16 %v2786
      %v3344 = vunpack.c.l.b16 %v2787
      %v3345 = vunpack.c.h.b16 %v2787
      %v3346 = vunpack.c.l.b16 %v2788
      %v3347 = vunpack.c.h.b16 %v2788
      %v3348 = vunpack.c.l.b16 %v2789
      %v3349 = vunpack.c.h.b16 %v2789
      %v3350 = vunpack.c.l.b16 %v2790
      %v3351 = vunpack.c.h.b16 %v2790
      %v3352 = vunpack.c.l.b16 %v2791
      %v3353 = vunpack.c.h.b16 %v2791
      %v3354 = vunpack.c.l.b16 %v2792
      %v3355 = vunpack.c.h.b16 %v2792
      %v3356 = vunpack.c.l.b16 %v2793
      %v3357 = vunpack.c.h.b16 %v2793
      %v3358 = vunpack.c.l.b16 %v2794
      %v3359 = vunpack.c.h.b16 %v2794
      %v3360 = vunpack.c.l.b16 %v2795
      %v3361 = vunpack.c.h.b16 %v2795
      %v3362 = vunpack.c.l.b16 %v2796
      %v3363 = vunpack.c.h.b16 %v2796
      %v3364 = vunpack.c.l.b16 %v2797
      %v3365 = vunpack.c.h.b16 %v2797
      %v3366 = vunpack.c.l.b16 %v2798
      %v3367 = vunpack.c.h.b16 %v2798
      %v3368 = vunpack.c.l.b16 %v2799
      %v3369 = vunpack.c.h.b16 %v2799
      %v3370 = vunpack.c.l.b16 %v2800
      %v3371 = vunpack.c.h.b16 %v2800
      %v3372 = vunpack.c.l.b16 %v2801
      %v3373 = vunpack.c.h.b16 %v2801
      %v3374 = vunpack.c.l.b16 %v2802
      %v3375 = vunpack.c.h.b16 %v2802
      %v3376 = vunpack.c.l.b16 %v2803
      %v3377 = vunpack.c.h.b16 %v2803
      %v3378 = vunpack.c.l.b16 %v2804
      %v3379 = vunpack.c.h.b16 %v2804
      %v3380 = vunpack.c.l.b16 %v2805
      %v3381 = vunpack.c.h.b16 %v2805
      %v3382 = vunpack.c.l.b16 %v2806
      %v3383 = vunpack.c.h.b16 %v2806
      %v3384 = vunpack.c.l.b16 %v2807
      %v3385 = vunpack.c.h.b16 %v2807
      %v3386 = vunpack.c.l.b16 %v2808
      %v3387 = vunpack.c.h.b16 %v2808
      %v3388 = vunpack.c.l.b16 %v2809
      %v3389 = vunpack.c.h.b16 %v2809
      %v3390 = vunpack.c.l.b16 %v2810
      %v3391 = vunpack.c.h.b16 %v2810
      %v3392 = vunpack.c.l.b16 %v2811
      %v3393 = vunpack.c.h.b16 %v2811
      %v3394 = vunpack.c.l.b16 %v2812
      %v3395 = vunpack.c.h.b16 %v2812
      %v3396 = vunpack.c.l.b16 %v2813
      %v3397 = vunpack.c.h.b16 %v2813
      %v3398 = vunpack.c.l.b16 %v2814
      %v3399 = vunpack.c.h.b16 %v2814
      %v3400 = vunpack.c.l.b16 %v2815
      %v3401 = vunpack.c.h.b16 %v2815
      %v3402 = vunpack.c.l.b16 %v2816
      %v3403 = vunpack.c.h.b16 %v2816
      %v3404 = vunpack.c.l.b16 %v2817
      %v3405 = vunpack.c.h.b16 %v2817
      %v3406 = vunpack.c.l.b16 %v2818
      %v3407 = vunpack.c.h.b16 %v2818
      %v3408 = vunpack.c.l.b16 %v2819
      %v3409 = vunpack.c.h.b16 %v2819
      %v3410 = vunpack.c.l.b16 %v2820
      %v3411 = vunpack.c.h.b16 %v2820
      %v3412 = vunpack.c.l.b16 %v2821
      %v3413 = vunpack.c.h.b16 %v2821
      %v3414 = vunpack.c.l.b16 %v2822
      %v3415 = vunpack.c.h.b16 %v2822
      %v3416 = vunpack.c.l.b16 %v2823
      %v3417 = vunpack.c.h.b16 %v2823
      %v3418 = vunpack.c.l.b16 %v2824
      %v3419 = vunpack.c.h.b16 %v2824
      %v3420 = vunpack.c.l.b16 %v2825
      %v3421 = vunpack.c.h.b16 %v2825
      %v3422 = vunpack.c.l.b16 %v2826
      %v3423 = vunpack.c.h.b16 %v2826
      %v3424 = vunpack.c.l.b16 %v2827
      %v3425 = vunpack.c.h.b16 %v2827
      %v3426 = vunpack.c.l.b16 %v2828
      %v3427 = vunpack.c.h.b16 %v2828
      %v3428 = vunpack.c.l.b16 %v2829
      %v3429 = vunpack.c.h.b16 %v2829
      %v3430 = vunpack.c.l.b16 %v2830
      %v3431 = vunpack.c.h.b16 %v2830
      %v3432 = vunpack.c.l.b16 %v2831
      %v3433 = vunpack.c.h.b16 %v2831
      %v3434 = vunpack.c.l.b16 %v2832
      %v3435 = vunpack.c.h.b16 %v2832
      %v3436 = vunpack.c.l.b16 %v2833
      %v3437 = vunpack.c.h.b16 %v2833
      %v3438 = vunpack.c.l.b16 %v2834
      %v3439 = vunpack.c.h.b16 %v2834
      %v3440 = vunpack.c.l.b16 %v2835
      %v3441 = vunpack.c.h.b16 %v2835
      %v3442 = vunpack.c.l.b16 %v2836
      %v3443 = vunpack.c.h.b16 %v2836
      %v3444 = vunpack.c.l.b16 %v2837
      %v3445 = vunpack.c.h.b16 %v2837
      %v3446 = vunpack.c.l.b16 %v2838
      %v3447 = vunpack.c.h.b16 %v2838
      %v3448 = vunpack.c.l.b16 %v2839
      %v3449 = vunpack.c.h.b16 %v2839
      %v3450 = vunpack.c.l.b16 %v2840
      %v3451 = vunpack.c.h.b16 %v2840
      %v3452 = vunpack.c.l.b16 %v2841
      %v3453 = vunpack.c.h.b16 %v2841
      %v3454 = vunpack.c.l.b16 %v2842
      %v3455 = vunpack.c.h.b16 %v2842
      %v3456 = vunpack.c.l.b16 %v2843
      %v3457 = vunpack.c.h.b16 %v2843
      %v3458 = vunpack.c.l.b16 %v2844
      %v3459 = vunpack.c.h.b16 %v2844
      %v3460 = vunpack.c.l.b16 %v2845
      %v3461 = vunpack.c.h.b16 %v2845
      %v3462 = vunpack.c.l.b16 %v2846
      %v3463 = vunpack.c.h.b16 %v2846
      %v3464 = vunpack.c.l.b16 %v2847
      %v3465 = vunpack.c.h.b16 %v2847
      %v3466 = vunpack.c.l.b16 %v2848
      %v3467 = vunpack.c.h.b16 %v2848
      %v3468 = vunpack.c.l.b16 %v2849
      %v3469 = vunpack.c.h.b16 %v2849
      %v3470 = vunpack.c.l.b16 %v2850
      %v3471 = vunpack.c.h.b16 %v2850
      %v3472 = vunpack.c.l.b16 %v2851
      %v3473 = vunpack.c.h.b16 %v2851
      %v3474 = vunpack.c.l.b16 %v2852
      %v3475 = vunpack.c.h.b16 %v2852
      %v3476 = vunpack.c.l.b16 %v2853
      %v3477 = vunpack.c.h.b16 %v2853
      %v3478 = vunpack.c.l.b16 %v2854
      %v3479 = vunpack.c.h.b16 %v2854
      %v3480 = vunpack.c.l.b16 %v2855
      %v3481 = vunpack.c.h.b16 %v2855
      %v3482 = vunpack.c.l.b16 %v2856
      %v3483 = vunpack.c.h.b16 %v2856
      %v3484 = vunpack.c.l.b16 %v2857
      %v3485 = vunpack.c.h.b16 %v2857
      %v3486 = vunpack.c.l.b16 %v2858
      %v3487 = vunpack.c.h.b16 %v2858
      %v3488 = vunpack.c.l.b16 %v2859
      %v3489 = vunpack.c.h.b16 %v2859
      %v3490 = vunpack.c.l.b16 %v2860
      %v3491 = vunpack.c.h.b16 %v2860
      %v3492 = vunpack.c.l.b16 %v2861
      %v3493 = vunpack.c.h.b16 %v2861
      %v3494 = vunpack.c.l.b16 %v2862
      %v3495 = vunpack.c.h.b16 %v2862
      %v3496 = vunpack.c.l.b16 %v2863
      %v3497 = vunpack.c.h.b16 %v2863
      %v3498 = vunpack.c.l.b16 %v2864
      %v3499 = vunpack.c.h.b16 %v2864
      %v3500 = vunpack.c.l.b16 %v2865
      %v3501 = vunpack.c.h.b16 %v2865
      %v3502 = vunpack.c.l.b16 %v2866
      %v3503 = vunpack.c.h.b16 %v2866
      %v3504 = vunpack.c.l.b16 %v2867
      %v3505 = vunpack.c.h.b16 %v2867
      %v3506 = vunpack.c.l.b16 %v2868
      %v3507 = vunpack.c.h.b16 %v2868
      %v3508 = vunpack.c.l.b16 %v2869
      %v3509 = vunpack.c.h.b16 %v2869
      %v3510 = vunpack.c.l.b16 %v2870
      %v3511 = vunpack.c.h.b16 %v2870
      %v3512 = vunpack.c.l.b16 %v2871
      %v3513 = vunpack.c.h.b16 %v2871
      %v3514 = vunpack.c.l.b16 %v2872
      %v3515 = vunpack.c.h.b16 %v2872
      %v3516 = vunpack.c.l.b16 %v2873
      %v3517 = vunpack.c.h.b16 %v2873
      %v3518 = vunpack.c.l.b16 %v2874
      %v3519 = vunpack.c.h.b16 %v2874
      %v3520 = vunpack.c.l.b16 %v2875
      %v3521 = vunpack.c.h.b16 %v2875
      %v3522 = vunpack.c.l.b16 %v2876
      %v3523 = vunpack.c.h.b16 %v2876
      %v3524 = vunpack.c.l.b16 %v2877
      %v3525 = vunpack.c.h.b16 %v2877
      %v3526 = vunpack.c.l.b16 %v2878
      %v3527 = vunpack.c.h.b16 %v2878
      %v3528 = vunpack.c.l.b16 %v2879
      %v3529 = vunpack.c.h.b16 %v2879
      %v3530 = vunpack.c.l.b16 %v2880
      %v3531 = vunpack.c.h.b16 %v2880
      %v3532 = vunpack.c.l.b16 %v2881
      %v3533 = vunpack.c.h.b16 %v2881
      %v3534 = vunpack.c.l.b16 %v2882
      %v3535 = vunpack.c.h.b16 %v2882
      %v3536 = vunpack.c.l.b16 %v2883
      %v3537 = vunpack.c.h.b16 %v2883
      %v3538 = vunpack.c.l.b16 %v2884
      %v3539 = vunpack.c.h.b16 %v2884
      %v3540 = vunpack.c.l.b16 %v2885
      %v3541 = vunpack.c.h.b16 %v2885
      %v3542 = vunpack.c.l.b16 %v2886
      %v3543 = vunpack.c.h.b16 %v2886
      %v3544 = vunpack.c.l.b16 %v2887
      %v3545 = vunpack.c.h.b16 %v2887
      %v3546 = vunpack.c.l.b16 %v2888
      %v3547 = vunpack.c.h.b16 %v2888
      %v3548 = vunpack.c.l.b16 %v2889
      %v3549 = vunpack.c.h.b16 %v2889
      %v3550 = vunpack.c.l.b16 %v2890
      %v3551 = vunpack.c.h.b16 %v2890
      %v3552 = vunpack.c.l.b16 %v2891
      %v3553 = vunpack.c.h.b16 %v2891
      %v3554 = vunpack.c.l.b16 %v2892
      %v3555 = vunpack.c.h.b16 %v2892
      %v3556 = vunpack.c.l.b16 %v2893
      %v3557 = vunpack.c.h.b16 %v2893
      %v3558 = vunpack.c.l.b16 %v2894
      %v3559 = vunpack.c.h.b16 %v2894
      %v3560 = vunpack.c.l.b16 %v2895
      %v3561 = vunpack.c.h.b16 %v2895
      %v3562 = vunpack.c.l.b16 %v2896
      %v3563 = vunpack.c.h.b16 %v2896
      %v3564 = vunpack.c.l.b16 %v2897
      %v3565 = vunpack.c.h.b16 %v2897
      %v3566 = vunpack.c.l.b16 %v2898
      %v3567 = vunpack.c.h.b16 %v2898
      %v3568 = vunpack.c.l.b16 %v2899
      %v3569 = vunpack.c.h.b16 %v2899
      %v3570 = vunpack.c.l.b16 %v2900
      %v3571 = vunpack.c.h.b16 %v2900
      %v3572 = vunpack.c.l.b16 %v2901
      %v3573 = vunpack.c.h.b16 %v2901
      %v3574 = vunpack.c.l.b16 %v2902
      %v3575 = vunpack.c.h.b16 %v2902
      %v3576 = vunpack.c.l.b16 %v2903
      %v3577 = vunpack.c.h.b16 %v2903
      %v3578 = vunpack.c.l.b16 %v2904
      %v3579 = vunpack.c.h.b16 %v2904
      %v3580 = vunpack.c.l.b16 %v2905
      %v3581 = vunpack.c.h.b16 %v2905
      %v3582 = vunpack.c.l.b16 %v2906
      %v3583 = vunpack.c.h.b16 %v2906
      %v3584 = vunpack.c.l.b16 %v2907
      %v3585 = vunpack.c.h.b16 %v2907
      %v3586 = vunpack.c.l.b16 %v2908
      %v3587 = vunpack.c.h.b16 %v2908
      %v3588 = vunpack.c.l.b16 %v2909
      %v3589 = vunpack.c.h.b16 %v2909
      %v3590 = vunpack.c.l.b16 %v2910
      %v3591 = vunpack.c.h.b16 %v2910
      %v3592 = vunpack.c.l.b16 %v2911
      %v3593 = vunpack.c.h.b16 %v2911
      %v3594 = vunpack.c.l.b16 %v2912
      %v3595 = vunpack.c.h.b16 %v2912
      %v3596 = vunpack.c.l.b16 %v2913
      %v3597 = vunpack.c.h.b16 %v2913
      %v3598 = vunpack.c.l.b16 %v2914
      %v3599 = vunpack.c.h.b16 %v2914
      %v3600 = vunpack.c.l.b16 %v2915
      %v3601 = vunpack.c.h.b16 %v2915
      %v3602 = vunpack.c.l.b16 %v2916
      %v3603 = vunpack.c.h.b16 %v2916
      %v3604 = vunpack.c.l.b16 %v2917
      %v3605 = vunpack.c.h.b16 %v2917
      %v3606 = vunpack.c.l.b16 %v2918
      %v3607 = vunpack.c.h.b16 %v2918
      %v3608 = vunpack.c.l.b16 %v2919
      %v3609 = vunpack.c.h.b16 %v2919
      %v3610 = vunpack.c.l.b16 %v2920
      %v3611 = vunpack.c.h.b16 %v2920
      %v3612 = vunpack.c.l.b16 %v2921
      %v3613 = vunpack.c.h.b16 %v2921
      %v3614 = vunpack.c.l.b16 %v2922
      %v3615 = vunpack.c.h.b16 %v2922
      %v3616 = vunpack.c.l.b16 %v2923
      %v3617 = vunpack.c.h.b16 %v2923
      %v3618 = vunpack.c.l.b16 %v2924
      %v3619 = vunpack.c.h.b16 %v2924
      %v3620 = vunpack.c.l.b16 %v2925
      %v3621 = vunpack.c.h.b16 %v2925
      %v3622 = vunpack.c.l.b16 %v2926
      %v3623 = vunpack.c.h.b16 %v2926
      %v3624 = vunpack.c.l.b16 %v2927
      %v3625 = vunpack.c.h.b16 %v2927
      %v3626 = vunpack.c.l.b16 %v2928
      %v3627 = vunpack.c.h.b16 %v2928
      %v3628 = vunpack.c.l.b16 %v2929
      %v3629 = vunpack.c.h.b16 %v2929
      %v3630 = vunpack.c.l.b16 %v2930
      %v3631 = vunpack.c.h.b16 %v2930
      %v3632 = vunpack.c.l.b16 %v2931
      %v3633 = vunpack.c.h.b16 %v2931
      %v3634 = vunpack.c.l.b16 %v2932
      %v3635 = vunpack.c.h.b16 %v2932
      %v3636 = vunpack.c.l.b16 %v2933
      %v3637 = vunpack.c.h.b16 %v2933
      %v3638 = vunpack.c.l.b16 %v2934
      %v3639 = vunpack.c.h.b16 %v2934
      %v3640 = vunpack.c.l.b16 %v2935
      %v3641 = vunpack.c.h.b16 %v2935
      %v3642 = vunpack.c.l.b16 %v2936
      %v3643 = vunpack.c.h.b16 %v2936
      %v3644 = vunpack.c.l.b16 %v2937
      %v3645 = vunpack.c.h.b16 %v2937
      %v3646 = vunpack.c.l.b16 %v2938
      %v3647 = vunpack.c.h.b16 %v2938
      %v3648 = vunpack.c.l.b16 %v2939
      %v3649 = vunpack.c.h.b16 %v2939
      %v3650 = vunpack.c.l.b16 %v2940
      %v3651 = vunpack.c.h.b16 %v2940
      %v3652 = vunpack.c.l.b16 %v2941
      %v3653 = vunpack.c.h.b16 %v2941
      %v3654 = vunpack.c.l.b16 %v2942
      %v3655 = vunpack.c.h.b16 %v2942
      %v3656 = vunpack.c.l.b16 %v2943
      %v3657 = vunpack.c.h.b16 %v2943
      %v3658 = vunpack.c.l.b16 %v2944
      %v3659 = vunpack.c.h.b16 %v2944
      %v3660 = vunpack.c.l.b16 %v2945
      %v3661 = vunpack.c.h.b16 %v2945
      %v3662 = vunpack.c.l.b16 %v2946
      %v3663 = vunpack.c.h.b16 %v2946
      %v3664 = vunpack.c.l.b16 %v2947
      %v3665 = vunpack.c.h.b16 %v2947
      %v3666 = vunpack.c.l.b16 %v2948
      %v3667 = vunpack.c.h.b16 %v2948
      %v3668 = vunpack.c.l.b16 %v2949
      %v3669 = vunpack.c.h.b16 %v2949
      %v3670 = vunpack.c.l.b16 %v2950
      %v3671 = vunpack.c.h.b16 %v2950
      %v3672 = vunpack.c.l.b16 %v2951
      %v3673 = vunpack.c.h.b16 %v2951
      %v3674 = vunpack.c.l.b16 %v2952
      %v3675 = vunpack.c.h.b16 %v2952
      %v3676 = vunpack.c.l.b16 %v2953
      %v3677 = vunpack.c.h.b16 %v2953
      %v3678 = vunpack.c.l.b16 %v2954
      %v3679 = vunpack.c.h.b16 %v2954
      %v3680 = vunpack.c.l.b16 %v2955
      %v3681 = vunpack.c.h.b16 %v2955
      %v3682 = vunpack.c.l.b16 %v2956
      %v3683 = vunpack.c.h.b16 %v2956
      %v3684 = vunpack.c.l.b16 %v2957
      %v3685 = vunpack.c.h.b16 %v2957
      %v3686 = vunpack.c.l.b16 %v2958
      %v3687 = vunpack.c.h.b16 %v2958
      %v3688 = vunpack.c.l.b16 %v2959
      %v3689 = vunpack.c.h.b16 %v2959
      %v3690 = vunpack.c.l.b16 %v2960
      %v3691 = vunpack.c.h.b16 %v2960
      %v3692 = vunpack.c.l.b16 %v2961
      %v3693 = vunpack.c.h.b16 %v2961
      %v3694 = vunpack.c.l.b16 %v2962
      %v3695 = vunpack.c.h.b16 %v2962
      %v3696 = vunpack.c.l.b16 %v2963
      %v3697 = vunpack.c.h.b16 %v2963
      %v3698 = vunpack.c.l.b16 %v2964
      %v3699 = vunpack.c.h.b16 %v2964
      %v3700 = vunpack.c.l.b16 %v2965
      %v3701 = vunpack.c.h.b16 %v2965
      %v3702 = vunpack.c.l.b16 %v2966
      %v3703 = vunpack.c.h.b16 %v2966
      %v3704 = vunpack.c.l.b16 %v2967
      %v3705 = vunpack.c.h.b16 %v2967
      %v3706 = vunpack.c.l.b16 %v2968
      %v3707 = vunpack.c.h.b16 %v2968
      %v3708 = vunpack.c.l.b16 %v2969
      %v3709 = vunpack.c.h.b16 %v2969
      %v3710 = vunpack.c.l.b16 %v2970
      %v3711 = vunpack.c.h.b16 %v2970
      %v3712 = vunpack.c.l.b16 %v2971
      %v3713 = vunpack.c.h.b16 %v2971
      %v3714 = vunpack.c.l.b16 %v2972
      %v3715 = vunpack.c.h.b16 %v2972
      %v3716 = vunpack.c.l.b16 %v2973
      %v3717 = vunpack.c.h.b16 %v2973
      %v3718 = vunpack.c.l.b16 %v2974
      %v3719 = vunpack.c.h.b16 %v2974
      %v3720 = vunpack.c.l.b16 %v2975
      %v3721 = vunpack.c.h.b16 %v2975
      %v3722 = vunpack.c.l.b16 %v2976
      %v3723 = vunpack.c.h.b16 %v2976
      %v3724 = vunpack.c.l.b16 %v2977
      %v3725 = vunpack.c.h.b16 %v2977
      %v3726 = vunpack.c.l.b16 %v2978
      %v3727 = vunpack.c.h.b16 %v2978
      %v3728 = vunpack.c.l.b16 %v2979
      %v3729 = vunpack.c.h.b16 %v2979
      %v3730 = vunpack.c.l.b16 %v2980
      %v3731 = vunpack.c.h.b16 %v2980
      %v3732 = vunpack.c.l.b16 %v2981
      %v3733 = vunpack.c.h.b16 %v2981
      %v3734 = vunpack.c.l.b16 %v2982
      %v3735 = vunpack.c.h.b16 %v2982
      %v3736 = vunpack.c.l.b16 %v2983
      %v3737 = vunpack.c.h.b16 %v2983
      %v3738 = vunpack.c.l.b16 %v2984
      %v3739 = vunpack.c.h.b16 %v2984
      %v3740 = vunpack.c.l.b16 %v2985
      %v3741 = vunpack.c.h.b16 %v2985
      %v3742 = vunpack.c.l.b16 %v2986
      %v3743 = vunpack.c.h.b16 %v2986
      %v3744 = vunpack.c.l.b16 %v2987
      %v3745 = vunpack.c.h.b16 %v2987
      %v3746 = vunpack.c.l.b16 %v2988
      %v3747 = vunpack.c.h.b16 %v2988
      %v3748 = vunpack.c.l.b16 %v2989
      %v3749 = vunpack.c.h.b16 %v2989
      %v3750 = vunpack.c.l.b16 %v2990
      %v3751 = vunpack.c.h.b16 %v2990
      %v3752 = vunpack.c.l.b16 %v2991
      %v3753 = vunpack.c.h.b16 %v2991
      %v3754 = vunpack.c.l.b16 %v2992
      %v3755 = vunpack.c.h.b16 %v2992
      %v3756 = vunpack.c.l.b16 %v2993
      %v3757 = vunpack.c.h.b16 %v2993
      %v3758 = vunpack.c.l.b16 %v2994
      %v3759 = vunpack.c.h.b16 %v2994
      %v3760 = vunpack.c.l.b16 %v2995
      %v3761 = vunpack.c.h.b16 %v2995
      %v3762 = vunpack.c.l.b16 %v2996
      %v3763 = vunpack.c.h.b16 %v2996
      %v3764 = vunpack.c.l.b16 %v2997
      %v3765 = vunpack.c.h.b16 %v2997
      %v3766 = vunpack.c.l.b16 %v2998
      %v3767 = vunpack.c.h.b16 %v2998
      %v3768 = vunpack.c.l.b16 %v2999
      %v3769 = vunpack.c.h.b16 %v2999
      %v3770 = vunpack.c.l.b16 %v3000
      %v3771 = vunpack.c.h.b16 %v3000
      %v3772 = vunpack.c.l.b16 %v3001
      %v3773 = vunpack.c.h.b16 %v3001
      %v3774 = vunpack.c.l.b16 %v3002
      %v3775 = vunpack.c.h.b16 %v3002
      %v3776 = vunpack.c.l.b16 %v3003
      %v3777 = vunpack.c.h.b16 %v3003
      %v3778 = vunpack.c.l.b16 %v3004
      %v3779 = vunpack.c.h.b16 %v3004
      %v3780 = vunpack.c.l.b16 %v3005
      %v3781 = vunpack.c.h.b16 %v3005
      %v3782 = vunpack.c.l.b16 %v3006
      %v3783 = vunpack.c.h.b16 %v3006
      %v3784 = vunpack.c.l.b16 %v3007
      %v3785 = vunpack.c.h.b16 %v3007
      %v3786 = vpack.c.b16 %v3278, %v3274
      %v3787 = vpack.c.b16 %v3279, %v3275
      %v3788 = vpack.c.b16 %v3280, %v3276
      %v3789 = vpack.c.b16 %v3281, %v3277
      %v3790 = vpack.c.b16 %v3286, %v3282
      %v3791 = vpack.c.b16 %v3287, %v3283
      %v3792 = vpack.c.b16 %v3288, %v3284
      %v3793 = vpack.c.b16 %v3289, %v3285
      %v3794 = vpack.c.b16 %v3294, %v3290
      %v3795 = vpack.c.b16 %v3295, %v3291
      %v3796 = vpack.c.b16 %v3296, %v3292
      %v3797 = vpack.c.b16 %v3297, %v3293
      %v3798 = vpack.c.b16 %v3302, %v3298
      %v3799 = vpack.c.b16 %v3303, %v3299
      %v3800 = vpack.c.b16 %v3304, %v3300
      %v3801 = vpack.c.b16 %v3305, %v3301
      %v3802 = vpack.c.b16 %v3310, %v3306
      %v3803 = vpack.c.b16 %v3311, %v3307
      %v3804 = vpack.c.b16 %v3312, %v3308
      %v3805 = vpack.c.b16 %v3313, %v3309
      %v3806 = vpack.c.b16 %v3318, %v3314
      %v3807 = vpack.c.b16 %v3319, %v3315
      %v3808 = vpack.c.b16 %v3320, %v3316
      %v3809 = vpack.c.b16 %v3321, %v3317
      %v3810 = vpack.c.b16 %v3326, %v3322
      %v3811 = vpack.c.b16 %v3327, %v3323
      %v3812 = vpack.c.b16 %v3328, %v3324
      %v3813 = vpack.c.b16 %v3329, %v3325
      %v3814 = vpack.c.b16 %v3334, %v3330
      %v3815 = vpack.c.b16 %v3335, %v3331
      %v3816 = vpack.c.b16 %v3336, %v3332
      %v3817 = vpack.c.b16 %v3337, %v3333
      %v3818 = vpack.c.b16 %v3342, %v3338
      %v3819 = vpack.c.b16 %v3343, %v3339
      %v3820 = vpack.c.b16 %v3344, %v3340
      %v3821 = vpack.c.b16 %v3345, %v3341
      %v3822 = vpack.c.b16 %v3350, %v3346
      %v3823 = vpack.c.b16 %v3351, %v3347
      %v3824 = vpack.c.b16 %v3352, %v3348
      %v3825 = vpack.c.b16 %v3353, %v3349
      %v3826 = vpack.c.b16 %v3358, %v3354
      %v3827 = vpack.c.b16 %v3359, %v3355
      %v3828 = vpack.c.b16 %v3360, %v3356
      %v3829 = vpack.c.b16 %v3361, %v3357
      %v3830 = vpack.c.b16 %v3366, %v3362
      %v3831 = vpack.c.b16 %v3367, %v3363
      %v3832 = vpack.c.b16 %v3368, %v3364
      %v3833 = vpack.c.b16 %v3369, %v3365
      %v3834 = vpack.c.b16 %v3374, %v3370
      %v3835 = vpack.c.b16 %v3375, %v3371
      %v3836 = vpack.c.b16 %v3376, %v3372
      %v3837 = vpack.c.b16 %v3377, %v3373
      %v3838 = vpack.c.b16 %v3382, %v3378
      %v3839 = vpack.c.b16 %v3383, %v3379
      %v3840 = vpack.c.b16 %v3384, %v3380
      %v3841 = vpack.c.b16 %v3385, %v3381
      %v3842 = vpack.c.b16 %v3390, %v3386
      %v3843 = vpack.c.b16 %v3391, %v3387
      %v3844 = vpack.c.b16 %v3392, %v3388
      %v3845 = vpack.c.b16 %v3393, %v3389
      %v3846 = vpack.c.b16 %v3398, %v3394
      %v3847 = vpack.c.b16 %v3399, %v3395
      %v3848 = vpack.c.b16 %v3400, %v3396
      %v3849 = vpack.c.b16 %v3401, %v3397
      %v3850 = vpack.c.b16 %v3406, %v3402
      %v3851 = vpack.c.b16 %v3407, %v3403
      %v3852 = vpack.c.b16 %v3408, %v3404
      %v3853 = vpack.c.b16 %v3409, %v3405
      %v3854 = vpack.c.b16 %v3414, %v3410
      %v3855 = vpack.c.b16 %v3415, %v3411
      %v3856 = vpack.c.b16 %v3416, %v3412
      %v3857 = vpack.c.b16 %v3417, %v3413
      %v3858 = vpack.c.b16 %v3422, %v3418
      %v3859 = vpack.c.b16 %v3423, %v3419
      %v3860 = vpack.c.b16 %v3424, %v3420
      %v3861 = vpack.c.b16 %v3425, %v3421
      %v3862 = vpack.c.b16 %v3430, %v3426
      %v3863 = vpack.c.b16 %v3431, %v3427
      %v3864 = vpack.c.b16 %v3432, %v3428
      %v3865 = vpack.c.b16 %v3433, %v3429
      %v3866 = vpack.c.b16 %v3438, %v3434
      %v3867 = vpack.c.b16 %v3439, %v3435
      %v3868 = vpack.c.b16 %v3440, %v3436
      %v3869 = vpack.c.b16 %v3441, %v3437
      %v3870 = vpack.c.b16 %v3446, %v3442
      %v3871 = vpack.c.b16 %v3447, %v3443
      %v3872 = vpack.c.b16 %v3448, %v3444
      %v3873 = vpack.c.b16 %v3449, %v3445
      %v3874 = vpack.c.b16 %v3454, %v3450
      %v3875 = vpack.c.b16 %v3455, %v3451
      %v3876 = vpack.c.b16 %v3456, %v3452
      %v3877 = vpack.c.b16 %v3457, %v3453
      %v3878 = vpack.c.b16 %v3462, %v3458
      %v3879 = vpack.c.b16 %v3463, %v3459
      %v3880 = vpack.c.b16 %v3464, %v3460
      %v3881 = vpack.c.b16 %v3465, %v3461
      %v3882 = vpack.c.b16 %v3470, %v3466
      %v3883 = vpack.c.b16 %v3471, %v3467
      %v3884 = vpack.c.b16 %v3472, %v3468
      %v3885 = vpack.c.b16 %v3473, %v3469
      %v3886 = vpack.c.b16 %v3478, %v3474
      %v3887 = vpack.c.b16 %v3479, %v3475
      %v3888 = vpack.c.b16 %v3480, %v3476
      %v3889 = vpack.c.b16 %v3481, %v3477
      %v3890 = vpack.c.b16 %v3486, %v3482
      %v3891 = vpack.c.b16 %v3487, %v3483
      %v3892 = vpack.c.b16 %v3488, %v3484
      %v3893 = vpack.c.b16 %v3489, %v3485
      %v3894 = vpack.c.b16 %v3494, %v3490
      %v3895 = vpack.c.b16 %v3495, %v3491
      %v3896 = vpack.c.b16 %v3496, %v3492
      %v3897 = vpack.c.b16 %v3497, %v3493
      %v3898 = vpack.c.b16 %v3502, %v3498
      %v3899 = vpack.c.b16 %v3503, %v3499
      %v3900 = vpack.c.b16 %v3504, %v3500
      %v3901 = vpack.c.b16 %v3505, %v3501
      %v3902 = vpack.c.b16 %v3510, %v3506
      %v3903 = vpack.c.b16 %v3511, %v3507
      %v3904 = vpack.c.b16 %v3512, %v3508
      %v3905 = vpack.c.b16 %v3513, %v3509
      %v3906 = vpack.c.b16 %v3518, %v3514
      %v3907 = vpack.c.b16 %v3519, %v3515
      %v3908 = vpack.c.b16 %v3520, %v3516
      %v3909 = vpack.c.b16 %v3521, %v3517
      %v3910 = vpack.c.b16 %v3526, %v3522
      %v3911 = vpack.c.b16 %v3527, %v3523
      %v3912 = vpack.c.b16 %v3528, %v3524
      %v3913 = vpack.c.b16 %v3529, %v3525
      %v3914 = vpack.c.b16 %v3534, %v3530
      %v3915 = vpack.c.b16 %v3535, %v3531
      %v3916 = vpack.c.b16 %v3536, %v3532
      %v3917 = vpack.c.b16 %v3537, %v3533
      %v3918 = vpack.c.b16 %v3542, %v3538
      %v3919 = vpack.c.b16 %v3543, %v3539
      %v3920 = vpack.c.b16 %v3544, %v3540
      %v3921 = vpack.c.b16 %v3545, %v3541
      %v3922 = vpack.c.b16 %v3550, %v3546
      %v3923 = vpack.c.b16 %v3551, %v3547
      %v3924 = vpack.c.b16 %v3552, %v3548
      %v3925 = vpack.c.b16 %v3553, %v3549
      %v3926 = vpack.c.b16 %v3558, %v3554
      %v3927 = vpack.c.b16 %v3559, %v3555
      %v3928 = vpack.c.b16 %v3560, %v3556
      %v3929 = vpack.c.b16 %v3561, %v3557
      %v3930 = vpack.c.b16 %v3566, %v3562
      %v3931 = vpack.c.b16 %v3567, %v3563
      %v3932 = vpack.c.b16 %v3568, %v3564
      %v3933 = vpack.c.b16 %v3569, %v3565
      %v3934 = vpack.c.b16 %v3574, %v3570
      %v3935 = vpack.c.b16 %v3575, %v3571
      %v3936 = vpack.c.b16 %v3576, %v3572
      %v3937 = vpack.c.b16 %v3577, %v3573
      %v3938 = vpack.c.b16 %v3582, %v3578
      %v3939 = vpack.c.b16 %v3583, %v3579
      %v3940 = vpack.c.b16 %v3584, %v3580
      %v3941 = vpack.c.b16 %v3585, %v3581
      %v3942 = vpack.c.b16 %v3590, %v3586
      %v3943 = vpack.c.b16 %v3591, %v3587
      %v3944 = vpack.c.b16 %v3592, %v3588
      %v3945 = vpack.c.b16 %v3593, %v3589
      %v3946 = vpack.c.b16 %v3598, %v3594
      %v3947 = vpack.c.b16 %v3599, %v3595
      %v3948 = vpack.c.b16 %v3600, %v3596
      %v3949 = vpack.c.b16 %v3601, %v3597
      %v3950 = vpack.c.b16 %v3606, %v3602
      %v3951 = vpack.c.b16 %v3607, %v3603
      %v3952 = vpack.c.b16 %v3608, %v3604
      %v3953 = vpack.c.b16 %v3609, %v3605
      %v3954 = vpack.c.b16 %v3614, %v3610
      %v3955 = vpack.c.b16 %v3615, %v3611
      %v3956 = vpack.c.b16 %v3616, %v3612
      %v3957 = vpack.c.b16 %v3617, %v3613
      %v3958 = vpack.c.b16 %v3622, %v3618
      %v3959 = vpack.c.b16 %v3623, %v3619
      %v3960 = vpack.c.b16 %v3624, %v3620
      %v3961 = vpack.c.b16 %v3625, %v3621
      %v3962 = vpack.c.b16 %v3630, %v3626
      %v3963 = vpack.c.b16 %v3631, %v3627
      %v3964 = vpack.c.b16 %v3632, %v3628
      %v3965 = vpack.c.b16 %v3633, %v3629
      %v3966 = vpack.c.b16 %v3638, %v3634
      %v3967 = vpack.c.b16 %v3639, %v3635
      %v3968 = vpack.c.b16 %v3640, %v3636
      %v3969 = vpack.c.b16 %v3641, %v3637
      %v3970 = vpack.c.b16 %v3646, %v3642
      %v3971 = vpack.c.b16 %v3647, %v3643
      %v3972 = vpack.c.b16 %v3648, %v3644
      %v3973 = vpack.c.b16 %v3649, %v3645
      %v3974 = vpack.c.b16 %v3654, %v3650
      %v3975 = vpack.c.b16 %v3655, %v3651
      %v3976 = vpack.c.b16 %v3656, %v3652
      %v3977 = vpack.c.b16 %v3657, %v3653
      %v3978 = vpack.c.b16 %v3662, %v3658
      %v3979 = vpack.c.b16 %v3663, %v3659
      %v3980 = vpack.c.b16 %v3664, %v3660
      %v3981 = vpack.c.b16 %v3665, %v3661
      %v3982 = vpack.c.b16 %v3670, %v3666
      %v3983 = vpack.c.b16 %v3671, %v3667
      %v3984 = vpack.c.b16 %v3672, %v3668
      %v3985 = vpack.c.b16 %v3673, %v3669
      %v3986 = vpack.c.b16 %v3678, %v3674
      %v3987 = vpack.c.b16 %v3679, %v3675
      %v3988 = vpack.c.b16 %v3680, %v3676
      %v3989 = vpack.c.b16 %v3681, %v3677
      %v3990 = vpack.c.b16 %v3686, %v3682
      %v3991 = vpack.c.b16 %v3687, %v3683
      %v3992 = vpack.c.b16 %v3688, %v3684
      %v3993 = vpack.c.b16 %v3689, %v3685
      %v3994 = vpack.c.b16 %v3694, %v3690
      %v3995 = vpack.c.b16 %v3695, %v3691
      %v3996 = vpack.c.b16 %v3696, %v3692
      %v3997 = vpack.c.b16 %v3697, %v3693
      %v3998 = vpack.c.b16 %v3702, %v3698
      %v3999 = vpack.c.b16 %v3703, %v3699
      %v4000 = vpack.c.b16 %v3704, %v3700
      %v4001 = vpack.c.b16 %v3705, %v3701
      %v4002 = vpack.c.b16 %v3710, %v3706
      %v4003 = vpack.c.b16 %v3711, %v3707
      %v4004 = vpack.c.b16 %v3712, %v3708
      %v4005 = vpack.c.b16 %v3713, %v3709
      %v4006 = vpack.c.b16 %v3718, %v3714
      %v4007 = vpack.c.b16 %v3719, %v3715
      %v4008 = vpack.c.b16 %v3720, %v3716
      %v4009 = vpack.c.b16 %v3721, %v3717
      %v4010 = vpack.c.b16 %v3726, %v3722
      %v4011 = vpack.c.b16 %v3727, %v3723
      %v4012 = vpack.c.b16 %v3728, %v3724
      %v4013 = vpack.c.b16 %v3729, %v3725
      %v4014 = vpack.c.b16 %v3734, %v3730
      %v4015 = vpack.c.b16 %v3735, %v3731
      %v4016 = vpack.c.b16 %v3736, %v3732
      %v4017 = vpack.c.b16 %v3737, %v3733
      %v4018 = vpack.c.b16 %v3742, %v3738
      %v4019 = vpack.c.b16 %v3743, %v3739
      %v4020 = vpack.c.b16 %v3744, %v3740
      %v4021 = vpack.c.b16 %v3745, %v3741
      %v4022 = vpack.c.b16 %v3750, %v3746
      %v4023 = vpack.c.b16 %v3751, %v3747
      %v4024 = vpack.c.b16 %v3752, %v3748
      %v4025 = vpack.c.b16 %v3753, %v3749
      %v4026 = vpack.c.b16 %v3758, %v3754
      %v4027 = vpack.c.b16 %v3759, %v3755
      %v4028 = vpack.c.b16 %v3760, %v3756
      %v4029 = vpack.c.b16 %v3761, %v3757
      %v4030 = vpack.c.b16 %v3766, %v3762
      %v4031 = vpack.c.b16 %v3767, %v3763
      %v4032 = vpack.c.b16 %v3768, %v3764
      %v4033 = vpack.c.b16 %v3769, %v3765
      %v4034 = vpack.c.b16 %v3774, %v3770
      %v4035 = vpack.c.b16 %v3775, %v3771
      %v4036 = vpack.c.b16 %v3776, %v3772
      %v4037 = vpack.c.b16 %v3777, %v3773
      %v4038 = vpack.c.b16 %v3782, %v3778
      %v4039 = vpack.c.b16 %v3783, %v3779
      %v4040 = vpack.c.b16 %v3784, %v3780
      %v4041 = vpack.c.b16 %v3785, %v3781
      %4298 = vmatpush.bf16.msra.mxu0 %v3814
      %4299 = vmatpush.bf16.msra.mxu0 %v3810
      %4300 = vmatpush.bf16.msra.mxu0 %v3806
      %4301 = vmatpush.bf16.msra.mxu0 %v3802
      %4302 = vmatpush.bf16.msra.mxu0 %v3798
      %4303 = vmatpush.bf16.msra.mxu0 %v3794
      %4304 = vmatpush.bf16.msra.mxu0 %v3790
      %4305 = vmatpush.bf16.msra.mxu0 %v3786
      %4306 = vmatmul.bf16.gmra.mxu0 %v2744
      %v4307 = vpop.f32.mrf.mxu0
      %v4308 = vadd.f32 %v3010, %v4307
      %v4309 = vpop.f32.mrf.mxu0
      %4310 = vdwg.mxu0
      %4311 = vmatpush.bf16.msra.mxu0 %v3846
      %4312 = vmatpush.bf16.msra.mxu0 %v3842
      %4313 = vmatpush.bf16.msra.mxu0 %v3838
      %4314 = vmatpush.bf16.msra.mxu0 %v3834
      %4315 = vmatpush.bf16.msra.mxu0 %v3830
      %4316 = vmatpush.bf16.msra.mxu0 %v3826
      %4317 = vmatpush.bf16.msra.mxu0 %v3822
      %4318 = vmatpush.bf16.msra.mxu0 %v3818
      %4319 = vmatmul.bf16.gmra.mxu0 %v2745
      %v4320 = vpop.f32.mrf.mxu0
      %v4321 = vadd.f32 %v4308, %v4320
      %v4322 = vpop.f32.mrf.mxu0
      %4323 = vdwg.mxu0
      %4324 = vmatpush.bf16.msra.mxu0 %v3878
      %4325 = vmatpush.bf16.msra.mxu0 %v3874
      %4326 = vmatpush.bf16.msra.mxu0 %v3870
      %4327 = vmatpush.bf16.msra.mxu0 %v3866
      %4328 = vmatpush.bf16.msra.mxu0 %v3862
      %4329 = vmatpush.bf16.msra.mxu0 %v3858
      %4330 = vmatpush.bf16.msra.mxu0 %v3854
      %4331 = vmatpush.bf16.msra.mxu0 %v3850
      %4332 = vmatmul.bf16.gmra.mxu0 %v2746
      %v4333 = vpop.f32.mrf.mxu0
      %v4334 = vadd.f32 %v4321, %v4333
      %v4335 = vpop.f32.mrf.mxu0
      %4336 = vdwg.mxu0
      %4337 = vmatpush.bf16.msra.mxu0 %v3910
      %4338 = vmatpush.bf16.msra.mxu0 %v3906
      %4339 = vmatpush.bf16.msra.mxu0 %v3902
      %4340 = vmatpush.bf16.msra.mxu0 %v3898
      %4341 = vmatpush.bf16.msra.mxu0 %v3894
      %4342 = vmatpush.bf16.msra.mxu0 %v3890
      %4343 = vmatpush.bf16.msra.mxu0 %v3886
      %4344 = vmatpush.bf16.msra.mxu0 %v3882
      %4345 = vmatmul.bf16.gmra.mxu0 %v2747
      %v4346 = vpop.f32.mrf.mxu0
      %v4347 = vadd.f32 %v4334, %v4346
      %v4348 = vpop.f32.mrf.mxu0
      %4349 = vdwg.mxu0
      %4350 = vmatpush.bf16.msra.mxu0 %v3942
      %4351 = vmatpush.bf16.msra.mxu0 %v3938
      %4352 = vmatpush.bf16.msra.mxu0 %v3934
      %4353 = vmatpush.bf16.msra.mxu0 %v3930
      %4354 = vmatpush.bf16.msra.mxu0 %v3926
      %4355 = vmatpush.bf16.msra.mxu0 %v3922
      %4356 = vmatpush.bf16.msra.mxu0 %v3918
      %4357 = vmatpush.bf16.msra.mxu0 %v3914
      %4358 = vmatmul.bf16.gmra.mxu0 %v2748
      %v4359 = vpop.f32.mrf.mxu0
      %v4360 = vadd.f32 %v4347, %v4359
      %v4361 = vpop.f32.mrf.mxu0
      %4362 = vdwg.mxu0
      %4363 = vmatpush.bf16.msra.mxu0 %v3974
      %4364 = vmatpush.bf16.msra.mxu0 %v3970
      %4365 = vmatpush.bf16.msra.mxu0 %v3966
      %4366 = vmatpush.bf16.msra.mxu0 %v3962
      %4367 = vmatpush.bf16.msra.mxu0 %v3958
      %4368 = vmatpush.bf16.msra.mxu0 %v3954
      %4369 = vmatpush.bf16.msra.mxu0 %v3950
      %4370 = vmatpush.bf16.msra.mxu0 %v3946
      %4371 = vmatmul.bf16.gmra.mxu0 %v2749
      %v4372 = vpop.f32.mrf.mxu0
      %v4373 = vadd.f32 %v4360, %v4372
      %v4374 = vpop.f32.mrf.mxu0
      %4375 = vdwg.mxu0
      %4376 = vmatpush.bf16.msra.mxu0 %v4006
      %4377 = vmatpush.bf16.msra.mxu0 %v4002
      %4378 = vmatpush.bf16.msra.mxu0 %v3998
      %4379 = vmatpush.bf16.msra.mxu0 %v3994
      %4380 = vmatpush.bf16.msra.mxu0 %v3990
      %4381 = vmatpush.bf16.msra.mxu0 %v3986
      %4382 = vmatpush.bf16.msra.mxu0 %v3982
      %4383 = vmatpush.bf16.msra.mxu0 %v3978
      %4384 = vmatmul.bf16.gmra.mxu0 %v2750
      %v4385 = vpop.f32.mrf.mxu0
      %v4386 = vadd.f32 %v4373, %v4385
      %v4387 = vpop.f32.mrf.mxu0
      %4388 = vdwg.mxu0
      %4389 = vmatpush.bf16.msra.mxu0 %v4038
      %4390 = vmatpush.bf16.msra.mxu0 %v4034
      %4391 = vmatpush.bf16.msra.mxu0 %v4030
      %4392 = vmatpush.bf16.msra.mxu0 %v4026
      %4393 = vmatpush.bf16.msra.mxu0 %v4022
      %4394 = vmatpush.bf16.msra.mxu0 %v4018
      %4395 = vmatpush.bf16.msra.mxu0 %v4014
      %4396 = vmatpush.bf16.msra.mxu0 %v4010
      %4397 = vmatmul.bf16.gmra.mxu0 %v2751
      %v4398 = vpop.f32.mrf.mxu0
      %v4399 = vadd.f32 %v4386, %v4398
      %v4400 = vpop.f32.mrf.mxu0
      %4401 = vdwg.mxu0
      %4402 = vmatpush.bf16.msra.mxu0 %v3815
      %4403 = vmatpush.bf16.msra.mxu0 %v3811
      %4404 = vmatpush.bf16.msra.mxu0 %v3807
      %4405 = vmatpush.bf16.msra.mxu0 %v3803
      %4406 = vmatpush.bf16.msra.mxu0 %v3799
      %4407 = vmatpush.bf16.msra.mxu0 %v3795
      %4408 = vmatpush.bf16.msra.mxu0 %v3791
      %4409 = vmatpush.bf16.msra.mxu0 %v3787
      %4410 = vmatmul.bf16.gmra.mxu0 %v2744
      %v4411 = vpop.f32.mrf.mxu0
      %v4412 = vadd.f32 %v3011, %v4411
      %v4413 = vpop.f32.mrf.mxu0
      %4414 = vdwg.mxu0
      %4415 = vmatpush.bf16.msra.mxu0 %v3847
      %4416 = vmatpush.bf16.msra.mxu0 %v3843
      %4417 = vmatpush.bf16.msra.mxu0 %v3839
      %4418 = vmatpush.bf16.msra.mxu0 %v3835
      %4419 = vmatpush.bf16.msra.mxu0 %v3831
      %4420 = vmatpush.bf16.msra.mxu0 %v3827
      %4421 = vmatpush.bf16.msra.mxu0 %v3823
      %4422 = vmatpush.bf16.msra.mxu0 %v3819
      %4423 = vmatmul.bf16.gmra.mxu0 %v2745
      %v4424 = vpop.f32.mrf.mxu0
      %v4425 = vadd.f32 %v4412, %v4424
      %v4426 = vpop.f32.mrf.mxu0
      %4427 = vdwg.mxu0
      %4428 = vmatpush.bf16.msra.mxu0 %v3879
      %4429 = vmatpush.bf16.msra.mxu0 %v3875
      %4430 = vmatpush.bf16.msra.mxu0 %v3871
      %4431 = vmatpush.bf16.msra.mxu0 %v3867
      %4432 = vmatpush.bf16.msra.mxu0 %v3863
      %4433 = vmatpush.bf16.msra.mxu0 %v3859
      %4434 = vmatpush.bf16.msra.mxu0 %v3855
      %4435 = vmatpush.bf16.msra.mxu0 %v3851
      %4436 = vmatmul.bf16.gmra.mxu0 %v2746
      %v4437 = vpop.f32.mrf.mxu0
      %v4438 = vadd.f32 %v4425, %v4437
      %v4439 = vpop.f32.mrf.mxu0
      %4440 = vdwg.mxu0
      %4441 = vmatpush.bf16.msra.mxu0 %v3911
      %4442 = vmatpush.bf16.msra.mxu0 %v3907
      %4443 = vmatpush.bf16.msra.mxu0 %v3903
      %4444 = vmatpush.bf16.msra.mxu0 %v3899
      %4445 = vmatpush.bf16.msra.mxu0 %v3895
      %4446 = vmatpush.bf16.msra.mxu0 %v3891
      %4447 = vmatpush.bf16.msra.mxu0 %v3887
      %4448 = vmatpush.bf16.msra.mxu0 %v3883
      %4449 = vmatmul.bf16.gmra.mxu0 %v2747
      %v4450 = vpop.f32.mrf.mxu0
      %v4451 = vadd.f32 %v4438, %v4450
      %v4452 = vpop.f32.mrf.mxu0
      %4453 = vdwg.mxu0
      %4454 = vmatpush.bf16.msra.mxu0 %v3943
      %4455 = vmatpush.bf16.msra.mxu0 %v3939
      %4456 = vmatpush.bf16.msra.mxu0 %v3935
      %4457 = vmatpush.bf16.msra.mxu0 %v3931
      %4458 = vmatpush.bf16.msra.mxu0 %v3927
      %4459 = vmatpush.bf16.msra.mxu0 %v3923
      %4460 = vmatpush.bf16.msra.mxu0 %v3919
      %4461 = vmatpush.bf16.msra.mxu0 %v3915
      %4462 = vmatmul.bf16.gmra.mxu0 %v2748
      %v4463 = vpop.f32.mrf.mxu0
      %v4464 = vadd.f32 %v4451, %v4463
      %v4465 = vpop.f32.mrf.mxu0
      %4466 = vdwg.mxu0
      %4467 = vmatpush.bf16.msra.mxu0 %v3975
      %4468 = vmatpush.bf16.msra.mxu0 %v3971
      %4469 = vmatpush.bf16.msra.mxu0 %v3967
      %4470 = vmatpush.bf16.msra.mxu0 %v3963
      %4471 = vmatpush.bf16.msra.mxu0 %v3959
      %4472 = vmatpush.bf16.msra.mxu0 %v3955
      %4473 = vmatpush.bf16.msra.mxu0 %v3951
      %4474 = vmatpush.bf16.msra.mxu0 %v3947
      %4475 = vmatmul.bf16.gmra.mxu0 %v2749
      %v4476 = vpop.f32.mrf.mxu0
      %v4477 = vadd.f32 %v4464, %v4476
      %v4478 = vpop.f32.mrf.mxu0
      %4479 = vdwg.mxu0
      %4480 = vmatpush.bf16.msra.mxu0 %v4007
      %4481 = vmatpush.bf16.msra.mxu0 %v4003
      %4482 = vmatpush.bf16.msra.mxu0 %v3999
      %4483 = vmatpush.bf16.msra.mxu0 %v3995
      %4484 = vmatpush.bf16.msra.mxu0 %v3991
      %4485 = vmatpush.bf16.msra.mxu0 %v3987
      %4486 = vmatpush.bf16.msra.mxu0 %v3983
      %4487 = vmatpush.bf16.msra.mxu0 %v3979
      %4488 = vmatmul.bf16.gmra.mxu0 %v2750
      %v4489 = vpop.f32.mrf.mxu0
      %v4490 = vadd.f32 %v4477, %v4489
      %v4491 = vpop.f32.mrf.mxu0
      %4492 = vdwg.mxu0
      %4493 = vmatpush.bf16.msra.mxu0 %v4039
      %4494 = vmatpush.bf16.msra.mxu0 %v4035
      %4495 = vmatpush.bf16.msra.mxu0 %v4031
      %4496 = vmatpush.bf16.msra.mxu0 %v4027
      %4497 = vmatpush.bf16.msra.mxu0 %v4023
      %4498 = vmatpush.bf16.msra.mxu0 %v4019
      %4499 = vmatpush.bf16.msra.mxu0 %v4015
      %4500 = vmatpush.bf16.msra.mxu0 %v4011
      %4501 = vmatmul.bf16.gmra.mxu0 %v2751
      %v4502 = vpop.f32.mrf.mxu0
      %v4503 = vadd.f32 %v4490, %v4502
      %v4504 = vpop.f32.mrf.mxu0
      %4505 = vdwg.mxu0
      %4506 = vmatpush.bf16.msra.mxu0 %v3816
      %4507 = vmatpush.bf16.msra.mxu0 %v3812
      %4508 = vmatpush.bf16.msra.mxu0 %v3808
      %4509 = vmatpush.bf16.msra.mxu0 %v3804
      %4510 = vmatpush.bf16.msra.mxu0 %v3800
      %4511 = vmatpush.bf16.msra.mxu0 %v3796
      %4512 = vmatpush.bf16.msra.mxu0 %v3792
      %4513 = vmatpush.bf16.msra.mxu0 %v3788
      %4514 = vmatmul.bf16.gmra.mxu0 %v2744
      %v4515 = vpop.f32.mrf.mxu0
      %v4516 = vadd.f32 %v3012, %v4515
      %v4517 = vpop.f32.mrf.mxu0
      %4518 = vdwg.mxu0
      %4519 = vmatpush.bf16.msra.mxu0 %v3848
      %4520 = vmatpush.bf16.msra.mxu0 %v3844
      %4521 = vmatpush.bf16.msra.mxu0 %v3840
      %4522 = vmatpush.bf16.msra.mxu0 %v3836
      %4523 = vmatpush.bf16.msra.mxu0 %v3832
      %4524 = vmatpush.bf16.msra.mxu0 %v3828
      %4525 = vmatpush.bf16.msra.mxu0 %v3824
      %4526 = vmatpush.bf16.msra.mxu0 %v3820
      %4527 = vmatmul.bf16.gmra.mxu0 %v2745
      %v4528 = vpop.f32.mrf.mxu0
      %v4529 = vadd.f32 %v4516, %v4528
      %v4530 = vpop.f32.mrf.mxu0
      %4531 = vdwg.mxu0
      %4532 = vmatpush.bf16.msra.mxu0 %v3880
      %4533 = vmatpush.bf16.msra.mxu0 %v3876
      %4534 = vmatpush.bf16.msra.mxu0 %v3872
      %4535 = vmatpush.bf16.msra.mxu0 %v3868
      %4536 = vmatpush.bf16.msra.mxu0 %v3864
      %4537 = vmatpush.bf16.msra.mxu0 %v3860
      %4538 = vmatpush.bf16.msra.mxu0 %v3856
      %4539 = vmatpush.bf16.msra.mxu0 %v3852
      %4540 = vmatmul.bf16.gmra.mxu0 %v2746
      %v4541 = vpop.f32.mrf.mxu0
      %v4542 = vadd.f32 %v4529, %v4541
      %v4543 = vpop.f32.mrf.mxu0
      %4544 = vdwg.mxu0
      %4545 = vmatpush.bf16.msra.mxu0 %v3912
      %4546 = vmatpush.bf16.msra.mxu0 %v3908
      %4547 = vmatpush.bf16.msra.mxu0 %v3904
      %4548 = vmatpush.bf16.msra.mxu0 %v3900
      %4549 = vmatpush.bf16.msra.mxu0 %v3896
      %4550 = vmatpush.bf16.msra.mxu0 %v3892
      %4551 = vmatpush.bf16.msra.mxu0 %v3888
      %4552 = vmatpush.bf16.msra.mxu0 %v3884
      %4553 = vmatmul.bf16.gmra.mxu0 %v2747
      %v4554 = vpop.f32.mrf.mxu0
      %v4555 = vadd.f32 %v4542, %v4554
      %v4556 = vpop.f32.mrf.mxu0
      %4557 = vdwg.mxu0
      %4558 = vmatpush.bf16.msra.mxu0 %v3944
      %4559 = vmatpush.bf16.msra.mxu0 %v3940
      %4560 = vmatpush.bf16.msra.mxu0 %v3936
      %4561 = vmatpush.bf16.msra.mxu0 %v3932
      %4562 = vmatpush.bf16.msra.mxu0 %v3928
      %4563 = vmatpush.bf16.msra.mxu0 %v3924
      %4564 = vmatpush.bf16.msra.mxu0 %v3920
      %4565 = vmatpush.bf16.msra.mxu0 %v3916
      %4566 = vmatmul.bf16.gmra.mxu0 %v2748
      %v4567 = vpop.f32.mrf.mxu0
      %v4568 = vadd.f32 %v4555, %v4567
      %v4569 = vpop.f32.mrf.mxu0
      %4570 = vdwg.mxu0
      %4571 = vmatpush.bf16.msra.mxu0 %v3976
      %4572 = vmatpush.bf16.msra.mxu0 %v3972
      %4573 = vmatpush.bf16.msra.mxu0 %v3968
      %4574 = vmatpush.bf16.msra.mxu0 %v3964
      %4575 = vmatpush.bf16.msra.mxu0 %v3960
      %4576 = vmatpush.bf16.msra.mxu0 %v3956
      %4577 = vmatpush.bf16.msra.mxu0 %v3952
      %4578 = vmatpush.bf16.msra.mxu0 %v3948
      %4579 = vmatmul.bf16.gmra.mxu0 %v2749
      %v4580 = vpop.f32.mrf.mxu0
      %v4581 = vadd.f32 %v4568, %v4580
      %v4582 = vpop.f32.mrf.mxu0
      %4583 = vdwg.mxu0
      %4584 = vmatpush.bf16.msra.mxu0 %v4008
      %4585 = vmatpush.bf16.msra.mxu0 %v4004
      %4586 = vmatpush.bf16.msra.mxu0 %v4000
      %4587 = vmatpush.bf16.msra.mxu0 %v3996
      %4588 = vmatpush.bf16.msra.mxu0 %v3992
      %4589 = vmatpush.bf16.msra.mxu0 %v3988
      %4590 = vmatpush.bf16.msra.mxu0 %v3984
      %4591 = vmatpush.bf16.msra.mxu0 %v3980
      %4592 = vmatmul.bf16.gmra.mxu0 %v2750
      %v4593 = vpop.f32.mrf.mxu0
      %v4594 = vadd.f32 %v4581, %v4593
      %v4595 = vpop.f32.mrf.mxu0
      %4596 = vdwg.mxu0
      %4597 = vmatpush.bf16.msra.mxu0 %v4040
      %4598 = vmatpush.bf16.msra.mxu0 %v4036
      %4599 = vmatpush.bf16.msra.mxu0 %v4032
      %4600 = vmatpush.bf16.msra.mxu0 %v4028
      %4601 = vmatpush.bf16.msra.mxu0 %v4024
      %4602 = vmatpush.bf16.msra.mxu0 %v4020
      %4603 = vmatpush.bf16.msra.mxu0 %v4016
      %4604 = vmatpush.bf16.msra.mxu0 %v4012
      %4605 = vmatmul.bf16.gmra.mxu0 %v2751
      %v4606 = vpop.f32.mrf.mxu0
      %v4607 = vadd.f32 %v4594, %v4606
      %v4608 = vpop.f32.mrf.mxu0
      %4609 = vdwg.mxu0
      %4610 = vmatpush.bf16.msra.mxu0 %v3817
      %4611 = vmatpush.bf16.msra.mxu0 %v3813
      %4612 = vmatpush.bf16.msra.mxu0 %v3809
      %4613 = vmatpush.bf16.msra.mxu0 %v3805
      %4614 = vmatpush.bf16.msra.mxu0 %v3801
      %4615 = vmatpush.bf16.msra.mxu0 %v3797
      %4616 = vmatpush.bf16.msra.mxu0 %v3793
      %4617 = vmatpush.bf16.msra.mxu0 %v3789
      %4618 = vmatmul.bf16.gmra.mxu0 %v2744
      %v4619 = vpop.f32.mrf.mxu0
      %v4620 = vadd.f32 %v3013, %v4619
      %v4621 = vpop.f32.mrf.mxu0
      %4622 = vdwg.mxu0
      %4623 = vmatpush.bf16.msra.mxu0 %v3849
      %4624 = vmatpush.bf16.msra.mxu0 %v3845
      %4625 = vmatpush.bf16.msra.mxu0 %v3841
      %4626 = vmatpush.bf16.msra.mxu0 %v3837
      %4627 = vmatpush.bf16.msra.mxu0 %v3833
      %4628 = vmatpush.bf16.msra.mxu0 %v3829
      %4629 = vmatpush.bf16.msra.mxu0 %v3825
      %4630 = vmatpush.bf16.msra.mxu0 %v3821
      %4631 = vmatmul.bf16.gmra.mxu0 %v2745
      %v4632 = vpop.f32.mrf.mxu0
      %v4633 = vadd.f32 %v4620, %v4632
      %v4634 = vpop.f32.mrf.mxu0
      %4635 = vdwg.mxu0
      %4636 = vmatpush.bf16.msra.mxu0 %v3881
      %4637 = vmatpush.bf16.msra.mxu0 %v3877
      %4638 = vmatpush.bf16.msra.mxu0 %v3873
      %4639 = vmatpush.bf16.msra.mxu0 %v3869
      %4640 = vmatpush.bf16.msra.mxu0 %v3865
      %4641 = vmatpush.bf16.msra.mxu0 %v3861
      %4642 = vmatpush.bf16.msra.mxu0 %v3857
      %4643 = vmatpush.bf16.msra.mxu0 %v3853
      %4644 = vmatmul.bf16.gmra.mxu0 %v2746
      %v4645 = vpop.f32.mrf.mxu0
      %v4646 = vadd.f32 %v4633, %v4645
      %v4647 = vpop.f32.mrf.mxu0
      %4648 = vdwg.mxu0
      %4649 = vmatpush.bf16.msra.mxu0 %v3913
      %4650 = vmatpush.bf16.msra.mxu0 %v3909
      %4651 = vmatpush.bf16.msra.mxu0 %v3905
      %4652 = vmatpush.bf16.msra.mxu0 %v3901
      %4653 = vmatpush.bf16.msra.mxu0 %v3897
      %4654 = vmatpush.bf16.msra.mxu0 %v3893
      %4655 = vmatpush.bf16.msra.mxu0 %v3889
      %4656 = vmatpush.bf16.msra.mxu0 %v3885
      %4657 = vmatmul.bf16.gmra.mxu0 %v2747
      %v4658 = vpop.f32.mrf.mxu0
      %v4659 = vadd.f32 %v4646, %v4658
      %v4660 = vpop.f32.mrf.mxu0
      %4661 = vdwg.mxu0
      %4662 = vmatpush.bf16.msra.mxu0 %v3945
      %4663 = vmatpush.bf16.msra.mxu0 %v3941
      %4664 = vmatpush.bf16.msra.mxu0 %v3937
      %4665 = vmatpush.bf16.msra.mxu0 %v3933
      %4666 = vmatpush.bf16.msra.mxu0 %v3929
      %4667 = vmatpush.bf16.msra.mxu0 %v3925
      %4668 = vmatpush.bf16.msra.mxu0 %v3921
      %4669 = vmatpush.bf16.msra.mxu0 %v3917
      %4670 = vmatmul.bf16.gmra.mxu0 %v2748
      %v4671 = vpop.f32.mrf.mxu0
      %v4672 = vadd.f32 %v4659, %v4671
      %v4673 = vpop.f32.mrf.mxu0
      %4674 = vdwg.mxu0
      %4675 = vmatpush.bf16.msra.mxu0 %v3977
      %4676 = vmatpush.bf16.msra.mxu0 %v3973
      %4677 = vmatpush.bf16.msra.mxu0 %v3969
      %4678 = vmatpush.bf16.msra.mxu0 %v3965
      %4679 = vmatpush.bf16.msra.mxu0 %v3961
      %4680 = vmatpush.bf16.msra.mxu0 %v3957
      %4681 = vmatpush.bf16.msra.mxu0 %v3953
      %4682 = vmatpush.bf16.msra.mxu0 %v3949
      %4683 = vmatmul.bf16.gmra.mxu0 %v2749
      %v4684 = vpop.f32.mrf.mxu0
      %v4685 = vadd.f32 %v4672, %v4684
      %v4686 = vpop.f32.mrf.mxu0
      %4687 = vdwg.mxu0
      %4688 = vmatpush.bf16.msra.mxu0 %v4009
      %4689 = vmatpush.bf16.msra.mxu0 %v4005
      %4690 = vmatpush.bf16.msra.mxu0 %v4001
      %4691 = vmatpush.bf16.msra.mxu0 %v3997
      %4692 = vmatpush.bf16.msra.mxu0 %v3993
      %4693 = vmatpush.bf16.msra.mxu0 %v3989
      %4694 = vmatpush.bf16.msra.mxu0 %v3985
      %4695 = vmatpush.bf16.msra.mxu0 %v3981
      %4696 = vmatmul.bf16.gmra.mxu0 %v2750
      %v4697 = vpop.f32.mrf.mxu0
      %v4698 = vadd.f32 %v4685, %v4697
      %v4699 = vpop.f32.mrf.mxu0
      %4700 = vdwg.mxu0
      %4701 = vmatpush.bf16.msra.mxu0 %v4041
      %4702 = vmatpush.bf16.msra.mxu0 %v4037
      %4703 = vmatpush.bf16.msra.mxu0 %v4033
      %4704 = vmatpush.bf16.msra.mxu0 %v4029
      %4705 = vmatpush.bf16.msra.mxu0 %v4025
      %4706 = vmatpush.bf16.msra.mxu0 %v4021
      %4707 = vmatpush.bf16.msra.mxu0 %v4017
      %4708 = vmatpush.bf16.msra.mxu0 %v4013
      %4709 = vmatmul.bf16.gmra.mxu0 %v2751
      %v4710 = vpop.f32.mrf.mxu0
      %v4711 = vadd.f32 %v4698, %v4710
      %v4712 = vpop.f32.mrf.mxu0
      %4713 = vdwg.mxu0
      %v4714 = vmax.f32 %v4399, 0.0
      %v4715 = vmax.f32 %v4503, 0.0
      %v4716 = vmax.f32 %v4607, 0.0
      %v4717 = vmax.f32 %v4711, 0.0
      %v4722 = vrot.slane %v4715, 7
      %v4723 = vrot.slane %v4716, 6
      %v4724 = vrot.slane %v4717, 5
      %v4725 = vsel %vm1092, %v4714, %v4722
      %v4726 = vsel %vm1095, %v4723, %v4724
      %v4727 = vsel %vm1099, %v4725, %v4726
      %v4728 = vsel %vm1102, %v4714, %v4722
      %v4729 = vsel %vm1104, %v4723, %v4724
      %v4730 = vsel %vm1106, %v4728, %v4729
      %v4731 = vrot.slane %v4730, 1
      %v4732 = vsel %vm1095, %v4714, %v4722
      %vm4733 = vcmask 1044484
      %v4734 = vsel %vm4733, %v4723, %v4724
      %vm4735 = vcmask 1043458
      %v4736 = vsel %vm4735, %v4732, %v4734
      %v4737 = vrot.slane %v4736, 2
      %v4738 = vsel %vm1104, %v4714, %v4722
      %vm4739 = vcmask 1045509
      %v4740 = vsel %vm4739, %v4723, %v4724
      %vm4741 = vcmask 1044483
      %v4742 = vsel %vm4741, %v4738, %v4740
      %v4743 = vrot.slane %v4742, 3
      %v4748 = vlaneseq
      %vm4749 = vcmp.ge.s32.totalorder %v4748, 0
      %vm4750 = vcmp.lt.s32.totalorder %v4748, 512
      %vm4751 = vmand %vm4749, %vm4750
      %4752 = vst.msk [vmem:[%s337] sm:$0xf] %vm4751, %v4727
      %4753 = vst.msk [vmem:[%s337 + $0x4] sm:$0xf] %vm4751, %v4731
      %4754 = vst.msk [vmem:[%s337 + $0x8] sm:$0xf] %vm4751, %v4737
      %4755 = vst.msk [vmem:[%s337 + $0xc] sm:$0xf] %vm4751, %v4743
      %s4756 = smul.u32 4, %s20
      %p4757 = scmp.lt.s32.totalorder %s4756, 7
      %s4758 = scalar_select %p4757, %s4756, 7
      %s4759 = smul.addr %s4758, 4
      %s4760 = scalar_lea.vmem %s9, %s4759
      // Predicated region
      $region57: #{cnn_model_forward.3} parent=55 // pred_check
        %p4761 = pneg %p232
      $region58: #{cnn_model_forward.3} parent=55 // pred_check_branch
        %4763 = sbr.rel (%p4761) target = $region60
      $region59: #{cnn_model_forward.3} parent=55 // pred_region
        %s4764 = smul.u32 4, %s20
      $region60: #{cnn_model_forward.3} parent=55 // pred_fallthru
        _
    $region56: #{cnn_model_forward.3} parent=5 // pred_fallthru
      _
    %p4765 = scmp.le.s32.totalorder 2, %s15
    // Predicated region
    $region61: #{cnn_model_forward.3} parent=5 // pred_check
      %p4766 = pneg %p4765
    $region62: #{cnn_model_forward.3} parent=5 // pred_check_branch
      %4768 = sbr.rel (%p4766) target = $region64
    $region63: #{cnn_model_forward.3} parent=5 // pred_region
      %s4769 = ssub.s32 %s15, 2
      // Predicated region
      $region65: #{cnn_model_forward.3} parent=63 // pred_check
        %p4770 = pneg %p238
      $region66: #{cnn_model_forward.3} parent=63 // pred_check_branch
        %4772 = sbr.rel (%p4770) target = $region68
      $region67: #{cnn_model_forward.3} parent=63 // pred_region
        %s4773 = smul.u32 4, %s21
        %p4774 = scmp.lt.s32.totalorder %s4773, 7
        %s4775 = scalar_select %p4774, %s4773, 7
        %s4776 = smul.addr %s4775, 4
        %s4777 = scalar_lea.vmem %s9, %s4776
      $region68: #{cnn_model_forward.3} parent=63 // pred_fallthru
        _
    $region64: #{cnn_model_forward.3} parent=5 // pred_fallthru
      _
  $region6: #{cnn_model_forward.3} parent=0 // loop_footer
    %s19 = sadd.s32 1, %s15
  $region7: #{cnn_model_forward.3} parent=0 // loop_footer_branch
    %14 = sbr.rel target = $region3
  $region8: #{cnn_model_forward.3} parent=0 // loop_exit
    _

// kernel: cnn_model_forward.2
$region0: #{cnn_model_forward.2}
  #allocation0 [shape = 'u32[]', space=smem, size = 0x4, offset = 0x4, fixed_abs, tag = 'smem constant byte address 0x4 - core index']
  #allocation1 [shape = 'u32[72,128]{1,0:T(1,128)}', space=vmem, size = 0x9000, scoped, tag = 'internal scratch']
  %s0 = inlined_call_operand.vmem [shape: bf16[8,9,4,9,16], index: 0, kind: input, shape index: {}]
  %s1 = inlined_call_operand.vmem [shape: bf16[256,32], index: 1, kind: input, shape index: {}]
  %s2 = inlined_call_operand.vmem [shape: f32[1,32], index: 2, kind: input, shape index: {}]
  %s3 = inlined_call_operand.vmem [shape: bf16[8,8,8,32], index: 3, kind: output, shape index: {}]
  %s4 = sld [smem:[#allocation0]]
  $region45: #{cnn_model_forward.2} parent=0
    _
  %s6 = ssub.s32 1, %s4
  %s7 = scalar_select 0, %s6, %s4
  loop: start=0, step=1, limit=4
  $region2: #{cnn_model_forward.2} parent=0 // loop_pre_header
    _
  $region3: #{cnn_model_forward.2} parent=0 // loop_header
    %s9 = sphi 0, %s13
    %p10 = scmp.ge.s32.totalorder %s9, 4
    %s19 = sphi 0, %s21
    %s22 = sphi 0, %s19
    %s23 = sphi 0, %s22
    %s39 = sphi 0, %s23
    %s43 = sphi 0, %s43
    %s45 = sphi 0, %s43
    %s46 = sphi 0, %s45
    %s60 = sphi 0, %s46
    %s64 = sphi 0, %s64
    %s66 = sphi 0, %s64
    %s67 = sphi 0, %s66
    %s81 = sphi 0, %s67
    %s87 = sphi 0, %s89
    %s90 = sphi 0, %s87
    %s91 = sphi 0, %s90
    %s107 = sphi 0, %s91
  $region4: #{cnn_model_forward.2} parent=0 // loop_header_branch
    %12 = sbr.rel (%p10) target = $region8
  $region5: #{cnn_model_forward.2} parent=0 // loop_body
    %s14 = ssub.s32 %s9, 1
    %s15 = ssub.s32 %s9, 2
    %s16 = sadd.s32 %s9, 1
    %s17 = ssub.s32 %s9, %s16
    %p18 = scmp.eq.s32.totalorder %s17, 0
    %s20 = sadd.s32 %s19, 1
    %s21 = scalar_select %p18, %s19, %s20
    %p24 = pneg %p18
    %p25 = scmp.eq.s32.totalorder %s9, 1
    %p26 = por %p24, %p25
    %p27 = scmp.ne.s32.totalorder %s19, %s22
    %p28 = scmp.eq.s32.totalorder %s9, 0
    %p29 = por %p27, %p28
    %p30 = scmp.ne.s32.totalorder %s19, %s22
    %p31 = scmp.eq.s32.totalorder %s14, 1
    %p32 = por %p30, %p31
    %p33 = scmp.ne.s32.totalorder %s22, %s23
    %p34 = scmp.eq.s32.totalorder %s14, 0
    %p35 = por %p33, %p34
    %p36 = scmp.ne.s32.totalorder %s22, %s23
    %p37 = scmp.eq.s32.totalorder %s15, 1
    %p38 = por %p36, %p37
    %p40 = scmp.ne.s32.totalorder %s23, %s39
    %p41 = scmp.eq.s32.totalorder %s15, 0
    %p42 = por %p40, %p41
    %s44 = sadd.s32 %s43, 1
    %p47 = scmp.eq.s32.totalorder %s9, 1
    %p48 = scmp.ne.s32.totalorder %s43, %s45
    %p49 = scmp.eq.s32.totalorder %s9, 0
    %p50 = por %p48, %p49
    %p51 = scmp.ne.s32.totalorder %s43, %s45
    %p52 = scmp.eq.s32.totalorder %s14, 1
    %p53 = por %p51, %p52
    %p54 = scmp.ne.s32.totalorder %s45, %s46
    %p55 = scmp.eq.s32.totalorder %s14, 0
    %p56 = por %p54, %p55
    %p57 = scmp.ne.s32.totalorder %s45, %s46
    %p58 = scmp.eq.s32.totalorder %s15, 1
    %p59 = por %p57, %p58
    %p61 = scmp.ne.s32.totalorder %s46, %s60
    %p62 = scmp.eq.s32.totalorder %s15, 0
    %p63 = por %p61, %p62
    %s65 = sadd.s32 %s64, 1
    %p68 = scmp.eq.s32.totalorder %s9, 1
    %p69 = scmp.ne.s32.totalorder %s64, %s66
    %p70 = scmp.eq.s32.totalorder %s9, 0
    %p71 = por %p69, %p70
    %p72 = scmp.ne.s32.totalorder %s64, %s66
    %p73 = scmp.eq.s32.totalorder %s14, 1
    %p74 = por %p72, %p73
    %p75 = scmp.ne.s32.totalorder %s66, %s67
    %p76 = scmp.eq.s32.totalorder %s14, 0
    %p77 = por %p75, %p76
    %p78 = scmp.ne.s32.totalorder %s66, %s67
    %p79 = scmp.eq.s32.totalorder %s15, 1
    %p80 = por %p78, %p79
    %p82 = scmp.ne.s32.totalorder %s67, %s81
    %p83 = scmp.eq.s32.totalorder %s15, 0
    %p84 = por %p82, %p83
    %s85 = ssub.s32 %s9, %s16
    %p86 = scmp.eq.s32.totalorder %s85, 0
    %s88 = sadd.s32 %s87, 1
    %s89 = scalar_select %p86, %s87, %s88
    %p92 = pneg %p86
    %p93 = scmp.eq.s32.totalorder %s9, 1
    %p94 = por %p92, %p93
    %p95 = scmp.ne.s32.totalorder %s87, %s90
    %p96 = scmp.eq.s32.totalorder %s9, 0
    %p97 = por %p95, %p96
    %p98 = scmp.ne.s32.totalorder %s87, %s90
    %p99 = scmp.eq.s32.totalorder %s14, 1
    %p100 = por %p98, %p99
    %p101 = scmp.ne.s32.totalorder %s90, %s91
    %p102 = scmp.eq.s32.totalorder %s14, 0
    %p103 = por %p101, %p102
    %p104 = scmp.ne.s32.totalorder %s90, %s91
    %p105 = scmp.eq.s32.totalorder %s15, 1
    %p106 = por %p104, %p105
    %p108 = scmp.ne.s32.totalorder %s91, %s107
    %p109 = scmp.eq.s32.totalorder %s15, 0
    %p110 = por %p108, %p109
    %p111 = scmp.le.s32.totalorder 1, %s9
    %p112 = scmp.lt.s32.totalorder %s9, 3
    %p113 = pnand %p111, %p112
    %p114 = pneg %p113
    // Predicated region
    $region9: #{cnn_model_forward.2} parent=5 // pred_check
      _
    $region10: #{cnn_model_forward.2} parent=5 // pred_check_branch
      %116 = sbr.rel (%p113) target = $region12
    $region11: #{cnn_model_forward.2} parent=5 // pred_region
      %s117 = ssub.s32 %s9, 1
      // Predicated region
      $region13: #{cnn_model_forward.2} parent=11 // pred_check
        %p118 = pneg %p56
      $region14: #{cnn_model_forward.2} parent=11 // pred_check_branch
        %120 = sbr.rel (%p118) target = $region16
      $region15: #{cnn_model_forward.2} parent=11 // pred_region
        _
      $region16: #{cnn_model_forward.2} parent=11 // pred_fallthru
        _
      // Predicated region
      $region17: #{cnn_model_forward.2} parent=11 // pred_check
        %p121 = pneg %p77
      $region18: #{cnn_model_forward.2} parent=11 // pred_check_branch
        %123 = sbr.rel (%p121) target = $region20
      $region19: #{cnn_model_forward.2} parent=11 // pred_region
        _
      $region20: #{cnn_model_forward.2} parent=11 // pred_fallthru
        _
    $region12: #{cnn_model_forward.2} parent=5 // pred_fallthru
      _
    %p124 = scmp.lt.s32.totalorder %s9, 2
    // Predicated region
    $region21: #{cnn_model_forward.2} parent=5 // pred_check
      %p125 = pneg %p124
    $region22: #{cnn_model_forward.2} parent=5 // pred_check_branch
      %127 = sbr.rel (%p125) target = $region24
    $region23: #{cnn_model_forward.2} parent=5 // pred_region
      // Predicated region
      $region25: #{cnn_model_forward.2} parent=23 // pred_check
        %p128 = pneg %p29
      $region26: #{cnn_model_forward.2} parent=23 // pred_check_branch
        %130 = sbr.rel (%p128) target = $region28
      $region27: #{cnn_model_forward.2} parent=23 // pred_region
        %s131 = smul.u32 4, %s9
        %p132 = scmp.lt.s32.totalorder %s131, 7
        %s133 = scalar_select %p132, %s131, 7
        %s134 = smul.addr %s133, 72
        %s135 = smul.addr %s134, 4
        %s136 = scalar_lea.vmem %s0, %s135
        %s137 = smul.u32 4, %s9
      $region28: #{cnn_model_forward.2} parent=23 // pred_fallthru
        _
    $region24: #{cnn_model_forward.2} parent=5 // pred_fallthru
      _
    %p138 = scmp.le.s32.totalorder 1, %s9
    %p139 = scmp.lt.s32.totalorder %s9, 3
    %p140 = pnand %p138, %p139
    %p141 = pneg %p140
    // Predicated region
    $region29: #{cnn_model_forward.2} parent=5 // pred_check
      _
    $region30: #{cnn_model_forward.2} parent=5 // pred_check_branch
      %143 = sbr.rel (%p140) target = $region32
    $region31: #{cnn_model_forward.2} parent=5 // pred_region
      %s144 = ssub.s32 %s9, 1
      %s145 = smul.u32 4, %s14
      %p146 = scmp.lt.s32.totalorder %s145, 7
      %s147 = scalar_select %p146, %s145, 7
      %s148 = smul.addr %s147, 72
      %s149 = smul.addr %s148, 4
      %s150 = scalar_lea.vmem %s0, %s149
      %p151 = pneg %p35
      %p152 = pneg %p32
      %p153 = pneg %p56
      %p154 = pneg %p53
      %p155 = pneg %p77
      %p156 = pneg %p74
      %p157 = pneg %p103
      %p158 = pneg %p100
      %s159 = smul.u32 4, %s14
      %p160 = scmp.lt.s32.totalorder %s159, 7
      %s161 = scalar_select %p160, %s159, 7
      %s162 = smul.addr %s161, 8
      %s163 = smul.addr %s162, 4
      %s164 = scalar_lea.vmem %s3, %s163
      %s165 = smul.u32 4, %s14
      %p166 = scmp.lt.s32.totalorder %s165, 7
      %s167 = scalar_select %p166, %s165, 7
      %s168 = smul.addr %s167, 72
      %s169 = smul.addr %s168, 4
      %s170 = scalar_lea.vmem %s0, %s169
      %s171 = smul.u32 4, %s14
      %s172 = smul.u32 4, %s14
      %p173 = scmp.lt.s32.totalorder %s172, 7
      %s174 = scalar_select %p173, %s172, 7
      %s175 = smul.addr %s174, 8
      %s176 = smul.addr %s175, 4
      %s177 = scalar_lea.vmem %s3, %s176
      %s178 = smul.u32 4, %s14
      %v179 = vld [vmem:[%s170] sm:$0xf]
      %v180 = vld [vmem:[%s170 + $0x20] sm:$0xf]
      %v181 = vld [vmem:[%s170 + $0x40] sm:$0xf]
      %v182 = vld [vmem:[%s170 + $0x60] sm:$0xf]
      %v183 = vld [vmem:[%s170 + $0x80] sm:$0xf]
      %v184 = vld [vmem:[%s170 + $0xa0] sm:$0xf]
      %v185 = vld [vmem:[%s170 + $0xc0] sm:$0xf]
      %v186 = vld [vmem:[%s170 + $0xe0] sm:$0xf]
      %v187 = vld [vmem:[%s170 + $0x120] sm:$0xf]
      %v188 = vld [vmem:[%s170 + $0x140] sm:$0xf]
      %v189 = vld [vmem:[%s170 + $0x160] sm:$0xf]
      %v190 = vld [vmem:[%s170 + $0x180] sm:$0xf]
      %v191 = vld [vmem:[%s170 + $0x1a0] sm:$0xf]
      %v192 = vld [vmem:[%s170 + $0x1c0] sm:$0xf]
      %v193 = vld [vmem:[%s170 + $0x1e0] sm:$0xf]
      %v194 = vld [vmem:[%s170 + $0x200] sm:$0xf]
      %v195 = vld [vmem:[%s170 + $0x240] sm:$0xf]
      %v196 = vld [vmem:[%s170 + $0x260] sm:$0xf]
      %v197 = vld [vmem:[%s170 + $0x280] sm:$0xf]
      %v198 = vld [vmem:[%s170 + $0x2a0] sm:$0xf]
      %v199 = vld [vmem:[%s170 + $0x2c0] sm:$0xf]
      %v200 = vld [vmem:[%s170 + $0x2e0] sm:$0xf]
      %v201 = vld [vmem:[%s170 + $0x300] sm:$0xf]
      %v202 = vld [vmem:[%s170 + $0x320] sm:$0xf]
      %v203 = vld [vmem:[%s170 + $0x360] sm:$0xf]
      %v204 = vld [vmem:[%s170 + $0x380] sm:$0xf]
      %v205 = vld [vmem:[%s170 + $0x3a0] sm:$0xf]
      %v206 = vld [vmem:[%s170 + $0x3c0] sm:$0xf]
      %v207 = vld [vmem:[%s170 + $0x3e0] sm:$0xf]
      %v208 = vld [vmem:[%s170 + $0x400] sm:$0xf]
      %v209 = vld [vmem:[%s170 + $0x420] sm:$0xf]
      %v210 = vld [vmem:[%s170 + $0x440] sm:$0xf]
      %v211 = vld [vmem:[%s170 + $0x4] sm:$0x1]
      %v212 = vld [vmem:[%s170 + $0x24] sm:$0x1]
      %v213 = vld [vmem:[%s170 + $0x44] sm:$0x1]
      %v214 = vld [vmem:[%s170 + $0x64] sm:$0x1]
      %v215 = vld [vmem:[%s170 + $0x84] sm:$0x1]
      %v216 = vld [vmem:[%s170 + $0xa4] sm:$0x1]
      %v217 = vld [vmem:[%s170 + $0xc4] sm:$0x1]
      %v218 = vld [vmem:[%s170 + $0xe4] sm:$0x1]
      %v219 = vld [vmem:[%s170 + $0x124] sm:$0x1]
      %v220 = vld [vmem:[%s170 + $0x144] sm:$0x1]
      %v221 = vld [vmem:[%s170 + $0x164] sm:$0x1]
      %v222 = vld [vmem:[%s170 + $0x184] sm:$0x1]
      %v223 = vld [vmem:[%s170 + $0x1a4] sm:$0x1]
      %v224 = vld [vmem:[%s170 + $0x1c4] sm:$0x1]
      %v225 = vld [vmem:[%s170 + $0x1e4] sm:$0x1]
      %v226 = vld [vmem:[%s170 + $0x204] sm:$0x1]
      %v227 = vld [vmem:[%s170 + $0x244] sm:$0x1]
      %v228 = vld [vmem:[%s170 + $0x264] sm:$0x1]
      %v229 = vld [vmem:[%s170 + $0x284] sm:$0x1]
      %v230 = vld [vmem:[%s170 + $0x2a4] sm:$0x1]
      %v231 = vld [vmem:[%s170 + $0x2c4] sm:$0x1]
      %v232 = vld [vmem:[%s170 + $0x2e4] sm:$0x1]
      %v233 = vld [vmem:[%s170 + $0x304] sm:$0x1]
      %v234 = vld [vmem:[%s170 + $0x324] sm:$0x1]
      %v235 = vld [vmem:[%s170 + $0x364] sm:$0x1]
      %v236 = vld [vmem:[%s170 + $0x384] sm:$0x1]
      %v237 = vld [vmem:[%s170 + $0x3a4] sm:$0x1]
      %v238 = vld [vmem:[%s170 + $0x3c4] sm:$0x1]
      %v239 = vld [vmem:[%s170 + $0x3e4] sm:$0x1]
      %v240 = vld [vmem:[%s170 + $0x404] sm:$0x1]
      %v241 = vld [vmem:[%s170 + $0x424] sm:$0x1]
      %v242 = vld [vmem:[%s170 + $0x444] sm:$0x1]
      %s243 = scalar_lea.vmem %s170, 8
      %v244 = vld [vmem:[%s243] sm:$0xf]
      %v245 = vld [vmem:[%s243 + $0x20] sm:$0xf]
      %v246 = vld [vmem:[%s243 + $0x40] sm:$0xf]
      %v247 = vld [vmem:[%s243 + $0x60] sm:$0xf]
      %v248 = vld [vmem:[%s243 + $0x80] sm:$0xf]
      %v249 = vld [vmem:[%s243 + $0xa0] sm:$0xf]
      %v250 = vld [vmem:[%s243 + $0xc0] sm:$0xf]
      %v251 = vld [vmem:[%s243 + $0xe0] sm:$0xf]
      %v252 = vld [vmem:[%s243 + $0x120] sm:$0xf]
      %v253 = vld [vmem:[%s243 + $0x140] sm:$0xf]
      %v254 = vld [vmem:[%s243 + $0x160] sm:$0xf]
      %v255 = vld [vmem:[%s243 + $0x180] sm:$0xf]
      %v256 = vld [vmem:[%s243 + $0x1a0] sm:$0xf]
      %v257 = vld [vmem:[%s243 + $0x1c0] sm:$0xf]
      %v258 = vld [vmem:[%s243 + $0x1e0] sm:$0xf]
      %v259 = vld [vmem:[%s243 + $0x200] sm:$0xf]
      %v260 = vld [vmem:[%s243 + $0x240] sm:$0xf]
      %v261 = vld [vmem:[%s243 + $0x260] sm:$0xf]
      %v262 = vld [vmem:[%s243 + $0x280] sm:$0xf]
      %v263 = vld [vmem:[%s243 + $0x2a0] sm:$0xf]
      %v264 = vld [vmem:[%s243 + $0x2c0] sm:$0xf]
      %v265 = vld [vmem:[%s243 + $0x2e0] sm:$0xf]
      %v266 = vld [vmem:[%s243 + $0x300] sm:$0xf]
      %v267 = vld [vmem:[%s243 + $0x320] sm:$0xf]
      %v268 = vld [vmem:[%s243 + $0x360] sm:$0xf]
      %v269 = vld [vmem:[%s243 + $0x380] sm:$0xf]
      %v270 = vld [vmem:[%s243 + $0x3a0] sm:$0xf]
      %v271 = vld [vmem:[%s243 + $0x3c0] sm:$0xf]
      %v272 = vld [vmem:[%s243 + $0x3e0] sm:$0xf]
      %v273 = vld [vmem:[%s243 + $0x400] sm:$0xf]
      %v274 = vld [vmem:[%s243 + $0x420] sm:$0xf]
      %v275 = vld [vmem:[%s243 + $0x440] sm:$0xf]
      %v276 = vld [vmem:[%s243 + $0x4] sm:$0x1]
      %v277 = vld [vmem:[%s243 + $0x24] sm:$0x1]
      %v278 = vld [vmem:[%s243 + $0x44] sm:$0x1]
      %v279 = vld [vmem:[%s243 + $0x64] sm:$0x1]
      %v280 = vld [vmem:[%s243 + $0x84] sm:$0x1]
      %v281 = vld [vmem:[%s243 + $0xa4] sm:$0x1]
      %v282 = vld [vmem:[%s243 + $0xc4] sm:$0x1]
      %v283 = vld [vmem:[%s243 + $0xe4] sm:$0x1]
      %v284 = vld [vmem:[%s243 + $0x124] sm:$0x1]
      %v285 = vld [vmem:[%s243 + $0x144] sm:$0x1]
      %v286 = vld [vmem:[%s243 + $0x164] sm:$0x1]
      %v287 = vld [vmem:[%s243 + $0x184] sm:$0x1]
      %v288 = vld [vmem:[%s243 + $0x1a4] sm:$0x1]
      %v289 = vld [vmem:[%s243 + $0x1c4] sm:$0x1]
      %v290 = vld [vmem:[%s243 + $0x1e4] sm:$0x1]
      %v291 = vld [vmem:[%s243 + $0x204] sm:$0x1]
      %v292 = vld [vmem:[%s243 + $0x244] sm:$0x1]
      %v293 = vld [vmem:[%s243 + $0x264] sm:$0x1]
      %v294 = vld [vmem:[%s243 + $0x284] sm:$0x1]
      %v295 = vld [vmem:[%s243 + $0x2a4] sm:$0x1]
      %v296 = vld [vmem:[%s243 + $0x2c4] sm:$0x1]
      %v297 = vld [vmem:[%s243 + $0x2e4] sm:$0x1]
      %v298 = vld [vmem:[%s243 + $0x304] sm:$0x1]
      %v299 = vld [vmem:[%s243 + $0x324] sm:$0x1]
      %v300 = vld [vmem:[%s243 + $0x364] sm:$0x1]
      %v301 = vld [vmem:[%s243 + $0x384] sm:$0x1]
      %v302 = vld [vmem:[%s243 + $0x3a4] sm:$0x1]
      %v303 = vld [vmem:[%s243 + $0x3c4] sm:$0x1]
      %v304 = vld [vmem:[%s243 + $0x3e4] sm:$0x1]
      %v305 = vld [vmem:[%s243 + $0x404] sm:$0x1]
      %v306 = vld [vmem:[%s243 + $0x424] sm:$0x1]
      %v307 = vld [vmem:[%s243 + $0x444] sm:$0x1]
      %s308 = scalar_lea.vmem %s170, 16
      %v309 = vld [vmem:[%s308] sm:$0xf]
      %v310 = vld [vmem:[%s308 + $0x20] sm:$0xf]
      %v311 = vld [vmem:[%s308 + $0x40] sm:$0xf]
      %v312 = vld [vmem:[%s308 + $0x60] sm:$0xf]
      %v313 = vld [vmem:[%s308 + $0x80] sm:$0xf]
      %v314 = vld [vmem:[%s308 + $0xa0] sm:$0xf]
      %v315 = vld [vmem:[%s308 + $0xc0] sm:$0xf]
      %v316 = vld [vmem:[%s308 + $0xe0] sm:$0xf]
      %v317 = vld [vmem:[%s308 + $0x120] sm:$0xf]
      %v318 = vld [vmem:[%s308 + $0x140] sm:$0xf]
      %v319 = vld [vmem:[%s308 + $0x160] sm:$0xf]
      %v320 = vld [vmem:[%s308 + $0x180] sm:$0xf]
      %v321 = vld [vmem:[%s308 + $0x1a0] sm:$0xf]
      %v322 = vld [vmem:[%s308 + $0x1c0] sm:$0xf]
      %v323 = vld [vmem:[%s308 + $0x1e0] sm:$0xf]
      %v324 = vld [vmem:[%s308 + $0x200] sm:$0xf]
      %v325 = vld [vmem:[%s308 + $0x240] sm:$0xf]
      %v326 = vld [vmem:[%s308 + $0x260] sm:$0xf]
      %v327 = vld [vmem:[%s308 + $0x280] sm:$0xf]
      %v328 = vld [vmem:[%s308 + $0x2a0] sm:$0xf]
      %v329 = vld [vmem:[%s308 + $0x2c0] sm:$0xf]
      %v330 = vld [vmem:[%s308 + $0x2e0] sm:$0xf]
      %v331 = vld [vmem:[%s308 + $0x300] sm:$0xf]
      %v332 = vld [vmem:[%s308 + $0x320] sm:$0xf]
      %v333 = vld [vmem:[%s308 + $0x360] sm:$0xf]
      %v334 = vld [vmem:[%s308 + $0x380] sm:$0xf]
      %v335 = vld [vmem:[%s308 + $0x3a0] sm:$0xf]
      %v336 = vld [vmem:[%s308 + $0x3c0] sm:$0xf]
      %v337 = vld [vmem:[%s308 + $0x3e0] sm:$0xf]
      %v338 = vld [vmem:[%s308 + $0x400] sm:$0xf]
      %v339 = vld [vmem:[%s308 + $0x420] sm:$0xf]
      %v340 = vld [vmem:[%s308 + $0x440] sm:$0xf]
      %v341 = vld [vmem:[%s308 + $0x4] sm:$0x1]
      %v342 = vld [vmem:[%s308 + $0x24] sm:$0x1]
      %v343 = vld [vmem:[%s308 + $0x44] sm:$0x1]
      %v344 = vld [vmem:[%s308 + $0x64] sm:$0x1]
      %v345 = vld [vmem:[%s308 + $0x84] sm:$0x1]
      %v346 = vld [vmem:[%s308 + $0xa4] sm:$0x1]
      %v347 = vld [vmem:[%s308 + $0xc4] sm:$0x1]
      %v348 = vld [vmem:[%s308 + $0xe4] sm:$0x1]
      %v349 = vld [vmem:[%s308 + $0x124] sm:$0x1]
      %v350 = vld [vmem:[%s308 + $0x144] sm:$0x1]
      %v351 = vld [vmem:[%s308 + $0x164] sm:$0x1]
      %v352 = vld [vmem:[%s308 + $0x184] sm:$0x1]
      %v353 = vld [vmem:[%s308 + $0x1a4] sm:$0x1]
      %v354 = vld [vmem:[%s308 + $0x1c4] sm:$0x1]
      %v355 = vld [vmem:[%s308 + $0x1e4] sm:$0x1]
      %v356 = vld [vmem:[%s308 + $0x204] sm:$0x1]
      %v357 = vld [vmem:[%s308 + $0x244] sm:$0x1]
      %v358 = vld [vmem:[%s308 + $0x264] sm:$0x1]
      %v359 = vld [vmem:[%s308 + $0x284] sm:$0x1]
      %v360 = vld [vmem:[%s308 + $0x2a4] sm:$0x1]
      %v361 = vld [vmem:[%s308 + $0x2c4] sm:$0x1]
      %v362 = vld [vmem:[%s308 + $0x2e4] sm:$0x1]
      %v363 = vld [vmem:[%s308 + $0x304] sm:$0x1]
      %v364 = vld [vmem:[%s308 + $0x324] sm:$0x1]
      %v365 = vld [vmem:[%s308 + $0x364] sm:$0x1]
      %v366 = vld [vmem:[%s308 + $0x384] sm:$0x1]
      %v367 = vld [vmem:[%s308 + $0x3a4] sm:$0x1]
      %v368 = vld [vmem:[%s308 + $0x3c4] sm:$0x1]
      %v369 = vld [vmem:[%s308 + $0x3e4] sm:$0x1]
      %v370 = vld [vmem:[%s308 + $0x404] sm:$0x1]
      %v371 = vld [vmem:[%s308 + $0x424] sm:$0x1]
      %v372 = vld [vmem:[%s308 + $0x444] sm:$0x1]
      %s373 = scalar_lea.vmem %s170, 24
      %v374 = vld [vmem:[%s373] sm:$0xf]
      %v375 = vld [vmem:[%s373 + $0x20] sm:$0xf]
      %v376 = vld [vmem:[%s373 + $0x40] sm:$0xf]
      %v377 = vld [vmem:[%s373 + $0x60] sm:$0xf]
      %v378 = vld [vmem:[%s373 + $0x80] sm:$0xf]
      %v379 = vld [vmem:[%s373 + $0xa0] sm:$0xf]
      %v380 = vld [vmem:[%s373 + $0xc0] sm:$0xf]
      %v381 = vld [vmem:[%s373 + $0xe0] sm:$0xf]
      %v382 = vld [vmem:[%s373 + $0x120] sm:$0xf]
      %v383 = vld [vmem:[%s373 + $0x140] sm:$0xf]
      %v384 = vld [vmem:[%s373 + $0x160] sm:$0xf]
      %v385 = vld [vmem:[%s373 + $0x180] sm:$0xf]
      %v386 = vld [vmem:[%s373 + $0x1a0] sm:$0xf]
      %v387 = vld [vmem:[%s373 + $0x1c0] sm:$0xf]
      %v388 = vld [vmem:[%s373 + $0x1e0] sm:$0xf]
      %v389 = vld [vmem:[%s373 + $0x200] sm:$0xf]
      %v390 = vld [vmem:[%s373 + $0x240] sm:$0xf]
      %v391 = vld [vmem:[%s373 + $0x260] sm:$0xf]
      %v392 = vld [vmem:[%s373 + $0x280] sm:$0xf]
      %v393 = vld [vmem:[%s373 + $0x2a0] sm:$0xf]
      %v394 = vld [vmem:[%s373 + $0x2c0] sm:$0xf]
      %v395 = vld [vmem:[%s373 + $0x2e0] sm:$0xf]
      %v396 = vld [vmem:[%s373 + $0x300] sm:$0xf]
      %v397 = vld [vmem:[%s373 + $0x320] sm:$0xf]
      %v398 = vld [vmem:[%s373 + $0x360] sm:$0xf]
      %v399 = vld [vmem:[%s373 + $0x380] sm:$0xf]
      %v400 = vld [vmem:[%s373 + $0x3a0] sm:$0xf]
      %v401 = vld [vmem:[%s373 + $0x3c0] sm:$0xf]
      %v402 = vld [vmem:[%s373 + $0x3e0] sm:$0xf]
      %v403 = vld [vmem:[%s373 + $0x400] sm:$0xf]
      %v404 = vld [vmem:[%s373 + $0x420] sm:$0xf]
      %v405 = vld [vmem:[%s373 + $0x440] sm:$0xf]
      %v406 = vld [vmem:[%s373 + $0x4] sm:$0x1]
      %v407 = vld [vmem:[%s373 + $0x24] sm:$0x1]
      %v408 = vld [vmem:[%s373 + $0x44] sm:$0x1]
      %v409 = vld [vmem:[%s373 + $0x64] sm:$0x1]
      %v410 = vld [vmem:[%s373 + $0x84] sm:$0x1]
      %v411 = vld [vmem:[%s373 + $0xa4] sm:$0x1]
      %v412 = vld [vmem:[%s373 + $0xc4] sm:$0x1]
      %v413 = vld [vmem:[%s373 + $0xe4] sm:$0x1]
      %v414 = vld [vmem:[%s373 + $0x124] sm:$0x1]
      %v415 = vld [vmem:[%s373 + $0x144] sm:$0x1]
      %v416 = vld [vmem:[%s373 + $0x164] sm:$0x1]
      %v417 = vld [vmem:[%s373 + $0x184] sm:$0x1]
      %v418 = vld [vmem:[%s373 + $0x1a4] sm:$0x1]
      %v419 = vld [vmem:[%s373 + $0x1c4] sm:$0x1]
      %v420 = vld [vmem:[%s373 + $0x1e4] sm:$0x1]
      %v421 = vld [vmem:[%s373 + $0x204] sm:$0x1]
      %v422 = vld [vmem:[%s373 + $0x244] sm:$0x1]
      %v423 = vld [vmem:[%s373 + $0x264] sm:$0x1]
      %v424 = vld [vmem:[%s373 + $0x284] sm:$0x1]
      %v425 = vld [vmem:[%s373 + $0x2a4] sm:$0x1]
      %v426 = vld [vmem:[%s373 + $0x2c4] sm:$0x1]
      %v427 = vld [vmem:[%s373 + $0x2e4] sm:$0x1]
      %v428 = vld [vmem:[%s373 + $0x304] sm:$0x1]
      %v429 = vld [vmem:[%s373 + $0x324] sm:$0x1]
      %v430 = vld [vmem:[%s373 + $0x364] sm:$0x1]
      %v431 = vld [vmem:[%s373 + $0x384] sm:$0x1]
      %v432 = vld [vmem:[%s373 + $0x3a4] sm:$0x1]
      %v433 = vld [vmem:[%s373 + $0x3c4] sm:$0x1]
      %v434 = vld [vmem:[%s373 + $0x3e4] sm:$0x1]
      %v435 = vld [vmem:[%s373 + $0x404] sm:$0x1]
      %v436 = vld [vmem:[%s373 + $0x424] sm:$0x1]
      %v437 = vld [vmem:[%s373 + $0x444] sm:$0x1]
      %s438 = scalar_lea.vmem %s170, 32
      %v439 = vld [vmem:[%s438] sm:$0xf]
      %v440 = vld [vmem:[%s438 + $0x20] sm:$0xf]
      %v441 = vld [vmem:[%s438 + $0x40] sm:$0xf]
      %v442 = vld [vmem:[%s438 + $0x60] sm:$0xf]
      %v443 = vld [vmem:[%s438 + $0x80] sm:$0xf]
      %v444 = vld [vmem:[%s438 + $0xa0] sm:$0xf]
      %v445 = vld [vmem:[%s438 + $0xc0] sm:$0xf]
      %v446 = vld [vmem:[%s438 + $0xe0] sm:$0xf]
      %v447 = vld [vmem:[%s438 + $0x120] sm:$0xf]
      %v448 = vld [vmem:[%s438 + $0x140] sm:$0xf]
      %v449 = vld [vmem:[%s438 + $0x160] sm:$0xf]
      %v450 = vld [vmem:[%s438 + $0x180] sm:$0xf]
      %v451 = vld [vmem:[%s438 + $0x1a0] sm:$0xf]
      %v452 = vld [vmem:[%s438 + $0x1c0] sm:$0xf]
      %v453 = vld [vmem:[%s438 + $0x1e0] sm:$0xf]
      %v454 = vld [vmem:[%s438 + $0x200] sm:$0xf]
      %v455 = vld [vmem:[%s438 + $0x240] sm:$0xf]
      %v456 = vld [vmem:[%s438 + $0x260] sm:$0xf]
      %v457 = vld [vmem:[%s438 + $0x280] sm:$0xf]
      %v458 = vld [vmem:[%s438 + $0x2a0] sm:$0xf]
      %v459 = vld [vmem:[%s438 + $0x2c0] sm:$0xf]
      %v460 = vld [vmem:[%s438 + $0x2e0] sm:$0xf]
      %v461 = vld [vmem:[%s438 + $0x300] sm:$0xf]
      %v462 = vld [vmem:[%s438 + $0x320] sm:$0xf]
      %v463 = vld [vmem:[%s438 + $0x360] sm:$0xf]
      %v464 = vld [vmem:[%s438 + $0x380] sm:$0xf]
      %v465 = vld [vmem:[%s438 + $0x3a0] sm:$0xf]
      %v466 = vld [vmem:[%s438 + $0x3c0] sm:$0xf]
      %v467 = vld [vmem:[%s438 + $0x3e0] sm:$0xf]
      %v468 = vld [vmem:[%s438 + $0x400] sm:$0xf]
      %v469 = vld [vmem:[%s438 + $0x420] sm:$0xf]
      %v470 = vld [vmem:[%s438 + $0x440] sm:$0xf]
      %v471 = vld [vmem:[%s438 + $0x4] sm:$0x1]
      %v472 = vld [vmem:[%s438 + $0x24] sm:$0x1]
      %v473 = vld [vmem:[%s438 + $0x44] sm:$0x1]
      %v474 = vld [vmem:[%s438 + $0x64] sm:$0x1]
      %v475 = vld [vmem:[%s438 + $0x84] sm:$0x1]
      %v476 = vld [vmem:[%s438 + $0xa4] sm:$0x1]
      %v477 = vld [vmem:[%s438 + $0xc4] sm:$0x1]
      %v478 = vld [vmem:[%s438 + $0xe4] sm:$0x1]
      %v479 = vld [vmem:[%s438 + $0x124] sm:$0x1]
      %v480 = vld [vmem:[%s438 + $0x144] sm:$0x1]
      %v481 = vld [vmem:[%s438 + $0x164] sm:$0x1]
      %v482 = vld [vmem:[%s438 + $0x184] sm:$0x1]
      %v483 = vld [vmem:[%s438 + $0x1a4] sm:$0x1]
      %v484 = vld [vmem:[%s438 + $0x1c4] sm:$0x1]
      %v485 = vld [vmem:[%s438 + $0x1e4] sm:$0x1]
      %v486 = vld [vmem:[%s438 + $0x204] sm:$0x1]
      %v487 = vld [vmem:[%s438 + $0x244] sm:$0x1]
      %v488 = vld [vmem:[%s438 + $0x264] sm:$0x1]
      %v489 = vld [vmem:[%s438 + $0x284] sm:$0x1]
      %v490 = vld [vmem:[%s438 + $0x2a4] sm:$0x1]
      %v491 = vld [vmem:[%s438 + $0x2c4] sm:$0x1]
      %v492 = vld [vmem:[%s438 + $0x2e4] sm:$0x1]
      %v493 = vld [vmem:[%s438 + $0x304] sm:$0x1]
      %v494 = vld [vmem:[%s438 + $0x324] sm:$0x1]
      %v495 = vld [vmem:[%s438 + $0x364] sm:$0x1]
      %v496 = vld [vmem:[%s438 + $0x384] sm:$0x1]
      %v497 = vld [vmem:[%s438 + $0x3a4] sm:$0x1]
      %v498 = vld [vmem:[%s438 + $0x3c4] sm:$0x1]
      %v499 = vld [vmem:[%s438 + $0x3e4] sm:$0x1]
      %v500 = vld [vmem:[%s438 + $0x404] sm:$0x1]
      %v501 = vld [vmem:[%s438 + $0x424] sm:$0x1]
      %v502 = vld [vmem:[%s438 + $0x444] sm:$0x1]
      %s503 = scalar_lea.vmem %s170, 40
      %v504 = vld [vmem:[%s503] sm:$0xf]
      %v505 = vld [vmem:[%s503 + $0x20] sm:$0xf]
      %v506 = vld [vmem:[%s503 + $0x40] sm:$0xf]
      %v507 = vld [vmem:[%s503 + $0x60] sm:$0xf]
      %v508 = vld [vmem:[%s503 + $0x80] sm:$0xf]
      %v509 = vld [vmem:[%s503 + $0xa0] sm:$0xf]
      %v510 = vld [vmem:[%s503 + $0xc0] sm:$0xf]
      %v511 = vld [vmem:[%s503 + $0xe0] sm:$0xf]
      %v512 = vld [vmem:[%s503 + $0x120] sm:$0xf]
      %v513 = vld [vmem:[%s503 + $0x140] sm:$0xf]
      %v514 = vld [vmem:[%s503 + $0x160] sm:$0xf]
      %v515 = vld [vmem:[%s503 + $0x180] sm:$0xf]
      %v516 = vld [vmem:[%s503 + $0x1a0] sm:$0xf]
      %v517 = vld [vmem:[%s503 + $0x1c0] sm:$0xf]
      %v518 = vld [vmem:[%s503 + $0x1e0] sm:$0xf]
      %v519 = vld [vmem:[%s503 + $0x200] sm:$0xf]
      %v520 = vld [vmem:[%s503 + $0x240] sm:$0xf]
      %v521 = vld [vmem:[%s503 + $0x260] sm:$0xf]
      %v522 = vld [vmem:[%s503 + $0x280] sm:$0xf]
      %v523 = vld [vmem:[%s503 + $0x2a0] sm:$0xf]
      %v524 = vld [vmem:[%s503 + $0x2c0] sm:$0xf]
      %v525 = vld [vmem:[%s503 + $0x2e0] sm:$0xf]
      %v526 = vld [vmem:[%s503 + $0x300] sm:$0xf]
      %v527 = vld [vmem:[%s503 + $0x320] sm:$0xf]
      %v528 = vld [vmem:[%s503 + $0x360] sm:$0xf]
      %v529 = vld [vmem:[%s503 + $0x380] sm:$0xf]
      %v530 = vld [vmem:[%s503 + $0x3a0] sm:$0xf]
      %v531 = vld [vmem:[%s503 + $0x3c0] sm:$0xf]
      %v532 = vld [vmem:[%s503 + $0x3e0] sm:$0xf]
      %v533 = vld [vmem:[%s503 + $0x400] sm:$0xf]
      %v534 = vld [vmem:[%s503 + $0x420] sm:$0xf]
      %v535 = vld [vmem:[%s503 + $0x440] sm:$0xf]
      %v536 = vld [vmem:[%s503 + $0x4] sm:$0x1]
      %v537 = vld [vmem:[%s503 + $0x24] sm:$0x1]
      %v538 = vld [vmem:[%s503 + $0x44] sm:$0x1]
      %v539 = vld [vmem:[%s503 + $0x64] sm:$0x1]
      %v540 = vld [vmem:[%s503 + $0x84] sm:$0x1]
      %v541 = vld [vmem:[%s503 + $0xa4] sm:$0x1]
      %v542 = vld [vmem:[%s503 + $0xc4] sm:$0x1]
      %v543 = vld [vmem:[%s503 + $0xe4] sm:$0x1]
      %v544 = vld [vmem:[%s503 + $0x124] sm:$0x1]
      %v545 = vld [vmem:[%s503 + $0x144] sm:$0x1]
      %v546 = vld [vmem:[%s503 + $0x164] sm:$0x1]
      %v547 = vld [vmem:[%s503 + $0x184] sm:$0x1]
      %v548 = vld [vmem:[%s503 + $0x1a4] sm:$0x1]
      %v549 = vld [vmem:[%s503 + $0x1c4] sm:$0x1]
      %v550 = vld [vmem:[%s503 + $0x1e4] sm:$0x1]
      %v551 = vld [vmem:[%s503 + $0x204] sm:$0x1]
      %v552 = vld [vmem:[%s503 + $0x244] sm:$0x1]
      %v553 = vld [vmem:[%s503 + $0x264] sm:$0x1]
      %v554 = vld [vmem:[%s503 + $0x284] sm:$0x1]
      %v555 = vld [vmem:[%s503 + $0x2a4] sm:$0x1]
      %v556 = vld [vmem:[%s503 + $0x2c4] sm:$0x1]
      %v557 = vld [vmem:[%s503 + $0x2e4] sm:$0x1]
      %v558 = vld [vmem:[%s503 + $0x304] sm:$0x1]
      %v559 = vld [vmem:[%s503 + $0x324] sm:$0x1]
      %v560 = vld [vmem:[%s503 + $0x364] sm:$0x1]
      %v561 = vld [vmem:[%s503 + $0x384] sm:$0x1]
      %v562 = vld [vmem:[%s503 + $0x3a4] sm:$0x1]
      %v563 = vld [vmem:[%s503 + $0x3c4] sm:$0x1]
      %v564 = vld [vmem:[%s503 + $0x3e4] sm:$0x1]
      %v565 = vld [vmem:[%s503 + $0x404] sm:$0x1]
      %v566 = vld [vmem:[%s503 + $0x424] sm:$0x1]
      %v567 = vld [vmem:[%s503 + $0x444] sm:$0x1]
      %s568 = scalar_lea.vmem %s170, 48
      %v569 = vld [vmem:[%s568] sm:$0xf]
      %v570 = vld [vmem:[%s568 + $0x20] sm:$0xf]
      %v571 = vld [vmem:[%s568 + $0x40] sm:$0xf]
      %v572 = vld [vmem:[%s568 + $0x60] sm:$0xf]
      %v573 = vld [vmem:[%s568 + $0x80] sm:$0xf]
      %v574 = vld [vmem:[%s568 + $0xa0] sm:$0xf]
      %v575 = vld [vmem:[%s568 + $0xc0] sm:$0xf]
      %v576 = vld [vmem:[%s568 + $0xe0] sm:$0xf]
      %v577 = vld [vmem:[%s568 + $0x120] sm:$0xf]
      %v578 = vld [vmem:[%s568 + $0x140] sm:$0xf]
      %v579 = vld [vmem:[%s568 + $0x160] sm:$0xf]
      %v580 = vld [vmem:[%s568 + $0x180] sm:$0xf]
      %v581 = vld [vmem:[%s568 + $0x1a0] sm:$0xf]
      %v582 = vld [vmem:[%s568 + $0x1c0] sm:$0xf]
      %v583 = vld [vmem:[%s568 + $0x1e0] sm:$0xf]
      %v584 = vld [vmem:[%s568 + $0x200] sm:$0xf]
      %v585 = vld [vmem:[%s568 + $0x240] sm:$0xf]
      %v586 = vld [vmem:[%s568 + $0x260] sm:$0xf]
      %v587 = vld [vmem:[%s568 + $0x280] sm:$0xf]
      %v588 = vld [vmem:[%s568 + $0x2a0] sm:$0xf]
      %v589 = vld [vmem:[%s568 + $0x2c0] sm:$0xf]
      %v590 = vld [vmem:[%s568 + $0x2e0] sm:$0xf]
      %v591 = vld [vmem:[%s568 + $0x300] sm:$0xf]
      %v592 = vld [vmem:[%s568 + $0x320] sm:$0xf]
      %v593 = vld [vmem:[%s568 + $0x360] sm:$0xf]
      %v594 = vld [vmem:[%s568 + $0x380] sm:$0xf]
      %v595 = vld [vmem:[%s568 + $0x3a0] sm:$0xf]
      %v596 = vld [vmem:[%s568 + $0x3c0] sm:$0xf]
      %v597 = vld [vmem:[%s568 + $0x3e0] sm:$0xf]
      %v598 = vld [vmem:[%s568 + $0x400] sm:$0xf]
      %v599 = vld [vmem:[%s568 + $0x420] sm:$0xf]
      %v600 = vld [vmem:[%s568 + $0x440] sm:$0xf]
      %v601 = vld [vmem:[%s568 + $0x4] sm:$0x1]
      %v602 = vld [vmem:[%s568 + $0x24] sm:$0x1]
      %v603 = vld [vmem:[%s568 + $0x44] sm:$0x1]
      %v604 = vld [vmem:[%s568 + $0x64] sm:$0x1]
      %v605 = vld [vmem:[%s568 + $0x84] sm:$0x1]
      %v606 = vld [vmem:[%s568 + $0xa4] sm:$0x1]
      %v607 = vld [vmem:[%s568 + $0xc4] sm:$0x1]
      %v608 = vld [vmem:[%s568 + $0xe4] sm:$0x1]
      %v609 = vld [vmem:[%s568 + $0x124] sm:$0x1]
      %v610 = vld [vmem:[%s568 + $0x144] sm:$0x1]
      %v611 = vld [vmem:[%s568 + $0x164] sm:$0x1]
      %v612 = vld [vmem:[%s568 + $0x184] sm:$0x1]
      %v613 = vld [vmem:[%s568 + $0x1a4] sm:$0x1]
      %v614 = vld [vmem:[%s568 + $0x1c4] sm:$0x1]
      %v615 = vld [vmem:[%s568 + $0x1e4] sm:$0x1]
      %v616 = vld [vmem:[%s568 + $0x204] sm:$0x1]
      %v617 = vld [vmem:[%s568 + $0x244] sm:$0x1]
      %v618 = vld [vmem:[%s568 + $0x264] sm:$0x1]
      %v619 = vld [vmem:[%s568 + $0x284] sm:$0x1]
      %v620 = vld [vmem:[%s568 + $0x2a4] sm:$0x1]
      %v621 = vld [vmem:[%s568 + $0x2c4] sm:$0x1]
      %v622 = vld [vmem:[%s568 + $0x2e4] sm:$0x1]
      %v623 = vld [vmem:[%s568 + $0x304] sm:$0x1]
      %v624 = vld [vmem:[%s568 + $0x324] sm:$0x1]
      %v625 = vld [vmem:[%s568 + $0x364] sm:$0x1]
      %v626 = vld [vmem:[%s568 + $0x384] sm:$0x1]
      %v627 = vld [vmem:[%s568 + $0x3a4] sm:$0x1]
      %v628 = vld [vmem:[%s568 + $0x3c4] sm:$0x1]
      %v629 = vld [vmem:[%s568 + $0x3e4] sm:$0x1]
      %v630 = vld [vmem:[%s568 + $0x404] sm:$0x1]
      %v631 = vld [vmem:[%s568 + $0x424] sm:$0x1]
      %v632 = vld [vmem:[%s568 + $0x444] sm:$0x1]
      %s633 = scalar_lea.vmem %s170, 56
      %v634 = vld [vmem:[%s633] sm:$0xf]
      %v635 = vld [vmem:[%s633 + $0x20] sm:$0xf]
      %v636 = vld [vmem:[%s633 + $0x40] sm:$0xf]
      %v637 = vld [vmem:[%s633 + $0x60] sm:$0xf]
      %v638 = vld [vmem:[%s633 + $0x80] sm:$0xf]
      %v639 = vld [vmem:[%s633 + $0xa0] sm:$0xf]
      %v640 = vld [vmem:[%s633 + $0xc0] sm:$0xf]
      %v641 = vld [vmem:[%s633 + $0xe0] sm:$0xf]
      %v642 = vld [vmem:[%s633 + $0x120] sm:$0xf]
      %v643 = vld [vmem:[%s633 + $0x140] sm:$0xf]
      %v644 = vld [vmem:[%s633 + $0x160] sm:$0xf]
      %v645 = vld [vmem:[%s633 + $0x180] sm:$0xf]
      %v646 = vld [vmem:[%s633 + $0x1a0] sm:$0xf]
      %v647 = vld [vmem:[%s633 + $0x1c0] sm:$0xf]
      %v648 = vld [vmem:[%s633 + $0x1e0] sm:$0xf]
      %v649 = vld [vmem:[%s633 + $0x200] sm:$0xf]
      %v650 = vld [vmem:[%s633 + $0x240] sm:$0xf]
      %v651 = vld [vmem:[%s633 + $0x260] sm:$0xf]
      %v652 = vld [vmem:[%s633 + $0x280] sm:$0xf]
      %v653 = vld [vmem:[%s633 + $0x2a0] sm:$0xf]
      %v654 = vld [vmem:[%s633 + $0x2c0] sm:$0xf]
      %v655 = vld [vmem:[%s633 + $0x2e0] sm:$0xf]
      %v656 = vld [vmem:[%s633 + $0x300] sm:$0xf]
      %v657 = vld [vmem:[%s633 + $0x320] sm:$0xf]
      %v658 = vld [vmem:[%s633 + $0x360] sm:$0xf]
      %v659 = vld [vmem:[%s633 + $0x380] sm:$0xf]
      %v660 = vld [vmem:[%s633 + $0x3a0] sm:$0xf]
      %v661 = vld [vmem:[%s633 + $0x3c0] sm:$0xf]
      %v662 = vld [vmem:[%s633 + $0x3e0] sm:$0xf]
      %v663 = vld [vmem:[%s633 + $0x400] sm:$0xf]
      %v664 = vld [vmem:[%s633 + $0x420] sm:$0xf]
      %v665 = vld [vmem:[%s633 + $0x440] sm:$0xf]
      %v666 = vld [vmem:[%s633 + $0x4] sm:$0x1]
      %v667 = vld [vmem:[%s633 + $0x24] sm:$0x1]
      %v668 = vld [vmem:[%s633 + $0x44] sm:$0x1]
      %v669 = vld [vmem:[%s633 + $0x64] sm:$0x1]
      %v670 = vld [vmem:[%s633 + $0x84] sm:$0x1]
      %v671 = vld [vmem:[%s633 + $0xa4] sm:$0x1]
      %v672 = vld [vmem:[%s633 + $0xc4] sm:$0x1]
      %v673 = vld [vmem:[%s633 + $0xe4] sm:$0x1]
      %v674 = vld [vmem:[%s633 + $0x124] sm:$0x1]
      %v675 = vld [vmem:[%s633 + $0x144] sm:$0x1]
      %v676 = vld [vmem:[%s633 + $0x164] sm:$0x1]
      %v677 = vld [vmem:[%s633 + $0x184] sm:$0x1]
      %v678 = vld [vmem:[%s633 + $0x1a4] sm:$0x1]
      %v679 = vld [vmem:[%s633 + $0x1c4] sm:$0x1]
      %v680 = vld [vmem:[%s633 + $0x1e4] sm:$0x1]
      %v681 = vld [vmem:[%s633 + $0x204] sm:$0x1]
      %v682 = vld [vmem:[%s633 + $0x244] sm:$0x1]
      %v683 = vld [vmem:[%s633 + $0x264] sm:$0x1]
      %v684 = vld [vmem:[%s633 + $0x284] sm:$0x1]
      %v685 = vld [vmem:[%s633 + $0x2a4] sm:$0x1]
      %v686 = vld [vmem:[%s633 + $0x2c4] sm:$0x1]
      %v687 = vld [vmem:[%s633 + $0x2e4] sm:$0x1]
      %v688 = vld [vmem:[%s633 + $0x304] sm:$0x1]
      %v689 = vld [vmem:[%s633 + $0x324] sm:$0x1]
      %v690 = vld [vmem:[%s633 + $0x364] sm:$0x1]
      %v691 = vld [vmem:[%s633 + $0x384] sm:$0x1]
      %v692 = vld [vmem:[%s633 + $0x3a4] sm:$0x1]
      %v693 = vld [vmem:[%s633 + $0x3c4] sm:$0x1]
      %v694 = vld [vmem:[%s633 + $0x3e4] sm:$0x1]
      %v695 = vld [vmem:[%s633 + $0x404] sm:$0x1]
      %v696 = vld [vmem:[%s633 + $0x424] sm:$0x1]
      %v697 = vld [vmem:[%s633 + $0x444] sm:$0x1]
      %v762 = vunpack.c.l.b16 %v179
      %v763 = vunpack.c.l.b16 %v211
      %v764 = vunpack.c.l.b16 %v180
      %v765 = vunpack.c.l.b16 %v212
      %v766 = vunpack.c.l.b16 %v181
      %v767 = vunpack.c.l.b16 %v213
      %v768 = vunpack.c.l.b16 %v182
      %v769 = vunpack.c.l.b16 %v214
      %v770 = vunpack.c.l.b16 %v183
      %v771 = vunpack.c.l.b16 %v215
      %v772 = vunpack.c.l.b16 %v184
      %v773 = vunpack.c.l.b16 %v216
      %v774 = vunpack.c.l.b16 %v185
      %v775 = vunpack.c.l.b16 %v217
      %v776 = vunpack.c.l.b16 %v186
      %v777 = vunpack.c.l.b16 %v218
      %v778 = vunpack.c.l.b16 %v187
      %v779 = vunpack.c.l.b16 %v219
      %v780 = vunpack.c.l.b16 %v188
      %v781 = vunpack.c.l.b16 %v220
      %v782 = vunpack.c.l.b16 %v189
      %v783 = vunpack.c.l.b16 %v221
      %v784 = vunpack.c.l.b16 %v190
      %v785 = vunpack.c.l.b16 %v222
      %v786 = vunpack.c.l.b16 %v191
      %v787 = vunpack.c.l.b16 %v223
      %v788 = vunpack.c.l.b16 %v192
      %v789 = vunpack.c.l.b16 %v224
      %v790 = vunpack.c.l.b16 %v193
      %v791 = vunpack.c.l.b16 %v225
      %v792 = vunpack.c.l.b16 %v194
      %v793 = vunpack.c.l.b16 %v226
      %v794 = vunpack.c.l.b16 %v195
      %v795 = vunpack.c.l.b16 %v227
      %v796 = vunpack.c.l.b16 %v196
      %v797 = vunpack.c.l.b16 %v228
      %v798 = vunpack.c.l.b16 %v197
      %v799 = vunpack.c.l.b16 %v229
      %v800 = vunpack.c.l.b16 %v198
      %v801 = vunpack.c.l.b16 %v230
      %v802 = vunpack.c.l.b16 %v199
      %v803 = vunpack.c.l.b16 %v231
      %v804 = vunpack.c.l.b16 %v200
      %v805 = vunpack.c.l.b16 %v232
      %v806 = vunpack.c.l.b16 %v201
      %v807 = vunpack.c.l.b16 %v233
      %v808 = vunpack.c.l.b16 %v202
      %v809 = vunpack.c.l.b16 %v234
      %v810 = vunpack.c.l.b16 %v203
      %v811 = vunpack.c.l.b16 %v235
      %v812 = vunpack.c.l.b16 %v204
      %v813 = vunpack.c.l.b16 %v236
      %v814 = vunpack.c.l.b16 %v205
      %v815 = vunpack.c.l.b16 %v237
      %v816 = vunpack.c.l.b16 %v206
      %v817 = vunpack.c.l.b16 %v238
      %v818 = vunpack.c.l.b16 %v207
      %v819 = vunpack.c.l.b16 %v239
      %v820 = vunpack.c.l.b16 %v208
      %v821 = vunpack.c.l.b16 %v240
      %v822 = vunpack.c.l.b16 %v209
      %v823 = vunpack.c.l.b16 %v241
      %v824 = vunpack.c.l.b16 %v210
      %v825 = vunpack.c.l.b16 %v242
      %v826 = vpack.c.b16 %v763, %v762
      %v827 = vpack.c.b16 %v765, %v764
      %v828 = vpack.c.b16 %v767, %v766
      %v829 = vpack.c.b16 %v769, %v768
      %v830 = vpack.c.b16 %v771, %v770
      %v831 = vpack.c.b16 %v773, %v772
      %v832 = vpack.c.b16 %v775, %v774
      %v833 = vpack.c.b16 %v777, %v776
      %v834 = vpack.c.b16 %v779, %v778
      %v835 = vpack.c.b16 %v781, %v780
      %v836 = vpack.c.b16 %v783, %v782
      %v837 = vpack.c.b16 %v785, %v784
      %v838 = vpack.c.b16 %v787, %v786
      %v839 = vpack.c.b16 %v789, %v788
      %v840 = vpack.c.b16 %v791, %v790
      %v841 = vpack.c.b16 %v793, %v792
      %v842 = vpack.c.b16 %v795, %v794
      %v843 = vpack.c.b16 %v797, %v796
      %v844 = vpack.c.b16 %v799, %v798
      %v845 = vpack.c.b16 %v801, %v800
      %v846 = vpack.c.b16 %v803, %v802
      %v847 = vpack.c.b16 %v805, %v804
      %v848 = vpack.c.b16 %v807, %v806
      %v849 = vpack.c.b16 %v809, %v808
      %v850 = vpack.c.b16 %v811, %v810
      %v851 = vpack.c.b16 %v813, %v812
      %v852 = vpack.c.b16 %v815, %v814
      %v853 = vpack.c.b16 %v817, %v816
      %v854 = vpack.c.b16 %v819, %v818
      %v855 = vpack.c.b16 %v821, %v820
      %v856 = vpack.c.b16 %v823, %v822
      %v857 = vpack.c.b16 %v825, %v824
      %v859 = vshrl.u32 %v826, 16
      %v861 = vshll.u32 %v826, 16
      %v863 = vrot.slane %v861, 1
      %v864 = vor.u32 %v859, %v863
      %v866 = vshrl.u32 %v827, 16
      %v868 = vshll.u32 %v827, 16
      %v870 = vrot.slane %v868, 1
      %v871 = vor.u32 %v866, %v870
      %v873 = vshrl.u32 %v828, 16
      %v875 = vshll.u32 %v828, 16
      %v877 = vrot.slane %v875, 1
      %v878 = vor.u32 %v873, %v877
      %v880 = vshrl.u32 %v829, 16
      %v882 = vshll.u32 %v829, 16
      %v884 = vrot.slane %v882, 1
      %v885 = vor.u32 %v880, %v884
      %v887 = vshrl.u32 %v830, 16
      %v889 = vshll.u32 %v830, 16
      %v891 = vrot.slane %v889, 1
      %v892 = vor.u32 %v887, %v891
      %v894 = vshrl.u32 %v831, 16
      %v896 = vshll.u32 %v831, 16
      %v898 = vrot.slane %v896, 1
      %v899 = vor.u32 %v894, %v898
      %v901 = vshrl.u32 %v832, 16
      %v903 = vshll.u32 %v832, 16
      %v905 = vrot.slane %v903, 1
      %v906 = vor.u32 %v901, %v905
      %v908 = vshrl.u32 %v833, 16
      %v910 = vshll.u32 %v833, 16
      %v912 = vrot.slane %v910, 1
      %v913 = vor.u32 %v908, %v912
      %v915 = vshrl.u32 %v834, 16
      %v917 = vshll.u32 %v834, 16
      %v919 = vrot.slane %v917, 1
      %v920 = vor.u32 %v915, %v919
      %v922 = vshrl.u32 %v835, 16
      %v924 = vshll.u32 %v835, 16
      %v926 = vrot.slane %v924, 1
      %v927 = vor.u32 %v922, %v926
      %v929 = vshrl.u32 %v836, 16
      %v931 = vshll.u32 %v836, 16
      %v933 = vrot.slane %v931, 1
      %v934 = vor.u32 %v929, %v933
      %v936 = vshrl.u32 %v837, 16
      %v938 = vshll.u32 %v837, 16
      %v940 = vrot.slane %v938, 1
      %v941 = vor.u32 %v936, %v940
      %v943 = vshrl.u32 %v838, 16
      %v945 = vshll.u32 %v838, 16
      %v947 = vrot.slane %v945, 1
      %v948 = vor.u32 %v943, %v947
      %v950 = vshrl.u32 %v839, 16
      %v952 = vshll.u32 %v839, 16
      %v954 = vrot.slane %v952, 1
      %v955 = vor.u32 %v950, %v954
      %v957 = vshrl.u32 %v840, 16
      %v959 = vshll.u32 %v840, 16
      %v961 = vrot.slane %v959, 1
      %v962 = vor.u32 %v957, %v961
      %v964 = vshrl.u32 %v841, 16
      %v966 = vshll.u32 %v841, 16
      %v968 = vrot.slane %v966, 1
      %v969 = vor.u32 %v964, %v968
      %v971 = vshrl.u32 %v842, 16
      %v973 = vshll.u32 %v842, 16
      %v975 = vrot.slane %v973, 1
      %v976 = vor.u32 %v971, %v975
      %v978 = vshrl.u32 %v843, 16
      %v980 = vshll.u32 %v843, 16
      %v982 = vrot.slane %v980, 1
      %v983 = vor.u32 %v978, %v982
      %v985 = vshrl.u32 %v844, 16
      %v987 = vshll.u32 %v844, 16
      %v989 = vrot.slane %v987, 1
      %v990 = vor.u32 %v985, %v989
      %v992 = vshrl.u32 %v845, 16
      %v994 = vshll.u32 %v845, 16
      %v996 = vrot.slane %v994, 1
      %v997 = vor.u32 %v992, %v996
      %v999 = vshrl.u32 %v846, 16
      %v1001 = vshll.u32 %v846, 16
      %v1003 = vrot.slane %v1001, 1
      %v1004 = vor.u32 %v999, %v1003
      %v1006 = vshrl.u32 %v847, 16
      %v1008 = vshll.u32 %v847, 16
      %v1010 = vrot.slane %v1008, 1
      %v1011 = vor.u32 %v1006, %v1010
      %v1013 = vshrl.u32 %v848, 16
      %v1015 = vshll.u32 %v848, 16
      %v1017 = vrot.slane %v1015, 1
      %v1018 = vor.u32 %v1013, %v1017
      %v1020 = vshrl.u32 %v849, 16
      %v1022 = vshll.u32 %v849, 16
      %v1024 = vrot.slane %v1022, 1
      %v1025 = vor.u32 %v1020, %v1024
      %v1027 = vshrl.u32 %v850, 16
      %v1029 = vshll.u32 %v850, 16
      %v1031 = vrot.slane %v1029, 1
      %v1032 = vor.u32 %v1027, %v1031
      %v1034 = vshrl.u32 %v851, 16
      %v1036 = vshll.u32 %v851, 16
      %v1038 = vrot.slane %v1036, 1
      %v1039 = vor.u32 %v1034, %v1038
      %v1041 = vshrl.u32 %v852, 16
      %v1043 = vshll.u32 %v852, 16
      %v1045 = vrot.slane %v1043, 1
      %v1046 = vor.u32 %v1041, %v1045
      %v1048 = vshrl.u32 %v853, 16
      %v1050 = vshll.u32 %v853, 16
      %v1052 = vrot.slane %v1050, 1
      %v1053 = vor.u32 %v1048, %v1052
      %v1055 = vshrl.u32 %v854, 16
      %v1057 = vshll.u32 %v854, 16
      %v1059 = vrot.slane %v1057, 1
      %v1060 = vor.u32 %v1055, %v1059
      %v1062 = vshrl.u32 %v855, 16
      %v1064 = vshll.u32 %v855, 16
      %v1066 = vrot.slane %v1064, 1
      %v1067 = vor.u32 %v1062, %v1066
      %v1069 = vshrl.u32 %v856, 16
      %v1071 = vshll.u32 %v856, 16
      %v1073 = vrot.slane %v1071, 1
      %v1074 = vor.u32 %v1069, %v1073
      %v1076 = vshrl.u32 %v857, 16
      %v1078 = vshll.u32 %v857, 16
      %v1080 = vrot.slane %v1078, 1
      %v1081 = vor.u32 %v1076, %v1080
      %1082 = vrot.lane.b32.xlu0 %v864, 16
      %v1083 = vpop.permute.xlu0 %1082
      %1084 = vrot.lane.b32.xlu0 %v871, 16
      %v1085 = vpop.permute.xlu0 %1084
      %1086 = vrot.lane.b32.xlu0 %v878, 16
      %v1087 = vpop.permute.xlu0 %1086
      %1088 = vrot.lane.b32.xlu0 %v885, 16
      %v1089 = vpop.permute.xlu0 %1088
      %1090 = vrot.lane.b32.xlu0 %v892, 16
      %v1091 = vpop.permute.xlu0 %1090
      %1092 = vrot.lane.b32.xlu0 %v899, 16
      %v1093 = vpop.permute.xlu0 %1092
      %1094 = vrot.lane.b32.xlu0 %v906, 16
      %v1095 = vpop.permute.xlu0 %1094
      %1096 = vrot.lane.b32.xlu0 %v913, 16
      %v1097 = vpop.permute.xlu0 %1096
      %1098 = vrot.lane.b32.xlu0 %v920, 16
      %v1099 = vpop.permute.xlu0 %1098
      %1100 = vrot.lane.b32.xlu0 %v927, 16
      %v1101 = vpop.permute.xlu0 %1100
      %1102 = vrot.lane.b32.xlu0 %v934, 16
      %v1103 = vpop.permute.xlu0 %1102
      %1104 = vrot.lane.b32.xlu0 %v941, 16
      %v1105 = vpop.permute.xlu0 %1104
      %1106 = vrot.lane.b32.xlu0 %v948, 16
      %v1107 = vpop.permute.xlu0 %1106
      %1108 = vrot.lane.b32.xlu0 %v955, 16
      %v1109 = vpop.permute.xlu0 %1108
      %1110 = vrot.lane.b32.xlu0 %v962, 16
      %v1111 = vpop.permute.xlu0 %1110
      %1112 = vrot.lane.b32.xlu0 %v969, 16
      %v1113 = vpop.permute.xlu0 %1112
      %1114 = vrot.lane.b32.xlu0 %v976, 16
      %v1115 = vpop.permute.xlu0 %1114
      %1116 = vrot.lane.b32.xlu0 %v983, 16
      %v1117 = vpop.permute.xlu0 %1116
      %1118 = vrot.lane.b32.xlu0 %v990, 16
      %v1119 = vpop.permute.xlu0 %1118
      %1120 = vrot.lane.b32.xlu0 %v997, 16
      %v1121 = vpop.permute.xlu0 %1120
      %1122 = vrot.lane.b32.xlu0 %v1004, 16
      %v1123 = vpop.permute.xlu0 %1122
      %1124 = vrot.lane.b32.xlu0 %v1011, 16
      %v1125 = vpop.permute.xlu0 %1124
      %1126 = vrot.lane.b32.xlu0 %v1018, 16
      %v1127 = vpop.permute.xlu0 %1126
      %1128 = vrot.lane.b32.xlu0 %v1025, 16
      %v1129 = vpop.permute.xlu0 %1128
      %1130 = vrot.lane.b32.xlu0 %v1032, 16
      %v1131 = vpop.permute.xlu0 %1130
      %1132 = vrot.lane.b32.xlu0 %v1039, 16
      %v1133 = vpop.permute.xlu0 %1132
      %1134 = vrot.lane.b32.xlu0 %v1046, 16
      %v1135 = vpop.permute.xlu0 %1134
      %1136 = vrot.lane.b32.xlu0 %v1053, 16
      %v1137 = vpop.permute.xlu0 %1136
      %1138 = vrot.lane.b32.xlu0 %v1060, 16
      %v1139 = vpop.permute.xlu0 %1138
      %1140 = vrot.lane.b32.xlu0 %v1067, 16
      %v1141 = vpop.permute.xlu0 %1140
      %1142 = vrot.lane.b32.xlu0 %v1074, 16
      %v1143 = vpop.permute.xlu0 %1142
      %1144 = vrot.lane.b32.xlu0 %v1081, 16
      %v1145 = vpop.permute.xlu0 %1144
      %v1178 = vunpack.c.l.b16 %v244
      %v1179 = vunpack.c.l.b16 %v245
      %v1180 = vunpack.c.l.b16 %v246
      %v1181 = vunpack.c.l.b16 %v247
      %v1182 = vunpack.c.l.b16 %v248
      %v1183 = vunpack.c.l.b16 %v249
      %v1184 = vunpack.c.l.b16 %v250
      %v1185 = vunpack.c.l.b16 %v251
      %v1186 = vunpack.c.l.b16 %v252
      %v1187 = vunpack.c.l.b16 %v253
      %v1188 = vunpack.c.l.b16 %v254
      %v1189 = vunpack.c.l.b16 %v255
      %v1190 = vunpack.c.l.b16 %v256
      %v1191 = vunpack.c.l.b16 %v257
      %v1192 = vunpack.c.l.b16 %v258
      %v1193 = vunpack.c.l.b16 %v259
      %v1194 = vunpack.c.l.b16 %v260
      %v1195 = vunpack.c.l.b16 %v261
      %v1196 = vunpack.c.l.b16 %v262
      %v1197 = vunpack.c.l.b16 %v263
      %v1198 = vunpack.c.l.b16 %v264
      %v1199 = vunpack.c.l.b16 %v265
      %v1200 = vunpack.c.l.b16 %v266
      %v1201 = vunpack.c.l.b16 %v267
      %v1202 = vunpack.c.l.b16 %v268
      %v1203 = vunpack.c.l.b16 %v269
      %v1204 = vunpack.c.l.b16 %v270
      %v1205 = vunpack.c.l.b16 %v271
      %v1206 = vunpack.c.l.b16 %v272
      %v1207 = vunpack.c.l.b16 %v273
      %v1208 = vunpack.c.l.b16 %v274
      %v1209 = vunpack.c.l.b16 %v275
      %v1210 = vpack.c.b16 %v1178, %v1178
      %v1211 = vpack.c.b16 %v1179, %v1179
      %v1212 = vpack.c.b16 %v1180, %v1180
      %v1213 = vpack.c.b16 %v1181, %v1181
      %v1214 = vpack.c.b16 %v1182, %v1182
      %v1215 = vpack.c.b16 %v1183, %v1183
      %v1216 = vpack.c.b16 %v1184, %v1184
      %v1217 = vpack.c.b16 %v1185, %v1185
      %v1218 = vpack.c.b16 %v1186, %v1186
      %v1219 = vpack.c.b16 %v1187, %v1187
      %v1220 = vpack.c.b16 %v1188, %v1188
      %v1221 = vpack.c.b16 %v1189, %v1189
      %v1222 = vpack.c.b16 %v1190, %v1190
      %v1223 = vpack.c.b16 %v1191, %v1191
      %v1224 = vpack.c.b16 %v1192, %v1192
      %v1225 = vpack.c.b16 %v1193, %v1193
      %v1226 = vpack.c.b16 %v1194, %v1194
      %v1227 = vpack.c.b16 %v1195, %v1195
      %v1228 = vpack.c.b16 %v1196, %v1196
      %v1229 = vpack.c.b16 %v1197, %v1197
      %v1230 = vpack.c.b16 %v1198, %v1198
      %v1231 = vpack.c.b16 %v1199, %v1199
      %v1232 = vpack.c.b16 %v1200, %v1200
      %v1233 = vpack.c.b16 %v1201, %v1201
      %v1234 = vpack.c.b16 %v1202, %v1202
      %v1235 = vpack.c.b16 %v1203, %v1203
      %v1236 = vpack.c.b16 %v1204, %v1204
      %v1237 = vpack.c.b16 %v1205, %v1205
      %v1238 = vpack.c.b16 %v1206, %v1206
      %v1239 = vpack.c.b16 %v1207, %v1207
      %v1240 = vpack.c.b16 %v1208, %v1208
      %v1241 = vpack.c.b16 %v1209, %v1209
      %1242 = vrot.lane.b32.xlu0 %v1210, 32
      %v1243 = vpop.permute.xlu0 %1242
      %1244 = vrot.lane.b32.xlu0 %v1211, 32
      %v1245 = vpop.permute.xlu0 %1244
      %1246 = vrot.lane.b32.xlu0 %v1212, 32
      %v1247 = vpop.permute.xlu0 %1246
      %1248 = vrot.lane.b32.xlu0 %v1213, 32
      %v1249 = vpop.permute.xlu0 %1248
      %1250 = vrot.lane.b32.xlu0 %v1214, 32
      %v1251 = vpop.permute.xlu0 %1250
      %1252 = vrot.lane.b32.xlu0 %v1215, 32
      %v1253 = vpop.permute.xlu0 %1252
      %1254 = vrot.lane.b32.xlu0 %v1216, 32
      %v1255 = vpop.permute.xlu0 %1254
      %1256 = vrot.lane.b32.xlu0 %v1217, 32
      %v1257 = vpop.permute.xlu0 %1256
      %1258 = vrot.lane.b32.xlu0 %v1218, 32
      %v1259 = vpop.permute.xlu0 %1258
      %1260 = vrot.lane.b32.xlu0 %v1219, 32
      %v1261 = vpop.permute.xlu0 %1260
      %1262 = vrot.lane.b32.xlu0 %v1220, 32
      %v1263 = vpop.permute.xlu0 %1262
      %1264 = vrot.lane.b32.xlu0 %v1221, 32
      %v1265 = vpop.permute.xlu0 %1264
      %1266 = vrot.lane.b32.xlu0 %v1222, 32
      %v1267 = vpop.permute.xlu0 %1266
      %1268 = vrot.lane.b32.xlu0 %v1223, 32
      %v1269 = vpop.permute.xlu0 %1268
      %1270 = vrot.lane.b32.xlu0 %v1224, 32
      %v1271 = vpop.permute.xlu0 %1270
      %1272 = vrot.lane.b32.xlu0 %v1225, 32
      %v1273 = vpop.permute.xlu0 %1272
      %1274 = vrot.lane.b32.xlu0 %v1226, 32
      %v1275 = vpop.permute.xlu0 %1274
      %1276 = vrot.lane.b32.xlu0 %v1227, 32
      %v1277 = vpop.permute.xlu0 %1276
      %1278 = vrot.lane.b32.xlu0 %v1228, 32
      %v1279 = vpop.permute.xlu0 %1278
      %1280 = vrot.lane.b32.xlu0 %v1229, 32
      %v1281 = vpop.permute.xlu0 %1280
      %1282 = vrot.lane.b32.xlu0 %v1230, 32
      %v1283 = vpop.permute.xlu0 %1282
      %1284 = vrot.lane.b32.xlu0 %v1231, 32
      %v1285 = vpop.permute.xlu0 %1284
      %1286 = vrot.lane.b32.xlu0 %v1232, 32
      %v1287 = vpop.permute.xlu0 %1286
      %1288 = vrot.lane.b32.xlu0 %v1233, 32
      %v1289 = vpop.permute.xlu0 %1288
      %1290 = vrot.lane.b32.xlu0 %v1234, 32
      %v1291 = vpop.permute.xlu0 %1290
      %1292 = vrot.lane.b32.xlu0 %v1235, 32
      %v1293 = vpop.permute.xlu0 %1292
      %1294 = vrot.lane.b32.xlu0 %v1236, 32
      %v1295 = vpop.permute.xlu0 %1294
      %1296 = vrot.lane.b32.xlu0 %v1237, 32
      %v1297 = vpop.permute.xlu0 %1296
      %1298 = vrot.lane.b32.xlu0 %v1238, 32
      %v1299 = vpop.permute.xlu0 %1298
      %1300 = vrot.lane.b32.xlu0 %v1239, 32
      %v1301 = vpop.permute.xlu0 %1300
      %1302 = vrot.lane.b32.xlu0 %v1240, 32
      %v1303 = vpop.permute.xlu0 %1302
      %1304 = vrot.lane.b32.xlu0 %v1241, 32
      %v1305 = vpop.permute.xlu0 %1304
      %v1338 = vunpack.c.l.b16 %v276
      %v1339 = vunpack.c.l.b16 %v277
      %v1340 = vunpack.c.l.b16 %v278
      %v1341 = vunpack.c.l.b16 %v279
      %v1342 = vunpack.c.l.b16 %v280
      %v1343 = vunpack.c.l.b16 %v281
      %v1344 = vunpack.c.l.b16 %v282
      %v1345 = vunpack.c.l.b16 %v283
      %v1346 = vunpack.c.l.b16 %v284
      %v1347 = vunpack.c.l.b16 %v285
      %v1348 = vunpack.c.l.b16 %v286
      %v1349 = vunpack.c.l.b16 %v287
      %v1350 = vunpack.c.l.b16 %v288
      %v1351 = vunpack.c.l.b16 %v289
      %v1352 = vunpack.c.l.b16 %v290
      %v1353 = vunpack.c.l.b16 %v291
      %v1354 = vunpack.c.l.b16 %v292
      %v1355 = vunpack.c.l.b16 %v293
      %v1356 = vunpack.c.l.b16 %v294
      %v1357 = vunpack.c.l.b16 %v295
      %v1358 = vunpack.c.l.b16 %v296
      %v1359 = vunpack.c.l.b16 %v297
      %v1360 = vunpack.c.l.b16 %v298
      %v1361 = vunpack.c.l.b16 %v299
      %v1362 = vunpack.c.l.b16 %v300
      %v1363 = vunpack.c.l.b16 %v301
      %v1364 = vunpack.c.l.b16 %v302
      %v1365 = vunpack.c.l.b16 %v303
      %v1366 = vunpack.c.l.b16 %v304
      %v1367 = vunpack.c.l.b16 %v305
      %v1368 = vunpack.c.l.b16 %v306
      %v1369 = vunpack.c.l.b16 %v307
      %v1370 = vpack.c.b16 %v1338, %v1178
      %v1371 = vpack.c.b16 %v1339, %v1179
      %v1372 = vpack.c.b16 %v1340, %v1180
      %v1373 = vpack.c.b16 %v1341, %v1181
      %v1374 = vpack.c.b16 %v1342, %v1182
      %v1375 = vpack.c.b16 %v1343, %v1183
      %v1376 = vpack.c.b16 %v1344, %v1184
      %v1377 = vpack.c.b16 %v1345, %v1185
      %v1378 = vpack.c.b16 %v1346, %v1186
      %v1379 = vpack.c.b16 %v1347, %v1187
      %v1380 = vpack.c.b16 %v1348, %v1188
      %v1381 = vpack.c.b16 %v1349, %v1189
      %v1382 = vpack.c.b16 %v1350, %v1190
      %v1383 = vpack.c.b16 %v1351, %v1191
      %v1384 = vpack.c.b16 %v1352, %v1192
      %v1385 = vpack.c.b16 %v1353, %v1193
      %v1386 = vpack.c.b16 %v1354, %v1194
      %v1387 = vpack.c.b16 %v1355, %v1195
      %v1388 = vpack.c.b16 %v1356, %v1196
      %v1389 = vpack.c.b16 %v1357, %v1197
      %v1390 = vpack.c.b16 %v1358, %v1198
      %v1391 = vpack.c.b16 %v1359, %v1199
      %v1392 = vpack.c.b16 %v1360, %v1200
      %v1393 = vpack.c.b16 %v1361, %v1201
      %v1394 = vpack.c.b16 %v1362, %v1202
      %v1395 = vpack.c.b16 %v1363, %v1203
      %v1396 = vpack.c.b16 %v1364, %v1204
      %v1397 = vpack.c.b16 %v1365, %v1205
      %v1398 = vpack.c.b16 %v1366, %v1206
      %v1399 = vpack.c.b16 %v1367, %v1207
      %v1400 = vpack.c.b16 %v1368, %v1208
      %v1401 = vpack.c.b16 %v1369, %v1209
      %v1403 = vshrl.u32 %v1370, 16
      %v1405 = vshll.u32 %v1370, 16
      %v1407 = vrot.slane %v1405, 1
      %v1408 = vor.u32 %v1403, %v1407
      %v1410 = vshrl.u32 %v1371, 16
      %v1412 = vshll.u32 %v1371, 16
      %v1414 = vrot.slane %v1412, 1
      %v1415 = vor.u32 %v1410, %v1414
      %v1417 = vshrl.u32 %v1372, 16
      %v1419 = vshll.u32 %v1372, 16
      %v1421 = vrot.slane %v1419, 1
      %v1422 = vor.u32 %v1417, %v1421
      %v1424 = vshrl.u32 %v1373, 16
      %v1426 = vshll.u32 %v1373, 16
      %v1428 = vrot.slane %v1426, 1
      %v1429 = vor.u32 %v1424, %v1428
      %v1431 = vshrl.u32 %v1374, 16
      %v1433 = vshll.u32 %v1374, 16
      %v1435 = vrot.slane %v1433, 1
      %v1436 = vor.u32 %v1431, %v1435
      %v1438 = vshrl.u32 %v1375, 16
      %v1440 = vshll.u32 %v1375, 16
      %v1442 = vrot.slane %v1440, 1
      %v1443 = vor.u32 %v1438, %v1442
      %v1445 = vshrl.u32 %v1376, 16
      %v1447 = vshll.u32 %v1376, 16
      %v1449 = vrot.slane %v1447, 1
      %v1450 = vor.u32 %v1445, %v1449
      %v1452 = vshrl.u32 %v1377, 16
      %v1454 = vshll.u32 %v1377, 16
      %v1456 = vrot.slane %v1454, 1
      %v1457 = vor.u32 %v1452, %v1456
      %v1459 = vshrl.u32 %v1378, 16
      %v1461 = vshll.u32 %v1378, 16
      %v1463 = vrot.slane %v1461, 1
      %v1464 = vor.u32 %v1459, %v1463
      %v1466 = vshrl.u32 %v1379, 16
      %v1468 = vshll.u32 %v1379, 16
      %v1470 = vrot.slane %v1468, 1
      %v1471 = vor.u32 %v1466, %v1470
      %v1473 = vshrl.u32 %v1380, 16
      %v1475 = vshll.u32 %v1380, 16
      %v1477 = vrot.slane %v1475, 1
      %v1478 = vor.u32 %v1473, %v1477
      %v1480 = vshrl.u32 %v1381, 16
      %v1482 = vshll.u32 %v1381, 16
      %v1484 = vrot.slane %v1482, 1
      %v1485 = vor.u32 %v1480, %v1484
      %v1487 = vshrl.u32 %v1382, 16
      %v1489 = vshll.u32 %v1382, 16
      %v1491 = vrot.slane %v1489, 1
      %v1492 = vor.u32 %v1487, %v1491
      %v1494 = vshrl.u32 %v1383, 16
      %v1496 = vshll.u32 %v1383, 16
      %v1498 = vrot.slane %v1496, 1
      %v1499 = vor.u32 %v1494, %v1498
      %v1501 = vshrl.u32 %v1384, 16
      %v1503 = vshll.u32 %v1384, 16
      %v1505 = vrot.slane %v1503, 1
      %v1506 = vor.u32 %v1501, %v1505
      %v1508 = vshrl.u32 %v1385, 16
      %v1510 = vshll.u32 %v1385, 16
      %v1512 = vrot.slane %v1510, 1
      %v1513 = vor.u32 %v1508, %v1512
      %v1515 = vshrl.u32 %v1386, 16
      %v1517 = vshll.u32 %v1386, 16
      %v1519 = vrot.slane %v1517, 1
      %v1520 = vor.u32 %v1515, %v1519
      %v1522 = vshrl.u32 %v1387, 16
      %v1524 = vshll.u32 %v1387, 16
      %v1526 = vrot.slane %v1524, 1
      %v1527 = vor.u32 %v1522, %v1526
      %v1529 = vshrl.u32 %v1388, 16
      %v1531 = vshll.u32 %v1388, 16
      %v1533 = vrot.slane %v1531, 1
      %v1534 = vor.u32 %v1529, %v1533
      %v1536 = vshrl.u32 %v1389, 16
      %v1538 = vshll.u32 %v1389, 16
      %v1540 = vrot.slane %v1538, 1
      %v1541 = vor.u32 %v1536, %v1540
      %v1543 = vshrl.u32 %v1390, 16
      %v1545 = vshll.u32 %v1390, 16
      %v1547 = vrot.slane %v1545, 1
      %v1548 = vor.u32 %v1543, %v1547
      %v1550 = vshrl.u32 %v1391, 16
      %v1552 = vshll.u32 %v1391, 16
      %v1554 = vrot.slane %v1552, 1
      %v1555 = vor.u32 %v1550, %v1554
      %v1557 = vshrl.u32 %v1392, 16
      %v1559 = vshll.u32 %v1392, 16
      %v1561 = vrot.slane %v1559, 1
      %v1562 = vor.u32 %v1557, %v1561
      %v1564 = vshrl.u32 %v1393, 16
      %v1566 = vshll.u32 %v1393, 16
      %v1568 = vrot.slane %v1566, 1
      %v1569 = vor.u32 %v1564, %v1568
      %v1571 = vshrl.u32 %v1394, 16
      %v1573 = vshll.u32 %v1394, 16
      %v1575 = vrot.slane %v1573, 1
      %v1576 = vor.u32 %v1571, %v1575
      %v1578 = vshrl.u32 %v1395, 16
      %v1580 = vshll.u32 %v1395, 16
      %v1582 = vrot.slane %v1580, 1
      %v1583 = vor.u32 %v1578, %v1582
      %v1585 = vshrl.u32 %v1396, 16
      %v1587 = vshll.u32 %v1396, 16
      %v1589 = vrot.slane %v1587, 1
      %v1590 = vor.u32 %v1585, %v1589
      %v1592 = vshrl.u32 %v1397, 16
      %v1594 = vshll.u32 %v1397, 16
      %v1596 = vrot.slane %v1594, 1
      %v1597 = vor.u32 %v1592, %v1596
      %v1599 = vshrl.u32 %v1398, 16
      %v1601 = vshll.u32 %v1398, 16
      %v1603 = vrot.slane %v1601, 1
      %v1604 = vor.u32 %v1599, %v1603
      %v1606 = vshrl.u32 %v1399, 16
      %v1608 = vshll.u32 %v1399, 16
      %v1610 = vrot.slane %v1608, 1
      %v1611 = vor.u32 %v1606, %v1610
      %v1613 = vshrl.u32 %v1400, 16
      %v1615 = vshll.u32 %v1400, 16
      %v1617 = vrot.slane %v1615, 1
      %v1618 = vor.u32 %v1613, %v1617
      %v1620 = vshrl.u32 %v1401, 16
      %v1622 = vshll.u32 %v1401, 16
      %v1624 = vrot.slane %v1622, 1
      %v1625 = vor.u32 %v1620, %v1624
      %1626 = vrot.lane.b32.xlu0 %v1408, 48
      %v1627 = vpop.permute.xlu0 %1626
      %1628 = vrot.lane.b32.xlu0 %v1415, 48
      %v1629 = vpop.permute.xlu0 %1628
      %1630 = vrot.lane.b32.xlu0 %v1422, 48
      %v1631 = vpop.permute.xlu0 %1630
      %1632 = vrot.lane.b32.xlu0 %v1429, 48
      %v1633 = vpop.permute.xlu0 %1632
      %1634 = vrot.lane.b32.xlu0 %v1436, 48
      %v1635 = vpop.permute.xlu0 %1634
      %1636 = vrot.lane.b32.xlu0 %v1443, 48
      %v1637 = vpop.permute.xlu0 %1636
      %1638 = vrot.lane.b32.xlu0 %v1450, 48
      %v1639 = vpop.permute.xlu0 %1638
      %1640 = vrot.lane.b32.xlu0 %v1457, 48
      %v1641 = vpop.permute.xlu0 %1640
      %1642 = vrot.lane.b32.xlu0 %v1464, 48
      %v1643 = vpop.permute.xlu0 %1642
      %1644 = vrot.lane.b32.xlu0 %v1471, 48
      %v1645 = vpop.permute.xlu0 %1644
      %1646 = vrot.lane.b32.xlu0 %v1478, 48
      %v1647 = vpop.permute.xlu0 %1646
      %1648 = vrot.lane.b32.xlu0 %v1485, 48
      %v1649 = vpop.permute.xlu0 %1648
      %1650 = vrot.lane.b32.xlu0 %v1492, 48
      %v1651 = vpop.permute.xlu0 %1650
      %1652 = vrot.lane.b32.xlu0 %v1499, 48
      %v1653 = vpop.permute.xlu0 %1652
      %1654 = vrot.lane.b32.xlu0 %v1506, 48
      %v1655 = vpop.permute.xlu0 %1654
      %1656 = vrot.lane.b32.xlu0 %v1513, 48
      %v1657 = vpop.permute.xlu0 %1656
      %1658 = vrot.lane.b32.xlu0 %v1520, 48
      %v1659 = vpop.permute.xlu0 %1658
      %1660 = vrot.lane.b32.xlu0 %v1527, 48
      %v1661 = vpop.permute.xlu0 %1660
      %1662 = vrot.lane.b32.xlu0 %v1534, 48
      %v1663 = vpop.permute.xlu0 %1662
      %1664 = vrot.lane.b32.xlu0 %v1541, 48
      %v1665 = vpop.permute.xlu0 %1664
      %1666 = vrot.lane.b32.xlu0 %v1548, 48
      %v1667 = vpop.permute.xlu0 %1666
      %1668 = vrot.lane.b32.xlu0 %v1555, 48
      %v1669 = vpop.permute.xlu0 %1668
      %1670 = vrot.lane.b32.xlu0 %v1562, 48
      %v1671 = vpop.permute.xlu0 %1670
      %1672 = vrot.lane.b32.xlu0 %v1569, 48
      %v1673 = vpop.permute.xlu0 %1672
      %1674 = vrot.lane.b32.xlu0 %v1576, 48
      %v1675 = vpop.permute.xlu0 %1674
      %1676 = vrot.lane.b32.xlu0 %v1583, 48
      %v1677 = vpop.permute.xlu0 %1676
      %1678 = vrot.lane.b32.xlu0 %v1590, 48
      %v1679 = vpop.permute.xlu0 %1678
      %1680 = vrot.lane.b32.xlu0 %v1597, 48
      %v1681 = vpop.permute.xlu0 %1680
      %1682 = vrot.lane.b32.xlu0 %v1604, 48
      %v1683 = vpop.permute.xlu0 %1682
      %1684 = vrot.lane.b32.xlu0 %v1611, 48
      %v1685 = vpop.permute.xlu0 %1684
      %1686 = vrot.lane.b32.xlu0 %v1618, 48
      %v1687 = vpop.permute.xlu0 %1686
      %1688 = vrot.lane.b32.xlu0 %v1625, 48
      %v1689 = vpop.permute.xlu0 %1688
      %v1722 = vunpack.c.l.b16 %v309
      %v1723 = vunpack.c.l.b16 %v310
      %v1724 = vunpack.c.l.b16 %v311
      %v1725 = vunpack.c.l.b16 %v312
      %v1726 = vunpack.c.l.b16 %v313
      %v1727 = vunpack.c.l.b16 %v314
      %v1728 = vunpack.c.l.b16 %v315
      %v1729 = vunpack.c.l.b16 %v316
      %v1730 = vunpack.c.l.b16 %v317
      %v1731 = vunpack.c.l.b16 %v318
      %v1732 = vunpack.c.l.b16 %v319
      %v1733 = vunpack.c.l.b16 %v320
      %v1734 = vunpack.c.l.b16 %v321
      %v1735 = vunpack.c.l.b16 %v322
      %v1736 = vunpack.c.l.b16 %v323
      %v1737 = vunpack.c.l.b16 %v324
      %v1738 = vunpack.c.l.b16 %v325
      %v1739 = vunpack.c.l.b16 %v326
      %v1740 = vunpack.c.l.b16 %v327
      %v1741 = vunpack.c.l.b16 %v328
      %v1742 = vunpack.c.l.b16 %v329
      %v1743 = vunpack.c.l.b16 %v330
      %v1744 = vunpack.c.l.b16 %v331
      %v1745 = vunpack.c.l.b16 %v332
      %v1746 = vunpack.c.l.b16 %v333
      %v1747 = vunpack.c.l.b16 %v334
      %v1748 = vunpack.c.l.b16 %v335
      %v1749 = vunpack.c.l.b16 %v336
      %v1750 = vunpack.c.l.b16 %v337
      %v1751 = vunpack.c.l.b16 %v338
      %v1752 = vunpack.c.l.b16 %v339
      %v1753 = vunpack.c.l.b16 %v340
      %v1754 = vpack.c.b16 %v1722, %v1722
      %v1755 = vpack.c.b16 %v1723, %v1723
      %v1756 = vpack.c.b16 %v1724, %v1724
      %v1757 = vpack.c.b16 %v1725, %v1725
      %v1758 = vpack.c.b16 %v1726, %v1726
      %v1759 = vpack.c.b16 %v1727, %v1727
      %v1760 = vpack.c.b16 %v1728, %v1728
      %v1761 = vpack.c.b16 %v1729, %v1729
      %v1762 = vpack.c.b16 %v1730, %v1730
      %v1763 = vpack.c.b16 %v1731, %v1731
      %v1764 = vpack.c.b16 %v1732, %v1732
      %v1765 = vpack.c.b16 %v1733, %v1733
      %v1766 = vpack.c.b16 %v1734, %v1734
      %v1767 = vpack.c.b16 %v1735, %v1735
      %v1768 = vpack.c.b16 %v1736, %v1736
      %v1769 = vpack.c.b16 %v1737, %v1737
      %v1770 = vpack.c.b16 %v1738, %v1738
      %v1771 = vpack.c.b16 %v1739, %v1739
      %v1772 = vpack.c.b16 %v1740, %v1740
      %v1773 = vpack.c.b16 %v1741, %v1741
      %v1774 = vpack.c.b16 %v1742, %v1742
      %v1775 = vpack.c.b16 %v1743, %v1743
      %v1776 = vpack.c.b16 %v1744, %v1744
      %v1777 = vpack.c.b16 %v1745, %v1745
      %v1778 = vpack.c.b16 %v1746, %v1746
      %v1779 = vpack.c.b16 %v1747, %v1747
      %v1780 = vpack.c.b16 %v1748, %v1748
      %v1781 = vpack.c.b16 %v1749, %v1749
      %v1782 = vpack.c.b16 %v1750, %v1750
      %v1783 = vpack.c.b16 %v1751, %v1751
      %v1784 = vpack.c.b16 %v1752, %v1752
      %v1785 = vpack.c.b16 %v1753, %v1753
      %1786 = vrot.lane.b32.xlu0 %v1754, 64
      %v1787 = vpop.permute.xlu0 %1786
      %1788 = vrot.lane.b32.xlu0 %v1755, 64
      %v1789 = vpop.permute.xlu0 %1788
      %1790 = vrot.lane.b32.xlu0 %v1756, 64
      %v1791 = vpop.permute.xlu0 %1790
      %1792 = vrot.lane.b32.xlu0 %v1757, 64
      %v1793 = vpop.permute.xlu0 %1792
      %1794 = vrot.lane.b32.xlu0 %v1758, 64
      %v1795 = vpop.permute.xlu0 %1794
      %1796 = vrot.lane.b32.xlu0 %v1759, 64
      %v1797 = vpop.permute.xlu0 %1796
      %1798 = vrot.lane.b32.xlu0 %v1760, 64
      %v1799 = vpop.permute.xlu0 %1798
      %1800 = vrot.lane.b32.xlu0 %v1761, 64
      %v1801 = vpop.permute.xlu0 %1800
      %1802 = vrot.lane.b32.xlu0 %v1762, 64
      %v1803 = vpop.permute.xlu0 %1802
      %1804 = vrot.lane.b32.xlu0 %v1763, 64
      %v1805 = vpop.permute.xlu0 %1804
      %1806 = vrot.lane.b32.xlu0 %v1764, 64
      %v1807 = vpop.permute.xlu0 %1806
      %1808 = vrot.lane.b32.xlu0 %v1765, 64
      %v1809 = vpop.permute.xlu0 %1808
      %1810 = vrot.lane.b32.xlu0 %v1766, 64
      %v1811 = vpop.permute.xlu0 %1810
      %1812 = vrot.lane.b32.xlu0 %v1767, 64
      %v1813 = vpop.permute.xlu0 %1812
      %1814 = vrot.lane.b32.xlu0 %v1768, 64
      %v1815 = vpop.permute.xlu0 %1814
      %1816 = vrot.lane.b32.xlu0 %v1769, 64
      %v1817 = vpop.permute.xlu0 %1816
      %1818 = vrot.lane.b32.xlu0 %v1770, 64
      %v1819 = vpop.permute.xlu0 %1818
      %1820 = vrot.lane.b32.xlu0 %v1771, 64
      %v1821 = vpop.permute.xlu0 %1820
      %1822 = vrot.lane.b32.xlu0 %v1772, 64
      %v1823 = vpop.permute.xlu0 %1822
      %1824 = vrot.lane.b32.xlu0 %v1773, 64
      %v1825 = vpop.permute.xlu0 %1824
      %1826 = vrot.lane.b32.xlu0 %v1774, 64
      %v1827 = vpop.permute.xlu0 %1826
      %1828 = vrot.lane.b32.xlu0 %v1775, 64
      %v1829 = vpop.permute.xlu0 %1828
      %1830 = vrot.lane.b32.xlu0 %v1776, 64
      %v1831 = vpop.permute.xlu0 %1830
      %1832 = vrot.lane.b32.xlu0 %v1777, 64
      %v1833 = vpop.permute.xlu0 %1832
      %1834 = vrot.lane.b32.xlu0 %v1778, 64
      %v1835 = vpop.permute.xlu0 %1834
      %1836 = vrot.lane.b32.xlu0 %v1779, 64
      %v1837 = vpop.permute.xlu0 %1836
      %1838 = vrot.lane.b32.xlu0 %v1780, 64
      %v1839 = vpop.permute.xlu0 %1838
      %1840 = vrot.lane.b32.xlu0 %v1781, 64
      %v1841 = vpop.permute.xlu0 %1840
      %1842 = vrot.lane.b32.xlu0 %v1782, 64
      %v1843 = vpop.permute.xlu0 %1842
      %1844 = vrot.lane.b32.xlu0 %v1783, 64
      %v1845 = vpop.permute.xlu0 %1844
      %1846 = vrot.lane.b32.xlu0 %v1784, 64
      %v1847 = vpop.permute.xlu0 %1846
      %1848 = vrot.lane.b32.xlu0 %v1785, 64
      %v1849 = vpop.permute.xlu0 %1848
      %v1882 = vunpack.c.l.b16 %v341
      %v1883 = vunpack.c.l.b16 %v342
      %v1884 = vunpack.c.l.b16 %v343
      %v1885 = vunpack.c.l.b16 %v344
      %v1886 = vunpack.c.l.b16 %v345
      %v1887 = vunpack.c.l.b16 %v346
      %v1888 = vunpack.c.l.b16 %v347
      %v1889 = vunpack.c.l.b16 %v348
      %v1890 = vunpack.c.l.b16 %v349
      %v1891 = vunpack.c.l.b16 %v350
      %v1892 = vunpack.c.l.b16 %v351
      %v1893 = vunpack.c.l.b16 %v352
      %v1894 = vunpack.c.l.b16 %v353
      %v1895 = vunpack.c.l.b16 %v354
      %v1896 = vunpack.c.l.b16 %v355
      %v1897 = vunpack.c.l.b16 %v356
      %v1898 = vunpack.c.l.b16 %v357
      %v1899 = vunpack.c.l.b16 %v358
      %v1900 = vunpack.c.l.b16 %v359
      %v1901 = vunpack.c.l.b16 %v360
      %v1902 = vunpack.c.l.b16 %v361
      %v1903 = vunpack.c.l.b16 %v362
      %v1904 = vunpack.c.l.b16 %v363
      %v1905 = vunpack.c.l.b16 %v364
      %v1906 = vunpack.c.l.b16 %v365
      %v1907 = vunpack.c.l.b16 %v366
      %v1908 = vunpack.c.l.b16 %v367
      %v1909 = vunpack.c.l.b16 %v368
      %v1910 = vunpack.c.l.b16 %v369
      %v1911 = vunpack.c.l.b16 %v370
      %v1912 = vunpack.c.l.b16 %v371
      %v1913 = vunpack.c.l.b16 %v372
      %v1914 = vpack.c.b16 %v1882, %v1722
      %v1915 = vpack.c.b16 %v1883, %v1723
      %v1916 = vpack.c.b16 %v1884, %v1724
      %v1917 = vpack.c.b16 %v1885, %v1725
      %v1918 = vpack.c.b16 %v1886, %v1726
      %v1919 = vpack.c.b16 %v1887, %v1727
      %v1920 = vpack.c.b16 %v1888, %v1728
      %v1921 = vpack.c.b16 %v1889, %v1729
      %v1922 = vpack.c.b16 %v1890, %v1730
      %v1923 = vpack.c.b16 %v1891, %v1731
      %v1924 = vpack.c.b16 %v1892, %v1732
      %v1925 = vpack.c.b16 %v1893, %v1733
      %v1926 = vpack.c.b16 %v1894, %v1734
      %v1927 = vpack.c.b16 %v1895, %v1735
      %v1928 = vpack.c.b16 %v1896, %v1736
      %v1929 = vpack.c.b16 %v1897, %v1737
      %v1930 = vpack.c.b16 %v1898, %v1738
      %v1931 = vpack.c.b16 %v1899, %v1739
      %v1932 = vpack.c.b16 %v1900, %v1740
      %v1933 = vpack.c.b16 %v1901, %v1741
      %v1934 = vpack.c.b16 %v1902, %v1742
      %v1935 = vpack.c.b16 %v1903, %v1743
      %v1936 = vpack.c.b16 %v1904, %v1744
      %v1937 = vpack.c.b16 %v1905, %v1745
      %v1938 = vpack.c.b16 %v1906, %v1746
      %v1939 = vpack.c.b16 %v1907, %v1747
      %v1940 = vpack.c.b16 %v1908, %v1748
      %v1941 = vpack.c.b16 %v1909, %v1749
      %v1942 = vpack.c.b16 %v1910, %v1750
      %v1943 = vpack.c.b16 %v1911, %v1751
      %v1944 = vpack.c.b16 %v1912, %v1752
      %v1945 = vpack.c.b16 %v1913, %v1753
      %v1947 = vshrl.u32 %v1914, 16
      %v1949 = vshll.u32 %v1914, 16
      %v1951 = vrot.slane %v1949, 1
      %v1952 = vor.u32 %v1947, %v1951
      %v1954 = vshrl.u32 %v1915, 16
      %v1956 = vshll.u32 %v1915, 16
      %v1958 = vrot.slane %v1956, 1
      %v1959 = vor.u32 %v1954, %v1958
      %v1961 = vshrl.u32 %v1916, 16
      %v1963 = vshll.u32 %v1916, 16
      %v1965 = vrot.slane %v1963, 1
      %v1966 = vor.u32 %v1961, %v1965
      %v1968 = vshrl.u32 %v1917, 16
      %v1970 = vshll.u32 %v1917, 16
      %v1972 = vrot.slane %v1970, 1
      %v1973 = vor.u32 %v1968, %v1972
      %v1975 = vshrl.u32 %v1918, 16
      %v1977 = vshll.u32 %v1918, 16
      %v1979 = vrot.slane %v1977, 1
      %v1980 = vor.u32 %v1975, %v1979
      %v1982 = vshrl.u32 %v1919, 16
      %v1984 = vshll.u32 %v1919, 16
      %v1986 = vrot.slane %v1984, 1
      %v1987 = vor.u32 %v1982, %v1986
      %v1989 = vshrl.u32 %v1920, 16
      %v1991 = vshll.u32 %v1920, 16
      %v1993 = vrot.slane %v1991, 1
      %v1994 = vor.u32 %v1989, %v1993
      %v1996 = vshrl.u32 %v1921, 16
      %v1998 = vshll.u32 %v1921, 16
      %v2000 = vrot.slane %v1998, 1
      %v2001 = vor.u32 %v1996, %v2000
      %v2003 = vshrl.u32 %v1922, 16
      %v2005 = vshll.u32 %v1922, 16
      %v2007 = vrot.slane %v2005, 1
      %v2008 = vor.u32 %v2003, %v2007
      %v2010 = vshrl.u32 %v1923, 16
      %v2012 = vshll.u32 %v1923, 16
      %v2014 = vrot.slane %v2012, 1
      %v2015 = vor.u32 %v2010, %v2014
      %v2017 = vshrl.u32 %v1924, 16
      %v2019 = vshll.u32 %v1924, 16
      %v2021 = vrot.slane %v2019, 1
      %v2022 = vor.u32 %v2017, %v2021
      %v2024 = vshrl.u32 %v1925, 16
      %v2026 = vshll.u32 %v1925, 16
      %v2028 = vrot.slane %v2026, 1
      %v2029 = vor.u32 %v2024, %v2028
      %v2031 = vshrl.u32 %v1926, 16
      %v2033 = vshll.u32 %v1926, 16
      %v2035 = vrot.slane %v2033, 1
      %v2036 = vor.u32 %v2031, %v2035
      %v2038 = vshrl.u32 %v1927, 16
      %v2040 = vshll.u32 %v1927, 16
      %v2042 = vrot.slane %v2040, 1
      %v2043 = vor.u32 %v2038, %v2042
      %v2045 = vshrl.u32 %v1928, 16
      %v2047 = vshll.u32 %v1928, 16
      %v2049 = vrot.slane %v2047, 1
      %v2050 = vor.u32 %v2045, %v2049
      %v2052 = vshrl.u32 %v1929, 16
      %v2054 = vshll.u32 %v1929, 16
      %v2056 = vrot.slane %v2054, 1
      %v2057 = vor.u32 %v2052, %v2056
      %v2059 = vshrl.u32 %v1930, 16
      %v2061 = vshll.u32 %v1930, 16
      %v2063 = vrot.slane %v2061, 1
      %v2064 = vor.u32 %v2059, %v2063
      %v2066 = vshrl.u32 %v1931, 16
      %v2068 = vshll.u32 %v1931, 16
      %v2070 = vrot.slane %v2068, 1
      %v2071 = vor.u32 %v2066, %v2070
      %v2073 = vshrl.u32 %v1932, 16
      %v2075 = vshll.u32 %v1932, 16
      %v2077 = vrot.slane %v2075, 1
      %v2078 = vor.u32 %v2073, %v2077
      %v2080 = vshrl.u32 %v1933, 16
      %v2082 = vshll.u32 %v1933, 16
      %v2084 = vrot.slane %v2082, 1
      %v2085 = vor.u32 %v2080, %v2084
      %v2087 = vshrl.u32 %v1934, 16
      %v2089 = vshll.u32 %v1934, 16
      %v2091 = vrot.slane %v2089, 1
      %v2092 = vor.u32 %v2087, %v2091
      %v2094 = vshrl.u32 %v1935, 16
      %v2096 = vshll.u32 %v1935, 16
      %v2098 = vrot.slane %v2096, 1
      %v2099 = vor.u32 %v2094, %v2098
      %v2101 = vshrl.u32 %v1936, 16
      %v2103 = vshll.u32 %v1936, 16
      %v2105 = vrot.slane %v2103, 1
      %v2106 = vor.u32 %v2101, %v2105
      %v2108 = vshrl.u32 %v1937, 16
      %v2110 = vshll.u32 %v1937, 16
      %v2112 = vrot.slane %v2110, 1
      %v2113 = vor.u32 %v2108, %v2112
      %v2115 = vshrl.u32 %v1938, 16
      %v2117 = vshll.u32 %v1938, 16
      %v2119 = vrot.slane %v2117, 1
      %v2120 = vor.u32 %v2115, %v2119
      %v2122 = vshrl.u32 %v1939, 16
      %v2124 = vshll.u32 %v1939, 16
      %v2126 = vrot.slane %v2124, 1
      %v2127 = vor.u32 %v2122, %v2126
      %v2129 = vshrl.u32 %v1940, 16
      %v2131 = vshll.u32 %v1940, 16
      %v2133 = vrot.slane %v2131, 1
      %v2134 = vor.u32 %v2129, %v2133
      %v2136 = vshrl.u32 %v1941, 16
      %v2138 = vshll.u32 %v1941, 16
      %v2140 = vrot.slane %v2138, 1
      %v2141 = vor.u32 %v2136, %v2140
      %v2143 = vshrl.u32 %v1942, 16
      %v2145 = vshll.u32 %v1942, 16
      %v2147 = vrot.slane %v2145, 1
      %v2148 = vor.u32 %v2143, %v2147
      %v2150 = vshrl.u32 %v1943, 16
      %v2152 = vshll.u32 %v1943, 16
      %v2154 = vrot.slane %v2152, 1
      %v2155 = vor.u32 %v2150, %v2154
      %v2157 = vshrl.u32 %v1944, 16
      %v2159 = vshll.u32 %v1944, 16
      %v2161 = vrot.slane %v2159, 1
      %v2162 = vor.u32 %v2157, %v2161
      %v2164 = vshrl.u32 %v1945, 16
      %v2166 = vshll.u32 %v1945, 16
      %v2168 = vrot.slane %v2166, 1
      %v2169 = vor.u32 %v2164, %v2168
      %2170 = vrot.lane.b32.xlu0 %v1952, 80
      %v2171 = vpop.permute.xlu0 %2170
      %2172 = vrot.lane.b32.xlu0 %v1959, 80
      %v2173 = vpop.permute.xlu0 %2172
      %2174 = vrot.lane.b32.xlu0 %v1966, 80
      %v2175 = vpop.permute.xlu0 %2174
      %2176 = vrot.lane.b32.xlu0 %v1973, 80
      %v2177 = vpop.permute.xlu0 %2176
      %2178 = vrot.lane.b32.xlu0 %v1980, 80
      %v2179 = vpop.permute.xlu0 %2178
      %2180 = vrot.lane.b32.xlu0 %v1987, 80
      %v2181 = vpop.permute.xlu0 %2180
      %2182 = vrot.lane.b32.xlu0 %v1994, 80
      %v2183 = vpop.permute.xlu0 %2182
      %2184 = vrot.lane.b32.xlu0 %v2001, 80
      %v2185 = vpop.permute.xlu0 %2184
      %2186 = vrot.lane.b32.xlu0 %v2008, 80
      %v2187 = vpop.permute.xlu0 %2186
      %2188 = vrot.lane.b32.xlu0 %v2015, 80
      %v2189 = vpop.permute.xlu0 %2188
      %2190 = vrot.lane.b32.xlu0 %v2022, 80
      %v2191 = vpop.permute.xlu0 %2190
      %2192 = vrot.lane.b32.xlu0 %v2029, 80
      %v2193 = vpop.permute.xlu0 %2192
      %2194 = vrot.lane.b32.xlu0 %v2036, 80
      %v2195 = vpop.permute.xlu0 %2194
      %2196 = vrot.lane.b32.xlu0 %v2043, 80
      %v2197 = vpop.permute.xlu0 %2196
      %2198 = vrot.lane.b32.xlu0 %v2050, 80
      %v2199 = vpop.permute.xlu0 %2198
      %2200 = vrot.lane.b32.xlu0 %v2057, 80
      %v2201 = vpop.permute.xlu0 %2200
      %2202 = vrot.lane.b32.xlu0 %v2064, 80
      %v2203 = vpop.permute.xlu0 %2202
      %2204 = vrot.lane.b32.xlu0 %v2071, 80
      %v2205 = vpop.permute.xlu0 %2204
      %2206 = vrot.lane.b32.xlu0 %v2078, 80
      %v2207 = vpop.permute.xlu0 %2206
      %2208 = vrot.lane.b32.xlu0 %v2085, 80
      %v2209 = vpop.permute.xlu0 %2208
      %2210 = vrot.lane.b32.xlu0 %v2092, 80
      %v2211 = vpop.permute.xlu0 %2210
      %2212 = vrot.lane.b32.xlu0 %v2099, 80
      %v2213 = vpop.permute.xlu0 %2212
      %2214 = vrot.lane.b32.xlu0 %v2106, 80
      %v2215 = vpop.permute.xlu0 %2214
      %2216 = vrot.lane.b32.xlu0 %v2113, 80
      %v2217 = vpop.permute.xlu0 %2216
      %2218 = vrot.lane.b32.xlu0 %v2120, 80
      %v2219 = vpop.permute.xlu0 %2218
      %2220 = vrot.lane.b32.xlu0 %v2127, 80
      %v2221 = vpop.permute.xlu0 %2220
      %2222 = vrot.lane.b32.xlu0 %v2134, 80
      %v2223 = vpop.permute.xlu0 %2222
      %2224 = vrot.lane.b32.xlu0 %v2141, 80
      %v2225 = vpop.permute.xlu0 %2224
      %2226 = vrot.lane.b32.xlu0 %v2148, 80
      %v2227 = vpop.permute.xlu0 %2226
      %2228 = vrot.lane.b32.xlu0 %v2155, 80
      %v2229 = vpop.permute.xlu0 %2228
      %2230 = vrot.lane.b32.xlu0 %v2162, 80
      %v2231 = vpop.permute.xlu0 %2230
      %2232 = vrot.lane.b32.xlu0 %v2169, 80
      %v2233 = vpop.permute.xlu0 %2232
      %v2266 = vunpack.c.l.b16 %v374
      %v2267 = vunpack.c.l.b16 %v375
      %v2268 = vunpack.c.l.b16 %v376
      %v2269 = vunpack.c.l.b16 %v377
      %v2270 = vunpack.c.l.b16 %v378
      %v2271 = vunpack.c.l.b16 %v379
      %v2272 = vunpack.c.l.b16 %v380
      %v2273 = vunpack.c.l.b16 %v381
      %v2274 = vunpack.c.l.b16 %v382
      %v2275 = vunpack.c.l.b16 %v383
      %v2276 = vunpack.c.l.b16 %v384
      %v2277 = vunpack.c.l.b16 %v385
      %v2278 = vunpack.c.l.b16 %v386
      %v2279 = vunpack.c.l.b16 %v387
      %v2280 = vunpack.c.l.b16 %v388
      %v2281 = vunpack.c.l.b16 %v389
      %v2282 = vunpack.c.l.b16 %v390
      %v2283 = vunpack.c.l.b16 %v391
      %v2284 = vunpack.c.l.b16 %v392
      %v2285 = vunpack.c.l.b16 %v393
      %v2286 = vunpack.c.l.b16 %v394
      %v2287 = vunpack.c.l.b16 %v395
      %v2288 = vunpack.c.l.b16 %v396
      %v2289 = vunpack.c.l.b16 %v397
      %v2290 = vunpack.c.l.b16 %v398
      %v2291 = vunpack.c.l.b16 %v399
      %v2292 = vunpack.c.l.b16 %v400
      %v2293 = vunpack.c.l.b16 %v401
      %v2294 = vunpack.c.l.b16 %v402
      %v2295 = vunpack.c.l.b16 %v403
      %v2296 = vunpack.c.l.b16 %v404
      %v2297 = vunpack.c.l.b16 %v405
      %v2298 = vpack.c.b16 %v2266, %v2266
      %v2299 = vpack.c.b16 %v2267, %v2267
      %v2300 = vpack.c.b16 %v2268, %v2268
      %v2301 = vpack.c.b16 %v2269, %v2269
      %v2302 = vpack.c.b16 %v2270, %v2270
      %v2303 = vpack.c.b16 %v2271, %v2271
      %v2304 = vpack.c.b16 %v2272, %v2272
      %v2305 = vpack.c.b16 %v2273, %v2273
      %v2306 = vpack.c.b16 %v2274, %v2274
      %v2307 = vpack.c.b16 %v2275, %v2275
      %v2308 = vpack.c.b16 %v2276, %v2276
      %v2309 = vpack.c.b16 %v2277, %v2277
      %v2310 = vpack.c.b16 %v2278, %v2278
      %v2311 = vpack.c.b16 %v2279, %v2279
      %v2312 = vpack.c.b16 %v2280, %v2280
      %v2313 = vpack.c.b16 %v2281, %v2281
      %v2314 = vpack.c.b16 %v2282, %v2282
      %v2315 = vpack.c.b16 %v2283, %v2283
      %v2316 = vpack.c.b16 %v2284, %v2284
      %v2317 = vpack.c.b16 %v2285, %v2285
      %v2318 = vpack.c.b16 %v2286, %v2286
      %v2319 = vpack.c.b16 %v2287, %v2287
      %v2320 = vpack.c.b16 %v2288, %v2288
      %v2321 = vpack.c.b16 %v2289, %v2289
      %v2322 = vpack.c.b16 %v2290, %v2290
      %v2323 = vpack.c.b16 %v2291, %v2291
      %v2324 = vpack.c.b16 %v2292, %v2292
      %v2325 = vpack.c.b16 %v2293, %v2293
      %v2326 = vpack.c.b16 %v2294, %v2294
      %v2327 = vpack.c.b16 %v2295, %v2295
      %v2328 = vpack.c.b16 %v2296, %v2296
      %v2329 = vpack.c.b16 %v2297, %v2297
      %2330 = vrot.lane.b32.xlu0 %v2298, 96
      %v2331 = vpop.permute.xlu0 %2330
      %2332 = vrot.lane.b32.xlu0 %v2299, 96
      %v2333 = vpop.permute.xlu0 %2332
      %2334 = vrot.lane.b32.xlu0 %v2300, 96
      %v2335 = vpop.permute.xlu0 %2334
      %2336 = vrot.lane.b32.xlu0 %v2301, 96
      %v2337 = vpop.permute.xlu0 %2336
      %2338 = vrot.lane.b32.xlu0 %v2302, 96
      %v2339 = vpop.permute.xlu0 %2338
      %2340 = vrot.lane.b32.xlu0 %v2303, 96
      %v2341 = vpop.permute.xlu0 %2340
      %2342 = vrot.lane.b32.xlu0 %v2304, 96
      %v2343 = vpop.permute.xlu0 %2342
      %2344 = vrot.lane.b32.xlu0 %v2305, 96
      %v2345 = vpop.permute.xlu0 %2344
      %2346 = vrot.lane.b32.xlu0 %v2306, 96
      %v2347 = vpop.permute.xlu0 %2346
      %2348 = vrot.lane.b32.xlu0 %v2307, 96
      %v2349 = vpop.permute.xlu0 %2348
      %2350 = vrot.lane.b32.xlu0 %v2308, 96
      %v2351 = vpop.permute.xlu0 %2350
      %2352 = vrot.lane.b32.xlu0 %v2309, 96
      %v2353 = vpop.permute.xlu0 %2352
      %2354 = vrot.lane.b32.xlu0 %v2310, 96
      %v2355 = vpop.permute.xlu0 %2354
      %2356 = vrot.lane.b32.xlu0 %v2311, 96
      %v2357 = vpop.permute.xlu0 %2356
      %2358 = vrot.lane.b32.xlu0 %v2312, 96
      %v2359 = vpop.permute.xlu0 %2358
      %2360 = vrot.lane.b32.xlu0 %v2313, 96
      %v2361 = vpop.permute.xlu0 %2360
      %2362 = vrot.lane.b32.xlu0 %v2314, 96
      %v2363 = vpop.permute.xlu0 %2362
      %2364 = vrot.lane.b32.xlu0 %v2315, 96
      %v2365 = vpop.permute.xlu0 %2364
      %2366 = vrot.lane.b32.xlu0 %v2316, 96
      %v2367 = vpop.permute.xlu0 %2366
      %2368 = vrot.lane.b32.xlu0 %v2317, 96
      %v2369 = vpop.permute.xlu0 %2368
      %2370 = vrot.lane.b32.xlu0 %v2318, 96
      %v2371 = vpop.permute.xlu0 %2370
      %2372 = vrot.lane.b32.xlu0 %v2319, 96
      %v2373 = vpop.permute.xlu0 %2372
      %2374 = vrot.lane.b32.xlu0 %v2320, 96
      %v2375 = vpop.permute.xlu0 %2374
      %2376 = vrot.lane.b32.xlu0 %v2321, 96
      %v2377 = vpop.permute.xlu0 %2376
      %2378 = vrot.lane.b32.xlu0 %v2322, 96
      %v2379 = vpop.permute.xlu0 %2378
      %2380 = vrot.lane.b32.xlu0 %v2323, 96
      %v2381 = vpop.permute.xlu0 %2380
      %2382 = vrot.lane.b32.xlu0 %v2324, 96
      %v2383 = vpop.permute.xlu0 %2382
      %2384 = vrot.lane.b32.xlu0 %v2325, 96
      %v2385 = vpop.permute.xlu0 %2384
      %2386 = vrot.lane.b32.xlu0 %v2326, 96
      %v2387 = vpop.permute.xlu0 %2386
      %2388 = vrot.lane.b32.xlu0 %v2327, 96
      %v2389 = vpop.permute.xlu0 %2388
      %2390 = vrot.lane.b32.xlu0 %v2328, 96
      %v2391 = vpop.permute.xlu0 %2390
      %2392 = vrot.lane.b32.xlu0 %v2329, 96
      %v2393 = vpop.permute.xlu0 %2392
      %v2426 = vunpack.c.l.b16 %v406
      %v2427 = vunpack.c.l.b16 %v407
      %v2428 = vunpack.c.l.b16 %v408
      %v2429 = vunpack.c.l.b16 %v409
      %v2430 = vunpack.c.l.b16 %v410
      %v2431 = vunpack.c.l.b16 %v411
      %v2432 = vunpack.c.l.b16 %v412
      %v2433 = vunpack.c.l.b16 %v413
      %v2434 = vunpack.c.l.b16 %v414
      %v2435 = vunpack.c.l.b16 %v415
      %v2436 = vunpack.c.l.b16 %v416
      %v2437 = vunpack.c.l.b16 %v417
      %v2438 = vunpack.c.l.b16 %v418
      %v2439 = vunpack.c.l.b16 %v419
      %v2440 = vunpack.c.l.b16 %v420
      %v2441 = vunpack.c.l.b16 %v421
      %v2442 = vunpack.c.l.b16 %v422
      %v2443 = vunpack.c.l.b16 %v423
      %v2444 = vunpack.c.l.b16 %v424
      %v2445 = vunpack.c.l.b16 %v425
      %v2446 = vunpack.c.l.b16 %v426
      %v2447 = vunpack.c.l.b16 %v427
      %v2448 = vunpack.c.l.b16 %v428
      %v2449 = vunpack.c.l.b16 %v429
      %v2450 = vunpack.c.l.b16 %v430
      %v2451 = vunpack.c.l.b16 %v431
      %v2452 = vunpack.c.l.b16 %v432
      %v2453 = vunpack.c.l.b16 %v433
      %v2454 = vunpack.c.l.b16 %v434
      %v2455 = vunpack.c.l.b16 %v435
      %v2456 = vunpack.c.l.b16 %v436
      %v2457 = vunpack.c.l.b16 %v437
      %v2458 = vpack.c.b16 %v2426, %v2266
      %v2459 = vpack.c.b16 %v2427, %v2267
      %v2460 = vpack.c.b16 %v2428, %v2268
      %v2461 = vpack.c.b16 %v2429, %v2269
      %v2462 = vpack.c.b16 %v2430, %v2270
      %v2463 = vpack.c.b16 %v2431, %v2271
      %v2464 = vpack.c.b16 %v2432, %v2272
      %v2465 = vpack.c.b16 %v2433, %v2273
      %v2466 = vpack.c.b16 %v2434, %v2274
      %v2467 = vpack.c.b16 %v2435, %v2275
      %v2468 = vpack.c.b16 %v2436, %v2276
      %v2469 = vpack.c.b16 %v2437, %v2277
      %v2470 = vpack.c.b16 %v2438, %v2278
      %v2471 = vpack.c.b16 %v2439, %v2279
      %v2472 = vpack.c.b16 %v2440, %v2280
      %v2473 = vpack.c.b16 %v2441, %v2281
      %v2474 = vpack.c.b16 %v2442, %v2282
      %v2475 = vpack.c.b16 %v2443, %v2283
      %v2476 = vpack.c.b16 %v2444, %v2284
      %v2477 = vpack.c.b16 %v2445, %v2285
      %v2478 = vpack.c.b16 %v2446, %v2286
      %v2479 = vpack.c.b16 %v2447, %v2287
      %v2480 = vpack.c.b16 %v2448, %v2288
      %v2481 = vpack.c.b16 %v2449, %v2289
      %v2482 = vpack.c.b16 %v2450, %v2290
      %v2483 = vpack.c.b16 %v2451, %v2291
      %v2484 = vpack.c.b16 %v2452, %v2292
      %v2485 = vpack.c.b16 %v2453, %v2293
      %v2486 = vpack.c.b16 %v2454, %v2294
      %v2487 = vpack.c.b16 %v2455, %v2295
      %v2488 = vpack.c.b16 %v2456, %v2296
      %v2489 = vpack.c.b16 %v2457, %v2297
      %v2491 = vshrl.u32 %v2458, 16
      %v2493 = vshll.u32 %v2458, 16
      %v2495 = vrot.slane %v2493, 1
      %v2496 = vor.u32 %v2491, %v2495
      %v2498 = vshrl.u32 %v2459, 16
      %v2500 = vshll.u32 %v2459, 16
      %v2502 = vrot.slane %v2500, 1
      %v2503 = vor.u32 %v2498, %v2502
      %v2505 = vshrl.u32 %v2460, 16
      %v2507 = vshll.u32 %v2460, 16
      %v2509 = vrot.slane %v2507, 1
      %v2510 = vor.u32 %v2505, %v2509
      %v2512 = vshrl.u32 %v2461, 16
      %v2514 = vshll.u32 %v2461, 16
      %v2516 = vrot.slane %v2514, 1
      %v2517 = vor.u32 %v2512, %v2516
      %v2519 = vshrl.u32 %v2462, 16
      %v2521 = vshll.u32 %v2462, 16
      %v2523 = vrot.slane %v2521, 1
      %v2524 = vor.u32 %v2519, %v2523
      %v2526 = vshrl.u32 %v2463, 16
      %v2528 = vshll.u32 %v2463, 16
      %v2530 = vrot.slane %v2528, 1
      %v2531 = vor.u32 %v2526, %v2530
      %v2533 = vshrl.u32 %v2464, 16
      %v2535 = vshll.u32 %v2464, 16
      %v2537 = vrot.slane %v2535, 1
      %v2538 = vor.u32 %v2533, %v2537
      %v2540 = vshrl.u32 %v2465, 16
      %v2542 = vshll.u32 %v2465, 16
      %v2544 = vrot.slane %v2542, 1
      %v2545 = vor.u32 %v2540, %v2544
      %v2547 = vshrl.u32 %v2466, 16
      %v2549 = vshll.u32 %v2466, 16
      %v2551 = vrot.slane %v2549, 1
      %v2552 = vor.u32 %v2547, %v2551
      %v2554 = vshrl.u32 %v2467, 16
      %v2556 = vshll.u32 %v2467, 16
      %v2558 = vrot.slane %v2556, 1
      %v2559 = vor.u32 %v2554, %v2558
      %v2561 = vshrl.u32 %v2468, 16
      %v2563 = vshll.u32 %v2468, 16
      %v2565 = vrot.slane %v2563, 1
      %v2566 = vor.u32 %v2561, %v2565
      %v2568 = vshrl.u32 %v2469, 16
      %v2570 = vshll.u32 %v2469, 16
      %v2572 = vrot.slane %v2570, 1
      %v2573 = vor.u32 %v2568, %v2572
      %v2575 = vshrl.u32 %v2470, 16
      %v2577 = vshll.u32 %v2470, 16
      %v2579 = vrot.slane %v2577, 1
      %v2580 = vor.u32 %v2575, %v2579
      %v2582 = vshrl.u32 %v2471, 16
      %v2584 = vshll.u32 %v2471, 16
      %v2586 = vrot.slane %v2584, 1
      %v2587 = vor.u32 %v2582, %v2586
      %v2589 = vshrl.u32 %v2472, 16
      %v2591 = vshll.u32 %v2472, 16
      %v2593 = vrot.slane %v2591, 1
      %v2594 = vor.u32 %v2589, %v2593
      %v2596 = vshrl.u32 %v2473, 16
      %v2598 = vshll.u32 %v2473, 16
      %v2600 = vrot.slane %v2598, 1
      %v2601 = vor.u32 %v2596, %v2600
      %v2603 = vshrl.u32 %v2474, 16
      %v2605 = vshll.u32 %v2474, 16
      %v2607 = vrot.slane %v2605, 1
      %v2608 = vor.u32 %v2603, %v2607
      %v2610 = vshrl.u32 %v2475, 16
      %v2612 = vshll.u32 %v2475, 16
      %v2614 = vrot.slane %v2612, 1
      %v2615 = vor.u32 %v2610, %v2614
      %v2617 = vshrl.u32 %v2476, 16
      %v2619 = vshll.u32 %v2476, 16
      %v2621 = vrot.slane %v2619, 1
      %v2622 = vor.u32 %v2617, %v2621
      %v2624 = vshrl.u32 %v2477, 16
      %v2626 = vshll.u32 %v2477, 16
      %v2628 = vrot.slane %v2626, 1
      %v2629 = vor.u32 %v2624, %v2628
      %v2631 = vshrl.u32 %v2478, 16
      %v2633 = vshll.u32 %v2478, 16
      %v2635 = vrot.slane %v2633, 1
      %v2636 = vor.u32 %v2631, %v2635
      %v2638 = vshrl.u32 %v2479, 16
      %v2640 = vshll.u32 %v2479, 16
      %v2642 = vrot.slane %v2640, 1
      %v2643 = vor.u32 %v2638, %v2642
      %v2645 = vshrl.u32 %v2480, 16
      %v2647 = vshll.u32 %v2480, 16
      %v2649 = vrot.slane %v2647, 1
      %v2650 = vor.u32 %v2645, %v2649
      %v2652 = vshrl.u32 %v2481, 16
      %v2654 = vshll.u32 %v2481, 16
      %v2656 = vrot.slane %v2654, 1
      %v2657 = vor.u32 %v2652, %v2656
      %v2659 = vshrl.u32 %v2482, 16
      %v2661 = vshll.u32 %v2482, 16
      %v2663 = vrot.slane %v2661, 1
      %v2664 = vor.u32 %v2659, %v2663
      %v2666 = vshrl.u32 %v2483, 16
      %v2668 = vshll.u32 %v2483, 16
      %v2670 = vrot.slane %v2668, 1
      %v2671 = vor.u32 %v2666, %v2670
      %v2673 = vshrl.u32 %v2484, 16
      %v2675 = vshll.u32 %v2484, 16
      %v2677 = vrot.slane %v2675, 1
      %v2678 = vor.u32 %v2673, %v2677
      %v2680 = vshrl.u32 %v2485, 16
      %v2682 = vshll.u32 %v2485, 16
      %v2684 = vrot.slane %v2682, 1
      %v2685 = vor.u32 %v2680, %v2684
      %v2687 = vshrl.u32 %v2486, 16
      %v2689 = vshll.u32 %v2486, 16
      %v2691 = vrot.slane %v2689, 1
      %v2692 = vor.u32 %v2687, %v2691
      %v2694 = vshrl.u32 %v2487, 16
      %v2696 = vshll.u32 %v2487, 16
      %v2698 = vrot.slane %v2696, 1
      %v2699 = vor.u32 %v2694, %v2698
      %v2701 = vshrl.u32 %v2488, 16
      %v2703 = vshll.u32 %v2488, 16
      %v2705 = vrot.slane %v2703, 1
      %v2706 = vor.u32 %v2701, %v2705
      %v2708 = vshrl.u32 %v2489, 16
      %v2710 = vshll.u32 %v2489, 16
      %v2712 = vrot.slane %v2710, 1
      %v2713 = vor.u32 %v2708, %v2712
      %2714 = vrot.lane.b32.xlu0 %v2496, 112
      %v2715 = vpop.permute.xlu0 %2714
      %2716 = vrot.lane.b32.xlu0 %v2503, 112
      %v2717 = vpop.permute.xlu0 %2716
      %2718 = vrot.lane.b32.xlu0 %v2510, 112
      %v2719 = vpop.permute.xlu0 %2718
      %2720 = vrot.lane.b32.xlu0 %v2517, 112
      %v2721 = vpop.permute.xlu0 %2720
      %2722 = vrot.lane.b32.xlu0 %v2524, 112
      %v2723 = vpop.permute.xlu0 %2722
      %2724 = vrot.lane.b32.xlu0 %v2531, 112
      %v2725 = vpop.permute.xlu0 %2724
      %2726 = vrot.lane.b32.xlu0 %v2538, 112
      %v2727 = vpop.permute.xlu0 %2726
      %2728 = vrot.lane.b32.xlu0 %v2545, 112
      %v2729 = vpop.permute.xlu0 %2728
      %2730 = vrot.lane.b32.xlu0 %v2552, 112
      %v2731 = vpop.permute.xlu0 %2730
      %2732 = vrot.lane.b32.xlu0 %v2559, 112
      %v2733 = vpop.permute.xlu0 %2732
      %2734 = vrot.lane.b32.xlu0 %v2566, 112
      %v2735 = vpop.permute.xlu0 %2734
      %2736 = vrot.lane.b32.xlu0 %v2573, 112
      %v2737 = vpop.permute.xlu0 %2736
      %2738 = vrot.lane.b32.xlu0 %v2580, 112
      %v2739 = vpop.permute.xlu0 %2738
      %2740 = vrot.lane.b32.xlu0 %v2587, 112
      %v2741 = vpop.permute.xlu0 %2740
      %2742 = vrot.lane.b32.xlu0 %v2594, 112
      %v2743 = vpop.permute.xlu0 %2742
      %2744 = vrot.lane.b32.xlu0 %v2601, 112
      %v2745 = vpop.permute.xlu0 %2744
      %2746 = vrot.lane.b32.xlu0 %v2608, 112
      %v2747 = vpop.permute.xlu0 %2746
      %2748 = vrot.lane.b32.xlu0 %v2615, 112
      %v2749 = vpop.permute.xlu0 %2748
      %2750 = vrot.lane.b32.xlu0 %v2622, 112
      %v2751 = vpop.permute.xlu0 %2750
      %2752 = vrot.lane.b32.xlu0 %v2629, 112
      %v2753 = vpop.permute.xlu0 %2752
      %2754 = vrot.lane.b32.xlu0 %v2636, 112
      %v2755 = vpop.permute.xlu0 %2754
      %2756 = vrot.lane.b32.xlu0 %v2643, 112
      %v2757 = vpop.permute.xlu0 %2756
      %2758 = vrot.lane.b32.xlu0 %v2650, 112
      %v2759 = vpop.permute.xlu0 %2758
      %2760 = vrot.lane.b32.xlu0 %v2657, 112
      %v2761 = vpop.permute.xlu0 %2760
      %2762 = vrot.lane.b32.xlu0 %v2664, 112
      %v2763 = vpop.permute.xlu0 %2762
      %2764 = vrot.lane.b32.xlu0 %v2671, 112
      %v2765 = vpop.permute.xlu0 %2764
      %2766 = vrot.lane.b32.xlu0 %v2678, 112
      %v2767 = vpop.permute.xlu0 %2766
      %2768 = vrot.lane.b32.xlu0 %v2685, 112
      %v2769 = vpop.permute.xlu0 %2768
      %2770 = vrot.lane.b32.xlu0 %v2692, 112
      %v2771 = vpop.permute.xlu0 %2770
      %2772 = vrot.lane.b32.xlu0 %v2699, 112
      %v2773 = vpop.permute.xlu0 %2772
      %2774 = vrot.lane.b32.xlu0 %v2706, 112
      %v2775 = vpop.permute.xlu0 %2774
      %2776 = vrot.lane.b32.xlu0 %v2713, 112
      %v2777 = vpop.permute.xlu0 %2776
      %v2842 = vunpack.c.l.b16 %v439
      %v2843 = vunpack.c.l.b16 %v471
      %v2844 = vunpack.c.l.b16 %v440
      %v2845 = vunpack.c.l.b16 %v472
      %v2846 = vunpack.c.l.b16 %v441
      %v2847 = vunpack.c.l.b16 %v473
      %v2848 = vunpack.c.l.b16 %v442
      %v2849 = vunpack.c.l.b16 %v474
      %v2850 = vunpack.c.l.b16 %v443
      %v2851 = vunpack.c.l.b16 %v475
      %v2852 = vunpack.c.l.b16 %v444
      %v2853 = vunpack.c.l.b16 %v476
      %v2854 = vunpack.c.l.b16 %v445
      %v2855 = vunpack.c.l.b16 %v477
      %v2856 = vunpack.c.l.b16 %v446
      %v2857 = vunpack.c.l.b16 %v478
      %v2858 = vunpack.c.l.b16 %v447
      %v2859 = vunpack.c.l.b16 %v479
      %v2860 = vunpack.c.l.b16 %v448
      %v2861 = vunpack.c.l.b16 %v480
      %v2862 = vunpack.c.l.b16 %v449
      %v2863 = vunpack.c.l.b16 %v481
      %v2864 = vunpack.c.l.b16 %v450
      %v2865 = vunpack.c.l.b16 %v482
      %v2866 = vunpack.c.l.b16 %v451
      %v2867 = vunpack.c.l.b16 %v483
      %v2868 = vunpack.c.l.b16 %v452
      %v2869 = vunpack.c.l.b16 %v484
      %v2870 = vunpack.c.l.b16 %v453
      %v2871 = vunpack.c.l.b16 %v485
      %v2872 = vunpack.c.l.b16 %v454
      %v2873 = vunpack.c.l.b16 %v486
      %v2874 = vunpack.c.l.b16 %v455
      %v2875 = vunpack.c.l.b16 %v487
      %v2876 = vunpack.c.l.b16 %v456
      %v2877 = vunpack.c.l.b16 %v488
      %v2878 = vunpack.c.l.b16 %v457
      %v2879 = vunpack.c.l.b16 %v489
      %v2880 = vunpack.c.l.b16 %v458
      %v2881 = vunpack.c.l.b16 %v490
      %v2882 = vunpack.c.l.b16 %v459
      %v2883 = vunpack.c.l.b16 %v491
      %v2884 = vunpack.c.l.b16 %v460
      %v2885 = vunpack.c.l.b16 %v492
      %v2886 = vunpack.c.l.b16 %v461
      %v2887 = vunpack.c.l.b16 %v493
      %v2888 = vunpack.c.l.b16 %v462
      %v2889 = vunpack.c.l.b16 %v494
      %v2890 = vunpack.c.l.b16 %v463
      %v2891 = vunpack.c.l.b16 %v495
      %v2892 = vunpack.c.l.b16 %v464
      %v2893 = vunpack.c.l.b16 %v496
      %v2894 = vunpack.c.l.b16 %v465
      %v2895 = vunpack.c.l.b16 %v497
      %v2896 = vunpack.c.l.b16 %v466
      %v2897 = vunpack.c.l.b16 %v498
      %v2898 = vunpack.c.l.b16 %v467
      %v2899 = vunpack.c.l.b16 %v499
      %v2900 = vunpack.c.l.b16 %v468
      %v2901 = vunpack.c.l.b16 %v500
      %v2902 = vunpack.c.l.b16 %v469
      %v2903 = vunpack.c.l.b16 %v501
      %v2904 = vunpack.c.l.b16 %v470
      %v2905 = vunpack.c.l.b16 %v502
      %v2906 = vpack.c.b16 %v2843, %v2842
      %v2907 = vpack.c.b16 %v2845, %v2844
      %v2908 = vpack.c.b16 %v2847, %v2846
      %v2909 = vpack.c.b16 %v2849, %v2848
      %v2910 = vpack.c.b16 %v2851, %v2850
      %v2911 = vpack.c.b16 %v2853, %v2852
      %v2912 = vpack.c.b16 %v2855, %v2854
      %v2913 = vpack.c.b16 %v2857, %v2856
      %v2914 = vpack.c.b16 %v2859, %v2858
      %v2915 = vpack.c.b16 %v2861, %v2860
      %v2916 = vpack.c.b16 %v2863, %v2862
      %v2917 = vpack.c.b16 %v2865, %v2864
      %v2918 = vpack.c.b16 %v2867, %v2866
      %v2919 = vpack.c.b16 %v2869, %v2868
      %v2920 = vpack.c.b16 %v2871, %v2870
      %v2921 = vpack.c.b16 %v2873, %v2872
      %v2922 = vpack.c.b16 %v2875, %v2874
      %v2923 = vpack.c.b16 %v2877, %v2876
      %v2924 = vpack.c.b16 %v2879, %v2878
      %v2925 = vpack.c.b16 %v2881, %v2880
      %v2926 = vpack.c.b16 %v2883, %v2882
      %v2927 = vpack.c.b16 %v2885, %v2884
      %v2928 = vpack.c.b16 %v2887, %v2886
      %v2929 = vpack.c.b16 %v2889, %v2888
      %v2930 = vpack.c.b16 %v2891, %v2890
      %v2931 = vpack.c.b16 %v2893, %v2892
      %v2932 = vpack.c.b16 %v2895, %v2894
      %v2933 = vpack.c.b16 %v2897, %v2896
      %v2934 = vpack.c.b16 %v2899, %v2898
      %v2935 = vpack.c.b16 %v2901, %v2900
      %v2936 = vpack.c.b16 %v2903, %v2902
      %v2937 = vpack.c.b16 %v2905, %v2904
      %v2939 = vshrl.u32 %v2906, 16
      %v2941 = vshll.u32 %v2906, 16
      %v2943 = vrot.slane %v2941, 1
      %v2944 = vor.u32 %v2939, %v2943
      %v2946 = vshrl.u32 %v2907, 16
      %v2948 = vshll.u32 %v2907, 16
      %v2950 = vrot.slane %v2948, 1
      %v2951 = vor.u32 %v2946, %v2950
      %v2953 = vshrl.u32 %v2908, 16
      %v2955 = vshll.u32 %v2908, 16
      %v2957 = vrot.slane %v2955, 1
      %v2958 = vor.u32 %v2953, %v2957
      %v2960 = vshrl.u32 %v2909, 16
      %v2962 = vshll.u32 %v2909, 16
      %v2964 = vrot.slane %v2962, 1
      %v2965 = vor.u32 %v2960, %v2964
      %v2967 = vshrl.u32 %v2910, 16
      %v2969 = vshll.u32 %v2910, 16
      %v2971 = vrot.slane %v2969, 1
      %v2972 = vor.u32 %v2967, %v2971
      %v2974 = vshrl.u32 %v2911, 16
      %v2976 = vshll.u32 %v2911, 16
      %v2978 = vrot.slane %v2976, 1
      %v2979 = vor.u32 %v2974, %v2978
      %v2981 = vshrl.u32 %v2912, 16
      %v2983 = vshll.u32 %v2912, 16
      %v2985 = vrot.slane %v2983, 1
      %v2986 = vor.u32 %v2981, %v2985
      %v2988 = vshrl.u32 %v2913, 16
      %v2990 = vshll.u32 %v2913, 16
      %v2992 = vrot.slane %v2990, 1
      %v2993 = vor.u32 %v2988, %v2992
      %v2995 = vshrl.u32 %v2914, 16
      %v2997 = vshll.u32 %v2914, 16
      %v2999 = vrot.slane %v2997, 1
      %v3000 = vor.u32 %v2995, %v2999
      %v3002 = vshrl.u32 %v2915, 16
      %v3004 = vshll.u32 %v2915, 16
      %v3006 = vrot.slane %v3004, 1
      %v3007 = vor.u32 %v3002, %v3006
      %v3009 = vshrl.u32 %v2916, 16
      %v3011 = vshll.u32 %v2916, 16
      %v3013 = vrot.slane %v3011, 1
      %v3014 = vor.u32 %v3009, %v3013
      %v3016 = vshrl.u32 %v2917, 16
      %v3018 = vshll.u32 %v2917, 16
      %v3020 = vrot.slane %v3018, 1
      %v3021 = vor.u32 %v3016, %v3020
      %v3023 = vshrl.u32 %v2918, 16
      %v3025 = vshll.u32 %v2918, 16
      %v3027 = vrot.slane %v3025, 1
      %v3028 = vor.u32 %v3023, %v3027
      %v3030 = vshrl.u32 %v2919, 16
      %v3032 = vshll.u32 %v2919, 16
      %v3034 = vrot.slane %v3032, 1
      %v3035 = vor.u32 %v3030, %v3034
      %v3037 = vshrl.u32 %v2920, 16
      %v3039 = vshll.u32 %v2920, 16
      %v3041 = vrot.slane %v3039, 1
      %v3042 = vor.u32 %v3037, %v3041
      %v3044 = vshrl.u32 %v2921, 16
      %v3046 = vshll.u32 %v2921, 16
      %v3048 = vrot.slane %v3046, 1
      %v3049 = vor.u32 %v3044, %v3048
      %v3051 = vshrl.u32 %v2922, 16
      %v3053 = vshll.u32 %v2922, 16
      %v3055 = vrot.slane %v3053, 1
      %v3056 = vor.u32 %v3051, %v3055
      %v3058 = vshrl.u32 %v2923, 16
      %v3060 = vshll.u32 %v2923, 16
      %v3062 = vrot.slane %v3060, 1
      %v3063 = vor.u32 %v3058, %v3062
      %v3065 = vshrl.u32 %v2924, 16
      %v3067 = vshll.u32 %v2924, 16
      %v3069 = vrot.slane %v3067, 1
      %v3070 = vor.u32 %v3065, %v3069
      %v3072 = vshrl.u32 %v2925, 16
      %v3074 = vshll.u32 %v2925, 16
      %v3076 = vrot.slane %v3074, 1
      %v3077 = vor.u32 %v3072, %v3076
      %v3079 = vshrl.u32 %v2926, 16
      %v3081 = vshll.u32 %v2926, 16
      %v3083 = vrot.slane %v3081, 1
      %v3084 = vor.u32 %v3079, %v3083
      %v3086 = vshrl.u32 %v2927, 16
      %v3088 = vshll.u32 %v2927, 16
      %v3090 = vrot.slane %v3088, 1
      %v3091 = vor.u32 %v3086, %v3090
      %v3093 = vshrl.u32 %v2928, 16
      %v3095 = vshll.u32 %v2928, 16
      %v3097 = vrot.slane %v3095, 1
      %v3098 = vor.u32 %v3093, %v3097
      %v3100 = vshrl.u32 %v2929, 16
      %v3102 = vshll.u32 %v2929, 16
      %v3104 = vrot.slane %v3102, 1
      %v3105 = vor.u32 %v3100, %v3104
      %v3107 = vshrl.u32 %v2930, 16
      %v3109 = vshll.u32 %v2930, 16
      %v3111 = vrot.slane %v3109, 1
      %v3112 = vor.u32 %v3107, %v3111
      %v3114 = vshrl.u32 %v2931, 16
      %v3116 = vshll.u32 %v2931, 16
      %v3118 = vrot.slane %v3116, 1
      %v3119 = vor.u32 %v3114, %v3118
      %v3121 = vshrl.u32 %v2932, 16
      %v3123 = vshll.u32 %v2932, 16
      %v3125 = vrot.slane %v3123, 1
      %v3126 = vor.u32 %v3121, %v3125
      %v3128 = vshrl.u32 %v2933, 16
      %v3130 = vshll.u32 %v2933, 16
      %v3132 = vrot.slane %v3130, 1
      %v3133 = vor.u32 %v3128, %v3132
      %v3135 = vshrl.u32 %v2934, 16
      %v3137 = vshll.u32 %v2934, 16
      %v3139 = vrot.slane %v3137, 1
      %v3140 = vor.u32 %v3135, %v3139
      %v3142 = vshrl.u32 %v2935, 16
      %v3144 = vshll.u32 %v2935, 16
      %v3146 = vrot.slane %v3144, 1
      %v3147 = vor.u32 %v3142, %v3146
      %v3149 = vshrl.u32 %v2936, 16
      %v3151 = vshll.u32 %v2936, 16
      %v3153 = vrot.slane %v3151, 1
      %v3154 = vor.u32 %v3149, %v3153
      %v3156 = vshrl.u32 %v2937, 16
      %v3158 = vshll.u32 %v2937, 16
      %v3160 = vrot.slane %v3158, 1
      %v3161 = vor.u32 %v3156, %v3160
      %3162 = vrot.lane.b32.xlu0 %v2944, 16
      %v3163 = vpop.permute.xlu0 %3162
      %3164 = vrot.lane.b32.xlu0 %v2951, 16
      %v3165 = vpop.permute.xlu0 %3164
      %3166 = vrot.lane.b32.xlu0 %v2958, 16
      %v3167 = vpop.permute.xlu0 %3166
      %3168 = vrot.lane.b32.xlu0 %v2965, 16
      %v3169 = vpop.permute.xlu0 %3168
      %3170 = vrot.lane.b32.xlu0 %v2972, 16
      %v3171 = vpop.permute.xlu0 %3170
      %3172 = vrot.lane.b32.xlu0 %v2979, 16
      %v3173 = vpop.permute.xlu0 %3172
      %3174 = vrot.lane.b32.xlu0 %v2986, 16
      %v3175 = vpop.permute.xlu0 %3174
      %3176 = vrot.lane.b32.xlu0 %v2993, 16
      %v3177 = vpop.permute.xlu0 %3176
      %3178 = vrot.lane.b32.xlu0 %v3000, 16
      %v3179 = vpop.permute.xlu0 %3178
      %3180 = vrot.lane.b32.xlu0 %v3007, 16
      %v3181 = vpop.permute.xlu0 %3180
      %3182 = vrot.lane.b32.xlu0 %v3014, 16
      %v3183 = vpop.permute.xlu0 %3182
      %3184 = vrot.lane.b32.xlu0 %v3021, 16
      %v3185 = vpop.permute.xlu0 %3184
      %3186 = vrot.lane.b32.xlu0 %v3028, 16
      %v3187 = vpop.permute.xlu0 %3186
      %3188 = vrot.lane.b32.xlu0 %v3035, 16
      %v3189 = vpop.permute.xlu0 %3188
      %3190 = vrot.lane.b32.xlu0 %v3042, 16
      %v3191 = vpop.permute.xlu0 %3190
      %3192 = vrot.lane.b32.xlu0 %v3049, 16
      %v3193 = vpop.permute.xlu0 %3192
      %3194 = vrot.lane.b32.xlu0 %v3056, 16
      %v3195 = vpop.permute.xlu0 %3194
      %3196 = vrot.lane.b32.xlu0 %v3063, 16
      %v3197 = vpop.permute.xlu0 %3196
      %3198 = vrot.lane.b32.xlu0 %v3070, 16
      %v3199 = vpop.permute.xlu0 %3198
      %3200 = vrot.lane.b32.xlu0 %v3077, 16
      %v3201 = vpop.permute.xlu0 %3200
      %3202 = vrot.lane.b32.xlu0 %v3084, 16
      %v3203 = vpop.permute.xlu0 %3202
      %3204 = vrot.lane.b32.xlu0 %v3091, 16
      %v3205 = vpop.permute.xlu0 %3204
      %3206 = vrot.lane.b32.xlu0 %v3098, 16
      %v3207 = vpop.permute.xlu0 %3206
      %3208 = vrot.lane.b32.xlu0 %v3105, 16
      %v3209 = vpop.permute.xlu0 %3208
      %3210 = vrot.lane.b32.xlu0 %v3112, 16
      %v3211 = vpop.permute.xlu0 %3210
      %3212 = vrot.lane.b32.xlu0 %v3119, 16
      %v3213 = vpop.permute.xlu0 %3212
      %3214 = vrot.lane.b32.xlu0 %v3126, 16
      %v3215 = vpop.permute.xlu0 %3214
      %3216 = vrot.lane.b32.xlu0 %v3133, 16
      %v3217 = vpop.permute.xlu0 %3216
      %3218 = vrot.lane.b32.xlu0 %v3140, 16
      %v3219 = vpop.permute.xlu0 %3218
      %3220 = vrot.lane.b32.xlu0 %v3147, 16
      %v3221 = vpop.permute.xlu0 %3220
      %3222 = vrot.lane.b32.xlu0 %v3154, 16
      %v3223 = vpop.permute.xlu0 %3222
      %3224 = vrot.lane.b32.xlu0 %v3161, 16
      %v3225 = vpop.permute.xlu0 %3224
      %v3258 = vunpack.c.l.b16 %v504
      %v3259 = vunpack.c.l.b16 %v505
      %v3260 = vunpack.c.l.b16 %v506
      %v3261 = vunpack.c.l.b16 %v507
      %v3262 = vunpack.c.l.b16 %v508
      %v3263 = vunpack.c.l.b16 %v509
      %v3264 = vunpack.c.l.b16 %v510
      %v3265 = vunpack.c.l.b16 %v511
      %v3266 = vunpack.c.l.b16 %v512
      %v3267 = vunpack.c.l.b16 %v513
      %v3268 = vunpack.c.l.b16 %v514
      %v3269 = vunpack.c.l.b16 %v515
      %v3270 = vunpack.c.l.b16 %v516
      %v3271 = vunpack.c.l.b16 %v517
      %v3272 = vunpack.c.l.b16 %v518
      %v3273 = vunpack.c.l.b16 %v519
      %v3274 = vunpack.c.l.b16 %v520
      %v3275 = vunpack.c.l.b16 %v521
      %v3276 = vunpack.c.l.b16 %v522
      %v3277 = vunpack.c.l.b16 %v523
      %v3278 = vunpack.c.l.b16 %v524
      %v3279 = vunpack.c.l.b16 %v525
      %v3280 = vunpack.c.l.b16 %v526
      %v3281 = vunpack.c.l.b16 %v527
      %v3282 = vunpack.c.l.b16 %v528
      %v3283 = vunpack.c.l.b16 %v529
      %v3284 = vunpack.c.l.b16 %v530
      %v3285 = vunpack.c.l.b16 %v531
      %v3286 = vunpack.c.l.b16 %v532
      %v3287 = vunpack.c.l.b16 %v533
      %v3288 = vunpack.c.l.b16 %v534
      %v3289 = vunpack.c.l.b16 %v535
      %v3290 = vpack.c.b16 %v3258, %v3258
      %v3291 = vpack.c.b16 %v3259, %v3259
      %v3292 = vpack.c.b16 %v3260, %v3260
      %v3293 = vpack.c.b16 %v3261, %v3261
      %v3294 = vpack.c.b16 %v3262, %v3262
      %v3295 = vpack.c.b16 %v3263, %v3263
      %v3296 = vpack.c.b16 %v3264, %v3264
      %v3297 = vpack.c.b16 %v3265, %v3265
      %v3298 = vpack.c.b16 %v3266, %v3266
      %v3299 = vpack.c.b16 %v3267, %v3267
      %v3300 = vpack.c.b16 %v3268, %v3268
      %v3301 = vpack.c.b16 %v3269, %v3269
      %v3302 = vpack.c.b16 %v3270, %v3270
      %v3303 = vpack.c.b16 %v3271, %v3271
      %v3304 = vpack.c.b16 %v3272, %v3272
      %v3305 = vpack.c.b16 %v3273, %v3273
      %v3306 = vpack.c.b16 %v3274, %v3274
      %v3307 = vpack.c.b16 %v3275, %v3275
      %v3308 = vpack.c.b16 %v3276, %v3276
      %v3309 = vpack.c.b16 %v3277, %v3277
      %v3310 = vpack.c.b16 %v3278, %v3278
      %v3311 = vpack.c.b16 %v3279, %v3279
      %v3312 = vpack.c.b16 %v3280, %v3280
      %v3313 = vpack.c.b16 %v3281, %v3281
      %v3314 = vpack.c.b16 %v3282, %v3282
      %v3315 = vpack.c.b16 %v3283, %v3283
      %v3316 = vpack.c.b16 %v3284, %v3284
      %v3317 = vpack.c.b16 %v3285, %v3285
      %v3318 = vpack.c.b16 %v3286, %v3286
      %v3319 = vpack.c.b16 %v3287, %v3287
      %v3320 = vpack.c.b16 %v3288, %v3288
      %v3321 = vpack.c.b16 %v3289, %v3289
      %3322 = vrot.lane.b32.xlu0 %v3290, 32
      %v3323 = vpop.permute.xlu0 %3322
      %3324 = vrot.lane.b32.xlu0 %v3291, 32
      %v3325 = vpop.permute.xlu0 %3324
      %3326 = vrot.lane.b32.xlu0 %v3292, 32
      %v3327 = vpop.permute.xlu0 %3326
      %3328 = vrot.lane.b32.xlu0 %v3293, 32
      %v3329 = vpop.permute.xlu0 %3328
      %3330 = vrot.lane.b32.xlu0 %v3294, 32
      %v3331 = vpop.permute.xlu0 %3330
      %3332 = vrot.lane.b32.xlu0 %v3295, 32
      %v3333 = vpop.permute.xlu0 %3332
      %3334 = vrot.lane.b32.xlu0 %v3296, 32
      %v3335 = vpop.permute.xlu0 %3334
      %3336 = vrot.lane.b32.xlu0 %v3297, 32
      %v3337 = vpop.permute.xlu0 %3336
      %3338 = vrot.lane.b32.xlu0 %v3298, 32
      %v3339 = vpop.permute.xlu0 %3338
      %3340 = vrot.lane.b32.xlu0 %v3299, 32
      %v3341 = vpop.permute.xlu0 %3340
      %3342 = vrot.lane.b32.xlu0 %v3300, 32
      %v3343 = vpop.permute.xlu0 %3342
      %3344 = vrot.lane.b32.xlu0 %v3301, 32
      %v3345 = vpop.permute.xlu0 %3344
      %3346 = vrot.lane.b32.xlu0 %v3302, 32
      %v3347 = vpop.permute.xlu0 %3346
      %3348 = vrot.lane.b32.xlu0 %v3303, 32
      %v3349 = vpop.permute.xlu0 %3348
      %3350 = vrot.lane.b32.xlu0 %v3304, 32
      %v3351 = vpop.permute.xlu0 %3350
      %3352 = vrot.lane.b32.xlu0 %v3305, 32
      %v3353 = vpop.permute.xlu0 %3352
      %3354 = vrot.lane.b32.xlu0 %v3306, 32
      %v3355 = vpop.permute.xlu0 %3354
      %3356 = vrot.lane.b32.xlu0 %v3307, 32
      %v3357 = vpop.permute.xlu0 %3356
      %3358 = vrot.lane.b32.xlu0 %v3308, 32
      %v3359 = vpop.permute.xlu0 %3358
      %3360 = vrot.lane.b32.xlu0 %v3309, 32
      %v3361 = vpop.permute.xlu0 %3360
      %3362 = vrot.lane.b32.xlu0 %v3310, 32
      %v3363 = vpop.permute.xlu0 %3362
      %3364 = vrot.lane.b32.xlu0 %v3311, 32
      %v3365 = vpop.permute.xlu0 %3364
      %3366 = vrot.lane.b32.xlu0 %v3312, 32
      %v3367 = vpop.permute.xlu0 %3366
      %3368 = vrot.lane.b32.xlu0 %v3313, 32
      %v3369 = vpop.permute.xlu0 %3368
      %3370 = vrot.lane.b32.xlu0 %v3314, 32
      %v3371 = vpop.permute.xlu0 %3370
      %3372 = vrot.lane.b32.xlu0 %v3315, 32
      %v3373 = vpop.permute.xlu0 %3372
      %3374 = vrot.lane.b32.xlu0 %v3316, 32
      %v3375 = vpop.permute.xlu0 %3374
      %3376 = vrot.lane.b32.xlu0 %v3317, 32
      %v3377 = vpop.permute.xlu0 %3376
      %3378 = vrot.lane.b32.xlu0 %v3318, 32
      %v3379 = vpop.permute.xlu0 %3378
      %3380 = vrot.lane.b32.xlu0 %v3319, 32
      %v3381 = vpop.permute.xlu0 %3380
      %3382 = vrot.lane.b32.xlu0 %v3320, 32
      %v3383 = vpop.permute.xlu0 %3382
      %3384 = vrot.lane.b32.xlu0 %v3321, 32
      %v3385 = vpop.permute.xlu0 %3384
      %v3418 = vunpack.c.l.b16 %v536
      %v3419 = vunpack.c.l.b16 %v537
      %v3420 = vunpack.c.l.b16 %v538
      %v3421 = vunpack.c.l.b16 %v539
      %v3422 = vunpack.c.l.b16 %v540
      %v3423 = vunpack.c.l.b16 %v541
      %v3424 = vunpack.c.l.b16 %v542
      %v3425 = vunpack.c.l.b16 %v543
      %v3426 = vunpack.c.l.b16 %v544
      %v3427 = vunpack.c.l.b16 %v545
      %v3428 = vunpack.c.l.b16 %v546
      %v3429 = vunpack.c.l.b16 %v547
      %v3430 = vunpack.c.l.b16 %v548
      %v3431 = vunpack.c.l.b16 %v549
      %v3432 = vunpack.c.l.b16 %v550
      %v3433 = vunpack.c.l.b16 %v551
      %v3434 = vunpack.c.l.b16 %v552
      %v3435 = vunpack.c.l.b16 %v553
      %v3436 = vunpack.c.l.b16 %v554
      %v3437 = vunpack.c.l.b16 %v555
      %v3438 = vunpack.c.l.b16 %v556
      %v3439 = vunpack.c.l.b16 %v557
      %v3440 = vunpack.c.l.b16 %v558
      %v3441 = vunpack.c.l.b16 %v559
      %v3442 = vunpack.c.l.b16 %v560
      %v3443 = vunpack.c.l.b16 %v561
      %v3444 = vunpack.c.l.b16 %v562
      %v3445 = vunpack.c.l.b16 %v563
      %v3446 = vunpack.c.l.b16 %v564
      %v3447 = vunpack.c.l.b16 %v565
      %v3448 = vunpack.c.l.b16 %v566
      %v3449 = vunpack.c.l.b16 %v567
      %v3450 = vpack.c.b16 %v3418, %v3258
      %v3451 = vpack.c.b16 %v3419, %v3259
      %v3452 = vpack.c.b16 %v3420, %v3260
      %v3453 = vpack.c.b16 %v3421, %v3261
      %v3454 = vpack.c.b16 %v3422, %v3262
      %v3455 = vpack.c.b16 %v3423, %v3263
      %v3456 = vpack.c.b16 %v3424, %v3264
      %v3457 = vpack.c.b16 %v3425, %v3265
      %v3458 = vpack.c.b16 %v3426, %v3266
      %v3459 = vpack.c.b16 %v3427, %v3267
      %v3460 = vpack.c.b16 %v3428, %v3268
      %v3461 = vpack.c.b16 %v3429, %v3269
      %v3462 = vpack.c.b16 %v3430, %v3270
      %v3463 = vpack.c.b16 %v3431, %v3271
      %v3464 = vpack.c.b16 %v3432, %v3272
      %v3465 = vpack.c.b16 %v3433, %v3273
      %v3466 = vpack.c.b16 %v3434, %v3274
      %v3467 = vpack.c.b16 %v3435, %v3275
      %v3468 = vpack.c.b16 %v3436, %v3276
      %v3469 = vpack.c.b16 %v3437, %v3277
      %v3470 = vpack.c.b16 %v3438, %v3278
      %v3471 = vpack.c.b16 %v3439, %v3279
      %v3472 = vpack.c.b16 %v3440, %v3280
      %v3473 = vpack.c.b16 %v3441, %v3281
      %v3474 = vpack.c.b16 %v3442, %v3282
      %v3475 = vpack.c.b16 %v3443, %v3283
      %v3476 = vpack.c.b16 %v3444, %v3284
      %v3477 = vpack.c.b16 %v3445, %v3285
      %v3478 = vpack.c.b16 %v3446, %v3286
      %v3479 = vpack.c.b16 %v3447, %v3287
      %v3480 = vpack.c.b16 %v3448, %v3288
      %v3481 = vpack.c.b16 %v3449, %v3289
      %v3483 = vshrl.u32 %v3450, 16
      %v3485 = vshll.u32 %v3450, 16
      %v3487 = vrot.slane %v3485, 1
      %v3488 = vor.u32 %v3483, %v3487
      %v3490 = vshrl.u32 %v3451, 16
      %v3492 = vshll.u32 %v3451, 16
      %v3494 = vrot.slane %v3492, 1
      %v3495 = vor.u32 %v3490, %v3494
      %v3497 = vshrl.u32 %v3452, 16
      %v3499 = vshll.u32 %v3452, 16
      %v3501 = vrot.slane %v3499, 1
      %v3502 = vor.u32 %v3497, %v3501
      %v3504 = vshrl.u32 %v3453, 16
      %v3506 = vshll.u32 %v3453, 16
      %v3508 = vrot.slane %v3506, 1
      %v3509 = vor.u32 %v3504, %v3508
      %v3511 = vshrl.u32 %v3454, 16
      %v3513 = vshll.u32 %v3454, 16
      %v3515 = vrot.slane %v3513, 1
      %v3516 = vor.u32 %v3511, %v3515
      %v3518 = vshrl.u32 %v3455, 16
      %v3520 = vshll.u32 %v3455, 16
      %v3522 = vrot.slane %v3520, 1
      %v3523 = vor.u32 %v3518, %v3522
      %v3525 = vshrl.u32 %v3456, 16
      %v3527 = vshll.u32 %v3456, 16
      %v3529 = vrot.slane %v3527, 1
      %v3530 = vor.u32 %v3525, %v3529
      %v3532 = vshrl.u32 %v3457, 16
      %v3534 = vshll.u32 %v3457, 16
      %v3536 = vrot.slane %v3534, 1
      %v3537 = vor.u32 %v3532, %v3536
      %v3539 = vshrl.u32 %v3458, 16
      %v3541 = vshll.u32 %v3458, 16
      %v3543 = vrot.slane %v3541, 1
      %v3544 = vor.u32 %v3539, %v3543
      %v3546 = vshrl.u32 %v3459, 16
      %v3548 = vshll.u32 %v3459, 16
      %v3550 = vrot.slane %v3548, 1
      %v3551 = vor.u32 %v3546, %v3550
      %v3553 = vshrl.u32 %v3460, 16
      %v3555 = vshll.u32 %v3460, 16
      %v3557 = vrot.slane %v3555, 1
      %v3558 = vor.u32 %v3553, %v3557
      %v3560 = vshrl.u32 %v3461, 16
      %v3562 = vshll.u32 %v3461, 16
      %v3564 = vrot.slane %v3562, 1
      %v3565 = vor.u32 %v3560, %v3564
      %v3567 = vshrl.u32 %v3462, 16
      %v3569 = vshll.u32 %v3462, 16
      %v3571 = vrot.slane %v3569, 1
      %v3572 = vor.u32 %v3567, %v3571
      %v3574 = vshrl.u32 %v3463, 16
      %v3576 = vshll.u32 %v3463, 16
      %v3578 = vrot.slane %v3576, 1
      %v3579 = vor.u32 %v3574, %v3578
      %v3581 = vshrl.u32 %v3464, 16
      %v3583 = vshll.u32 %v3464, 16
      %v3585 = vrot.slane %v3583, 1
      %v3586 = vor.u32 %v3581, %v3585
      %v3588 = vshrl.u32 %v3465, 16
      %v3590 = vshll.u32 %v3465, 16
      %v3592 = vrot.slane %v3590, 1
      %v3593 = vor.u32 %v3588, %v3592
      %v3595 = vshrl.u32 %v3466, 16
      %v3597 = vshll.u32 %v3466, 16
      %v3599 = vrot.slane %v3597, 1
      %v3600 = vor.u32 %v3595, %v3599
      %v3602 = vshrl.u32 %v3467, 16
      %v3604 = vshll.u32 %v3467, 16
      %v3606 = vrot.slane %v3604, 1
      %v3607 = vor.u32 %v3602, %v3606
      %v3609 = vshrl.u32 %v3468, 16
      %v3611 = vshll.u32 %v3468, 16
      %v3613 = vrot.slane %v3611, 1
      %v3614 = vor.u32 %v3609, %v3613
      %v3616 = vshrl.u32 %v3469, 16
      %v3618 = vshll.u32 %v3469, 16
      %v3620 = vrot.slane %v3618, 1
      %v3621 = vor.u32 %v3616, %v3620
      %v3623 = vshrl.u32 %v3470, 16
      %v3625 = vshll.u32 %v3470, 16
      %v3627 = vrot.slane %v3625, 1
      %v3628 = vor.u32 %v3623, %v3627
      %v3630 = vshrl.u32 %v3471, 16
      %v3632 = vshll.u32 %v3471, 16
      %v3634 = vrot.slane %v3632, 1
      %v3635 = vor.u32 %v3630, %v3634
      %v3637 = vshrl.u32 %v3472, 16
      %v3639 = vshll.u32 %v3472, 16
      %v3641 = vrot.slane %v3639, 1
      %v3642 = vor.u32 %v3637, %v3641
      %v3644 = vshrl.u32 %v3473, 16
      %v3646 = vshll.u32 %v3473, 16
      %v3648 = vrot.slane %v3646, 1
      %v3649 = vor.u32 %v3644, %v3648
      %v3651 = vshrl.u32 %v3474, 16
      %v3653 = vshll.u32 %v3474, 16
      %v3655 = vrot.slane %v3653, 1
      %v3656 = vor.u32 %v3651, %v3655
      %v3658 = vshrl.u32 %v3475, 16
      %v3660 = vshll.u32 %v3475, 16
      %v3662 = vrot.slane %v3660, 1
      %v3663 = vor.u32 %v3658, %v3662
      %v3665 = vshrl.u32 %v3476, 16
      %v3667 = vshll.u32 %v3476, 16
      %v3669 = vrot.slane %v3667, 1
      %v3670 = vor.u32 %v3665, %v3669
      %v3672 = vshrl.u32 %v3477, 16
      %v3674 = vshll.u32 %v3477, 16
      %v3676 = vrot.slane %v3674, 1
      %v3677 = vor.u32 %v3672, %v3676
      %v3679 = vshrl.u32 %v3478, 16
      %v3681 = vshll.u32 %v3478, 16
      %v3683 = vrot.slane %v3681, 1
      %v3684 = vor.u32 %v3679, %v3683
      %v3686 = vshrl.u32 %v3479, 16
      %v3688 = vshll.u32 %v3479, 16
      %v3690 = vrot.slane %v3688, 1
      %v3691 = vor.u32 %v3686, %v3690
      %v3693 = vshrl.u32 %v3480, 16
      %v3695 = vshll.u32 %v3480, 16
      %v3697 = vrot.slane %v3695, 1
      %v3698 = vor.u32 %v3693, %v3697
      %v3700 = vshrl.u32 %v3481, 16
      %v3702 = vshll.u32 %v3481, 16
      %v3704 = vrot.slane %v3702, 1
      %v3705 = vor.u32 %v3700, %v3704
      %3706 = vrot.lane.b32.xlu0 %v3488, 48
      %v3707 = vpop.permute.xlu0 %3706
      %3708 = vrot.lane.b32.xlu0 %v3495, 48
      %v3709 = vpop.permute.xlu0 %3708
      %3710 = vrot.lane.b32.xlu0 %v3502, 48
      %v3711 = vpop.permute.xlu0 %3710
      %3712 = vrot.lane.b32.xlu0 %v3509, 48
      %v3713 = vpop.permute.xlu0 %3712
      %3714 = vrot.lane.b32.xlu0 %v3516, 48
      %v3715 = vpop.permute.xlu0 %3714
      %3716 = vrot.lane.b32.xlu0 %v3523, 48
      %v3717 = vpop.permute.xlu0 %3716
      %3718 = vrot.lane.b32.xlu0 %v3530, 48
      %v3719 = vpop.permute.xlu0 %3718
      %3720 = vrot.lane.b32.xlu0 %v3537, 48
      %v3721 = vpop.permute.xlu0 %3720
      %3722 = vrot.lane.b32.xlu0 %v3544, 48
      %v3723 = vpop.permute.xlu0 %3722
      %3724 = vrot.lane.b32.xlu0 %v3551, 48
      %v3725 = vpop.permute.xlu0 %3724
      %3726 = vrot.lane.b32.xlu0 %v3558, 48
      %v3727 = vpop.permute.xlu0 %3726
      %3728 = vrot.lane.b32.xlu0 %v3565, 48
      %v3729 = vpop.permute.xlu0 %3728
      %3730 = vrot.lane.b32.xlu0 %v3572, 48
      %v3731 = vpop.permute.xlu0 %3730
      %3732 = vrot.lane.b32.xlu0 %v3579, 48
      %v3733 = vpop.permute.xlu0 %3732
      %3734 = vrot.lane.b32.xlu0 %v3586, 48
      %v3735 = vpop.permute.xlu0 %3734
      %3736 = vrot.lane.b32.xlu0 %v3593, 48
      %v3737 = vpop.permute.xlu0 %3736
      %3738 = vrot.lane.b32.xlu0 %v3600, 48
      %v3739 = vpop.permute.xlu0 %3738
      %3740 = vrot.lane.b32.xlu0 %v3607, 48
      %v3741 = vpop.permute.xlu0 %3740
      %3742 = vrot.lane.b32.xlu0 %v3614, 48
      %v3743 = vpop.permute.xlu0 %3742
      %3744 = vrot.lane.b32.xlu0 %v3621, 48
      %v3745 = vpop.permute.xlu0 %3744
      %3746 = vrot.lane.b32.xlu0 %v3628, 48
      %v3747 = vpop.permute.xlu0 %3746
      %3748 = vrot.lane.b32.xlu0 %v3635, 48
      %v3749 = vpop.permute.xlu0 %3748
      %3750 = vrot.lane.b32.xlu0 %v3642, 48
      %v3751 = vpop.permute.xlu0 %3750
      %3752 = vrot.lane.b32.xlu0 %v3649, 48
      %v3753 = vpop.permute.xlu0 %3752
      %3754 = vrot.lane.b32.xlu0 %v3656, 48
      %v3755 = vpop.permute.xlu0 %3754
      %3756 = vrot.lane.b32.xlu0 %v3663, 48
      %v3757 = vpop.permute.xlu0 %3756
      %3758 = vrot.lane.b32.xlu0 %v3670, 48
      %v3759 = vpop.permute.xlu0 %3758
      %3760 = vrot.lane.b32.xlu0 %v3677, 48
      %v3761 = vpop.permute.xlu0 %3760
      %3762 = vrot.lane.b32.xlu0 %v3684, 48
      %v3763 = vpop.permute.xlu0 %3762
      %3764 = vrot.lane.b32.xlu0 %v3691, 48
      %v3765 = vpop.permute.xlu0 %3764
      %3766 = vrot.lane.b32.xlu0 %v3698, 48
      %v3767 = vpop.permute.xlu0 %3766
      %3768 = vrot.lane.b32.xlu0 %v3705, 48
      %v3769 = vpop.permute.xlu0 %3768
      %v3802 = vunpack.c.l.b16 %v569
      %v3803 = vunpack.c.l.b16 %v570
      %v3804 = vunpack.c.l.b16 %v571
      %v3805 = vunpack.c.l.b16 %v572
      %v3806 = vunpack.c.l.b16 %v573
      %v3807 = vunpack.c.l.b16 %v574
      %v3808 = vunpack.c.l.b16 %v575
      %v3809 = vunpack.c.l.b16 %v576
      %v3810 = vunpack.c.l.b16 %v577
      %v3811 = vunpack.c.l.b16 %v578
      %v3812 = vunpack.c.l.b16 %v579
      %v3813 = vunpack.c.l.b16 %v580
      %v3814 = vunpack.c.l.b16 %v581
      %v3815 = vunpack.c.l.b16 %v582
      %v3816 = vunpack.c.l.b16 %v583
      %v3817 = vunpack.c.l.b16 %v584
      %v3818 = vunpack.c.l.b16 %v585
      %v3819 = vunpack.c.l.b16 %v586
      %v3820 = vunpack.c.l.b16 %v587
      %v3821 = vunpack.c.l.b16 %v588
      %v3822 = vunpack.c.l.b16 %v589
      %v3823 = vunpack.c.l.b16 %v590
      %v3824 = vunpack.c.l.b16 %v591
      %v3825 = vunpack.c.l.b16 %v592
      %v3826 = vunpack.c.l.b16 %v593
      %v3827 = vunpack.c.l.b16 %v594
      %v3828 = vunpack.c.l.b16 %v595
      %v3829 = vunpack.c.l.b16 %v596
      %v3830 = vunpack.c.l.b16 %v597
      %v3831 = vunpack.c.l.b16 %v598
      %v3832 = vunpack.c.l.b16 %v599
      %v3833 = vunpack.c.l.b16 %v600
      %v3834 = vpack.c.b16 %v3802, %v3802
      %v3835 = vpack.c.b16 %v3803, %v3803
      %v3836 = vpack.c.b16 %v3804, %v3804
      %v3837 = vpack.c.b16 %v3805, %v3805
      %v3838 = vpack.c.b16 %v3806, %v3806
      %v3839 = vpack.c.b16 %v3807, %v3807
      %v3840 = vpack.c.b16 %v3808, %v3808
      %v3841 = vpack.c.b16 %v3809, %v3809
      %v3842 = vpack.c.b16 %v3810, %v3810
      %v3843 = vpack.c.b16 %v3811, %v3811
      %v3844 = vpack.c.b16 %v3812, %v3812
      %v3845 = vpack.c.b16 %v3813, %v3813
      %v3846 = vpack.c.b16 %v3814, %v3814
      %v3847 = vpack.c.b16 %v3815, %v3815
      %v3848 = vpack.c.b16 %v3816, %v3816
      %v3849 = vpack.c.b16 %v3817, %v3817
      %v3850 = vpack.c.b16 %v3818, %v3818
      %v3851 = vpack.c.b16 %v3819, %v3819
      %v3852 = vpack.c.b16 %v3820, %v3820
      %v3853 = vpack.c.b16 %v3821, %v3821
      %v3854 = vpack.c.b16 %v3822, %v3822
      %v3855 = vpack.c.b16 %v3823, %v3823
      %v3856 = vpack.c.b16 %v3824, %v3824
      %v3857 = vpack.c.b16 %v3825, %v3825
      %v3858 = vpack.c.b16 %v3826, %v3826
      %v3859 = vpack.c.b16 %v3827, %v3827
      %v3860 = vpack.c.b16 %v3828, %v3828
      %v3861 = vpack.c.b16 %v3829, %v3829
      %v3862 = vpack.c.b16 %v3830, %v3830
      %v3863 = vpack.c.b16 %v3831, %v3831
      %v3864 = vpack.c.b16 %v3832, %v3832
      %v3865 = vpack.c.b16 %v3833, %v3833
      %3866 = vrot.lane.b32.xlu0 %v3834, 64
      %v3867 = vpop.permute.xlu0 %3866
      %3868 = vrot.lane.b32.xlu0 %v3835, 64
      %v3869 = vpop.permute.xlu0 %3868
      %3870 = vrot.lane.b32.xlu0 %v3836, 64
      %v3871 = vpop.permute.xlu0 %3870
      %3872 = vrot.lane.b32.xlu0 %v3837, 64
      %v3873 = vpop.permute.xlu0 %3872
      %3874 = vrot.lane.b32.xlu0 %v3838, 64
      %v3875 = vpop.permute.xlu0 %3874
      %3876 = vrot.lane.b32.xlu0 %v3839, 64
      %v3877 = vpop.permute.xlu0 %3876
      %3878 = vrot.lane.b32.xlu0 %v3840, 64
      %v3879 = vpop.permute.xlu0 %3878
      %3880 = vrot.lane.b32.xlu0 %v3841, 64
      %v3881 = vpop.permute.xlu0 %3880
      %3882 = vrot.lane.b32.xlu0 %v3842, 64
      %v3883 = vpop.permute.xlu0 %3882
      %3884 = vrot.lane.b32.xlu0 %v3843, 64
      %v3885 = vpop.permute.xlu0 %3884
      %3886 = vrot.lane.b32.xlu0 %v3844, 64
      %v3887 = vpop.permute.xlu0 %3886
      %3888 = vrot.lane.b32.xlu0 %v3845, 64
      %v3889 = vpop.permute.xlu0 %3888
      %3890 = vrot.lane.b32.xlu0 %v3846, 64
      %v3891 = vpop.permute.xlu0 %3890
      %3892 = vrot.lane.b32.xlu0 %v3847, 64
      %v3893 = vpop.permute.xlu0 %3892
      %3894 = vrot.lane.b32.xlu0 %v3848, 64
      %v3895 = vpop.permute.xlu0 %3894
      %3896 = vrot.lane.b32.xlu0 %v3849, 64
      %v3897 = vpop.permute.xlu0 %3896
      %3898 = vrot.lane.b32.xlu0 %v3850, 64
      %v3899 = vpop.permute.xlu0 %3898
      %3900 = vrot.lane.b32.xlu0 %v3851, 64
      %v3901 = vpop.permute.xlu0 %3900
      %3902 = vrot.lane.b32.xlu0 %v3852, 64
      %v3903 = vpop.permute.xlu0 %3902
      %3904 = vrot.lane.b32.xlu0 %v3853, 64
      %v3905 = vpop.permute.xlu0 %3904
      %3906 = vrot.lane.b32.xlu0 %v3854, 64
      %v3907 = vpop.permute.xlu0 %3906
      %3908 = vrot.lane.b32.xlu0 %v3855, 64
      %v3909 = vpop.permute.xlu0 %3908
      %3910 = vrot.lane.b32.xlu0 %v3856, 64
      %v3911 = vpop.permute.xlu0 %3910
      %3912 = vrot.lane.b32.xlu0 %v3857, 64
      %v3913 = vpop.permute.xlu0 %3912
      %3914 = vrot.lane.b32.xlu0 %v3858, 64
      %v3915 = vpop.permute.xlu0 %3914
      %3916 = vrot.lane.b32.xlu0 %v3859, 64
      %v3917 = vpop.permute.xlu0 %3916
      %3918 = vrot.lane.b32.xlu0 %v3860, 64
      %v3919 = vpop.permute.xlu0 %3918
      %3920 = vrot.lane.b32.xlu0 %v3861, 64
      %v3921 = vpop.permute.xlu0 %3920
      %3922 = vrot.lane.b32.xlu0 %v3862, 64
      %v3923 = vpop.permute.xlu0 %3922
      %3924 = vrot.lane.b32.xlu0 %v3863, 64
      %v3925 = vpop.permute.xlu0 %3924
      %3926 = vrot.lane.b32.xlu0 %v3864, 64
      %v3927 = vpop.permute.xlu0 %3926
      %3928 = vrot.lane.b32.xlu0 %v3865, 64
      %v3929 = vpop.permute.xlu0 %3928
      %v3962 = vunpack.c.l.b16 %v601
      %v3963 = vunpack.c.l.b16 %v602
      %v3964 = vunpack.c.l.b16 %v603
      %v3965 = vunpack.c.l.b16 %v604
      %v3966 = vunpack.c.l.b16 %v605
      %v3967 = vunpack.c.l.b16 %v606
      %v3968 = vunpack.c.l.b16 %v607
      %v3969 = vunpack.c.l.b16 %v608
      %v3970 = vunpack.c.l.b16 %v609
      %v3971 = vunpack.c.l.b16 %v610
      %v3972 = vunpack.c.l.b16 %v611
      %v3973 = vunpack.c.l.b16 %v612
      %v3974 = vunpack.c.l.b16 %v613
      %v3975 = vunpack.c.l.b16 %v614
      %v3976 = vunpack.c.l.b16 %v615
      %v3977 = vunpack.c.l.b16 %v616
      %v3978 = vunpack.c.l.b16 %v617
      %v3979 = vunpack.c.l.b16 %v618
      %v3980 = vunpack.c.l.b16 %v619
      %v3981 = vunpack.c.l.b16 %v620
      %v3982 = vunpack.c.l.b16 %v621
      %v3983 = vunpack.c.l.b16 %v622
      %v3984 = vunpack.c.l.b16 %v623
      %v3985 = vunpack.c.l.b16 %v624
      %v3986 = vunpack.c.l.b16 %v625
      %v3987 = vunpack.c.l.b16 %v626
      %v3988 = vunpack.c.l.b16 %v627
      %v3989 = vunpack.c.l.b16 %v628
      %v3990 = vunpack.c.l.b16 %v629
      %v3991 = vunpack.c.l.b16 %v630
      %v3992 = vunpack.c.l.b16 %v631
      %v3993 = vunpack.c.l.b16 %v632
      %v3994 = vpack.c.b16 %v3962, %v3802
      %v3995 = vpack.c.b16 %v3963, %v3803
      %v3996 = vpack.c.b16 %v3964, %v3804
      %v3997 = vpack.c.b16 %v3965, %v3805
      %v3998 = vpack.c.b16 %v3966, %v3806
      %v3999 = vpack.c.b16 %v3967, %v3807
      %v4000 = vpack.c.b16 %v3968, %v3808
      %v4001 = vpack.c.b16 %v3969, %v3809
      %v4002 = vpack.c.b16 %v3970, %v3810
      %v4003 = vpack.c.b16 %v3971, %v3811
      %v4004 = vpack.c.b16 %v3972, %v3812
      %v4005 = vpack.c.b16 %v3973, %v3813
      %v4006 = vpack.c.b16 %v3974, %v3814
      %v4007 = vpack.c.b16 %v3975, %v3815
      %v4008 = vpack.c.b16 %v3976, %v3816
      %v4009 = vpack.c.b16 %v3977, %v3817
      %v4010 = vpack.c.b16 %v3978, %v3818
      %v4011 = vpack.c.b16 %v3979, %v3819
      %v4012 = vpack.c.b16 %v3980, %v3820
      %v4013 = vpack.c.b16 %v3981, %v3821
      %v4014 = vpack.c.b16 %v3982, %v3822
      %v4015 = vpack.c.b16 %v3983, %v3823
      %v4016 = vpack.c.b16 %v3984, %v3824
      %v4017 = vpack.c.b16 %v3985, %v3825
      %v4018 = vpack.c.b16 %v3986, %v3826
      %v4019 = vpack.c.b16 %v3987, %v3827
      %v4020 = vpack.c.b16 %v3988, %v3828
      %v4021 = vpack.c.b16 %v3989, %v3829
      %v4022 = vpack.c.b16 %v3990, %v3830
      %v4023 = vpack.c.b16 %v3991, %v3831
      %v4024 = vpack.c.b16 %v3992, %v3832
      %v4025 = vpack.c.b16 %v3993, %v3833
      %v4027 = vshrl.u32 %v3994, 16
      %v4029 = vshll.u32 %v3994, 16
      %v4031 = vrot.slane %v4029, 1
      %v4032 = vor.u32 %v4027, %v4031
      %v4034 = vshrl.u32 %v3995, 16
      %v4036 = vshll.u32 %v3995, 16
      %v4038 = vrot.slane %v4036, 1
      %v4039 = vor.u32 %v4034, %v4038
      %v4041 = vshrl.u32 %v3996, 16
      %v4043 = vshll.u32 %v3996, 16
      %v4045 = vrot.slane %v4043, 1
      %v4046 = vor.u32 %v4041, %v4045
      %v4048 = vshrl.u32 %v3997, 16
      %v4050 = vshll.u32 %v3997, 16
      %v4052 = vrot.slane %v4050, 1
      %v4053 = vor.u32 %v4048, %v4052
      %v4055 = vshrl.u32 %v3998, 16
      %v4057 = vshll.u32 %v3998, 16
      %v4059 = vrot.slane %v4057, 1
      %v4060 = vor.u32 %v4055, %v4059
      %v4062 = vshrl.u32 %v3999, 16
      %v4064 = vshll.u32 %v3999, 16
      %v4066 = vrot.slane %v4064, 1
      %v4067 = vor.u32 %v4062, %v4066
      %v4069 = vshrl.u32 %v4000, 16
      %v4071 = vshll.u32 %v4000, 16
      %v4073 = vrot.slane %v4071, 1
      %v4074 = vor.u32 %v4069, %v4073
      %v4076 = vshrl.u32 %v4001, 16
      %v4078 = vshll.u32 %v4001, 16
      %v4080 = vrot.slane %v4078, 1
      %v4081 = vor.u32 %v4076, %v4080
      %v4083 = vshrl.u32 %v4002, 16
      %v4085 = vshll.u32 %v4002, 16
      %v4087 = vrot.slane %v4085, 1
      %v4088 = vor.u32 %v4083, %v4087
      %v4090 = vshrl.u32 %v4003, 16
      %v4092 = vshll.u32 %v4003, 16
      %v4094 = vrot.slane %v4092, 1
      %v4095 = vor.u32 %v4090, %v4094
      %v4097 = vshrl.u32 %v4004, 16
      %v4099 = vshll.u32 %v4004, 16
      %v4101 = vrot.slane %v4099, 1
      %v4102 = vor.u32 %v4097, %v4101
      %v4104 = vshrl.u32 %v4005, 16
      %v4106 = vshll.u32 %v4005, 16
      %v4108 = vrot.slane %v4106, 1
      %v4109 = vor.u32 %v4104, %v4108
      %v4111 = vshrl.u32 %v4006, 16
      %v4113 = vshll.u32 %v4006, 16
      %v4115 = vrot.slane %v4113, 1
      %v4116 = vor.u32 %v4111, %v4115
      %v4118 = vshrl.u32 %v4007, 16
      %v4120 = vshll.u32 %v4007, 16
      %v4122 = vrot.slane %v4120, 1
      %v4123 = vor.u32 %v4118, %v4122
      %v4125 = vshrl.u32 %v4008, 16
      %v4127 = vshll.u32 %v4008, 16
      %v4129 = vrot.slane %v4127, 1
      %v4130 = vor.u32 %v4125, %v4129
      %v4132 = vshrl.u32 %v4009, 16
      %v4134 = vshll.u32 %v4009, 16
      %v4136 = vrot.slane %v4134, 1
      %v4137 = vor.u32 %v4132, %v4136
      %v4139 = vshrl.u32 %v4010, 16
      %v4141 = vshll.u32 %v4010, 16
      %v4143 = vrot.slane %v4141, 1
      %v4144 = vor.u32 %v4139, %v4143
      %v4146 = vshrl.u32 %v4011, 16
      %v4148 = vshll.u32 %v4011, 16
      %v4150 = vrot.slane %v4148, 1
      %v4151 = vor.u32 %v4146, %v4150
      %v4153 = vshrl.u32 %v4012, 16
      %v4155 = vshll.u32 %v4012, 16
      %v4157 = vrot.slane %v4155, 1
      %v4158 = vor.u32 %v4153, %v4157
      %v4160 = vshrl.u32 %v4013, 16
      %v4162 = vshll.u32 %v4013, 16
      %v4164 = vrot.slane %v4162, 1
      %v4165 = vor.u32 %v4160, %v4164
      %v4167 = vshrl.u32 %v4014, 16
      %v4169 = vshll.u32 %v4014, 16
      %v4171 = vrot.slane %v4169, 1
      %v4172 = vor.u32 %v4167, %v4171
      %v4174 = vshrl.u32 %v4015, 16
      %v4176 = vshll.u32 %v4015, 16
      %v4178 = vrot.slane %v4176, 1
      %v4179 = vor.u32 %v4174, %v4178
      %v4181 = vshrl.u32 %v4016, 16
      %v4183 = vshll.u32 %v4016, 16
      %v4185 = vrot.slane %v4183, 1
      %v4186 = vor.u32 %v4181, %v4185
      %v4188 = vshrl.u32 %v4017, 16
      %v4190 = vshll.u32 %v4017, 16
      %v4192 = vrot.slane %v4190, 1
      %v4193 = vor.u32 %v4188, %v4192
      %v4195 = vshrl.u32 %v4018, 16
      %v4197 = vshll.u32 %v4018, 16
      %v4199 = vrot.slane %v4197, 1
      %v4200 = vor.u32 %v4195, %v4199
      %v4202 = vshrl.u32 %v4019, 16
      %v4204 = vshll.u32 %v4019, 16
      %v4206 = vrot.slane %v4204, 1
      %v4207 = vor.u32 %v4202, %v4206
      %v4209 = vshrl.u32 %v4020, 16
      %v4211 = vshll.u32 %v4020, 16
      %v4213 = vrot.slane %v4211, 1
      %v4214 = vor.u32 %v4209, %v4213
      %v4216 = vshrl.u32 %v4021, 16
      %v4218 = vshll.u32 %v4021, 16
      %v4220 = vrot.slane %v4218, 1
      %v4221 = vor.u32 %v4216, %v4220
      %v4223 = vshrl.u32 %v4022, 16
      %v4225 = vshll.u32 %v4022, 16
      %v4227 = vrot.slane %v4225, 1
      %v4228 = vor.u32 %v4223, %v4227
      %v4230 = vshrl.u32 %v4023, 16
      %v4232 = vshll.u32 %v4023, 16
      %v4234 = vrot.slane %v4232, 1
      %v4235 = vor.u32 %v4230, %v4234
      %v4237 = vshrl.u32 %v4024, 16
      %v4239 = vshll.u32 %v4024, 16
      %v4241 = vrot.slane %v4239, 1
      %v4242 = vor.u32 %v4237, %v4241
      %v4244 = vshrl.u32 %v4025, 16
      %v4246 = vshll.u32 %v4025, 16
      %v4248 = vrot.slane %v4246, 1
      %v4249 = vor.u32 %v4244, %v4248
      %4250 = vrot.lane.b32.xlu0 %v4032, 80
      %v4251 = vpop.permute.xlu0 %4250
      %4252 = vrot.lane.b32.xlu0 %v4039, 80
      %v4253 = vpop.permute.xlu0 %4252
      %4254 = vrot.lane.b32.xlu0 %v4046, 80
      %v4255 = vpop.permute.xlu0 %4254
      %4256 = vrot.lane.b32.xlu0 %v4053, 80
      %v4257 = vpop.permute.xlu0 %4256
      %4258 = vrot.lane.b32.xlu0 %v4060, 80
      %v4259 = vpop.permute.xlu0 %4258
      %4260 = vrot.lane.b32.xlu0 %v4067, 80
      %v4261 = vpop.permute.xlu0 %4260
      %4262 = vrot.lane.b32.xlu0 %v4074, 80
      %v4263 = vpop.permute.xlu0 %4262
      %4264 = vrot.lane.b32.xlu0 %v4081, 80
      %v4265 = vpop.permute.xlu0 %4264
      %4266 = vrot.lane.b32.xlu0 %v4088, 80
      %v4267 = vpop.permute.xlu0 %4266
      %4268 = vrot.lane.b32.xlu0 %v4095, 80
      %v4269 = vpop.permute.xlu0 %4268
      %4270 = vrot.lane.b32.xlu0 %v4102, 80
      %v4271 = vpop.permute.xlu0 %4270
      %4272 = vrot.lane.b32.xlu0 %v4109, 80
      %v4273 = vpop.permute.xlu0 %4272
      %4274 = vrot.lane.b32.xlu0 %v4116, 80
      %v4275 = vpop.permute.xlu0 %4274
      %4276 = vrot.lane.b32.xlu0 %v4123, 80
      %v4277 = vpop.permute.xlu0 %4276
      %4278 = vrot.lane.b32.xlu0 %v4130, 80
      %v4279 = vpop.permute.xlu0 %4278
      %4280 = vrot.lane.b32.xlu0 %v4137, 80
      %v4281 = vpop.permute.xlu0 %4280
      %4282 = vrot.lane.b32.xlu0 %v4144, 80
      %v4283 = vpop.permute.xlu0 %4282
      %4284 = vrot.lane.b32.xlu0 %v4151, 80
      %v4285 = vpop.permute.xlu0 %4284
      %4286 = vrot.lane.b32.xlu0 %v4158, 80
      %v4287 = vpop.permute.xlu0 %4286
      %4288 = vrot.lane.b32.xlu0 %v4165, 80
      %v4289 = vpop.permute.xlu0 %4288
      %4290 = vrot.lane.b32.xlu0 %v4172, 80
      %v4291 = vpop.permute.xlu0 %4290
      %4292 = vrot.lane.b32.xlu0 %v4179, 80
      %v4293 = vpop.permute.xlu0 %4292
      %4294 = vrot.lane.b32.xlu0 %v4186, 80
      %v4295 = vpop.permute.xlu0 %4294
      %4296 = vrot.lane.b32.xlu0 %v4193, 80
      %v4297 = vpop.permute.xlu0 %4296
      %4298 = vrot.lane.b32.xlu0 %v4200, 80
      %v4299 = vpop.permute.xlu0 %4298
      %4300 = vrot.lane.b32.xlu0 %v4207, 80
      %v4301 = vpop.permute.xlu0 %4300
      %4302 = vrot.lane.b32.xlu0 %v4214, 80
      %v4303 = vpop.permute.xlu0 %4302
      %4304 = vrot.lane.b32.xlu0 %v4221, 80
      %v4305 = vpop.permute.xlu0 %4304
      %4306 = vrot.lane.b32.xlu0 %v4228, 80
      %v4307 = vpop.permute.xlu0 %4306
      %4308 = vrot.lane.b32.xlu0 %v4235, 80
      %v4309 = vpop.permute.xlu0 %4308
      %4310 = vrot.lane.b32.xlu0 %v4242, 80
      %v4311 = vpop.permute.xlu0 %4310
      %4312 = vrot.lane.b32.xlu0 %v4249, 80
      %v4313 = vpop.permute.xlu0 %4312
      %v4346 = vunpack.c.l.b16 %v634
      %v4347 = vunpack.c.l.b16 %v635
      %v4348 = vunpack.c.l.b16 %v636
      %v4349 = vunpack.c.l.b16 %v637
      %v4350 = vunpack.c.l.b16 %v638
      %v4351 = vunpack.c.l.b16 %v639
      %v4352 = vunpack.c.l.b16 %v640
      %v4353 = vunpack.c.l.b16 %v641
      %v4354 = vunpack.c.l.b16 %v642
      %v4355 = vunpack.c.l.b16 %v643
      %v4356 = vunpack.c.l.b16 %v644
      %v4357 = vunpack.c.l.b16 %v645
      %v4358 = vunpack.c.l.b16 %v646
      %v4359 = vunpack.c.l.b16 %v647
      %v4360 = vunpack.c.l.b16 %v648
      %v4361 = vunpack.c.l.b16 %v649
      %v4362 = vunpack.c.l.b16 %v650
      %v4363 = vunpack.c.l.b16 %v651
      %v4364 = vunpack.c.l.b16 %v652
      %v4365 = vunpack.c.l.b16 %v653
      %v4366 = vunpack.c.l.b16 %v654
      %v4367 = vunpack.c.l.b16 %v655
      %v4368 = vunpack.c.l.b16 %v656
      %v4369 = vunpack.c.l.b16 %v657
      %v4370 = vunpack.c.l.b16 %v658
      %v4371 = vunpack.c.l.b16 %v659
      %v4372 = vunpack.c.l.b16 %v660
      %v4373 = vunpack.c.l.b16 %v661
      %v4374 = vunpack.c.l.b16 %v662
      %v4375 = vunpack.c.l.b16 %v663
      %v4376 = vunpack.c.l.b16 %v664
      %v4377 = vunpack.c.l.b16 %v665
      %v4378 = vpack.c.b16 %v4346, %v4346
      %v4379 = vpack.c.b16 %v4347, %v4347
      %v4380 = vpack.c.b16 %v4348, %v4348
      %v4381 = vpack.c.b16 %v4349, %v4349
      %v4382 = vpack.c.b16 %v4350, %v4350
      %v4383 = vpack.c.b16 %v4351, %v4351
      %v4384 = vpack.c.b16 %v4352, %v4352
      %v4385 = vpack.c.b16 %v4353, %v4353
      %v4386 = vpack.c.b16 %v4354, %v4354
      %v4387 = vpack.c.b16 %v4355, %v4355
      %v4388 = vpack.c.b16 %v4356, %v4356
      %v4389 = vpack.c.b16 %v4357, %v4357
      %v4390 = vpack.c.b16 %v4358, %v4358
      %v4391 = vpack.c.b16 %v4359, %v4359
      %v4392 = vpack.c.b16 %v4360, %v4360
      %v4393 = vpack.c.b16 %v4361, %v4361
      %v4394 = vpack.c.b16 %v4362, %v4362
      %v4395 = vpack.c.b16 %v4363, %v4363
      %v4396 = vpack.c.b16 %v4364, %v4364
      %v4397 = vpack.c.b16 %v4365, %v4365
      %v4398 = vpack.c.b16 %v4366, %v4366
      %v4399 = vpack.c.b16 %v4367, %v4367
      %v4400 = vpack.c.b16 %v4368, %v4368
      %v4401 = vpack.c.b16 %v4369, %v4369
      %v4402 = vpack.c.b16 %v4370, %v4370
      %v4403 = vpack.c.b16 %v4371, %v4371
      %v4404 = vpack.c.b16 %v4372, %v4372
      %v4405 = vpack.c.b16 %v4373, %v4373
      %v4406 = vpack.c.b16 %v4374, %v4374
      %v4407 = vpack.c.b16 %v4375, %v4375
      %v4408 = vpack.c.b16 %v4376, %v4376
      %v4409 = vpack.c.b16 %v4377, %v4377
      %4410 = vrot.lane.b32.xlu0 %v4378, 96
      %v4411 = vpop.permute.xlu0 %4410
      %4412 = vrot.lane.b32.xlu0 %v4379, 96
      %v4413 = vpop.permute.xlu0 %4412
      %4414 = vrot.lane.b32.xlu0 %v4380, 96
      %v4415 = vpop.permute.xlu0 %4414
      %4416 = vrot.lane.b32.xlu0 %v4381, 96
      %v4417 = vpop.permute.xlu0 %4416
      %4418 = vrot.lane.b32.xlu0 %v4382, 96
      %v4419 = vpop.permute.xlu0 %4418
      %4420 = vrot.lane.b32.xlu0 %v4383, 96
      %v4421 = vpop.permute.xlu0 %4420
      %4422 = vrot.lane.b32.xlu0 %v4384, 96
      %v4423 = vpop.permute.xlu0 %4422
      %4424 = vrot.lane.b32.xlu0 %v4385, 96
      %v4425 = vpop.permute.xlu0 %4424
      %4426 = vrot.lane.b32.xlu0 %v4386, 96
      %v4427 = vpop.permute.xlu0 %4426
      %4428 = vrot.lane.b32.xlu0 %v4387, 96
      %v4429 = vpop.permute.xlu0 %4428
      %4430 = vrot.lane.b32.xlu0 %v4388, 96
      %v4431 = vpop.permute.xlu0 %4430
      %4432 = vrot.lane.b32.xlu0 %v4389, 96
      %v4433 = vpop.permute.xlu0 %4432
      %4434 = vrot.lane.b32.xlu0 %v4390, 96
      %v4435 = vpop.permute.xlu0 %4434
      %4436 = vrot.lane.b32.xlu0 %v4391, 96
      %v4437 = vpop.permute.xlu0 %4436
      %4438 = vrot.lane.b32.xlu0 %v4392, 96
      %v4439 = vpop.permute.xlu0 %4438
      %4440 = vrot.lane.b32.xlu0 %v4393, 96
      %v4441 = vpop.permute.xlu0 %4440
      %4442 = vrot.lane.b32.xlu0 %v4394, 96
      %v4443 = vpop.permute.xlu0 %4442
      %4444 = vrot.lane.b32.xlu0 %v4395, 96
      %v4445 = vpop.permute.xlu0 %4444
      %4446 = vrot.lane.b32.xlu0 %v4396, 96
      %v4447 = vpop.permute.xlu0 %4446
      %4448 = vrot.lane.b32.xlu0 %v4397, 96
      %v4449 = vpop.permute.xlu0 %4448
      %4450 = vrot.lane.b32.xlu0 %v4398, 96
      %v4451 = vpop.permute.xlu0 %4450
      %4452 = vrot.lane.b32.xlu0 %v4399, 96
      %v4453 = vpop.permute.xlu0 %4452
      %4454 = vrot.lane.b32.xlu0 %v4400, 96
      %v4455 = vpop.permute.xlu0 %4454
      %4456 = vrot.lane.b32.xlu0 %v4401, 96
      %v4457 = vpop.permute.xlu0 %4456
      %4458 = vrot.lane.b32.xlu0 %v4402, 96
      %v4459 = vpop.permute.xlu0 %4458
      %4460 = vrot.lane.b32.xlu0 %v4403, 96
      %v4461 = vpop.permute.xlu0 %4460
      %4462 = vrot.lane.b32.xlu0 %v4404, 96
      %v4463 = vpop.permute.xlu0 %4462
      %4464 = vrot.lane.b32.xlu0 %v4405, 96
      %v4465 = vpop.permute.xlu0 %4464
      %4466 = vrot.lane.b32.xlu0 %v4406, 96
      %v4467 = vpop.permute.xlu0 %4466
      %4468 = vrot.lane.b32.xlu0 %v4407, 96
      %v4469 = vpop.permute.xlu0 %4468
      %4470 = vrot.lane.b32.xlu0 %v4408, 96
      %v4471 = vpop.permute.xlu0 %4470
      %4472 = vrot.lane.b32.xlu0 %v4409, 96
      %v4473 = vpop.permute.xlu0 %4472
      %v4506 = vunpack.c.l.b16 %v666
      %v4507 = vunpack.c.l.b16 %v667
      %v4508 = vunpack.c.l.b16 %v668
      %v4509 = vunpack.c.l.b16 %v669
      %v4510 = vunpack.c.l.b16 %v670
      %v4511 = vunpack.c.l.b16 %v671
      %v4512 = vunpack.c.l.b16 %v672
      %v4513 = vunpack.c.l.b16 %v673
      %v4514 = vunpack.c.l.b16 %v674
      %v4515 = vunpack.c.l.b16 %v675
      %v4516 = vunpack.c.l.b16 %v676
      %v4517 = vunpack.c.l.b16 %v677
      %v4518 = vunpack.c.l.b16 %v678
      %v4519 = vunpack.c.l.b16 %v679
      %v4520 = vunpack.c.l.b16 %v680
      %v4521 = vunpack.c.l.b16 %v681
      %v4522 = vunpack.c.l.b16 %v682
      %v4523 = vunpack.c.l.b16 %v683
      %v4524 = vunpack.c.l.b16 %v684
      %v4525 = vunpack.c.l.b16 %v685
      %v4526 = vunpack.c.l.b16 %v686
      %v4527 = vunpack.c.l.b16 %v687
      %v4528 = vunpack.c.l.b16 %v688
      %v4529 = vunpack.c.l.b16 %v689
      %v4530 = vunpack.c.l.b16 %v690
      %v4531 = vunpack.c.l.b16 %v691
      %v4532 = vunpack.c.l.b16 %v692
      %v4533 = vunpack.c.l.b16 %v693
      %v4534 = vunpack.c.l.b16 %v694
      %v4535 = vunpack.c.l.b16 %v695
      %v4536 = vunpack.c.l.b16 %v696
      %v4537 = vunpack.c.l.b16 %v697
      %v4538 = vpack.c.b16 %v4506, %v4346
      %v4539 = vpack.c.b16 %v4507, %v4347
      %v4540 = vpack.c.b16 %v4508, %v4348
      %v4541 = vpack.c.b16 %v4509, %v4349
      %v4542 = vpack.c.b16 %v4510, %v4350
      %v4543 = vpack.c.b16 %v4511, %v4351
      %v4544 = vpack.c.b16 %v4512, %v4352
      %v4545 = vpack.c.b16 %v4513, %v4353
      %v4546 = vpack.c.b16 %v4514, %v4354
      %v4547 = vpack.c.b16 %v4515, %v4355
      %v4548 = vpack.c.b16 %v4516, %v4356
      %v4549 = vpack.c.b16 %v4517, %v4357
      %v4550 = vpack.c.b16 %v4518, %v4358
      %v4551 = vpack.c.b16 %v4519, %v4359
      %v4552 = vpack.c.b16 %v4520, %v4360
      %v4553 = vpack.c.b16 %v4521, %v4361
      %v4554 = vpack.c.b16 %v4522, %v4362
      %v4555 = vpack.c.b16 %v4523, %v4363
      %v4556 = vpack.c.b16 %v4524, %v4364
      %v4557 = vpack.c.b16 %v4525, %v4365
      %v4558 = vpack.c.b16 %v4526, %v4366
      %v4559 = vpack.c.b16 %v4527, %v4367
      %v4560 = vpack.c.b16 %v4528, %v4368
      %v4561 = vpack.c.b16 %v4529, %v4369
      %v4562 = vpack.c.b16 %v4530, %v4370
      %v4563 = vpack.c.b16 %v4531, %v4371
      %v4564 = vpack.c.b16 %v4532, %v4372
      %v4565 = vpack.c.b16 %v4533, %v4373
      %v4566 = vpack.c.b16 %v4534, %v4374
      %v4567 = vpack.c.b16 %v4535, %v4375
      %v4568 = vpack.c.b16 %v4536, %v4376
      %v4569 = vpack.c.b16 %v4537, %v4377
      %v4571 = vshrl.u32 %v4538, 16
      %v4573 = vshll.u32 %v4538, 16
      %v4575 = vrot.slane %v4573, 1
      %v4576 = vor.u32 %v4571, %v4575
      %v4578 = vshrl.u32 %v4539, 16
      %v4580 = vshll.u32 %v4539, 16
      %v4582 = vrot.slane %v4580, 1
      %v4583 = vor.u32 %v4578, %v4582
      %v4585 = vshrl.u32 %v4540, 16
      %v4587 = vshll.u32 %v4540, 16
      %v4589 = vrot.slane %v4587, 1
      %v4590 = vor.u32 %v4585, %v4589
      %v4592 = vshrl.u32 %v4541, 16
      %v4594 = vshll.u32 %v4541, 16
      %v4596 = vrot.slane %v4594, 1
      %v4597 = vor.u32 %v4592, %v4596
      %v4599 = vshrl.u32 %v4542, 16
      %v4601 = vshll.u32 %v4542, 16
      %v4603 = vrot.slane %v4601, 1
      %v4604 = vor.u32 %v4599, %v4603
      %v4606 = vshrl.u32 %v4543, 16
      %v4608 = vshll.u32 %v4543, 16
      %v4610 = vrot.slane %v4608, 1
      %v4611 = vor.u32 %v4606, %v4610
      %v4613 = vshrl.u32 %v4544, 16
      %v4615 = vshll.u32 %v4544, 16
      %v4617 = vrot.slane %v4615, 1
      %v4618 = vor.u32 %v4613, %v4617
      %v4620 = vshrl.u32 %v4545, 16
      %v4622 = vshll.u32 %v4545, 16
      %v4624 = vrot.slane %v4622, 1
      %v4625 = vor.u32 %v4620, %v4624
      %v4627 = vshrl.u32 %v4546, 16
      %v4629 = vshll.u32 %v4546, 16
      %v4631 = vrot.slane %v4629, 1
      %v4632 = vor.u32 %v4627, %v4631
      %v4634 = vshrl.u32 %v4547, 16
      %v4636 = vshll.u32 %v4547, 16
      %v4638 = vrot.slane %v4636, 1
      %v4639 = vor.u32 %v4634, %v4638
      %v4641 = vshrl.u32 %v4548, 16
      %v4643 = vshll.u32 %v4548, 16
      %v4645 = vrot.slane %v4643, 1
      %v4646 = vor.u32 %v4641, %v4645
      %v4648 = vshrl.u32 %v4549, 16
      %v4650 = vshll.u32 %v4549, 16
      %v4652 = vrot.slane %v4650, 1
      %v4653 = vor.u32 %v4648, %v4652
      %v4655 = vshrl.u32 %v4550, 16
      %v4657 = vshll.u32 %v4550, 16
      %v4659 = vrot.slane %v4657, 1
      %v4660 = vor.u32 %v4655, %v4659
      %v4662 = vshrl.u32 %v4551, 16
      %v4664 = vshll.u32 %v4551, 16
      %v4666 = vrot.slane %v4664, 1
      %v4667 = vor.u32 %v4662, %v4666
      %v4669 = vshrl.u32 %v4552, 16
      %v4671 = vshll.u32 %v4552, 16
      %v4673 = vrot.slane %v4671, 1
      %v4674 = vor.u32 %v4669, %v4673
      %v4676 = vshrl.u32 %v4553, 16
      %v4678 = vshll.u32 %v4553, 16
      %v4680 = vrot.slane %v4678, 1
      %v4681 = vor.u32 %v4676, %v4680
      %v4683 = vshrl.u32 %v4554, 16
      %v4685 = vshll.u32 %v4554, 16
      %v4687 = vrot.slane %v4685, 1
      %v4688 = vor.u32 %v4683, %v4687
      %v4690 = vshrl.u32 %v4555, 16
      %v4692 = vshll.u32 %v4555, 16
      %v4694 = vrot.slane %v4692, 1
      %v4695 = vor.u32 %v4690, %v4694
      %v4697 = vshrl.u32 %v4556, 16
      %v4699 = vshll.u32 %v4556, 16
      %v4701 = vrot.slane %v4699, 1
      %v4702 = vor.u32 %v4697, %v4701
      %v4704 = vshrl.u32 %v4557, 16
      %v4706 = vshll.u32 %v4557, 16
      %v4708 = vrot.slane %v4706, 1
      %v4709 = vor.u32 %v4704, %v4708
      %v4711 = vshrl.u32 %v4558, 16
      %v4713 = vshll.u32 %v4558, 16
      %v4715 = vrot.slane %v4713, 1
      %v4716 = vor.u32 %v4711, %v4715
      %v4718 = vshrl.u32 %v4559, 16
      %v4720 = vshll.u32 %v4559, 16
      %v4722 = vrot.slane %v4720, 1
      %v4723 = vor.u32 %v4718, %v4722
      %v4725 = vshrl.u32 %v4560, 16
      %v4727 = vshll.u32 %v4560, 16
      %v4729 = vrot.slane %v4727, 1
      %v4730 = vor.u32 %v4725, %v4729
      %v4732 = vshrl.u32 %v4561, 16
      %v4734 = vshll.u32 %v4561, 16
      %v4736 = vrot.slane %v4734, 1
      %v4737 = vor.u32 %v4732, %v4736
      %v4739 = vshrl.u32 %v4562, 16
      %v4741 = vshll.u32 %v4562, 16
      %v4743 = vrot.slane %v4741, 1
      %v4744 = vor.u32 %v4739, %v4743
      %v4746 = vshrl.u32 %v4563, 16
      %v4748 = vshll.u32 %v4563, 16
      %v4750 = vrot.slane %v4748, 1
      %v4751 = vor.u32 %v4746, %v4750
      %v4753 = vshrl.u32 %v4564, 16
      %v4755 = vshll.u32 %v4564, 16
      %v4757 = vrot.slane %v4755, 1
      %v4758 = vor.u32 %v4753, %v4757
      %v4760 = vshrl.u32 %v4565, 16
      %v4762 = vshll.u32 %v4565, 16
      %v4764 = vrot.slane %v4762, 1
      %v4765 = vor.u32 %v4760, %v4764
      %v4767 = vshrl.u32 %v4566, 16
      %v4769 = vshll.u32 %v4566, 16
      %v4771 = vrot.slane %v4769, 1
      %v4772 = vor.u32 %v4767, %v4771
      %v4774 = vshrl.u32 %v4567, 16
      %v4776 = vshll.u32 %v4567, 16
      %v4778 = vrot.slane %v4776, 1
      %v4779 = vor.u32 %v4774, %v4778
      %v4781 = vshrl.u32 %v4568, 16
      %v4783 = vshll.u32 %v4568, 16
      %v4785 = vrot.slane %v4783, 1
      %v4786 = vor.u32 %v4781, %v4785
      %v4788 = vshrl.u32 %v4569, 16
      %v4790 = vshll.u32 %v4569, 16
      %v4792 = vrot.slane %v4790, 1
      %v4793 = vor.u32 %v4788, %v4792
      %4794 = vrot.lane.b32.xlu0 %v4576, 112
      %v4795 = vpop.permute.xlu0 %4794
      %4796 = vrot.lane.b32.xlu0 %v4583, 112
      %v4797 = vpop.permute.xlu0 %4796
      %4798 = vrot.lane.b32.xlu0 %v4590, 112
      %v4799 = vpop.permute.xlu0 %4798
      %4800 = vrot.lane.b32.xlu0 %v4597, 112
      %v4801 = vpop.permute.xlu0 %4800
      %4802 = vrot.lane.b32.xlu0 %v4604, 112
      %v4803 = vpop.permute.xlu0 %4802
      %4804 = vrot.lane.b32.xlu0 %v4611, 112
      %v4805 = vpop.permute.xlu0 %4804
      %4806 = vrot.lane.b32.xlu0 %v4618, 112
      %v4807 = vpop.permute.xlu0 %4806
      %4808 = vrot.lane.b32.xlu0 %v4625, 112
      %v4809 = vpop.permute.xlu0 %4808
      %4810 = vrot.lane.b32.xlu0 %v4632, 112
      %v4811 = vpop.permute.xlu0 %4810
      %4812 = vrot.lane.b32.xlu0 %v4639, 112
      %v4813 = vpop.permute.xlu0 %4812
      %4814 = vrot.lane.b32.xlu0 %v4646, 112
      %v4815 = vpop.permute.xlu0 %4814
      %4816 = vrot.lane.b32.xlu0 %v4653, 112
      %v4817 = vpop.permute.xlu0 %4816
      %4818 = vrot.lane.b32.xlu0 %v4660, 112
      %v4819 = vpop.permute.xlu0 %4818
      %4820 = vrot.lane.b32.xlu0 %v4667, 112
      %v4821 = vpop.permute.xlu0 %4820
      %4822 = vrot.lane.b32.xlu0 %v4674, 112
      %v4823 = vpop.permute.xlu0 %4822
      %4824 = vrot.lane.b32.xlu0 %v4681, 112
      %v4825 = vpop.permute.xlu0 %4824
      %4826 = vrot.lane.b32.xlu0 %v4688, 112
      %v4827 = vpop.permute.xlu0 %4826
      %4828 = vrot.lane.b32.xlu0 %v4695, 112
      %v4829 = vpop.permute.xlu0 %4828
      %4830 = vrot.lane.b32.xlu0 %v4702, 112
      %v4831 = vpop.permute.xlu0 %4830
      %4832 = vrot.lane.b32.xlu0 %v4709, 112
      %v4833 = vpop.permute.xlu0 %4832
      %4834 = vrot.lane.b32.xlu0 %v4716, 112
      %v4835 = vpop.permute.xlu0 %4834
      %4836 = vrot.lane.b32.xlu0 %v4723, 112
      %v4837 = vpop.permute.xlu0 %4836
      %4838 = vrot.lane.b32.xlu0 %v4730, 112
      %v4839 = vpop.permute.xlu0 %4838
      %4840 = vrot.lane.b32.xlu0 %v4737, 112
      %v4841 = vpop.permute.xlu0 %4840
      %4842 = vrot.lane.b32.xlu0 %v4744, 112
      %v4843 = vpop.permute.xlu0 %4842
      %4844 = vrot.lane.b32.xlu0 %v4751, 112
      %v4845 = vpop.permute.xlu0 %4844
      %4846 = vrot.lane.b32.xlu0 %v4758, 112
      %v4847 = vpop.permute.xlu0 %4846
      %4848 = vrot.lane.b32.xlu0 %v4765, 112
      %v4849 = vpop.permute.xlu0 %4848
      %4850 = vrot.lane.b32.xlu0 %v4772, 112
      %v4851 = vpop.permute.xlu0 %4850
      %4852 = vrot.lane.b32.xlu0 %v4779, 112
      %v4853 = vpop.permute.xlu0 %4852
      %4854 = vrot.lane.b32.xlu0 %v4786, 112
      %v4855 = vpop.permute.xlu0 %4854
      %4856 = vrot.lane.b32.xlu0 %v4793, 112
      %v4857 = vpop.permute.xlu0 %4856
      %vm4858 = vcmask 130048
      %v4861 = vsel %vm4858, %v179, %v1083
      %v4864 = vsel %vm4858, %v180, %v1085
      %v4867 = vsel %vm4858, %v181, %v1087
      %v4870 = vsel %vm4858, %v182, %v1089
      %v4873 = vsel %vm4858, %v183, %v1091
      %v4876 = vsel %vm4858, %v184, %v1093
      %v4879 = vsel %vm4858, %v185, %v1095
      %v4882 = vsel %vm4858, %v186, %v1097
      %v4885 = vsel %vm4858, %v187, %v1099
      %v4888 = vsel %vm4858, %v188, %v1101
      %v4891 = vsel %vm4858, %v189, %v1103
      %v4894 = vsel %vm4858, %v190, %v1105
      %v4897 = vsel %vm4858, %v191, %v1107
      %v4900 = vsel %vm4858, %v192, %v1109
      %v4903 = vsel %vm4858, %v193, %v1111
      %v4906 = vsel %vm4858, %v194, %v1113
      %v4909 = vsel %vm4858, %v195, %v1115
      %v4912 = vsel %vm4858, %v196, %v1117
      %v4915 = vsel %vm4858, %v197, %v1119
      %v4918 = vsel %vm4858, %v198, %v1121
      %v4921 = vsel %vm4858, %v199, %v1123
      %v4924 = vsel %vm4858, %v200, %v1125
      %v4927 = vsel %vm4858, %v201, %v1127
      %v4930 = vsel %vm4858, %v202, %v1129
      %v4933 = vsel %vm4858, %v203, %v1131
      %v4936 = vsel %vm4858, %v204, %v1133
      %v4939 = vsel %vm4858, %v205, %v1135
      %v4942 = vsel %vm4858, %v206, %v1137
      %v4945 = vsel %vm4858, %v207, %v1139
      %v4948 = vsel %vm4858, %v208, %v1141
      %v4951 = vsel %vm4858, %v209, %v1143
      %v4954 = vsel %vm4858, %v210, %v1145
      %vm4955 = vcmask 261120
      %v4957 = vsel %vm4955, %v4861, %v1243
      %v4959 = vsel %vm4955, %v4864, %v1245
      %v4961 = vsel %vm4955, %v4867, %v1247
      %v4963 = vsel %vm4955, %v4870, %v1249
      %v4965 = vsel %vm4955, %v4873, %v1251
      %v4967 = vsel %vm4955, %v4876, %v1253
      %v4969 = vsel %vm4955, %v4879, %v1255
      %v4971 = vsel %vm4955, %v4882, %v1257
      %v4973 = vsel %vm4955, %v4885, %v1259
      %v4975 = vsel %vm4955, %v4888, %v1261
      %v4977 = vsel %vm4955, %v4891, %v1263
      %v4979 = vsel %vm4955, %v4894, %v1265
      %v4981 = vsel %vm4955, %v4897, %v1267
      %v4983 = vsel %vm4955, %v4900, %v1269
      %v4985 = vsel %vm4955, %v4903, %v1271
      %v4987 = vsel %vm4955, %v4906, %v1273
      %v4989 = vsel %vm4955, %v4909, %v1275
      %v4991 = vsel %vm4955, %v4912, %v1277
      %v4993 = vsel %vm4955, %v4915, %v1279
      %v4995 = vsel %vm4955, %v4918, %v1281
      %v4997 = vsel %vm4955, %v4921, %v1283
      %v4999 = vsel %vm4955, %v4924, %v1285
      %v5001 = vsel %vm4955, %v4927, %v1287
      %v5003 = vsel %vm4955, %v4930, %v1289
      %v5005 = vsel %vm4955, %v4933, %v1291
      %v5007 = vsel %vm4955, %v4936, %v1293
      %v5009 = vsel %vm4955, %v4939, %v1295
      %v5011 = vsel %vm4955, %v4942, %v1297
      %v5013 = vsel %vm4955, %v4945, %v1299
      %v5015 = vsel %vm4955, %v4948, %v1301
      %v5017 = vsel %vm4955, %v4951, %v1303
      %v5019 = vsel %vm4955, %v4954, %v1305
      %vm5020 = vcmask 392192
      %v5022 = vsel %vm5020, %v4957, %v1627
      %v5024 = vsel %vm5020, %v4959, %v1629
      %v5026 = vsel %vm5020, %v4961, %v1631
      %v5028 = vsel %vm5020, %v4963, %v1633
      %v5030 = vsel %vm5020, %v4965, %v1635
      %v5032 = vsel %vm5020, %v4967, %v1637
      %v5034 = vsel %vm5020, %v4969, %v1639
      %v5036 = vsel %vm5020, %v4971, %v1641
      %v5038 = vsel %vm5020, %v4973, %v1643
      %v5040 = vsel %vm5020, %v4975, %v1645
      %v5042 = vsel %vm5020, %v4977, %v1647
      %v5044 = vsel %vm5020, %v4979, %v1649
      %v5046 = vsel %vm5020, %v4981, %v1651
      %v5048 = vsel %vm5020, %v4983, %v1653
      %v5050 = vsel %vm5020, %v4985, %v1655
      %v5052 = vsel %vm5020, %v4987, %v1657
      %v5054 = vsel %vm5020, %v4989, %v1659
      %v5056 = vsel %vm5020, %v4991, %v1661
      %v5058 = vsel %vm5020, %v4993, %v1663
      %v5060 = vsel %vm5020, %v4995, %v1665
      %v5062 = vsel %vm5020, %v4997, %v1667
      %v5064 = vsel %vm5020, %v4999, %v1669
      %v5066 = vsel %vm5020, %v5001, %v1671
      %v5068 = vsel %vm5020, %v5003, %v1673
      %v5070 = vsel %vm5020, %v5005, %v1675
      %v5072 = vsel %vm5020, %v5007, %v1677
      %v5074 = vsel %vm5020, %v5009, %v1679
      %v5076 = vsel %vm5020, %v5011, %v1681
      %v5078 = vsel %vm5020, %v5013, %v1683
      %v5080 = vsel %vm5020, %v5015, %v1685
      %v5082 = vsel %vm5020, %v5017, %v1687
      %v5084 = vsel %vm5020, %v5019, %v1689
      %vm5085 = vcmask 523264
      %v5087 = vsel %vm5085, %v5022, %v1787
      %v5089 = vsel %vm5085, %v5024, %v1789
      %v5091 = vsel %vm5085, %v5026, %v1791
      %v5093 = vsel %vm5085, %v5028, %v1793
      %v5095 = vsel %vm5085, %v5030, %v1795
      %v5097 = vsel %vm5085, %v5032, %v1797
      %v5099 = vsel %vm5085, %v5034, %v1799
      %v5101 = vsel %vm5085, %v5036, %v1801
      %v5103 = vsel %vm5085, %v5038, %v1803
      %v5105 = vsel %vm5085, %v5040, %v1805
      %v5107 = vsel %vm5085, %v5042, %v1807
      %v5109 = vsel %vm5085, %v5044, %v1809
      %v5111 = vsel %vm5085, %v5046, %v1811
      %v5113 = vsel %vm5085, %v5048, %v1813
      %v5115 = vsel %vm5085, %v5050, %v1815
      %v5117 = vsel %vm5085, %v5052, %v1817
      %v5119 = vsel %vm5085, %v5054, %v1819
      %v5121 = vsel %vm5085, %v5056, %v1821
      %v5123 = vsel %vm5085, %v5058, %v1823
      %v5125 = vsel %vm5085, %v5060, %v1825
      %v5127 = vsel %vm5085, %v5062, %v1827
      %v5129 = vsel %vm5085, %v5064, %v1829
      %v5131 = vsel %vm5085, %v5066, %v1831
      %v5133 = vsel %vm5085, %v5068, %v1833
      %v5135 = vsel %vm5085, %v5070, %v1835
      %v5137 = vsel %vm5085, %v5072, %v1837
      %v5139 = vsel %vm5085, %v5074, %v1839
      %v5141 = vsel %vm5085, %v5076, %v1841
      %v5143 = vsel %vm5085, %v5078, %v1843
      %v5145 = vsel %vm5085, %v5080, %v1845
      %v5147 = vsel %vm5085, %v5082, %v1847
      %v5149 = vsel %vm5085, %v5084, %v1849
      %vm5150 = vcmask 654336
      %v5152 = vsel %vm5150, %v5087, %v2171
      %v5154 = vsel %vm5150, %v5089, %v2173
      %v5156 = vsel %vm5150, %v5091, %v2175
      %v5158 = vsel %vm5150, %v5093, %v2177
      %v5160 = vsel %vm5150, %v5095, %v2179
      %v5162 = vsel %vm5150, %v5097, %v2181
      %v5164 = vsel %vm5150, %v5099, %v2183
      %v5166 = vsel %vm5150, %v5101, %v2185
      %v5168 = vsel %vm5150, %v5103, %v2187
      %v5170 = vsel %vm5150, %v5105, %v2189
      %v5172 = vsel %vm5150, %v5107, %v2191
      %v5174 = vsel %vm5150, %v5109, %v2193
      %v5176 = vsel %vm5150, %v5111, %v2195
      %v5178 = vsel %vm5150, %v5113, %v2197
      %v5180 = vsel %vm5150, %v5115, %v2199
      %v5182 = vsel %vm5150, %v5117, %v2201
      %v5184 = vsel %vm5150, %v5119, %v2203
      %v5186 = vsel %vm5150, %v5121, %v2205
      %v5188 = vsel %vm5150, %v5123, %v2207
      %v5190 = vsel %vm5150, %v5125, %v2209
      %v5192 = vsel %vm5150, %v5127, %v2211
      %v5194 = vsel %vm5150, %v5129, %v2213
      %v5196 = vsel %vm5150, %v5131, %v2215
      %v5198 = vsel %vm5150, %v5133, %v2217
      %v5200 = vsel %vm5150, %v5135, %v2219
      %v5202 = vsel %vm5150, %v5137, %v2221
      %v5204 = vsel %vm5150, %v5139, %v2223
      %v5206 = vsel %vm5150, %v5141, %v2225
      %v5208 = vsel %vm5150, %v5143, %v2227
      %v5210 = vsel %vm5150, %v5145, %v2229
      %v5212 = vsel %vm5150, %v5147, %v2231
      %v5214 = vsel %vm5150, %v5149, %v2233
      %vm5215 = vcmask 785408
      %v5217 = vsel %vm5215, %v5152, %v2331
      %v5219 = vsel %vm5215, %v5154, %v2333
      %v5221 = vsel %vm5215, %v5156, %v2335
      %v5223 = vsel %vm5215, %v5158, %v2337
      %v5225 = vsel %vm5215, %v5160, %v2339
      %v5227 = vsel %vm5215, %v5162, %v2341
      %v5229 = vsel %vm5215, %v5164, %v2343
      %v5231 = vsel %vm5215, %v5166, %v2345
      %v5233 = vsel %vm5215, %v5168, %v2347
      %v5235 = vsel %vm5215, %v5170, %v2349
      %v5237 = vsel %vm5215, %v5172, %v2351
      %v5239 = vsel %vm5215, %v5174, %v2353
      %v5241 = vsel %vm5215, %v5176, %v2355
      %v5243 = vsel %vm5215, %v5178, %v2357
      %v5245 = vsel %vm5215, %v5180, %v2359
      %v5247 = vsel %vm5215, %v5182, %v2361
      %v5249 = vsel %vm5215, %v5184, %v2363
      %v5251 = vsel %vm5215, %v5186, %v2365
      %v5253 = vsel %vm5215, %v5188, %v2367
      %v5255 = vsel %vm5215, %v5190, %v2369
      %v5257 = vsel %vm5215, %v5192, %v2371
      %v5259 = vsel %vm5215, %v5194, %v2373
      %v5261 = vsel %vm5215, %v5196, %v2375
      %v5263 = vsel %vm5215, %v5198, %v2377
      %v5265 = vsel %vm5215, %v5200, %v2379
      %v5267 = vsel %vm5215, %v5202, %v2381
      %v5269 = vsel %vm5215, %v5204, %v2383
      %v5271 = vsel %vm5215, %v5206, %v2385
      %v5273 = vsel %vm5215, %v5208, %v2387
      %v5275 = vsel %vm5215, %v5210, %v2389
      %v5277 = vsel %vm5215, %v5212, %v2391
      %v5279 = vsel %vm5215, %v5214, %v2393
      %vm5280 = vcmask 916480
      %v5282 = vsel %vm5280, %v5217, %v2715
      %v5284 = vsel %vm5280, %v5219, %v2717
      %v5286 = vsel %vm5280, %v5221, %v2719
      %v5288 = vsel %vm5280, %v5223, %v2721
      %v5290 = vsel %vm5280, %v5225, %v2723
      %v5292 = vsel %vm5280, %v5227, %v2725
      %v5294 = vsel %vm5280, %v5229, %v2727
      %v5296 = vsel %vm5280, %v5231, %v2729
      %v5298 = vsel %vm5280, %v5233, %v2731
      %v5300 = vsel %vm5280, %v5235, %v2733
      %v5302 = vsel %vm5280, %v5237, %v2735
      %v5304 = vsel %vm5280, %v5239, %v2737
      %v5306 = vsel %vm5280, %v5241, %v2739
      %v5308 = vsel %vm5280, %v5243, %v2741
      %v5310 = vsel %vm5280, %v5245, %v2743
      %v5312 = vsel %vm5280, %v5247, %v2745
      %v5314 = vsel %vm5280, %v5249, %v2747
      %v5316 = vsel %vm5280, %v5251, %v2749
      %v5318 = vsel %vm5280, %v5253, %v2751
      %v5320 = vsel %vm5280, %v5255, %v2753
      %v5322 = vsel %vm5280, %v5257, %v2755
      %v5324 = vsel %vm5280, %v5259, %v2757
      %v5326 = vsel %vm5280, %v5261, %v2759
      %v5328 = vsel %vm5280, %v5263, %v2761
      %v5330 = vsel %vm5280, %v5265, %v2763
      %v5332 = vsel %vm5280, %v5267, %v2765
      %v5334 = vsel %vm5280, %v5269, %v2767
      %v5336 = vsel %vm5280, %v5271, %v2769
      %v5338 = vsel %vm5280, %v5273, %v2771
      %v5340 = vsel %vm5280, %v5275, %v2773
      %v5342 = vsel %vm5280, %v5277, %v2775
      %v5344 = vsel %vm5280, %v5279, %v2777
      %v5347 = vsel %vm4858, %v439, %v3163
      %v5350 = vsel %vm4858, %v440, %v3165
      %v5353 = vsel %vm4858, %v441, %v3167
      %v5356 = vsel %vm4858, %v442, %v3169
      %v5359 = vsel %vm4858, %v443, %v3171
      %v5362 = vsel %vm4858, %v444, %v3173
      %v5365 = vsel %vm4858, %v445, %v3175
      %v5368 = vsel %vm4858, %v446, %v3177
      %v5371 = vsel %vm4858, %v447, %v3179
      %v5374 = vsel %vm4858, %v448, %v3181
      %v5377 = vsel %vm4858, %v449, %v3183
      %v5380 = vsel %vm4858, %v450, %v3185
      %v5383 = vsel %vm4858, %v451, %v3187
      %v5386 = vsel %vm4858, %v452, %v3189
      %v5389 = vsel %vm4858, %v453, %v3191
      %v5392 = vsel %vm4858, %v454, %v3193
      %v5395 = vsel %vm4858, %v455, %v3195
      %v5398 = vsel %vm4858, %v456, %v3197
      %v5401 = vsel %vm4858, %v457, %v3199
      %v5404 = vsel %vm4858, %v458, %v3201
      %v5407 = vsel %vm4858, %v459, %v3203
      %v5410 = vsel %vm4858, %v460, %v3205
      %v5413 = vsel %vm4858, %v461, %v3207
      %v5416 = vsel %vm4858, %v462, %v3209
      %v5419 = vsel %vm4858, %v463, %v3211
      %v5422 = vsel %vm4858, %v464, %v3213
      %v5425 = vsel %vm4858, %v465, %v3215
      %v5428 = vsel %vm4858, %v466, %v3217
      %v5431 = vsel %vm4858, %v467, %v3219
      %v5434 = vsel %vm4858, %v468, %v3221
      %v5437 = vsel %vm4858, %v469, %v3223
      %v5440 = vsel %vm4858, %v470, %v3225
      %v5442 = vsel %vm4955, %v5347, %v3323
      %v5444 = vsel %vm4955, %v5350, %v3325
      %v5446 = vsel %vm4955, %v5353, %v3327
      %v5448 = vsel %vm4955, %v5356, %v3329
      %v5450 = vsel %vm4955, %v5359, %v3331
      %v5452 = vsel %vm4955, %v5362, %v3333
      %v5454 = vsel %vm4955, %v5365, %v3335
      %v5456 = vsel %vm4955, %v5368, %v3337
      %v5458 = vsel %vm4955, %v5371, %v3339
      %v5460 = vsel %vm4955, %v5374, %v3341
      %v5462 = vsel %vm4955, %v5377, %v3343
      %v5464 = vsel %vm4955, %v5380, %v3345
      %v5466 = vsel %vm4955, %v5383, %v3347
      %v5468 = vsel %vm4955, %v5386, %v3349
      %v5470 = vsel %vm4955, %v5389, %v3351
      %v5472 = vsel %vm4955, %v5392, %v3353
      %v5474 = vsel %vm4955, %v5395, %v3355
      %v5476 = vsel %vm4955, %v5398, %v3357
      %v5478 = vsel %vm4955, %v5401, %v3359
      %v5480 = vsel %vm4955, %v5404, %v3361
      %v5482 = vsel %vm4955, %v5407, %v3363
      %v5484 = vsel %vm4955, %v5410, %v3365
      %v5486 = vsel %vm4955, %v5413, %v3367
      %v5488 = vsel %vm4955, %v5416, %v3369
      %v5490 = vsel %vm4955, %v5419, %v3371
      %v5492 = vsel %vm4955, %v5422, %v3373
      %v5494 = vsel %vm4955, %v5425, %v3375
      %v5496 = vsel %vm4955, %v5428, %v3377
      %v5498 = vsel %vm4955, %v5431, %v3379
      %v5500 = vsel %vm4955, %v5434, %v3381
      %v5502 = vsel %vm4955, %v5437, %v3383
      %v5504 = vsel %vm4955, %v5440, %v3385
      %v5506 = vsel %vm5020, %v5442, %v3707
      %v5508 = vsel %vm5020, %v5444, %v3709
      %v5510 = vsel %vm5020, %v5446, %v3711
      %v5512 = vsel %vm5020, %v5448, %v3713
      %v5514 = vsel %vm5020, %v5450, %v3715
      %v5516 = vsel %vm5020, %v5452, %v3717
      %v5518 = vsel %vm5020, %v5454, %v3719
      %v5520 = vsel %vm5020, %v5456, %v3721
      %v5522 = vsel %vm5020, %v5458, %v3723
      %v5524 = vsel %vm5020, %v5460, %v3725
      %v5526 = vsel %vm5020, %v5462, %v3727
      %v5528 = vsel %vm5020, %v5464, %v3729
      %v5530 = vsel %vm5020, %v5466, %v3731
      %v5532 = vsel %vm5020, %v5468, %v3733
      %v5534 = vsel %vm5020, %v5470, %v3735
      %v5536 = vsel %vm5020, %v5472, %v3737
      %v5538 = vsel %vm5020, %v5474, %v3739
      %v5540 = vsel %vm5020, %v5476, %v3741
      %v5542 = vsel %vm5020, %v5478, %v3743
      %v5544 = vsel %vm5020, %v5480, %v3745
      %v5546 = vsel %vm5020, %v5482, %v3747
      %v5548 = vsel %vm5020, %v5484, %v3749
      %v5550 = vsel %vm5020, %v5486, %v3751
      %v5552 = vsel %vm5020, %v5488, %v3753
      %v5554 = vsel %vm5020, %v5490, %v3755
      %v5556 = vsel %vm5020, %v5492, %v3757
      %v5558 = vsel %vm5020, %v5494, %v3759
      %v5560 = vsel %vm5020, %v5496, %v3761
      %v5562 = vsel %vm5020, %v5498, %v3763
      %v5564 = vsel %vm5020, %v5500, %v3765
      %v5566 = vsel %vm5020, %v5502, %v3767
      %v5568 = vsel %vm5020, %v5504, %v3769
      %v5570 = vsel %vm5085, %v5506, %v3867
      %v5572 = vsel %vm5085, %v5508, %v3869
      %v5574 = vsel %vm5085, %v5510, %v3871
      %v5576 = vsel %vm5085, %v5512, %v3873
      %v5578 = vsel %vm5085, %v5514, %v3875
      %v5580 = vsel %vm5085, %v5516, %v3877
      %v5582 = vsel %vm5085, %v5518, %v3879
      %v5584 = vsel %vm5085, %v5520, %v3881
      %v5586 = vsel %vm5085, %v5522, %v3883
      %v5588 = vsel %vm5085, %v5524, %v3885
      %v5590 = vsel %vm5085, %v5526, %v3887
      %v5592 = vsel %vm5085, %v5528, %v3889
      %v5594 = vsel %vm5085, %v5530, %v3891
      %v5596 = vsel %vm5085, %v5532, %v3893
      %v5598 = vsel %vm5085, %v5534, %v3895
      %v5600 = vsel %vm5085, %v5536, %v3897
      %v5602 = vsel %vm5085, %v5538, %v3899
      %v5604 = vsel %vm5085, %v5540, %v3901
      %v5606 = vsel %vm5085, %v5542, %v3903
      %v5608 = vsel %vm5085, %v5544, %v3905
      %v5610 = vsel %vm5085, %v5546, %v3907
      %v5612 = vsel %vm5085, %v5548, %v3909
      %v5614 = vsel %vm5085, %v5550, %v3911
      %v5616 = vsel %vm5085, %v5552, %v3913
      %v5618 = vsel %vm5085, %v5554, %v3915
      %v5620 = vsel %vm5085, %v5556, %v3917
      %v5622 = vsel %vm5085, %v5558, %v3919
      %v5624 = vsel %vm5085, %v5560, %v3921
      %v5626 = vsel %vm5085, %v5562, %v3923
      %v5628 = vsel %vm5085, %v5564, %v3925
      %v5630 = vsel %vm5085, %v5566, %v3927
      %v5632 = vsel %vm5085, %v5568, %v3929
      %v5634 = vsel %vm5150, %v5570, %v4251
      %v5636 = vsel %vm5150, %v5572, %v4253
      %v5638 = vsel %vm5150, %v5574, %v4255
      %v5640 = vsel %vm5150, %v5576, %v4257
      %v5642 = vsel %vm5150, %v5578, %v4259
      %v5644 = vsel %vm5150, %v5580, %v4261
      %v5646 = vsel %vm5150, %v5582, %v4263
      %v5648 = vsel %vm5150, %v5584, %v4265
      %v5650 = vsel %vm5150, %v5586, %v4267
      %v5652 = vsel %vm5150, %v5588, %v4269
      %v5654 = vsel %vm5150, %v5590, %v4271
      %v5656 = vsel %vm5150, %v5592, %v4273
      %v5658 = vsel %vm5150, %v5594, %v4275
      %v5660 = vsel %vm5150, %v5596, %v4277
      %v5662 = vsel %vm5150, %v5598, %v4279
      %v5664 = vsel %vm5150, %v5600, %v4281
      %v5666 = vsel %vm5150, %v5602, %v4283
      %v5668 = vsel %vm5150, %v5604, %v4285
      %v5670 = vsel %vm5150, %v5606, %v4287
      %v5672 = vsel %vm5150, %v5608, %v4289
      %v5674 = vsel %vm5150, %v5610, %v4291
      %v5676 = vsel %vm5150, %v5612, %v4293
      %v5678 = vsel %vm5150, %v5614, %v4295
      %v5680 = vsel %vm5150, %v5616, %v4297
      %v5682 = vsel %vm5150, %v5618, %v4299
      %v5684 = vsel %vm5150, %v5620, %v4301
      %v5686 = vsel %vm5150, %v5622, %v4303
      %v5688 = vsel %vm5150, %v5624, %v4305
      %v5690 = vsel %vm5150, %v5626, %v4307
      %v5692 = vsel %vm5150, %v5628, %v4309
      %v5694 = vsel %vm5150, %v5630, %v4311
      %v5696 = vsel %vm5150, %v5632, %v4313
      %v5698 = vsel %vm5215, %v5634, %v4411
      %v5700 = vsel %vm5215, %v5636, %v4413
      %v5702 = vsel %vm5215, %v5638, %v4415
      %v5704 = vsel %vm5215, %v5640, %v4417
      %v5706 = vsel %vm5215, %v5642, %v4419
      %v5708 = vsel %vm5215, %v5644, %v4421
      %v5710 = vsel %vm5215, %v5646, %v4423
      %v5712 = vsel %vm5215, %v5648, %v4425
      %v5714 = vsel %vm5215, %v5650, %v4427
      %v5716 = vsel %vm5215, %v5652, %v4429
      %v5718 = vsel %vm5215, %v5654, %v4431
      %v5720 = vsel %vm5215, %v5656, %v4433
      %v5722 = vsel %vm5215, %v5658, %v4435
      %v5724 = vsel %vm5215, %v5660, %v4437
      %v5726 = vsel %vm5215, %v5662, %v4439
      %v5728 = vsel %vm5215, %v5664, %v4441
      %v5730 = vsel %vm5215, %v5666, %v4443
      %v5732 = vsel %vm5215, %v5668, %v4445
      %v5734 = vsel %vm5215, %v5670, %v4447
      %v5736 = vsel %vm5215, %v5672, %v4449
      %v5738 = vsel %vm5215, %v5674, %v4451
      %v5740 = vsel %vm5215, %v5676, %v4453
      %v5742 = vsel %vm5215, %v5678, %v4455
      %v5744 = vsel %vm5215, %v5680, %v4457
      %v5746 = vsel %vm5215, %v5682, %v4459
      %v5748 = vsel %vm5215, %v5684, %v4461
      %v5750 = vsel %vm5215, %v5686, %v4463
      %v5752 = vsel %vm5215, %v5688, %v4465
      %v5754 = vsel %vm5215, %v5690, %v4467
      %v5756 = vsel %vm5215, %v5692, %v4469
      %v5758 = vsel %vm5215, %v5694, %v4471
      %v5760 = vsel %vm5215, %v5696, %v4473
      %v5762 = vsel %vm5280, %v5698, %v4795
      %v5764 = vsel %vm5280, %v5700, %v4797
      %v5766 = vsel %vm5280, %v5702, %v4799
      %v5768 = vsel %vm5280, %v5704, %v4801
      %v5770 = vsel %vm5280, %v5706, %v4803
      %v5772 = vsel %vm5280, %v5708, %v4805
      %v5774 = vsel %vm5280, %v5710, %v4807
      %v5776 = vsel %vm5280, %v5712, %v4809
      %v5778 = vsel %vm5280, %v5714, %v4811
      %v5780 = vsel %vm5280, %v5716, %v4813
      %v5782 = vsel %vm5280, %v5718, %v4815
      %v5784 = vsel %vm5280, %v5720, %v4817
      %v5786 = vsel %vm5280, %v5722, %v4819
      %v5788 = vsel %vm5280, %v5724, %v4821
      %v5790 = vsel %vm5280, %v5726, %v4823
      %v5792 = vsel %vm5280, %v5728, %v4825
      %v5794 = vsel %vm5280, %v5730, %v4827
      %v5796 = vsel %vm5280, %v5732, %v4829
      %v5798 = vsel %vm5280, %v5734, %v4831
      %v5800 = vsel %vm5280, %v5736, %v4833
      %v5802 = vsel %vm5280, %v5738, %v4835
      %v5804 = vsel %vm5280, %v5740, %v4837
      %v5806 = vsel %vm5280, %v5742, %v4839
      %v5808 = vsel %vm5280, %v5744, %v4841
      %v5810 = vsel %vm5280, %v5746, %v4843
      %v5812 = vsel %vm5280, %v5748, %v4845
      %v5814 = vsel %vm5280, %v5750, %v4847
      %v5816 = vsel %vm5280, %v5752, %v4849
      %v5818 = vsel %vm5280, %v5754, %v4851
      %v5820 = vsel %vm5280, %v5756, %v4853
      %v5822 = vsel %vm5280, %v5758, %v4855
      %v5824 = vsel %vm5280, %v5760, %v4857
      %v5889 = vunpack.c.l.b16 %v5282
      %v5890 = vunpack.c.l.b16 %v5762
      %v5891 = vunpack.c.l.b16 %v5284
      %v5892 = vunpack.c.l.b16 %v5764
      %v5893 = vunpack.c.l.b16 %v5286
      %v5894 = vunpack.c.l.b16 %v5766
      %v5895 = vunpack.c.l.b16 %v5288
      %v5896 = vunpack.c.l.b16 %v5768
      %v5897 = vunpack.c.l.b16 %v5290
      %v5898 = vunpack.c.l.b16 %v5770
      %v5899 = vunpack.c.l.b16 %v5292
      %v5900 = vunpack.c.l.b16 %v5772
      %v5901 = vunpack.c.l.b16 %v5294
      %v5902 = vunpack.c.l.b16 %v5774
      %v5903 = vunpack.c.l.b16 %v5296
      %v5904 = vunpack.c.l.b16 %v5776
      %v5905 = vunpack.c.l.b16 %v5298
      %v5906 = vunpack.c.l.b16 %v5778
      %v5907 = vunpack.c.l.b16 %v5300
      %v5908 = vunpack.c.l.b16 %v5780
      %v5909 = vunpack.c.l.b16 %v5302
      %v5910 = vunpack.c.l.b16 %v5782
      %v5911 = vunpack.c.l.b16 %v5304
      %v5912 = vunpack.c.l.b16 %v5784
      %v5913 = vunpack.c.l.b16 %v5306
      %v5914 = vunpack.c.l.b16 %v5786
      %v5915 = vunpack.c.l.b16 %v5308
      %v5916 = vunpack.c.l.b16 %v5788
      %v5917 = vunpack.c.l.b16 %v5310
      %v5918 = vunpack.c.l.b16 %v5790
      %v5919 = vunpack.c.l.b16 %v5312
      %v5920 = vunpack.c.l.b16 %v5792
      %v5921 = vunpack.c.l.b16 %v5314
      %v5922 = vunpack.c.l.b16 %v5794
      %v5923 = vunpack.c.l.b16 %v5316
      %v5924 = vunpack.c.l.b16 %v5796
      %v5925 = vunpack.c.l.b16 %v5318
      %v5926 = vunpack.c.l.b16 %v5798
      %v5927 = vunpack.c.l.b16 %v5320
      %v5928 = vunpack.c.l.b16 %v5800
      %v5929 = vunpack.c.l.b16 %v5322
      %v5930 = vunpack.c.l.b16 %v5802
      %v5931 = vunpack.c.l.b16 %v5324
      %v5932 = vunpack.c.l.b16 %v5804
      %v5933 = vunpack.c.l.b16 %v5326
      %v5934 = vunpack.c.l.b16 %v5806
      %v5935 = vunpack.c.l.b16 %v5328
      %v5936 = vunpack.c.l.b16 %v5808
      %v5937 = vunpack.c.l.b16 %v5330
      %v5938 = vunpack.c.l.b16 %v5810
      %v5939 = vunpack.c.l.b16 %v5332
      %v5940 = vunpack.c.l.b16 %v5812
      %v5941 = vunpack.c.l.b16 %v5334
      %v5942 = vunpack.c.l.b16 %v5814
      %v5943 = vunpack.c.l.b16 %v5336
      %v5944 = vunpack.c.l.b16 %v5816
      %v5945 = vunpack.c.l.b16 %v5338
      %v5946 = vunpack.c.l.b16 %v5818
      %v5947 = vunpack.c.l.b16 %v5340
      %v5948 = vunpack.c.l.b16 %v5820
      %v5949 = vunpack.c.l.b16 %v5342
      %v5950 = vunpack.c.l.b16 %v5822
      %v5951 = vunpack.c.l.b16 %v5344
      %v5952 = vunpack.c.l.b16 %v5824
      %v5953 = vld [vmem:[%s1] sm:$0xf]
      %v5954 = vld [vmem:[%s1 + $0x4] sm:$0xf]
      %v5955 = vld [vmem:[%s1 + $0x8] sm:$0xf]
      %v5956 = vld [vmem:[%s1 + $0xc] sm:$0xf]
      %v5957 = vld [vmem:[%s1 + $0x10] sm:$0xf]
      %v5958 = vld [vmem:[%s1 + $0x14] sm:$0xf]
      %v5959 = vld [vmem:[%s1 + $0x18] sm:$0xf]
      %v5960 = vld [vmem:[%s1 + $0x1c] sm:$0xf]
      %v5961 = vld [vmem:[%s1 + $0x20] sm:$0xf]
      %v5962 = vld [vmem:[%s1 + $0x24] sm:$0xf]
      %v5963 = vld [vmem:[%s1 + $0x28] sm:$0xf]
      %v5964 = vld [vmem:[%s1 + $0x2c] sm:$0xf]
      %v5965 = vld [vmem:[%s1 + $0x30] sm:$0xf]
      %v5966 = vld [vmem:[%s1 + $0x34] sm:$0xf]
      %v5967 = vld [vmem:[%s1 + $0x38] sm:$0xf]
      %v5968 = vld [vmem:[%s1 + $0x3c] sm:$0xf]
      %v5969 = vld [vmem:[%s1 + $0x40] sm:$0xf]
      %v5970 = vld [vmem:[%s1 + $0x44] sm:$0xf]
      %v5971 = vld [vmem:[%s1 + $0x48] sm:$0xf]
      %v5972 = vld [vmem:[%s1 + $0x4c] sm:$0xf]
      %v5973 = vld [vmem:[%s1 + $0x50] sm:$0xf]
      %v5974 = vld [vmem:[%s1 + $0x54] sm:$0xf]
      %v5975 = vld [vmem:[%s1 + $0x58] sm:$0xf]
      %v5976 = vld [vmem:[%s1 + $0x5c] sm:$0xf]
      %v5977 = vld [vmem:[%s1 + $0x60] sm:$0xf]
      %v5978 = vld [vmem:[%s1 + $0x64] sm:$0xf]
      %v5979 = vld [vmem:[%s1 + $0x68] sm:$0xf]
      %v5980 = vld [vmem:[%s1 + $0x6c] sm:$0xf]
      %v5981 = vld [vmem:[%s1 + $0x70] sm:$0xf]
      %v5982 = vld [vmem:[%s1 + $0x74] sm:$0xf]
      %v5983 = vld [vmem:[%s1 + $0x78] sm:$0xf]
      %v5984 = vld [vmem:[%s1 + $0x7c] sm:$0xf]
      %v5985 = vld [vmem:[%s2] sm:$0x1]
      %v5987 = vperm.slane %v5985, 0
      %v5989 = vpack.c.b16 %v5891, %v5889
      %v5990 = vpack.c.b16 %v5892, %v5890
      %v5991 = vpack.c.b16 %v5895, %v5893
      %v5992 = vpack.c.b16 %v5896, %v5894
      %v5993 = vpack.c.b16 %v5899, %v5897
      %v5994 = vpack.c.b16 %v5900, %v5898
      %v5995 = vpack.c.b16 %v5903, %v5901
      %v5996 = vpack.c.b16 %v5904, %v5902
      %v5997 = vpack.c.b16 %v5907, %v5905
      %v5998 = vpack.c.b16 %v5908, %v5906
      %v5999 = vpack.c.b16 %v5911, %v5909
      %v6000 = vpack.c.b16 %v5912, %v5910
      %v6001 = vpack.c.b16 %v5915, %v5913
      %v6002 = vpack.c.b16 %v5916, %v5914
      %v6003 = vpack.c.b16 %v5919, %v5917
      %v6004 = vpack.c.b16 %v5920, %v5918
      %v6005 = vpack.c.b16 %v5923, %v5921
      %v6006 = vpack.c.b16 %v5924, %v5922
      %v6007 = vpack.c.b16 %v5927, %v5925
      %v6008 = vpack.c.b16 %v5928, %v5926
      %v6009 = vpack.c.b16 %v5931, %v5929
      %v6010 = vpack.c.b16 %v5932, %v5930
      %v6011 = vpack.c.b16 %v5935, %v5933
      %v6012 = vpack.c.b16 %v5936, %v5934
      %v6013 = vpack.c.b16 %v5939, %v5937
      %v6014 = vpack.c.b16 %v5940, %v5938
      %v6015 = vpack.c.b16 %v5943, %v5941
      %v6016 = vpack.c.b16 %v5944, %v5942
      %v6017 = vpack.c.b16 %v5947, %v5945
      %v6018 = vpack.c.b16 %v5948, %v5946
      %v6019 = vpack.c.b16 %v5951, %v5949
      %v6020 = vpack.c.b16 %v5952, %v5950
      %v6085 = vunpack.c.l.b16 %v5953
      %v6086 = vunpack.c.l.b16 %v5954
      %v6087 = vunpack.c.l.b16 %v5955
      %v6088 = vunpack.c.l.b16 %v5956
      %v6089 = vunpack.c.l.b16 %v5957
      %v6090 = vunpack.c.l.b16 %v5958
      %v6091 = vunpack.c.l.b16 %v5959
      %v6092 = vunpack.c.l.b16 %v5960
      %v6093 = vunpack.c.l.b16 %v5961
      %v6094 = vunpack.c.l.b16 %v5962
      %v6095 = vunpack.c.l.b16 %v5963
      %v6096 = vunpack.c.l.b16 %v5964
      %v6097 = vunpack.c.l.b16 %v5965
      %v6098 = vunpack.c.l.b16 %v5966
      %v6099 = vunpack.c.l.b16 %v5967
      %v6100 = vunpack.c.l.b16 %v5968
      %v6101 = vunpack.c.l.b16 %v5969
      %v6102 = vunpack.c.l.b16 %v5970
      %v6103 = vunpack.c.l.b16 %v5971
      %v6104 = vunpack.c.l.b16 %v5972
      %v6105 = vunpack.c.l.b16 %v5973
      %v6106 = vunpack.c.l.b16 %v5974
      %v6107 = vunpack.c.l.b16 %v5975
      %v6108 = vunpack.c.l.b16 %v5976
      %v6109 = vunpack.c.l.b16 %v5977
      %v6110 = vunpack.c.l.b16 %v5978
      %v6111 = vunpack.c.l.b16 %v5979
      %v6112 = vunpack.c.l.b16 %v5980
      %v6113 = vunpack.c.l.b16 %v5981
      %v6114 = vunpack.c.l.b16 %v5982
      %v6115 = vunpack.c.l.b16 %v5983
      %v6116 = vunpack.c.l.b16 %v5984
      %v6117 = vpack.c.b16 %v6086, %v6085
      %v6118 = vpack.c.b16 %v6088, %v6087
      %v6119 = vpack.c.b16 %v6090, %v6089
      %v6120 = vpack.c.b16 %v6092, %v6091
      %v6121 = vpack.c.b16 %v6094, %v6093
      %v6122 = vpack.c.b16 %v6096, %v6095
      %v6123 = vpack.c.b16 %v6098, %v6097
      %v6124 = vpack.c.b16 %v6100, %v6099
      %v6125 = vpack.c.b16 %v6102, %v6101
      %v6126 = vpack.c.b16 %v6104, %v6103
      %v6127 = vpack.c.b16 %v6106, %v6105
      %v6128 = vpack.c.b16 %v6108, %v6107
      %v6129 = vpack.c.b16 %v6110, %v6109
      %v6130 = vpack.c.b16 %v6112, %v6111
      %v6131 = vpack.c.b16 %v6114, %v6113
      %v6132 = vpack.c.b16 %v6116, %v6115
      %6149 = vmatpush.bf16.msra.mxu0 %v6124
      %6150 = vmatpush.bf16.msra.mxu0 %v6123
      %6151 = vmatpush.bf16.msra.mxu0 %v6122
      %6152 = vmatpush.bf16.msra.mxu0 %v6121
      %6153 = vmatpush.bf16.msra.mxu0 %v6120
      %6154 = vmatpush.bf16.msra.mxu0 %v6119
      %6155 = vmatpush.bf16.msra.mxu0 %v6118
      %6156 = vmatpush.bf16.msra.mxu0 %v6117
      %6157 = vmatmul.bf16.gmra.mxu0 %v5989
      %v6158 = vpop.f32.mrf.mxu0
      %v6159 = vadd.f32 %v5987, %v6158
      %v6160 = vpop.f32.mrf.mxu0
      %v6161 = vadd.f32 %v5987, %v6160
      %6162 = vmatmul.bf16.gmra.mxu0 %v5991
      %v6163 = vpop.f32.mrf.mxu0
      %v6164 = vadd.f32 %v5987, %v6163
      %v6165 = vpop.f32.mrf.mxu0
      %v6166 = vadd.f32 %v5987, %v6165
      %6167 = vmatmul.bf16.gmra.mxu0 %v5993
      %v6168 = vpop.f32.mrf.mxu0
      %v6169 = vadd.f32 %v5987, %v6168
      %v6170 = vpop.f32.mrf.mxu0
      %v6171 = vadd.f32 %v5987, %v6170
      %6172 = vmatmul.bf16.gmra.mxu0 %v5995
      %v6173 = vpop.f32.mrf.mxu0
      %v6174 = vadd.f32 %v5987, %v6173
      %v6175 = vpop.f32.mrf.mxu0
      %v6176 = vadd.f32 %v5987, %v6175
      %6177 = vmatmul.bf16.gmra.mxu0 %v5997
      %v6178 = vpop.f32.mrf.mxu0
      %v6179 = vadd.f32 %v5987, %v6178
      %v6180 = vpop.f32.mrf.mxu0
      %v6181 = vadd.f32 %v5987, %v6180
      %6182 = vmatmul.bf16.gmra.mxu0 %v5999
      %v6183 = vpop.f32.mrf.mxu0
      %v6184 = vadd.f32 %v5987, %v6183
      %v6185 = vpop.f32.mrf.mxu0
      %v6186 = vadd.f32 %v5987, %v6185
      %6187 = vmatmul.bf16.gmra.mxu0 %v6001
      %v6188 = vpop.f32.mrf.mxu0
      %v6189 = vadd.f32 %v5987, %v6188
      %v6190 = vpop.f32.mrf.mxu0
      %v6191 = vadd.f32 %v5987, %v6190
      %6192 = vmatmul.bf16.gmra.mxu0 %v6003
      %v6193 = vpop.f32.mrf.mxu0
      %v6194 = vadd.f32 %v5987, %v6193
      %v6195 = vpop.f32.mrf.mxu0
      %v6196 = vadd.f32 %v5987, %v6195
      %6197 = vmatmul.bf16.gmra.mxu0 %v6005
      %v6198 = vpop.f32.mrf.mxu0
      %v6199 = vadd.f32 %v5987, %v6198
      %v6200 = vpop.f32.mrf.mxu0
      %v6201 = vadd.f32 %v5987, %v6200
      %6202 = vmatmul.bf16.gmra.mxu0 %v6007
      %v6203 = vpop.f32.mrf.mxu0
      %v6204 = vadd.f32 %v5987, %v6203
      %v6205 = vpop.f32.mrf.mxu0
      %v6206 = vadd.f32 %v5987, %v6205
      %6207 = vmatmul.bf16.gmra.mxu0 %v6009
      %v6208 = vpop.f32.mrf.mxu0
      %v6209 = vadd.f32 %v5987, %v6208
      %v6210 = vpop.f32.mrf.mxu0
      %v6211 = vadd.f32 %v5987, %v6210
      %6212 = vmatmul.bf16.gmra.mxu0 %v6011
      %v6213 = vpop.f32.mrf.mxu0
      %v6214 = vadd.f32 %v5987, %v6213
      %v6215 = vpop.f32.mrf.mxu0
      %v6216 = vadd.f32 %v5987, %v6215
      %6217 = vmatmul.bf16.gmra.mxu0 %v6013
      %v6218 = vpop.f32.mrf.mxu0
      %v6219 = vadd.f32 %v5987, %v6218
      %v6220 = vpop.f32.mrf.mxu0
      %v6221 = vadd.f32 %v5987, %v6220
      %6222 = vmatmul.bf16.gmra.mxu0 %v6015
      %v6223 = vpop.f32.mrf.mxu0
      %v6224 = vadd.f32 %v5987, %v6223
      %v6225 = vpop.f32.mrf.mxu0
      %v6226 = vadd.f32 %v5987, %v6225
      %6227 = vmatmul.bf16.gmra.mxu0 %v6017
      %v6228 = vpop.f32.mrf.mxu0
      %v6229 = vadd.f32 %v5987, %v6228
      %v6230 = vpop.f32.mrf.mxu0
      %v6231 = vadd.f32 %v5987, %v6230
      %6232 = vmatmul.bf16.gmra.mxu0 %v6019
      %v6233 = vpop.f32.mrf.mxu0
      %v6234 = vadd.f32 %v5987, %v6233
      %v6235 = vpop.f32.mrf.mxu0
      %v6236 = vadd.f32 %v5987, %v6235
      %6237 = vdwg.mxu0
      %6238 = vmatpush.bf16.msra.mxu0 %v6132
      %6239 = vmatpush.bf16.msra.mxu0 %v6131
      %6240 = vmatpush.bf16.msra.mxu0 %v6130
      %6241 = vmatpush.bf16.msra.mxu0 %v6129
      %6242 = vmatpush.bf16.msra.mxu0 %v6128
      %6243 = vmatpush.bf16.msra.mxu0 %v6127
      %6244 = vmatpush.bf16.msra.mxu0 %v6126
      %6245 = vmatpush.bf16.msra.mxu0 %v6125
      %6246 = vmatmul.bf16.gmra.mxu0 %v5990
      %v6247 = vpop.f32.mrf.mxu0
      %v6248 = vadd.f32 %v6159, %v6247
      %v6249 = vpop.f32.mrf.mxu0
      %v6250 = vadd.f32 %v6161, %v6249
      %6251 = vmatmul.bf16.gmra.mxu0 %v5992
      %v6252 = vpop.f32.mrf.mxu0
      %v6253 = vadd.f32 %v6164, %v6252
      %v6254 = vpop.f32.mrf.mxu0
      %v6255 = vadd.f32 %v6166, %v6254
      %6256 = vmatmul.bf16.gmra.mxu0 %v5994
      %v6257 = vpop.f32.mrf.mxu0
      %v6258 = vadd.f32 %v6169, %v6257
      %v6259 = vpop.f32.mrf.mxu0
      %v6260 = vadd.f32 %v6171, %v6259
      %6261 = vmatmul.bf16.gmra.mxu0 %v5996
      %v6262 = vpop.f32.mrf.mxu0
      %v6263 = vadd.f32 %v6174, %v6262
      %v6264 = vpop.f32.mrf.mxu0
      %v6265 = vadd.f32 %v6176, %v6264
      %6266 = vmatmul.bf16.gmra.mxu0 %v5998
      %v6267 = vpop.f32.mrf.mxu0
      %v6268 = vadd.f32 %v6179, %v6267
      %v6269 = vpop.f32.mrf.mxu0
      %v6270 = vadd.f32 %v6181, %v6269
      %6271 = vmatmul.bf16.gmra.mxu0 %v6000
      %v6272 = vpop.f32.mrf.mxu0
      %v6273 = vadd.f32 %v6184, %v6272
      %v6274 = vpop.f32.mrf.mxu0
      %v6275 = vadd.f32 %v6186, %v6274
      %6276 = vmatmul.bf16.gmra.mxu0 %v6002
      %v6277 = vpop.f32.mrf.mxu0
      %v6278 = vadd.f32 %v6189, %v6277
      %v6279 = vpop.f32.mrf.mxu0
      %v6280 = vadd.f32 %v6191, %v6279
      %6281 = vmatmul.bf16.gmra.mxu0 %v6004
      %v6282 = vpop.f32.mrf.mxu0
      %v6283 = vadd.f32 %v6194, %v6282
      %v6284 = vpop.f32.mrf.mxu0
      %v6285 = vadd.f32 %v6196, %v6284
      %6286 = vmatmul.bf16.gmra.mxu0 %v6006
      %v6287 = vpop.f32.mrf.mxu0
      %v6288 = vadd.f32 %v6199, %v6287
      %v6289 = vpop.f32.mrf.mxu0
      %v6290 = vadd.f32 %v6201, %v6289
      %6291 = vmatmul.bf16.gmra.mxu0 %v6008
      %v6292 = vpop.f32.mrf.mxu0
      %v6293 = vadd.f32 %v6204, %v6292
      %v6294 = vpop.f32.mrf.mxu0
      %v6295 = vadd.f32 %v6206, %v6294
      %6296 = vmatmul.bf16.gmra.mxu0 %v6010
      %v6297 = vpop.f32.mrf.mxu0
      %v6298 = vadd.f32 %v6209, %v6297
      %v6299 = vpop.f32.mrf.mxu0
      %v6300 = vadd.f32 %v6211, %v6299
      %6301 = vmatmul.bf16.gmra.mxu0 %v6012
      %v6302 = vpop.f32.mrf.mxu0
      %v6303 = vadd.f32 %v6214, %v6302
      %v6304 = vpop.f32.mrf.mxu0
      %v6305 = vadd.f32 %v6216, %v6304
      %6306 = vmatmul.bf16.gmra.mxu0 %v6014
      %v6307 = vpop.f32.mrf.mxu0
      %v6308 = vadd.f32 %v6219, %v6307
      %v6309 = vpop.f32.mrf.mxu0
      %v6310 = vadd.f32 %v6221, %v6309
      %6311 = vmatmul.bf16.gmra.mxu0 %v6016
      %v6312 = vpop.f32.mrf.mxu0
      %v6313 = vadd.f32 %v6224, %v6312
      %v6314 = vpop.f32.mrf.mxu0
      %v6315 = vadd.f32 %v6226, %v6314
      %6316 = vmatmul.bf16.gmra.mxu0 %v6018
      %v6317 = vpop.f32.mrf.mxu0
      %v6318 = vadd.f32 %v6229, %v6317
      %v6319 = vpop.f32.mrf.mxu0
      %v6320 = vadd.f32 %v6231, %v6319
      %6321 = vmatmul.bf16.gmra.mxu0 %v6020
      %v6322 = vpop.f32.mrf.mxu0
      %v6323 = vadd.f32 %v6234, %v6322
      %v6324 = vpop.f32.mrf.mxu0
      %v6325 = vadd.f32 %v6236, %v6324
      %6326 = vdwg.mxu0
      %v6327 = vmax.f32 %v6248, 0.0
      %v6328 = vmax.f32 %v6250, 0.0
      %v6329 = vmax.f32 %v6253, 0.0
      %v6330 = vmax.f32 %v6255, 0.0
      %v6331 = vmax.f32 %v6258, 0.0
      %v6332 = vmax.f32 %v6260, 0.0
      %v6333 = vmax.f32 %v6263, 0.0
      %v6334 = vmax.f32 %v6265, 0.0
      %v6335 = vmax.f32 %v6268, 0.0
      %v6336 = vmax.f32 %v6270, 0.0
      %v6337 = vmax.f32 %v6273, 0.0
      %v6338 = vmax.f32 %v6275, 0.0
      %v6339 = vmax.f32 %v6278, 0.0
      %v6340 = vmax.f32 %v6280, 0.0
      %v6341 = vmax.f32 %v6283, 0.0
      %v6342 = vmax.f32 %v6285, 0.0
      %v6343 = vmax.f32 %v6288, 0.0
      %v6344 = vmax.f32 %v6290, 0.0
      %v6345 = vmax.f32 %v6293, 0.0
      %v6346 = vmax.f32 %v6295, 0.0
      %v6347 = vmax.f32 %v6298, 0.0
      %v6348 = vmax.f32 %v6300, 0.0
      %v6349 = vmax.f32 %v6303, 0.0
      %v6350 = vmax.f32 %v6305, 0.0
      %v6351 = vmax.f32 %v6308, 0.0
      %v6352 = vmax.f32 %v6310, 0.0
      %v6353 = vmax.f32 %v6313, 0.0
      %v6354 = vmax.f32 %v6315, 0.0
      %v6355 = vmax.f32 %v6318, 0.0
      %v6356 = vmax.f32 %v6320, 0.0
      %v6357 = vmax.f32 %v6323, 0.0
      %v6358 = vmax.f32 %v6325, 0.0
      %v6359 = vpack.c.bf16 %v6327, %v6327
      %v6360 = vpack.c.bf16 %v6328, %v6328
      %v6361 = vpack.c.bf16 %v6329, %v6329
      %v6362 = vpack.c.bf16 %v6330, %v6330
      %v6363 = vpack.c.bf16 %v6331, %v6331
      %v6364 = vpack.c.bf16 %v6332, %v6332
      %v6365 = vpack.c.bf16 %v6333, %v6333
      %v6366 = vpack.c.bf16 %v6334, %v6334
      %v6367 = vpack.c.bf16 %v6335, %v6335
      %v6368 = vpack.c.bf16 %v6336, %v6336
      %v6369 = vpack.c.bf16 %v6337, %v6337
      %v6370 = vpack.c.bf16 %v6338, %v6338
      %v6371 = vpack.c.bf16 %v6339, %v6339
      %v6372 = vpack.c.bf16 %v6340, %v6340
      %v6373 = vpack.c.bf16 %v6341, %v6341
      %v6374 = vpack.c.bf16 %v6342, %v6342
      %v6375 = vpack.c.bf16 %v6343, %v6343
      %v6376 = vpack.c.bf16 %v6344, %v6344
      %v6377 = vpack.c.bf16 %v6345, %v6345
      %v6378 = vpack.c.bf16 %v6346, %v6346
      %v6379 = vpack.c.bf16 %v6347, %v6347
      %v6380 = vpack.c.bf16 %v6348, %v6348
      %v6381 = vpack.c.bf16 %v6349, %v6349
      %v6382 = vpack.c.bf16 %v6350, %v6350
      %v6383 = vpack.c.bf16 %v6351, %v6351
      %v6384 = vpack.c.bf16 %v6352, %v6352
      %v6385 = vpack.c.bf16 %v6353, %v6353
      %v6386 = vpack.c.bf16 %v6354, %v6354
      %v6387 = vpack.c.bf16 %v6355, %v6355
      %v6388 = vpack.c.bf16 %v6356, %v6356
      %v6389 = vpack.c.bf16 %v6357, %v6357
      %v6390 = vpack.c.bf16 %v6358, %v6358
      %vm6391 = vcmask 257024
      %6392 = vst.msk [vmem:[%s177] sm:$0xf] %vm6391, %v6359
      %6393 = vst.msk [vmem:[%s177 + $0x4] sm:$0xf] %vm6391, %v6360
      %6394 = vst.msk [vmem:[%s177 + $0x8] sm:$0xf] %vm6391, %v6361
      %6395 = vst.msk [vmem:[%s177 + $0xc] sm:$0xf] %vm6391, %v6362
      %6396 = vst.msk [vmem:[%s177 + $0x10] sm:$0xf] %vm6391, %v6363
      %6397 = vst.msk [vmem:[%s177 + $0x14] sm:$0xf] %vm6391, %v6364
      %6398 = vst.msk [vmem:[%s177 + $0x18] sm:$0xf] %vm6391, %v6365
      %6399 = vst.msk [vmem:[%s177 + $0x1c] sm:$0xf] %vm6391, %v6366
      %6400 = vst.msk [vmem:[%s177 + $0x20] sm:$0xf] %vm6391, %v6367
      %6401 = vst.msk [vmem:[%s177 + $0x24] sm:$0xf] %vm6391, %v6368
      %6402 = vst.msk [vmem:[%s177 + $0x28] sm:$0xf] %vm6391, %v6369
      %6403 = vst.msk [vmem:[%s177 + $0x2c] sm:$0xf] %vm6391, %v6370
      %6404 = vst.msk [vmem:[%s177 + $0x30] sm:$0xf] %vm6391, %v6371
      %6405 = vst.msk [vmem:[%s177 + $0x34] sm:$0xf] %vm6391, %v6372
      %6406 = vst.msk [vmem:[%s177 + $0x38] sm:$0xf] %vm6391, %v6373
      %6407 = vst.msk [vmem:[%s177 + $0x3c] sm:$0xf] %vm6391, %v6374
      %6408 = vst.msk [vmem:[%s177 + $0x40] sm:$0xf] %vm6391, %v6375
      %6409 = vst.msk [vmem:[%s177 + $0x44] sm:$0xf] %vm6391, %v6376
      %6410 = vst.msk [vmem:[%s177 + $0x48] sm:$0xf] %vm6391, %v6377
      %6411 = vst.msk [vmem:[%s177 + $0x4c] sm:$0xf] %vm6391, %v6378
      %6412 = vst.msk [vmem:[%s177 + $0x50] sm:$0xf] %vm6391, %v6379
      %6413 = vst.msk [vmem:[%s177 + $0x54] sm:$0xf] %vm6391, %v6380
      %6414 = vst.msk [vmem:[%s177 + $0x58] sm:$0xf] %vm6391, %v6381
      %6415 = vst.msk [vmem:[%s177 + $0x5c] sm:$0xf] %vm6391, %v6382
      %6416 = vst.msk [vmem:[%s177 + $0x60] sm:$0xf] %vm6391, %v6383
      %6417 = vst.msk [vmem:[%s177 + $0x64] sm:$0xf] %vm6391, %v6384
      %6418 = vst.msk [vmem:[%s177 + $0x68] sm:$0xf] %vm6391, %v6385
      %6419 = vst.msk [vmem:[%s177 + $0x6c] sm:$0xf] %vm6391, %v6386
      %6420 = vst.msk [vmem:[%s177 + $0x70] sm:$0xf] %vm6391, %v6387
      %6421 = vst.msk [vmem:[%s177 + $0x74] sm:$0xf] %vm6391, %v6388
      %6422 = vst.msk [vmem:[%s177 + $0x78] sm:$0xf] %vm6391, %v6389
      %6423 = vst.msk [vmem:[%s177 + $0x7c] sm:$0xf] %vm6391, %v6390
      %s6424 = smul.u32 4, %s14
      %p6425 = scmp.lt.s32.totalorder %s6424, 7
      %s6426 = scalar_select %p6425, %s6424, 7
      %s6427 = smul.addr %s6426, 8
      %s6428 = smul.addr %s6427, 4
      %s6429 = scalar_lea.vmem %s3, %s6428
      // Predicated region
      $region33: #{cnn_model_forward.2} parent=31 // pred_check
        %p6430 = pneg %p100
      $region34: #{cnn_model_forward.2} parent=31 // pred_check_branch
        %6432 = sbr.rel (%p6430) target = $region36
      $region35: #{cnn_model_forward.2} parent=31 // pred_region
        %s6433 = smul.u32 4, %s14
      $region36: #{cnn_model_forward.2} parent=31 // pred_fallthru
        _
    $region32: #{cnn_model_forward.2} parent=5 // pred_fallthru
      _
    %p6434 = scmp.le.s32.totalorder 2, %s9
    // Predicated region
    $region37: #{cnn_model_forward.2} parent=5 // pred_check
      %p6435 = pneg %p6434
    $region38: #{cnn_model_forward.2} parent=5 // pred_check_branch
      %6437 = sbr.rel (%p6435) target = $region40
    $region39: #{cnn_model_forward.2} parent=5 // pred_region
      %s6438 = ssub.s32 %s9, 2
      // Predicated region
      $region41: #{cnn_model_forward.2} parent=39 // pred_check
        %p6439 = pneg %p106
      $region42: #{cnn_model_forward.2} parent=39 // pred_check_branch
        %6441 = sbr.rel (%p6439) target = $region44
      $region43: #{cnn_model_forward.2} parent=39 // pred_region
        %s6442 = smul.u32 4, %s15
        %p6443 = scmp.lt.s32.totalorder %s6442, 7
        %s6444 = scalar_select %p6443, %s6442, 7
        %s6445 = smul.addr %s6444, 8
        %s6446 = smul.addr %s6445, 4
        %s6447 = scalar_lea.vmem %s3, %s6446
      $region44: #{cnn_model_forward.2} parent=39 // pred_fallthru
        _
    $region40: #{cnn_model_forward.2} parent=5 // pred_fallthru
      _
  $region6: #{cnn_model_forward.2} parent=0 // loop_footer
    %s13 = sadd.s32 1, %s9
  $region7: #{cnn_model_forward.2} parent=0 // loop_footer_branch
    %8 = sbr.rel target = $region3
  $region8: #{cnn_model_forward.2} parent=0 // loop_exit
    _

</llo_original>
